<compile_context>
chip_gen: v7x
topology: tpu7x:2x2x1
jax: 0.10.0
libtpu: 0.0.40
codegen_flags: <defaults>
</compile_context>

<pallas_src>
import jax
import jax.numpy as jnp
from jax.experimental import pallas as pl
from jax.experimental.pallas import tpu as pltpu


# --------------------------------------------------------------------------- kernel
def make_block_kernel(num_stages):
    """Fused: num_stages x [conv3x3 'same' + bias + ReLU + 2x2 maxpool] -> GAP -> FC."""

    def kernel(*args):
        x_ref = args[0]                                     # (1, H, W, Cin) f32
        w_refs = args[1:1 + num_stages]                     # (KH,KW,Cin,Cout) bf16
        b_refs = args[1 + num_stages:1 + 2 * num_stages]    # (1,Cout) f32
        wfc_ref = args[1 + 2 * num_stages]                  # (Cf, num_classes) bf16
        bfc_ref = args[2 + 2 * num_stages]                  # (1, num_classes) f32
        o_ref = args[3 + 2 * num_stages]                    # (1, 1, num_classes) f32
        scratch = args[4 + 2 * num_stages:]
        pad_refs = scratch[:num_stages]                     # (1,Hp,Wp,Cin) f32 padded act
        acc_refs = scratch[num_stages:2 * num_stages]       # (H*W,Cout) f32 accumulators

        y = x_ref[...]                                      # (1, H, W, Cin) f32

        for s in range(num_stages):
            p_ref, acc_ref = pad_refs[s], acc_refs[s]
            KH, KW, Cin, Cout = w_refs[s].shape
            _, Hp, Wp, _ = p_ref.shape
            H, W = Hp - (KH - 1), Wp - (KW - 1)
            H2, W2 = H // 2, W // 2
            ph, pw = KH // 2, KW // 2
            pdt = p_ref.dtype

            # Halo-only zero fill (4 thin border strips), then interior store.
            if ph > 0:
                p_ref[:, 0:ph, :, :] = jnp.zeros((1, ph, Wp, Cin), pdt)
                p_ref[:, ph + H:Hp, :, :] = jnp.zeros((1, Hp - ph - H, Wp, Cin), pdt)
            if pw > 0:
                p_ref[:, :, 0:pw, :] = jnp.zeros((1, Hp, pw, Cin), pdt)
                p_ref[:, :, pw + W:Wp, :] = jnp.zeros((1, Hp, Wp - pw - W, Cin), pdt)
            p_ref[:, ph:ph + H, pw:pw + W, :] = y.astype(pdt)

            # Conv as KH*KW shifted (H*W, Cin) @ (Cin, Cout) MXU matmuls.
            # Each tap is a bounded ref-slice load; accumulate in f32 VMEM scratch.
            first = True
            for kh in range(KH):
                for kw in range(KW):
                    patch = p_ref[:, kh:kh + H, kw:kw + W, :]
                    patch = patch.reshape(H * W, Cin).astype(jnp.bfloat16)
                    contrib = jnp.dot(patch, w_refs[s][kh, kw],
                                      preferred_element_type=jnp.float32)
                    if first:
                        acc_ref[...] = contrib
                        first = False
                    else:
                        acc_ref[...] += contrib

            a = jnp.maximum(acc_ref[...] + b_refs[s][...], 0.0)       # bias + ReLU (f32)

            # 2x2 max-pool, stride 2 (rank<=4 reshapes).
            z = jnp.max(a.reshape(H * W2, 2, Cout), axis=1)           # pool along W
            z = jnp.max(z.reshape(H2, 2, W2, Cout), axis=1)           # pool along H
            y = z.reshape(1, H2, W2, Cout)                            # f32

            # TODO(synk): nn.Dropout(p=0.5) is stochastic at train time; eval-mode identity here.

        # Head: AdaptiveAvgPool2d((1,1)) + flatten + Linear, fused into the same kernel.
        _, Hf, Wf, Cf = y.shape
        feat = jnp.sum(y.reshape(1, Hf * Wf, Cf), axis=1) * (1.0 / float(Hf * Wf))
        logits = jnp.dot(feat.astype(jnp.bfloat16), wfc_ref[...],
                         preferred_element_type=jnp.float32) + bfc_ref[...]
        o_ref[...] = logits.reshape(o_ref.shape).astype(o_ref.dtype)

    return kernel


# --------------------------------------------------------------------------- params
def weight_norm_effective(v, g):
    # PyTorch weight_norm(dim=0): w = g * v / ||v||, norm over (Cin, KH, KW) per out-channel.
    norm = jnp.sqrt(jnp.sum(v * v, axis=(1, 2, 3), keepdims=True))
    return (g.reshape(-1, 1, 1, 1) / norm) * v


def prepare_params(conv_params, fc_params):
    """One-time weight prep (weight-norm, layout transpose, bf16 cast for the MXU),
    hoisted out of the per-call forward path."""
    stage_w, stage_b = [], []
    for (v, g, b) in conv_params:
        w_eff = weight_norm_effective(v, g)                        # (Cout, Cin, KH, KW) f32
        stage_w.append(jnp.transpose(w_eff, (2, 3, 1, 0)).astype(jnp.bfloat16))
        stage_b.append(b.reshape(1, -1).astype(jnp.float32))
    w_fc, b_fc = fc_params
    return (tuple(stage_w), tuple(stage_b),
            w_fc.astype(jnp.bfloat16), b_fc.reshape(1, -1).astype(jnp.float32))


def init_params(key, num_classes, in_channels, hidden_dims, kernel_sizes):
    params = []
    cin = in_channels
    for hd, ks in zip(hidden_dims, kernel_sizes):
        key, k1, k2 = jax.random.split(key, 3)
        fan_in = cin * ks * ks
        v = jax.random.normal(k1, (hd, cin, ks, ks), jnp.float32) / jnp.sqrt(float(fan_in))
        g = jnp.sqrt(jnp.sum(v * v, axis=(1, 2, 3)))      # PyTorch weight_norm init: g = ||v||
        b = jax.random.normal(k2, (hd,), jnp.float32) * 0.01
        params.append((v, g, b))
        cin = hd
    key, k1, k2 = jax.random.split(key, 3)
    w_fc = jax.random.normal(k1, (hidden_dims[-1], num_classes), jnp.float32) / jnp.sqrt(
        float(hidden_dims[-1]))
    b_fc = jax.random.normal(k2, (num_classes,), jnp.float32) * 0.01
    return params, (w_fc, b_fc)


# --------------------------------------------------------------------------- forward
@jax.jit
def block_forward(x_nchw, stage_w, stage_b, w_fc, b_fc):
    x = jnp.transpose(x_nchw, (0, 2, 3, 1))                        # NCHW -> NHWC
    N, H, W, Cin = x.shape
    num_classes = w_fc.shape[1]

    # Per-stage per-batch padded-activation and accumulator scratch shapes (all VMEM, < 1 MiB).
    pad_shapes, acc_shapes = [], []
    h, w, cin = H, W, Cin
    for wk in stage_w:
        KH, KW, wcin, cout = wk.shape
        assert KH % 2 == 1 and KW % 2 == 1, "'same' padding needs odd kernel sizes"
        assert wcin == cin, "channel mismatch between stages"
        assert h % 2 == 0 and w % 2 == 0, "MaxPool2d(2) needs even spatial dims per stage"
        pad_shapes.append((1, h + (KH - 1), w + (KW - 1), cin))
        acc_shapes.append((h * w, cout))
        h, w, cin = h // 2, w // 2, cout

    kernel = make_block_kernel(len(stage_w))

    def full_spec(shp):
        return pl.BlockSpec(shp, lambda b: (0,) * len(shp))

    in_specs = ([pl.BlockSpec((1, H, W, Cin), lambda b: (b, 0, 0, 0))]
                + [full_spec(wk.shape) for wk in stage_w]
                + [full_spec(bk.shape) for bk in stage_b]
                + [full_spec(w_fc.shape), full_spec(b_fc.shape)])

    out = pl.pallas_call(
        kernel,
        out_shape=jax.ShapeDtypeStruct((N, 1, num_classes), jnp.float32),
        grid=(N,),
        in_specs=in_specs,
        out_specs=pl.BlockSpec((1, 1, num_classes), lambda b: (b, 0, 0)),
        scratch_shapes=([pltpu.VMEM(s, jnp.float32) for s in pad_shapes]
                        + [pltpu.VMEM(s, jnp.float32) for s in acc_shapes]),
        compiler_params=pltpu.CompilerParams(dimension_semantics=("parallel",)),
    )(x, *stage_w, *stage_b, w_fc, b_fc)
    return out.reshape(N, num_classes)


if __name__ == "__main__":
    num_classes = 10
    in_channels = 3
    hidden_dims = [16, 32, 64, 128]                      # small, module-consistent override
    kernel_sizes = [3, 3, 3, 3]

    key = jax.random.PRNGKey(0)
    kx, kp = jax.random.split(key)
    x = jax.random.normal(kx, (2, in_channels, 16, 16), jnp.float32)   # NCHW like PyTorch
    conv_params, fc_params = init_params(kp, num_classes, in_channels,
                                         hidden_dims, kernel_sizes)
    stage_w, stage_b, w_fc, b_fc = prepare_params(conv_params, fc_params)

    out = block_forward(x, stage_w, stage_b, w_fc, b_fc)
    jax.block_until_ready(out)
    assert out.shape == (2, num_classes), out.shape
    print("KERNEL_OK")
</pallas_src>

<mosaic_0001>
module attributes {stable_mosaic.version = 11 : i64} {
  func.func @kernel(%arg0: i32, %arg1: memref<1x16x16x3xf32, #tpu.memory_space<vmem>>, %arg2: memref<3x3x3x16xbf16, #tpu.memory_space<vmem>>, %arg3: memref<3x3x16x32xbf16, #tpu.memory_space<vmem>>, %arg4: memref<3x3x32x64xbf16, #tpu.memory_space<vmem>>, %arg5: memref<3x3x64x128xbf16, #tpu.memory_space<vmem>>, %arg6: memref<1x16xf32, #tpu.memory_space<vmem>>, %arg7: memref<1x32xf32, #tpu.memory_space<vmem>>, %arg8: memref<1x64xf32, #tpu.memory_space<vmem>>, %arg9: memref<1x128xf32, #tpu.memory_space<vmem>>, %arg10: memref<128x10xbf16, #tpu.memory_space<vmem>>, %arg11: memref<1x10xf32, #tpu.memory_space<vmem>>, %arg12: memref<1x1x10xf32, #tpu.memory_space<vmem>>, %arg13: memref<1x18x18x3xf32, #tpu.memory_space<vmem>>, %arg14: memref<1x10x10x16xf32, #tpu.memory_space<vmem>>, %arg15: memref<1x6x6x32xf32, #tpu.memory_space<vmem>>, %arg16: memref<1x4x4x64xf32, #tpu.memory_space<vmem>>, %arg17: memref<256x16xf32, #tpu.memory_space<vmem>>, %arg18: memref<64x32xf32, #tpu.memory_space<vmem>>, %arg19: memref<16x64xf32, #tpu.memory_space<vmem>>, %arg20: memref<4x128xf32, #tpu.memory_space<vmem>>) attributes {dimension_semantics = [#tpu.dimension_semantics<parallel>], iteration_bounds = array<i64: 2>, scalar_prefetch = 0 : i64, scratch_operands = 8 : i64, tpu.core_type = #tpu.core_type<tc>, window_params = [{transform_indices = @transform_0, window_bounds = array<i64: 1, 16, 16, 3>}, {pipeline_mode = #tpu.pipeline_mode<synchronous>, transform_indices = @transform_1, window_bounds = array<i64: 3, 3, 3, 16>}, {pipeline_mode = #tpu.pipeline_mode<synchronous>, transform_indices = @transform_2, window_bounds = array<i64: 3, 3, 16, 32>}, {pipeline_mode = #tpu.pipeline_mode<synchronous>, transform_indices = @transform_3, window_bounds = array<i64: 3, 3, 32, 64>}, {pipeline_mode = #tpu.pipeline_mode<synchronous>, transform_indices = @transform_4, window_bounds = array<i64: 3, 3, 64, 128>}, {pipeline_mode = #tpu.pipeline_mode<synchronous>, transform_indices = @transform_5, window_bounds = array<i64: 1, 16>}, {pipeline_mode = #tpu.pipeline_mode<synchronous>, transform_indices = @transform_6, window_bounds = array<i64: 1, 32>}, {pipeline_mode = #tpu.pipeline_mode<synchronous>, transform_indices = @transform_7, window_bounds = array<i64: 1, 64>}, {pipeline_mode = #tpu.pipeline_mode<synchronous>, transform_indices = @transform_8, window_bounds = array<i64: 1, 128>}, {pipeline_mode = #tpu.pipeline_mode<synchronous>, transform_indices = @transform_9, window_bounds = array<i64: 128, 10>}, {pipeline_mode = #tpu.pipeline_mode<synchronous>, transform_indices = @transform_10, window_bounds = array<i64: 1, 10>}, {transform_indices = @transform_11, window_bounds = array<i64: 1, 1, 10>}]} {
    %c0 = arith.constant 0 : index
    %c0_0 = arith.constant 0 : index
    %c0_1 = arith.constant 0 : index
    %c0_2 = arith.constant 0 : index
    %0 = vector.load %arg1[%c0, %c0_0, %c0_1, %c0_2] : memref<1x16x16x3xf32, #tpu.memory_space<vmem>>, vector<1x16x16x3xf32>
    %cst = arith.constant 0.000000e+00 : f32
    %1 = vector.broadcast %cst : f32 to vector<1x1x18x3xf32>
    %c0_3 = arith.constant 0 : index
    %c0_4 = arith.constant 0 : index
    %c0_5 = arith.constant 0 : index
    %c0_6 = arith.constant 0 : index
    %2 = vector.load %arg13[%c0_3, %c0_4, %c0_5, %c0_6] : memref<1x18x18x3xf32, #tpu.memory_space<vmem>>, vector<1x1x18x3xf32>
    tpu.vector_store %arg13[%c0_3, %c0_4, %c0_5, %c0_6], %1 {strides = array<i32>} : memref<1x18x18x3xf32, #tpu.memory_space<vmem>>, vector<1x1x18x3xf32>,
    %cst_7 = arith.constant 0.000000e+00 : f32
    %3 = vector.broadcast %cst_7 : f32 to vector<1x1x18x3xf32>
    %c0_8 = arith.constant 0 : index
    %c17 = arith.constant 17 : index
    %c0_9 = arith.constant 0 : index
    %c0_10 = arith.constant 0 : index
    %4 = vector.load %arg13[%c0_8, %c17, %c0_9, %c0_10] : memref<1x18x18x3xf32, #tpu.memory_space<vmem>>, vector<1x1x18x3xf32>
    tpu.vector_store %arg13[%c0_8, %c17, %c0_9, %c0_10], %3 {strides = array<i32>} : memref<1x18x18x3xf32, #tpu.memory_space<vmem>>, vector<1x1x18x3xf32>,
    %cst_11 = arith.constant 0.000000e+00 : f32
    %5 = vector.broadcast %cst_11 : f32 to vector<1x18x1x3xf32>
    %c0_12 = arith.constant 0 : index
    %c0_13 = arith.constant 0 : index
    %c0_14 = arith.constant 0 : index
    %c0_15 = arith.constant 0 : index
    %6 = vector.load %arg13[%c0_12, %c0_13, %c0_14, %c0_15] : memref<1x18x18x3xf32, #tpu.memory_space<vmem>>, vector<1x18x1x3xf32>
    tpu.vector_store %arg13[%c0_12, %c0_13, %c0_14, %c0_15], %5 {strides = array<i32>} : memref<1x18x18x3xf32, #tpu.memory_space<vmem>>, vector<1x18x1x3xf32>,
    %cst_16 = arith.constant 0.000000e+00 : f32
    %7 = vector.broadcast %cst_16 : f32 to vector<1x18x1x3xf32>
    %c0_17 = arith.constant 0 : index
    %c0_18 = arith.constant 0 : index
    %c17_19 = arith.constant 17 : index
    %c0_20 = arith.constant 0 : index
    %8 = vector.load %arg13[%c0_17, %c0_18, %c17_19, %c0_20] : memref<1x18x18x3xf32, #tpu.memory_space<vmem>>, vector<1x18x1x3xf32>
    tpu.vector_store %arg13[%c0_17, %c0_18, %c17_19, %c0_20], %7 {strides = array<i32>} : memref<1x18x18x3xf32, #tpu.memory_space<vmem>>, vector<1x18x1x3xf32>,
    %c0_21 = arith.constant 0 : index
    %c1 = arith.constant 1 : index
    %c1_22 = arith.constant 1 : index
    %c0_23 = arith.constant 0 : index
    %9 = vector.load %arg13[%c0_21, %c1, %c1_22, %c0_23] : memref<1x18x18x3xf32, #tpu.memory_space<vmem>>, vector<1x16x16x3xf32>
    tpu.vector_store %arg13[%c0_21, %c1, %c1_22, %c0_23], %0 {strides = array<i32>} : memref<1x18x18x3xf32, #tpu.memory_space<vmem>>, vector<1x16x16x3xf32>,
    %c0_24 = arith.constant 0 : index
    %c0_25 = arith.constant 0 : index
    %c0_26 = arith.constant 0 : index
    %c0_27 = arith.constant 0 : index
    %10 = vector.load %arg13[%c0_24, %c0_25, %c0_26, %c0_27] : memref<1x18x18x3xf32, #tpu.memory_space<vmem>>, vector<1x16x16x3xf32>
    %11 = vector.shape_cast %10 : vector<1x16x16x3xf32> to vector<256x3xf32>
    %12 = arith.truncf %11 : vector<256x3xf32> to vector<256x3xbf16>
    %c0_28 = arith.constant 0 : index
    %c0_29 = arith.constant 0 : index
    %c0_30 = arith.constant 0 : index
    %c0_31 = arith.constant 0 : index
    %13 = vector.load %arg2[%c0_28, %c0_29, %c0_30, %c0_31] : memref<3x3x3x16xbf16, #tpu.memory_space<vmem>>, vector<1x1x3x16xbf16>
    %14 = vector.shape_cast %13 : vector<1x1x3x16xbf16> to vector<3x16xbf16>
    %cst_32 = arith.constant dense<0.000000e+00> : vector<256x16xf32>
    %15 = tpu.matmul %12, %14, %cst_32 {dimension_numbers = #tpu.dot_dimension_numbers<[1], [0], [0], [1], [0, 0, 1, 1], [], []>} : vector<256x3xbf16>, vector<3x16xbf16>, vector<256x16xf32> -> vector<256x16xf32>
    %c0_33 = arith.constant 0 : index
    %c0_34 = arith.constant 0 : index
    %16 = vector.load %arg17[%c0_33, %c0_34] : memref<256x16xf32, #tpu.memory_space<vmem>>, vector<256x16xf32>
    tpu.vector_store %arg17[%c0_33, %c0_34], %15 {strides = array<i32>} : memref<256x16xf32, #tpu.memory_space<vmem>>, vector<256x16xf32>,
    %c0_35 = arith.constant 0 : index
    %c0_36 = arith.constant 0 : index
    %c1_37 = arith.constant 1 : index
    %c0_38 = arith.constant 0 : index
    %17 = vector.load %arg13[%c0_35, %c0_36, %c1_37, %c0_38] : memref<1x18x18x3xf32, #tpu.memory_space<vmem>>, vector<1x16x16x3xf32>
    %18 = vector.shape_cast %17 : vector<1x16x16x3xf32> to vector<256x3xf32>
    %19 = arith.truncf %18 : vector<256x3xf32> to vector<256x3xbf16>
    %c0_39 = arith.constant 0 : index
    %c1_40 = arith.constant 1 : index
    %c0_41 = arith.constant 0 : index
    %c0_42 = arith.constant 0 : index
    %20 = vector.load %arg2[%c0_39, %c1_40, %c0_41, %c0_42] : memref<3x3x3x16xbf16, #tpu.memory_space<vmem>>, vector<1x1x3x16xbf16>
    %21 = vector.shape_cast %20 : vector<1x1x3x16xbf16> to vector<3x16xbf16>
    %cst_43 = arith.constant dense<0.000000e+00> : vector<256x16xf32>
    %22 = tpu.matmul %19, %21, %cst_43 {dimension_numbers = #tpu.dot_dimension_numbers<[1], [0], [0], [1], [0, 0, 1, 1], [], []>} : vector<256x3xbf16>, vector<3x16xbf16>, vector<256x16xf32> -> vector<256x16xf32>
    %c0_44 = arith.constant 0 : index
    %c0_45 = arith.constant 0 : index
    %23 = vector.load %arg17[%c0_44, %c0_45] : memref<256x16xf32, #tpu.memory_space<vmem>>, vector<256x16xf32>
    %24 = arith.addf %23, %22 : vector<256x16xf32>
    %c0_46 = arith.constant 0 : index
    %c0_47 = arith.constant 0 : index
    %25 = vector.load %arg17[%c0_46, %c0_47] : memref<256x16xf32, #tpu.memory_space<vmem>>, vector<256x16xf32>
    tpu.vector_store %arg17[%c0_46, %c0_47], %24 {strides = array<i32>} : memref<256x16xf32, #tpu.memory_space<vmem>>, vector<256x16xf32>,
    %c0_48 = arith.constant 0 : index
    %c0_49 = arith.constant 0 : index
    %c2 = arith.constant 2 : index
    %c0_50 = arith.constant 0 : index
    %26 = vector.load %arg13[%c0_48, %c0_49, %c2, %c0_50] : memref<1x18x18x3xf32, #tpu.memory_space<vmem>>, vector<1x16x16x3xf32>
    %27 = vector.shape_cast %26 : vector<1x16x16x3xf32> to vector<256x3xf32>
    %28 = arith.truncf %27 : vector<256x3xf32> to vector<256x3xbf16>
    %c0_51 = arith.constant 0 : index
    %c2_52 = arith.constant 2 : index
    %c0_53 = arith.constant 0 : index
    %c0_54 = arith.constant 0 : index
    %29 = vector.load %arg2[%c0_51, %c2_52, %c0_53, %c0_54] : memref<3x3x3x16xbf16, #tpu.memory_space<vmem>>, vector<1x1x3x16xbf16>
    %30 = vector.shape_cast %29 : vector<1x1x3x16xbf16> to vector<3x16xbf16>
    %cst_55 = arith.constant dense<0.000000e+00> : vector<256x16xf32>
    %31 = tpu.matmul %28, %30, %cst_55 {dimension_numbers = #tpu.dot_dimension_numbers<[1], [0], [0], [1], [0, 0, 1, 1], [], []>} : vector<256x3xbf16>, vector<3x16xbf16>, vector<256x16xf32> -> vector<256x16xf32>
    %c0_56 = arith.constant 0 : index
    %c0_57 = arith.constant 0 : index
    %32 = vector.load %arg17[%c0_56, %c0_57] : memref<256x16xf32, #tpu.memory_space<vmem>>, vector<256x16xf32>
    %33 = arith.addf %32, %31 : vector<256x16xf32>
    %c0_58 = arith.constant 0 : index
    %c0_59 = arith.constant 0 : index
    %34 = vector.load %arg17[%c0_58, %c0_59] : memref<256x16xf32, #tpu.memory_space<vmem>>, vector<256x16xf32>
    tpu.vector_store %arg17[%c0_58, %c0_59], %33 {strides = array<i32>} : memref<256x16xf32, #tpu.memory_space<vmem>>, vector<256x16xf32>,
    %c0_60 = arith.constant 0 : index
    %c1_61 = arith.constant 1 : index
    %c0_62 = arith.constant 0 : index
    %c0_63 = arith.constant 0 : index
    %35 = vector.load %arg13[%c0_60, %c1_61, %c0_62, %c0_63] : memref<1x18x18x3xf32, #tpu.memory_space<vmem>>, vector<1x16x16x3xf32>
    %36 = vector.shape_cast %35 : vector<1x16x16x3xf32> to vector<256x3xf32>
    %37 = arith.truncf %36 : vector<256x3xf32> to vector<256x3xbf16>
    %c1_64 = arith.constant 1 : index
    %c0_65 = arith.constant 0 : index
    %c0_66 = arith.constant 0 : index
    %c0_67 = arith.constant 0 : index
    %38 = vector.load %arg2[%c1_64, %c0_65, %c0_66, %c0_67] : memref<3x3x3x16xbf16, #tpu.memory_space<vmem>>, vector<1x1x3x16xbf16>
    %39 = vector.shape_cast %38 : vector<1x1x3x16xbf16> to vector<3x16xbf16>
    %cst_68 = arith.constant dense<0.000000e+00> : vector<256x16xf32>
    %40 = tpu.matmul %37, %39, %cst_68 {dimension_numbers = #tpu.dot_dimension_numbers<[1], [0], [0], [1], [0, 0, 1, 1], [], []>} : vector<256x3xbf16>, vector<3x16xbf16>, vector<256x16xf32> -> vector<256x16xf32>
    %c0_69 = arith.constant 0 : index
    %c0_70 = arith.constant 0 : index
    %41 = vector.load %arg17[%c0_69, %c0_70] : memref<256x16xf32, #tpu.memory_space<vmem>>, vector<256x16xf32>
    %42 = arith.addf %41, %40 : vector<256x16xf32>
    %c0_71 = arith.constant 0 : index
    %c0_72 = arith.constant 0 : index
    %43 = vector.load %arg17[%c0_71, %c0_72] : memref<256x16xf32, #tpu.memory_space<vmem>>, vector<256x16xf32>
    tpu.vector_store %arg17[%c0_71, %c0_72], %42 {strides = array<i32>} : memref<256x16xf32, #tpu.memory_space<vmem>>, vector<256x16xf32>,
    %c0_73 = arith.constant 0 : index
    %c1_74 = arith.constant 1 : index
    %c1_75 = arith.constant 1 : index
    %c0_76 = arith.constant 0 : index
    %44 = vector.load %arg13[%c0_73, %c1_74, %c1_75, %c0_76] : memref<1x18x18x3xf32, #tpu.memory_space<vmem>>, vector<1x16x16x3xf32>
    %45 = vector.shape_cast %44 : vector<1x16x16x3xf32> to vector<256x3xf32>
    %46 = arith.truncf %45 : vector<256x3xf32> to vector<256x3xbf16>
    %c1_77 = arith.constant 1 : index
    %c1_78 = arith.constant 1 : index
    %c0_79 = arith.constant 0 : index
    %c0_80 = arith.constant 0 : index
    %47 = vector.load %arg2[%c1_77, %c1_78, %c0_79, %c0_80] : memref<3x3x3x16xbf16, #tpu.memory_space<vmem>>, vector<1x1x3x16xbf16>
    %48 = vector.shape_cast %47 : vector<1x1x3x16xbf16> to vector<3x16xbf16>
    %cst_81 = arith.constant dense<0.000000e+00> : vector<256x16xf32>
    %49 = tpu.matmul %46, %48, %cst_81 {dimension_numbers = #tpu.dot_dimension_numbers<[1], [0], [0], [1], [0, 0, 1, 1], [], []>} : vector<256x3xbf16>, vector<3x16xbf16>, vector<256x16xf32> -> vector<256x16xf32>
    %c0_82 = arith.constant 0 : index
    %c0_83 = arith.constant 0 : index
    %50 = vector.load %arg17[%c0_82, %c0_83] : memref<256x16xf32, #tpu.memory_space<vmem>>, vector<256x16xf32>
    %51 = arith.addf %50, %49 : vector<256x16xf32>
    %c0_84 = arith.constant 0 : index
    %c0_85 = arith.constant 0 : index
    %52 = vector.load %arg17[%c0_84, %c0_85] : memref<256x16xf32, #tpu.memory_space<vmem>>, vector<256x16xf32>
    tpu.vector_store %arg17[%c0_84, %c0_85], %51 {strides = array<i32>} : memref<256x16xf32, #tpu.memory_space<vmem>>, vector<256x16xf32>,
    %c0_86 = arith.constant 0 : index
    %c1_87 = arith.constant 1 : index
    %c2_88 = arith.constant 2 : index
    %c0_89 = arith.constant 0 : index
    %53 = vector.load %arg13[%c0_86, %c1_87, %c2_88, %c0_89] : memref<1x18x18x3xf32, #tpu.memory_space<vmem>>, vector<1x16x16x3xf32>
    %54 = vector.shape_cast %53 : vector<1x16x16x3xf32> to vector<256x3xf32>
    %55 = arith.truncf %54 : vector<256x3xf32> to vector<256x3xbf16>
    %c1_90 = arith.constant 1 : index
    %c2_91 = arith.constant 2 : index
    %c0_92 = arith.constant 0 : index
    %c0_93 = arith.constant 0 : index
    %56 = vector.load %arg2[%c1_90, %c2_91, %c0_92, %c0_93] : memref<3x3x3x16xbf16, #tpu.memory_space<vmem>>, vector<1x1x3x16xbf16>
    %57 = vector.shape_cast %56 : vector<1x1x3x16xbf16> to vector<3x16xbf16>
    %cst_94 = arith.constant dense<0.000000e+00> : vector<256x16xf32>
    %58 = tpu.matmul %55, %57, %cst_94 {dimension_numbers = #tpu.dot_dimension_numbers<[1], [0], [0], [1], [0, 0, 1, 1], [], []>} : vector<256x3xbf16>, vector<3x16xbf16>, vector<256x16xf32> -> vector<256x16xf32>
    %c0_95 = arith.constant 0 : index
    %c0_96 = arith.constant 0 : index
    %59 = vector.load %arg17[%c0_95, %c0_96] : memref<256x16xf32, #tpu.memory_space<vmem>>, vector<256x16xf32>
    %60 = arith.addf %59, %58 : vector<256x16xf32>
    %c0_97 = arith.constant 0 : index
    %c0_98 = arith.constant 0 : index
    %61 = vector.load %arg17[%c0_97, %c0_98] : memref<256x16xf32, #tpu.memory_space<vmem>>, vector<256x16xf32>
    tpu.vector_store %arg17[%c0_97, %c0_98], %60 {strides = array<i32>} : memref<256x16xf32, #tpu.memory_space<vmem>>, vector<256x16xf32>,
    %c0_99 = arith.constant 0 : index
    %c2_100 = arith.constant 2 : index
    %c0_101 = arith.constant 0 : index
    %c0_102 = arith.constant 0 : index
    %62 = vector.load %arg13[%c0_99, %c2_100, %c0_101, %c0_102] : memref<1x18x18x3xf32, #tpu.memory_space<vmem>>, vector<1x16x16x3xf32>
    %63 = vector.shape_cast %62 : vector<1x16x16x3xf32> to vector<256x3xf32>
    %64 = arith.truncf %63 : vector<256x3xf32> to vector<256x3xbf16>
    %c2_103 = arith.constant 2 : index
    %c0_104 = arith.constant 0 : index
    %c0_105 = arith.constant 0 : index
    %c0_106 = arith.constant 0 : index
    %65 = vector.load %arg2[%c2_103, %c0_104, %c0_105, %c0_106] : memref<3x3x3x16xbf16, #tpu.memory_space<vmem>>, vector<1x1x3x16xbf16>
    %66 = vector.shape_cast %65 : vector<1x1x3x16xbf16> to vector<3x16xbf16>
    %cst_107 = arith.constant dense<0.000000e+00> : vector<256x16xf32>
    %67 = tpu.matmul %64, %66, %cst_107 {dimension_numbers = #tpu.dot_dimension_numbers<[1], [0], [0], [1], [0, 0, 1, 1], [], []>} : vector<256x3xbf16>, vector<3x16xbf16>, vector<256x16xf32> -> vector<256x16xf32>
    %c0_108 = arith.constant 0 : index
    %c0_109 = arith.constant 0 : index
    %68 = vector.load %arg17[%c0_108, %c0_109] : memref<256x16xf32, #tpu.memory_space<vmem>>, vector<256x16xf32>
    %69 = arith.addf %68, %67 : vector<256x16xf32>
    %c0_110 = arith.constant 0 : index
    %c0_111 = arith.constant 0 : index
    %70 = vector.load %arg17[%c0_110, %c0_111] : memref<256x16xf32, #tpu.memory_space<vmem>>, vector<256x16xf32>
    tpu.vector_store %arg17[%c0_110, %c0_111], %69 {strides = array<i32>} : memref<256x16xf32, #tpu.memory_space<vmem>>, vector<256x16xf32>,
    %c0_112 = arith.constant 0 : index
    %c2_113 = arith.constant 2 : index
    %c1_114 = arith.constant 1 : index
    %c0_115 = arith.constant 0 : index
    %71 = vector.load %arg13[%c0_112, %c2_113, %c1_114, %c0_115] : memref<1x18x18x3xf32, #tpu.memory_space<vmem>>, vector<1x16x16x3xf32>
    %72 = vector.shape_cast %71 : vector<1x16x16x3xf32> to vector<256x3xf32>
    %73 = arith.truncf %72 : vector<256x3xf32> to vector<256x3xbf16>
    %c2_116 = arith.constant 2 : index
    %c1_117 = arith.constant 1 : index
    %c0_118 = arith.constant 0 : index
    %c0_119 = arith.constant 0 : index
    %74 = vector.load %arg2[%c2_116, %c1_117, %c0_118, %c0_119] : memref<3x3x3x16xbf16, #tpu.memory_space<vmem>>, vector<1x1x3x16xbf16>
    %75 = vector.shape_cast %74 : vector<1x1x3x16xbf16> to vector<3x16xbf16>
    %cst_120 = arith.constant dense<0.000000e+00> : vector<256x16xf32>
    %76 = tpu.matmul %73, %75, %cst_120 {dimension_numbers = #tpu.dot_dimension_numbers<[1], [0], [0], [1], [0, 0, 1, 1], [], []>} : vector<256x3xbf16>, vector<3x16xbf16>, vector<256x16xf32> -> vector<256x16xf32>
    %c0_121 = arith.constant 0 : index
    %c0_122 = arith.constant 0 : index
    %77 = vector.load %arg17[%c0_121, %c0_122] : memref<256x16xf32, #tpu.memory_space<vmem>>, vector<256x16xf32>
    %78 = arith.addf %77, %76 : vector<256x16xf32>
    %c0_123 = arith.constant 0 : index
    %c0_124 = arith.constant 0 : index
    %79 = vector.load %arg17[%c0_123, %c0_124] : memref<256x16xf32, #tpu.memory_space<vmem>>, vector<256x16xf32>
    tpu.vector_store %arg17[%c0_123, %c0_124], %78 {strides = array<i32>} : memref<256x16xf32, #tpu.memory_space<vmem>>, vector<256x16xf32>,
    %c0_125 = arith.constant 0 : index
    %c2_126 = arith.constant 2 : index
    %c2_127 = arith.constant 2 : index
    %c0_128 = arith.constant 0 : index
    %80 = vector.load %arg13[%c0_125, %c2_126, %c2_127, %c0_128] : memref<1x18x18x3xf32, #tpu.memory_space<vmem>>, vector<1x16x16x3xf32>
    %81 = vector.shape_cast %80 : vector<1x16x16x3xf32> to vector<256x3xf32>
    %82 = arith.truncf %81 : vector<256x3xf32> to vector<256x3xbf16>
    %c2_129 = arith.constant 2 : index
    %c2_130 = arith.constant 2 : index
    %c0_131 = arith.constant 0 : index
    %c0_132 = arith.constant 0 : index
    %83 = vector.load %arg2[%c2_129, %c2_130, %c0_131, %c0_132] : memref<3x3x3x16xbf16, #tpu.memory_space<vmem>>, vector<1x1x3x16xbf16>
    %84 = vector.shape_cast %83 : vector<1x1x3x16xbf16> to vector<3x16xbf16>
    %cst_133 = arith.constant dense<0.000000e+00> : vector<256x16xf32>
    %85 = tpu.matmul %82, %84, %cst_133 {dimension_numbers = #tpu.dot_dimension_numbers<[1], [0], [0], [1], [0, 0, 1, 1], [], []>} : vector<256x3xbf16>, vector<3x16xbf16>, vector<256x16xf32> -> vector<256x16xf32>
    %c0_134 = arith.constant 0 : index
    %c0_135 = arith.constant 0 : index
    %86 = vector.load %arg17[%c0_134, %c0_135] : memref<256x16xf32, #tpu.memory_space<vmem>>, vector<256x16xf32>
    %87 = arith.addf %86, %85 : vector<256x16xf32>
    %c0_136 = arith.constant 0 : index
    %c0_137 = arith.constant 0 : index
    %88 = vector.load %arg17[%c0_136, %c0_137] : memref<256x16xf32, #tpu.memory_space<vmem>>, vector<256x16xf32>
    tpu.vector_store %arg17[%c0_136, %c0_137], %87 {strides = array<i32>} : memref<256x16xf32, #tpu.memory_space<vmem>>, vector<256x16xf32>,
    %c0_138 = arith.constant 0 : index
    %c0_139 = arith.constant 0 : index
    %89 = vector.load %arg17[%c0_138, %c0_139] : memref<256x16xf32, #tpu.memory_space<vmem>>, vector<256x16xf32>
    %c0_140 = arith.constant 0 : index
    %c0_141 = arith.constant 0 : index
    %90 = vector.load %arg6[%c0_140, %c0_141] : memref<1x16xf32, #tpu.memory_space<vmem>>, vector<1x16xf32>
    %91 = vector.broadcast %90 : vector<1x16xf32> to vector<256x16xf32>
    %92 = arith.addf %89, %91 : vector<256x16xf32>
    %cst_142 = arith.constant 0.000000e+00 : f32
    %93 = vector.broadcast %cst_142 : f32 to vector<256x16xf32>
    %94 = arith.maximumf %92, %93 : vector<256x16xf32>
    %95 = vector.shape_cast %94 : vector<256x16xf32> to vector<128x2x16xf32>
    %cst_143 = arith.constant dense<0xFF800000> : vector<128x16xf32>
    %96 = vector.multi_reduction <maximumf>, %95, %cst_143 [1] : vector<128x2x16xf32> to vector<128x16xf32>
    %97 = vector.shape_cast %96 : vector<128x16xf32> to vector<8x2x8x16xf32>
    %cst_144 = arith.constant dense<0xFF800000> : vector<8x8x16xf32>
    %98 = vector.multi_reduction <maximumf>, %97, %cst_144 [1] : vector<8x2x8x16xf32> to vector<8x8x16xf32>
    %99 = vector.shape_cast %98 : vector<8x8x16xf32> to vector<1x8x8x16xf32>
    %cst_145 = arith.constant 0.000000e+00 : f32
    %100 = vector.broadcast %cst_145 : f32 to vector<1x1x10x16xf32>
    %c0_146 = arith.constant 0 : index
    %c0_147 = arith.constant 0 : index
    %c0_148 = arith.constant 0 : index
    %c0_149 = arith.constant 0 : index
    %101 = vector.load %arg14[%c0_146, %c0_147, %c0_148, %c0_149] : memref<1x10x10x16xf32, #tpu.memory_space<vmem>>, vector<1x1x10x16xf32>
    tpu.vector_store %arg14[%c0_146, %c0_147, %c0_148, %c0_149], %100 {strides = array<i32>} : memref<1x10x10x16xf32, #tpu.memory_space<vmem>>, vector<1x1x10x16xf32>,
    %cst_150 = arith.constant 0.000000e+00 : f32
    %102 = vector.broadcast %cst_150 : f32 to vector<1x1x10x16xf32>
    %c0_151 = arith.constant 0 : index
    %c9 = arith.constant 9 : index
    %c0_152 = arith.constant 0 : index
    %c0_153 = arith.constant 0 : index
    %103 = vector.load %arg14[%c0_151, %c9, %c0_152, %c0_153] : memref<1x10x10x16xf32, #tpu.memory_space<vmem>>, vector<1x1x10x16xf32>
    tpu.vector_store %arg14[%c0_151, %c9, %c0_152, %c0_153], %102 {strides = array<i32>} : memref<1x10x10x16xf32, #tpu.memory_space<vmem>>, vector<1x1x10x16xf32>,
    %cst_154 = arith.constant 0.000000e+00 : f32
    %104 = vector.broadcast %cst_154 : f32 to vector<1x10x1x16xf32>
    %c0_155 = arith.constant 0 : index
    %c0_156 = arith.constant 0 : index
    %c0_157 = arith.constant 0 : index
    %c0_158 = arith.constant 0 : index
    %105 = vector.load %arg14[%c0_155, %c0_156, %c0_157, %c0_158] : memref<1x10x10x16xf32, #tpu.memory_space<vmem>>, vector<1x10x1x16xf32>
    tpu.vector_store %arg14[%c0_155, %c0_156, %c0_157, %c0_158], %104 {strides = array<i32>} : memref<1x10x10x16xf32, #tpu.memory_space<vmem>>, vector<1x10x1x16xf32>,
    %cst_159 = arith.constant 0.000000e+00 : f32
    %106 = vector.broadcast %cst_159 : f32 to vector<1x10x1x16xf32>
    %c0_160 = arith.constant 0 : index
    %c0_161 = arith.constant 0 : index
    %c9_162 = arith.constant 9 : index
    %c0_163 = arith.constant 0 : index
    %107 = vector.load %arg14[%c0_160, %c0_161, %c9_162, %c0_163] : memref<1x10x10x16xf32, #tpu.memory_space<vmem>>, vector<1x10x1x16xf32>
    tpu.vector_store %arg14[%c0_160, %c0_161, %c9_162, %c0_163], %106 {strides = array<i32>} : memref<1x10x10x16xf32, #tpu.memory_space<vmem>>, vector<1x10x1x16xf32>,
    %c0_164 = arith.constant 0 : index
    %c1_165 = arith.constant 1 : index
    %c1_166 = arith.constant 1 : index
    %c0_167 = arith.constant 0 : index
    %108 = vector.load %arg14[%c0_164, %c1_165, %c1_166, %c0_167] : memref<1x10x10x16xf32, #tpu.memory_space<vmem>>, vector<1x8x8x16xf32>
    tpu.vector_store %arg14[%c0_164, %c1_165, %c1_166, %c0_167], %99 {strides = array<i32>} : memref<1x10x10x16xf32, #tpu.memory_space<vmem>>, vector<1x8x8x16xf32>,
    %c0_168 = arith.constant 0 : index
    %c0_169 = arith.constant 0 : index
    %c0_170 = arith.constant 0 : index
    %c0_171 = arith.constant 0 : index
    %109 = vector.load %arg14[%c0_168, %c0_169, %c0_170, %c0_171] : memref<1x10x10x16xf32, #tpu.memory_space<vmem>>, vector<1x8x8x16xf32>
    %110 = vector.shape_cast %109 : vector<1x8x8x16xf32> to vector<64x16xf32>
    %111 = arith.truncf %110 : vector<64x16xf32> to vector<64x16xbf16>
    %c0_172 = arith.constant 0 : index
    %c0_173 = arith.constant 0 : index
    %c0_174 = arith.constant 0 : index
    %c0_175 = arith.constant 0 : index
    %112 = vector.load %arg3[%c0_172, %c0_173, %c0_174, %c0_175] : memref<3x3x16x32xbf16, #tpu.memory_space<vmem>>, vector<1x1x16x32xbf16>
    %113 = vector.shape_cast %112 : vector<1x1x16x32xbf16> to vector<16x32xbf16>
    %cst_176 = arith.constant dense<0.000000e+00> : vector<64x32xf32>
    %114 = tpu.matmul %111, %113, %cst_176 {dimension_numbers = #tpu.dot_dimension_numbers<[1], [0], [0], [1], [0, 0, 1, 1], [], []>} : vector<64x16xbf16>, vector<16x32xbf16>, vector<64x32xf32> -> vector<64x32xf32>
    %c0_177 = arith.constant 0 : index
    %c0_178 = arith.constant 0 : index
    %115 = vector.load %arg18[%c0_177, %c0_178] : memref<64x32xf32, #tpu.memory_space<vmem>>, vector<64x32xf32>
    tpu.vector_store %arg18[%c0_177, %c0_178], %114 {strides = array<i32>} : memref<64x32xf32, #tpu.memory_space<vmem>>, vector<64x32xf32>,
    %c0_179 = arith.constant 0 : index
    %c0_180 = arith.constant 0 : index
    %c1_181 = arith.constant 1 : index
    %c0_182 = arith.constant 0 : index
    %116 = vector.load %arg14[%c0_179, %c0_180, %c1_181, %c0_182] : memref<1x10x10x16xf32, #tpu.memory_space<vmem>>, vector<1x8x8x16xf32>
    %117 = vector.shape_cast %116 : vector<1x8x8x16xf32> to vector<64x16xf32>
    %118 = arith.truncf %117 : vector<64x16xf32> to vector<64x16xbf16>
    %c0_183 = arith.constant 0 : index
    %c1_184 = arith.constant 1 : index
    %c0_185 = arith.constant 0 : index
    %c0_186 = arith.constant 0 : index
    %119 = vector.load %arg3[%c0_183, %c1_184, %c0_185, %c0_186] : memref<3x3x16x32xbf16, #tpu.memory_space<vmem>>, vector<1x1x16x32xbf16>
    %120 = vector.shape_cast %119 : vector<1x1x16x32xbf16> to vector<16x32xbf16>
    %cst_187 = arith.constant dense<0.000000e+00> : vector<64x32xf32>
    %121 = tpu.matmul %118, %120, %cst_187 {dimension_numbers = #tpu.dot_dimension_numbers<[1], [0], [0], [1], [0, 0, 1, 1], [], []>} : vector<64x16xbf16>, vector<16x32xbf16>, vector<64x32xf32> -> vector<64x32xf32>
    %c0_188 = arith.constant 0 : index
    %c0_189 = arith.constant 0 : index
    %122 = vector.load %arg18[%c0_188, %c0_189] : memref<64x32xf32, #tpu.memory_space<vmem>>, vector<64x32xf32>
    %123 = arith.addf %122, %121 : vector<64x32xf32>
    %c0_190 = arith.constant 0 : index
    %c0_191 = arith.constant 0 : index
    %124 = vector.load %arg18[%c0_190, %c0_191] : memref<64x32xf32, #tpu.memory_space<vmem>>, vector<64x32xf32>
    tpu.vector_store %arg18[%c0_190, %c0_191], %123 {strides = array<i32>} : memref<64x32xf32, #tpu.memory_space<vmem>>, vector<64x32xf32>,
    %c0_192 = arith.constant 0 : index
    %c0_193 = arith.constant 0 : index
    %c2_194 = arith.constant 2 : index
    %c0_195 = arith.constant 0 : index
    %125 = vector.load %arg14[%c0_192, %c0_193, %c2_194, %c0_195] : memref<1x10x10x16xf32, #tpu.memory_space<vmem>>, vector<1x8x8x16xf32>
    %126 = vector.shape_cast %125 : vector<1x8x8x16xf32> to vector<64x16xf32>
    %127 = arith.truncf %126 : vector<64x16xf32> to vector<64x16xbf16>
    %c0_196 = arith.constant 0 : index
    %c2_197 = arith.constant 2 : index
    %c0_198 = arith.constant 0 : index
    %c0_199 = arith.constant 0 : index
    %128 = vector.load %arg3[%c0_196, %c2_197, %c0_198, %c0_199] : memref<3x3x16x32xbf16, #tpu.memory_space<vmem>>, vector<1x1x16x32xbf16>
    %129 = vector.shape_cast %128 : vector<1x1x16x32xbf16> to vector<16x32xbf16>
    %cst_200 = arith.constant dense<0.000000e+00> : vector<64x32xf32>
    %130 = tpu.matmul %127, %129, %cst_200 {dimension_numbers = #tpu.dot_dimension_numbers<[1], [0], [0], [1], [0, 0, 1, 1], [], []>} : vector<64x16xbf16>, vector<16x32xbf16>, vector<64x32xf32> -> vector<64x32xf32>
    %c0_201 = arith.constant 0 : index
    %c0_202 = arith.constant 0 : index
    %131 = vector.load %arg18[%c0_201, %c0_202] : memref<64x32xf32, #tpu.memory_space<vmem>>, vector<64x32xf32>
    %132 = arith.addf %131, %130 : vector<64x32xf32>
    %c0_203 = arith.constant 0 : index
    %c0_204 = arith.constant 0 : index
    %133 = vector.load %arg18[%c0_203, %c0_204] : memref<64x32xf32, #tpu.memory_space<vmem>>, vector<64x32xf32>
    tpu.vector_store %arg18[%c0_203, %c0_204], %132 {strides = array<i32>} : memref<64x32xf32, #tpu.memory_space<vmem>>, vector<64x32xf32>,
    %c0_205 = arith.constant 0 : index
    %c1_206 = arith.constant 1 : index
    %c0_207 = arith.constant 0 : index
    %c0_208 = arith.constant 0 : index
    %134 = vector.load %arg14[%c0_205, %c1_206, %c0_207, %c0_208] : memref<1x10x10x16xf32, #tpu.memory_space<vmem>>, vector<1x8x8x16xf32>
    %135 = vector.shape_cast %134 : vector<1x8x8x16xf32> to vector<64x16xf32>
    %136 = arith.truncf %135 : vector<64x16xf32> to vector<64x16xbf16>
    %c1_209 = arith.constant 1 : index
    %c0_210 = arith.constant 0 : index
    %c0_211 = arith.constant 0 : index
    %c0_212 = arith.constant 0 : index
    %137 = vector.load %arg3[%c1_209, %c0_210, %c0_211, %c0_212] : memref<3x3x16x32xbf16, #tpu.memory_space<vmem>>, vector<1x1x16x32xbf16>
    %138 = vector.shape_cast %137 : vector<1x1x16x32xbf16> to vector<16x32xbf16>
    %cst_213 = arith.constant dense<0.000000e+00> : vector<64x32xf32>
    %139 = tpu.matmul %136, %138, %cst_213 {dimension_numbers = #tpu.dot_dimension_numbers<[1], [0], [0], [1], [0, 0, 1, 1], [], []>} : vector<64x16xbf16>, vector<16x32xbf16>, vector<64x32xf32> -> vector<64x32xf32>
    %c0_214 = arith.constant 0 : index
    %c0_215 = arith.constant 0 : index
    %140 = vector.load %arg18[%c0_214, %c0_215] : memref<64x32xf32, #tpu.memory_space<vmem>>, vector<64x32xf32>
    %141 = arith.addf %140, %139 : vector<64x32xf32>
    %c0_216 = arith.constant 0 : index
    %c0_217 = arith.constant 0 : index
    %142 = vector.load %arg18[%c0_216, %c0_217] : memref<64x32xf32, #tpu.memory_space<vmem>>, vector<64x32xf32>
    tpu.vector_store %arg18[%c0_216, %c0_217], %141 {strides = array<i32>} : memref<64x32xf32, #tpu.memory_space<vmem>>, vector<64x32xf32>,
    %c0_218 = arith.constant 0 : index
    %c1_219 = arith.constant 1 : index
    %c1_220 = arith.constant 1 : index
    %c0_221 = arith.constant 0 : index
    %143 = vector.load %arg14[%c0_218, %c1_219, %c1_220, %c0_221] : memref<1x10x10x16xf32, #tpu.memory_space<vmem>>, vector<1x8x8x16xf32>
    %144 = vector.shape_cast %143 : vector<1x8x8x16xf32> to vector<64x16xf32>
    %145 = arith.truncf %144 : vector<64x16xf32> to vector<64x16xbf16>
    %c1_222 = arith.constant 1 : index
    %c1_223 = arith.constant 1 : index
    %c0_224 = arith.constant 0 : index
    %c0_225 = arith.constant 0 : index
    %146 = vector.load %arg3[%c1_222, %c1_223, %c0_224, %c0_225] : memref<3x3x16x32xbf16, #tpu.memory_space<vmem>>, vector<1x1x16x32xbf16>
    %147 = vector.shape_cast %146 : vector<1x1x16x32xbf16> to vector<16x32xbf16>
    %cst_226 = arith.constant dense<0.000000e+00> : vector<64x32xf32>
    %148 = tpu.matmul %145, %147, %cst_226 {dimension_numbers = #tpu.dot_dimension_numbers<[1], [0], [0], [1], [0, 0, 1, 1], [], []>} : vector<64x16xbf16>, vector<16x32xbf16>, vector<64x32xf32> -> vector<64x32xf32>
    %c0_227 = arith.constant 0 : index
    %c0_228 = arith.constant 0 : index
    %149 = vector.load %arg18[%c0_227, %c0_228] : memref<64x32xf32, #tpu.memory_space<vmem>>, vector<64x32xf32>
    %150 = arith.addf %149, %148 : vector<64x32xf32>
    %c0_229 = arith.constant 0 : index
    %c0_230 = arith.constant 0 : index
    %151 = vector.load %arg18[%c0_229, %c0_230] : memref<64x32xf32, #tpu.memory_space<vmem>>, vector<64x32xf32>
    tpu.vector_store %arg18[%c0_229, %c0_230], %150 {strides = array<i32>} : memref<64x32xf32, #tpu.memory_space<vmem>>, vector<64x32xf32>,
    %c0_231 = arith.constant 0 : index
    %c1_232 = arith.constant 1 : index
    %c2_233 = arith.constant 2 : index
    %c0_234 = arith.constant 0 : index
    %152 = vector.load %arg14[%c0_231, %c1_232, %c2_233, %c0_234] : memref<1x10x10x16xf32, #tpu.memory_space<vmem>>, vector<1x8x8x16xf32>
    %153 = vector.shape_cast %152 : vector<1x8x8x16xf32> to vector<64x16xf32>
    %154 = arith.truncf %153 : vector<64x16xf32> to vector<64x16xbf16>
    %c1_235 = arith.constant 1 : index
    %c2_236 = arith.constant 2 : index
    %c0_237 = arith.constant 0 : index
    %c0_238 = arith.constant 0 : index
    %155 = vector.load %arg3[%c1_235, %c2_236, %c0_237, %c0_238] : memref<3x3x16x32xbf16, #tpu.memory_space<vmem>>, vector<1x1x16x32xbf16>
    %156 = vector.shape_cast %155 : vector<1x1x16x32xbf16> to vector<16x32xbf16>
    %cst_239 = arith.constant dense<0.000000e+00> : vector<64x32xf32>
    %157 = tpu.matmul %154, %156, %cst_239 {dimension_numbers = #tpu.dot_dimension_numbers<[1], [0], [0], [1], [0, 0, 1, 1], [], []>} : vector<64x16xbf16>, vector<16x32xbf16>, vector<64x32xf32> -> vector<64x32xf32>
    %c0_240 = arith.constant 0 : index
    %c0_241 = arith.constant 0 : index
    %158 = vector.load %arg18[%c0_240, %c0_241] : memref<64x32xf32, #tpu.memory_space<vmem>>, vector<64x32xf32>
    %159 = arith.addf %158, %157 : vector<64x32xf32>
    %c0_242 = arith.constant 0 : index
    %c0_243 = arith.constant 0 : index
    %160 = vector.load %arg18[%c0_242, %c0_243] : memref<64x32xf32, #tpu.memory_space<vmem>>, vector<64x32xf32>
    tpu.vector_store %arg18[%c0_242, %c0_243], %159 {strides = array<i32>} : memref<64x32xf32, #tpu.memory_space<vmem>>, vector<64x32xf32>,
    %c0_244 = arith.constant 0 : index
    %c2_245 = arith.constant 2 : index
    %c0_246 = arith.constant 0 : index
    %c0_247 = arith.constant 0 : index
    %161 = vector.load %arg14[%c0_244, %c2_245, %c0_246, %c0_247] : memref<1x10x10x16xf32, #tpu.memory_space<vmem>>, vector<1x8x8x16xf32>
    %162 = vector.shape_cast %161 : vector<1x8x8x16xf32> to vector<64x16xf32>
    %163 = arith.truncf %162 : vector<64x16xf32> to vector<64x16xbf16>
    %c2_248 = arith.constant 2 : index
    %c0_249 = arith.constant 0 : index
    %c0_250 = arith.constant 0 : index
    %c0_251 = arith.constant 0 : index
    %164 = vector.load %arg3[%c2_248, %c0_249, %c0_250, %c0_251] : memref<3x3x16x32xbf16, #tpu.memory_space<vmem>>, vector<1x1x16x32xbf16>
    %165 = vector.shape_cast %164 : vector<1x1x16x32xbf16> to vector<16x32xbf16>
    %cst_252 = arith.constant dense<0.000000e+00> : vector<64x32xf32>
    %166 = tpu.matmul %163, %165, %cst_252 {dimension_numbers = #tpu.dot_dimension_numbers<[1], [0], [0], [1], [0, 0, 1, 1], [], []>} : vector<64x16xbf16>, vector<16x32xbf16>, vector<64x32xf32> -> vector<64x32xf32>
    %c0_253 = arith.constant 0 : index
    %c0_254 = arith.constant 0 : index
    %167 = vector.load %arg18[%c0_253, %c0_254] : memref<64x32xf32, #tpu.memory_space<vmem>>, vector<64x32xf32>
    %168 = arith.addf %167, %166 : vector<64x32xf32>
    %c0_255 = arith.constant 0 : index
    %c0_256 = arith.constant 0 : index
    %169 = vector.load %arg18[%c0_255, %c0_256] : memref<64x32xf32, #tpu.memory_space<vmem>>, vector<64x32xf32>
    tpu.vector_store %arg18[%c0_255, %c0_256], %168 {strides = array<i32>} : memref<64x32xf32, #tpu.memory_space<vmem>>, vector<64x32xf32>,
    %c0_257 = arith.constant 0 : index
    %c2_258 = arith.constant 2 : index
    %c1_259 = arith.constant 1 : index
    %c0_260 = arith.constant 0 : index
    %170 = vector.load %arg14[%c0_257, %c2_258, %c1_259, %c0_260] : memref<1x10x10x16xf32, #tpu.memory_space<vmem>>, vector<1x8x8x16xf32>
    %171 = vector.shape_cast %170 : vector<1x8x8x16xf32> to vector<64x16xf32>
    %172 = arith.truncf %171 : vector<64x16xf32> to vector<64x16xbf16>
    %c2_261 = arith.constant 2 : index
    %c1_262 = arith.constant 1 : index
    %c0_263 = arith.constant 0 : index
    %c0_264 = arith.constant 0 : index
    %173 = vector.load %arg3[%c2_261, %c1_262, %c0_263, %c0_264] : memref<3x3x16x32xbf16, #tpu.memory_space<vmem>>, vector<1x1x16x32xbf16>
    %174 = vector.shape_cast %173 : vector<1x1x16x32xbf16> to vector<16x32xbf16>
    %cst_265 = arith.constant dense<0.000000e+00> : vector<64x32xf32>
    %175 = tpu.matmul %172, %174, %cst_265 {dimension_numbers = #tpu.dot_dimension_numbers<[1], [0], [0], [1], [0, 0, 1, 1], [], []>} : vector<64x16xbf16>, vector<16x32xbf16>, vector<64x32xf32> -> vector<64x32xf32>
    %c0_266 = arith.constant 0 : index
    %c0_267 = arith.constant 0 : index
    %176 = vector.load %arg18[%c0_266, %c0_267] : memref<64x32xf32, #tpu.memory_space<vmem>>, vector<64x32xf32>
    %177 = arith.addf %176, %175 : vector<64x32xf32>
    %c0_268 = arith.constant 0 : index
    %c0_269 = arith.constant 0 : index
    %178 = vector.load %arg18[%c0_268, %c0_269] : memref<64x32xf32, #tpu.memory_space<vmem>>, vector<64x32xf32>
    tpu.vector_store %arg18[%c0_268, %c0_269], %177 {strides = array<i32>} : memref<64x32xf32, #tpu.memory_space<vmem>>, vector<64x32xf32>,
    %c0_270 = arith.constant 0 : index
    %c2_271 = arith.constant 2 : index
    %c2_272 = arith.constant 2 : index
    %c0_273 = arith.constant 0 : index
    %179 = vector.load %arg14[%c0_270, %c2_271, %c2_272, %c0_273] : memref<1x10x10x16xf32, #tpu.memory_space<vmem>>, vector<1x8x8x16xf32>
    %180 = vector.shape_cast %179 : vector<1x8x8x16xf32> to vector<64x16xf32>
    %181 = arith.truncf %180 : vector<64x16xf32> to vector<64x16xbf16>
    %c2_274 = arith.constant 2 : index
    %c2_275 = arith.constant 2 : index
    %c0_276 = arith.constant 0 : index
    %c0_277 = arith.constant 0 : index
    %182 = vector.load %arg3[%c2_274, %c2_275, %c0_276, %c0_277] : memref<3x3x16x32xbf16, #tpu.memory_space<vmem>>, vector<1x1x16x32xbf16>
    %183 = vector.shape_cast %182 : vector<1x1x16x32xbf16> to vector<16x32xbf16>
    %cst_278 = arith.constant dense<0.000000e+00> : vector<64x32xf32>
    %184 = tpu.matmul %181, %183, %cst_278 {dimension_numbers = #tpu.dot_dimension_numbers<[1], [0], [0], [1], [0, 0, 1, 1], [], []>} : vector<64x16xbf16>, vector<16x32xbf16>, vector<64x32xf32> -> vector<64x32xf32>
    %c0_279 = arith.constant 0 : index
    %c0_280 = arith.constant 0 : index
    %185 = vector.load %arg18[%c0_279, %c0_280] : memref<64x32xf32, #tpu.memory_space<vmem>>, vector<64x32xf32>
    %186 = arith.addf %185, %184 : vector<64x32xf32>
    %c0_281 = arith.constant 0 : index
    %c0_282 = arith.constant 0 : index
    %187 = vector.load %arg18[%c0_281, %c0_282] : memref<64x32xf32, #tpu.memory_space<vmem>>, vector<64x32xf32>
    tpu.vector_store %arg18[%c0_281, %c0_282], %186 {strides = array<i32>} : memref<64x32xf32, #tpu.memory_space<vmem>>, vector<64x32xf32>,
    %c0_283 = arith.constant 0 : index
    %c0_284 = arith.constant 0 : index
    %188 = vector.load %arg18[%c0_283, %c0_284] : memref<64x32xf32, #tpu.memory_space<vmem>>, vector<64x32xf32>
    %c0_285 = arith.constant 0 : index
    %c0_286 = arith.constant 0 : index
    %189 = vector.load %arg7[%c0_285, %c0_286] : memref<1x32xf32, #tpu.memory_space<vmem>>, vector<1x32xf32>
    %190 = vector.broadcast %189 : vector<1x32xf32> to vector<64x32xf32>
    %191 = arith.addf %188, %190 : vector<64x32xf32>
    %cst_287 = arith.constant 0.000000e+00 : f32
    %192 = vector.broadcast %cst_287 : f32 to vector<64x32xf32>
    %193 = arith.maximumf %191, %192 : vector<64x32xf32>
    %194 = vector.shape_cast %193 : vector<64x32xf32> to vector<32x2x32xf32>
    %cst_288 = arith.constant dense<0xFF800000> : vector<32x32xf32>
    %195 = vector.multi_reduction <maximumf>, %194, %cst_288 [1] : vector<32x2x32xf32> to vector<32x32xf32>
    %196 = vector.shape_cast %195 : vector<32x32xf32> to vector<4x2x4x32xf32>
    %cst_289 = arith.constant dense<0xFF800000> : vector<4x4x32xf32>
    %197 = vector.multi_reduction <maximumf>, %196, %cst_289 [1] : vector<4x2x4x32xf32> to vector<4x4x32xf32>
    %198 = vector.shape_cast %197 : vector<4x4x32xf32> to vector<1x4x4x32xf32>
    %cst_290 = arith.constant 0.000000e+00 : f32
    %199 = vector.broadcast %cst_290 : f32 to vector<1x1x6x32xf32>
    %c0_291 = arith.constant 0 : index
    %c0_292 = arith.constant 0 : index
    %c0_293 = arith.constant 0 : index
    %c0_294 = arith.constant 0 : index
    %200 = vector.load %arg15[%c0_291, %c0_292, %c0_293, %c0_294] : memref<1x6x6x32xf32, #tpu.memory_space<vmem>>, vector<1x1x6x32xf32>
    tpu.vector_store %arg15[%c0_291, %c0_292, %c0_293, %c0_294], %199 {strides = array<i32>} : memref<1x6x6x32xf32, #tpu.memory_space<vmem>>, vector<1x1x6x32xf32>,
    %cst_295 = arith.constant 0.000000e+00 : f32
    %201 = vector.broadcast %cst_295 : f32 to vector<1x1x6x32xf32>
    %c0_296 = arith.constant 0 : index
    %c5 = arith.constant 5 : index
    %c0_297 = arith.constant 0 : index
    %c0_298 = arith.constant 0 : index
    %202 = vector.load %arg15[%c0_296, %c5, %c0_297, %c0_298] : memref<1x6x6x32xf32, #tpu.memory_space<vmem>>, vector<1x1x6x32xf32>
    tpu.vector_store %arg15[%c0_296, %c5, %c0_297, %c0_298], %201 {strides = array<i32>} : memref<1x6x6x32xf32, #tpu.memory_space<vmem>>, vector<1x1x6x32xf32>,
    %cst_299 = arith.constant 0.000000e+00 : f32
    %203 = vector.broadcast %cst_299 : f32 to vector<1x6x1x32xf32>
    %c0_300 = arith.constant 0 : index
    %c0_301 = arith.constant 0 : index
    %c0_302 = arith.constant 0 : index
    %c0_303 = arith.constant 0 : index
    %204 = vector.load %arg15[%c0_300, %c0_301, %c0_302, %c0_303] : memref<1x6x6x32xf32, #tpu.memory_space<vmem>>, vector<1x6x1x32xf32>
    tpu.vector_store %arg15[%c0_300, %c0_301, %c0_302, %c0_303], %203 {strides = array<i32>} : memref<1x6x6x32xf32, #tpu.memory_space<vmem>>, vector<1x6x1x32xf32>,
    %cst_304 = arith.constant 0.000000e+00 : f32
    %205 = vector.broadcast %cst_304 : f32 to vector<1x6x1x32xf32>
    %c0_305 = arith.constant 0 : index
    %c0_306 = arith.constant 0 : index
    %c5_307 = arith.constant 5 : index
    %c0_308 = arith.constant 0 : index
    %206 = vector.load %arg15[%c0_305, %c0_306, %c5_307, %c0_308] : memref<1x6x6x32xf32, #tpu.memory_space<vmem>>, vector<1x6x1x32xf32>
    tpu.vector_store %arg15[%c0_305, %c0_306, %c5_307, %c0_308], %205 {strides = array<i32>} : memref<1x6x6x32xf32, #tpu.memory_space<vmem>>, vector<1x6x1x32xf32>,
    %c0_309 = arith.constant 0 : index
    %c1_310 = arith.constant 1 : index
    %c1_311 = arith.constant 1 : index
    %c0_312 = arith.constant 0 : index
    %207 = vector.load %arg15[%c0_309, %c1_310, %c1_311, %c0_312] : memref<1x6x6x32xf32, #tpu.memory_space<vmem>>, vector<1x4x4x32xf32>
    tpu.vector_store %arg15[%c0_309, %c1_310, %c1_311, %c0_312], %198 {strides = array<i32>} : memref<1x6x6x32xf32, #tpu.memory_space<vmem>>, vector<1x4x4x32xf32>,
    %c0_313 = arith.constant 0 : index
    %c0_314 = arith.constant 0 : index
    %c0_315 = arith.constant 0 : index
    %c0_316 = arith.constant 0 : index
    %208 = vector.load %arg15[%c0_313, %c0_314, %c0_315, %c0_316] : memref<1x6x6x32xf32, #tpu.memory_space<vmem>>, vector<1x4x4x32xf32>
    %209 = vector.shape_cast %208 : vector<1x4x4x32xf32> to vector<16x32xf32>
    %210 = arith.truncf %209 : vector<16x32xf32> to vector<16x32xbf16>
    %c0_317 = arith.constant 0 : index
    %c0_318 = arith.constant 0 : index
    %c0_319 = arith.constant 0 : index
    %c0_320 = arith.constant 0 : index
    %211 = vector.load %arg4[%c0_317, %c0_318, %c0_319, %c0_320] : memref<3x3x32x64xbf16, #tpu.memory_space<vmem>>, vector<1x1x32x64xbf16>
    %212 = vector.shape_cast %211 : vector<1x1x32x64xbf16> to vector<32x64xbf16>
    %cst_321 = arith.constant dense<0.000000e+00> : vector<16x64xf32>
    %213 = tpu.matmul %210, %212, %cst_321 {dimension_numbers = #tpu.dot_dimension_numbers<[1], [0], [0], [1], [0, 0, 1, 1], [], []>} : vector<16x32xbf16>, vector<32x64xbf16>, vector<16x64xf32> -> vector<16x64xf32>
    %c0_322 = arith.constant 0 : index
    %c0_323 = arith.constant 0 : index
    %214 = vector.load %arg19[%c0_322, %c0_323] : memref<16x64xf32, #tpu.memory_space<vmem>>, vector<16x64xf32>
    tpu.vector_store %arg19[%c0_322, %c0_323], %213 {strides = array<i32>} : memref<16x64xf32, #tpu.memory_space<vmem>>, vector<16x64xf32>,
    %c0_324 = arith.constant 0 : index
    %c0_325 = arith.constant 0 : index
    %c1_326 = arith.constant 1 : index
    %c0_327 = arith.constant 0 : index
    %215 = vector.load %arg15[%c0_324, %c0_325, %c1_326, %c0_327] : memref<1x6x6x32xf32, #tpu.memory_space<vmem>>, vector<1x4x4x32xf32>
    %216 = vector.shape_cast %215 : vector<1x4x4x32xf32> to vector<16x32xf32>
    %217 = arith.truncf %216 : vector<16x32xf32> to vector<16x32xbf16>
    %c0_328 = arith.constant 0 : index
    %c1_329 = arith.constant 1 : index
    %c0_330 = arith.constant 0 : index
    %c0_331 = arith.constant 0 : index
    %218 = vector.load %arg4[%c0_328, %c1_329, %c0_330, %c0_331] : memref<3x3x32x64xbf16, #tpu.memory_space<vmem>>, vector<1x1x32x64xbf16>
    %219 = vector.shape_cast %218 : vector<1x1x32x64xbf16> to vector<32x64xbf16>
    %cst_332 = arith.constant dense<0.000000e+00> : vector<16x64xf32>
    %220 = tpu.matmul %217, %219, %cst_332 {dimension_numbers = #tpu.dot_dimension_numbers<[1], [0], [0], [1], [0, 0, 1, 1], [], []>} : vector<16x32xbf16>, vector<32x64xbf16>, vector<16x64xf32> -> vector<16x64xf32>
    %c0_333 = arith.constant 0 : index
    %c0_334 = arith.constant 0 : index
    %221 = vector.load %arg19[%c0_333, %c0_334] : memref<16x64xf32, #tpu.memory_space<vmem>>, vector<16x64xf32>
    %222 = arith.addf %221, %220 : vector<16x64xf32>
    %c0_335 = arith.constant 0 : index
    %c0_336 = arith.constant 0 : index
    %223 = vector.load %arg19[%c0_335, %c0_336] : memref<16x64xf32, #tpu.memory_space<vmem>>, vector<16x64xf32>
    tpu.vector_store %arg19[%c0_335, %c0_336], %222 {strides = array<i32>} : memref<16x64xf32, #tpu.memory_space<vmem>>, vector<16x64xf32>,
    %c0_337 = arith.constant 0 : index
    %c0_338 = arith.constant 0 : index
    %c2_339 = arith.constant 2 : index
    %c0_340 = arith.constant 0 : index
    %224 = vector.load %arg15[%c0_337, %c0_338, %c2_339, %c0_340] : memref<1x6x6x32xf32, #tpu.memory_space<vmem>>, vector<1x4x4x32xf32>
    %225 = vector.shape_cast %224 : vector<1x4x4x32xf32> to vector<16x32xf32>
    %226 = arith.truncf %225 : vector<16x32xf32> to vector<16x32xbf16>
    %c0_341 = arith.constant 0 : index
    %c2_342 = arith.constant 2 : index
    %c0_343 = arith.constant 0 : index
    %c0_344 = arith.constant 0 : index
    %227 = vector.load %arg4[%c0_341, %c2_342, %c0_343, %c0_344] : memref<3x3x32x64xbf16, #tpu.memory_space<vmem>>, vector<1x1x32x64xbf16>
    %228 = vector.shape_cast %227 : vector<1x1x32x64xbf16> to vector<32x64xbf16>
    %cst_345 = arith.constant dense<0.000000e+00> : vector<16x64xf32>
    %229 = tpu.matmul %226, %228, %cst_345 {dimension_numbers = #tpu.dot_dimension_numbers<[1], [0], [0], [1], [0, 0, 1, 1], [], []>} : vector<16x32xbf16>, vector<32x64xbf16>, vector<16x64xf32> -> vector<16x64xf32>
    %c0_346 = arith.constant 0 : index
    %c0_347 = arith.constant 0 : index
    %230 = vector.load %arg19[%c0_346, %c0_347] : memref<16x64xf32, #tpu.memory_space<vmem>>, vector<16x64xf32>
    %231 = arith.addf %230, %229 : vector<16x64xf32>
    %c0_348 = arith.constant 0 : index
    %c0_349 = arith.constant 0 : index
    %232 = vector.load %arg19[%c0_348, %c0_349] : memref<16x64xf32, #tpu.memory_space<vmem>>, vector<16x64xf32>
    tpu.vector_store %arg19[%c0_348, %c0_349], %231 {strides = array<i32>} : memref<16x64xf32, #tpu.memory_space<vmem>>, vector<16x64xf32>,
    %c0_350 = arith.constant 0 : index
    %c1_351 = arith.constant 1 : index
    %c0_352 = arith.constant 0 : index
    %c0_353 = arith.constant 0 : index
    %233 = vector.load %arg15[%c0_350, %c1_351, %c0_352, %c0_353] : memref<1x6x6x32xf32, #tpu.memory_space<vmem>>, vector<1x4x4x32xf32>
    %234 = vector.shape_cast %233 : vector<1x4x4x32xf32> to vector<16x32xf32>
    %235 = arith.truncf %234 : vector<16x32xf32> to vector<16x32xbf16>
    %c1_354 = arith.constant 1 : index
    %c0_355 = arith.constant 0 : index
    %c0_356 = arith.constant 0 : index
    %c0_357 = arith.constant 0 : index
    %236 = vector.load %arg4[%c1_354, %c0_355, %c0_356, %c0_357] : memref<3x3x32x64xbf16, #tpu.memory_space<vmem>>, vector<1x1x32x64xbf16>
    %237 = vector.shape_cast %236 : vector<1x1x32x64xbf16> to vector<32x64xbf16>
    %cst_358 = arith.constant dense<0.000000e+00> : vector<16x64xf32>
    %238 = tpu.matmul %235, %237, %cst_358 {dimension_numbers = #tpu.dot_dimension_numbers<[1], [0], [0], [1], [0, 0, 1, 1], [], []>} : vector<16x32xbf16>, vector<32x64xbf16>, vector<16x64xf32> -> vector<16x64xf32>
    %c0_359 = arith.constant 0 : index
    %c0_360 = arith.constant 0 : index
    %239 = vector.load %arg19[%c0_359, %c0_360] : memref<16x64xf32, #tpu.memory_space<vmem>>, vector<16x64xf32>
    %240 = arith.addf %239, %238 : vector<16x64xf32>
    %c0_361 = arith.constant 0 : index
    %c0_362 = arith.constant 0 : index
    %241 = vector.load %arg19[%c0_361, %c0_362] : memref<16x64xf32, #tpu.memory_space<vmem>>, vector<16x64xf32>
    tpu.vector_store %arg19[%c0_361, %c0_362], %240 {strides = array<i32>} : memref<16x64xf32, #tpu.memory_space<vmem>>, vector<16x64xf32>,
    %c0_363 = arith.constant 0 : index
    %c1_364 = arith.constant 1 : index
    %c1_365 = arith.constant 1 : index
    %c0_366 = arith.constant 0 : index
    %242 = vector.load %arg15[%c0_363, %c1_364, %c1_365, %c0_366] : memref<1x6x6x32xf32, #tpu.memory_space<vmem>>, vector<1x4x4x32xf32>
    %243 = vector.shape_cast %242 : vector<1x4x4x32xf32> to vector<16x32xf32>
    %244 = arith.truncf %243 : vector<16x32xf32> to vector<16x32xbf16>
    %c1_367 = arith.constant 1 : index
    %c1_368 = arith.constant 1 : index
    %c0_369 = arith.constant 0 : index
    %c0_370 = arith.constant 0 : index
    %245 = vector.load %arg4[%c1_367, %c1_368, %c0_369, %c0_370] : memref<3x3x32x64xbf16, #tpu.memory_space<vmem>>, vector<1x1x32x64xbf16>
    %246 = vector.shape_cast %245 : vector<1x1x32x64xbf16> to vector<32x64xbf16>
    %cst_371 = arith.constant dense<0.000000e+00> : vector<16x64xf32>
    %247 = tpu.matmul %244, %246, %cst_371 {dimension_numbers = #tpu.dot_dimension_numbers<[1], [0], [0], [1], [0, 0, 1, 1], [], []>} : vector<16x32xbf16>, vector<32x64xbf16>, vector<16x64xf32> -> vector<16x64xf32>
    %c0_372 = arith.constant 0 : index
    %c0_373 = arith.constant 0 : index
    %248 = vector.load %arg19[%c0_372, %c0_373] : memref<16x64xf32, #tpu.memory_space<vmem>>, vector<16x64xf32>
    %249 = arith.addf %248, %247 : vector<16x64xf32>
    %c0_374 = arith.constant 0 : index
    %c0_375 = arith.constant 0 : index
    %250 = vector.load %arg19[%c0_374, %c0_375] : memref<16x64xf32, #tpu.memory_space<vmem>>, vector<16x64xf32>
    tpu.vector_store %arg19[%c0_374, %c0_375], %249 {strides = array<i32>} : memref<16x64xf32, #tpu.memory_space<vmem>>, vector<16x64xf32>,
    %c0_376 = arith.constant 0 : index
    %c1_377 = arith.constant 1 : index
    %c2_378 = arith.constant 2 : index
    %c0_379 = arith.constant 0 : index
    %251 = vector.load %arg15[%c0_376, %c1_377, %c2_378, %c0_379] : memref<1x6x6x32xf32, #tpu.memory_space<vmem>>, vector<1x4x4x32xf32>
    %252 = vector.shape_cast %251 : vector<1x4x4x32xf32> to vector<16x32xf32>
    %253 = arith.truncf %252 : vector<16x32xf32> to vector<16x32xbf16>
    %c1_380 = arith.constant 1 : index
    %c2_381 = arith.constant 2 : index
    %c0_382 = arith.constant 0 : index
    %c0_383 = arith.constant 0 : index
    %254 = vector.load %arg4[%c1_380, %c2_381, %c0_382, %c0_383] : memref<3x3x32x64xbf16, #tpu.memory_space<vmem>>, vector<1x1x32x64xbf16>
    %255 = vector.shape_cast %254 : vector<1x1x32x64xbf16> to vector<32x64xbf16>
    %cst_384 = arith.constant dense<0.000000e+00> : vector<16x64xf32>
    %256 = tpu.matmul %253, %255, %cst_384 {dimension_numbers = #tpu.dot_dimension_numbers<[1], [0], [0], [1], [0, 0, 1, 1], [], []>} : vector<16x32xbf16>, vector<32x64xbf16>, vector<16x64xf32> -> vector<16x64xf32>
    %c0_385 = arith.constant 0 : index
    %c0_386 = arith.constant 0 : index
    %257 = vector.load %arg19[%c0_385, %c0_386] : memref<16x64xf32, #tpu.memory_space<vmem>>, vector<16x64xf32>
    %258 = arith.addf %257, %256 : vector<16x64xf32>
    %c0_387 = arith.constant 0 : index
    %c0_388 = arith.constant 0 : index
    %259 = vector.load %arg19[%c0_387, %c0_388] : memref<16x64xf32, #tpu.memory_space<vmem>>, vector<16x64xf32>
    tpu.vector_store %arg19[%c0_387, %c0_388], %258 {strides = array<i32>} : memref<16x64xf32, #tpu.memory_space<vmem>>, vector<16x64xf32>,
    %c0_389 = arith.constant 0 : index
    %c2_390 = arith.constant 2 : index
    %c0_391 = arith.constant 0 : index
    %c0_392 = arith.constant 0 : index
    %260 = vector.load %arg15[%c0_389, %c2_390, %c0_391, %c0_392] : memref<1x6x6x32xf32, #tpu.memory_space<vmem>>, vector<1x4x4x32xf32>
    %261 = vector.shape_cast %260 : vector<1x4x4x32xf32> to vector<16x32xf32>
    %262 = arith.truncf %261 : vector<16x32xf32> to vector<16x32xbf16>
    %c2_393 = arith.constant 2 : index
    %c0_394 = arith.constant 0 : index
    %c0_395 = arith.constant 0 : index
    %c0_396 = arith.constant 0 : index
    %263 = vector.load %arg4[%c2_393, %c0_394, %c0_395, %c0_396] : memref<3x3x32x64xbf16, #tpu.memory_space<vmem>>, vector<1x1x32x64xbf16>
    %264 = vector.shape_cast %263 : vector<1x1x32x64xbf16> to vector<32x64xbf16>
    %cst_397 = arith.constant dense<0.000000e+00> : vector<16x64xf32>
    %265 = tpu.matmul %262, %264, %cst_397 {dimension_numbers = #tpu.dot_dimension_numbers<[1], [0], [0], [1], [0, 0, 1, 1], [], []>} : vector<16x32xbf16>, vector<32x64xbf16>, vector<16x64xf32> -> vector<16x64xf32>
    %c0_398 = arith.constant 0 : index
    %c0_399 = arith.constant 0 : index
    %266 = vector.load %arg19[%c0_398, %c0_399] : memref<16x64xf32, #tpu.memory_space<vmem>>, vector<16x64xf32>
    %267 = arith.addf %266, %265 : vector<16x64xf32>
    %c0_400 = arith.constant 0 : index
    %c0_401 = arith.constant 0 : index
    %268 = vector.load %arg19[%c0_400, %c0_401] : memref<16x64xf32, #tpu.memory_space<vmem>>, vector<16x64xf32>
    tpu.vector_store %arg19[%c0_400, %c0_401], %267 {strides = array<i32>} : memref<16x64xf32, #tpu.memory_space<vmem>>, vector<16x64xf32>,
    %c0_402 = arith.constant 0 : index
    %c2_403 = arith.constant 2 : index
    %c1_404 = arith.constant 1 : index
    %c0_405 = arith.constant 0 : index
    %269 = vector.load %arg15[%c0_402, %c2_403, %c1_404, %c0_405] : memref<1x6x6x32xf32, #tpu.memory_space<vmem>>, vector<1x4x4x32xf32>
    %270 = vector.shape_cast %269 : vector<1x4x4x32xf32> to vector<16x32xf32>
    %271 = arith.truncf %270 : vector<16x32xf32> to vector<16x32xbf16>
    %c2_406 = arith.constant 2 : index
    %c1_407 = arith.constant 1 : index
    %c0_408 = arith.constant 0 : index
    %c0_409 = arith.constant 0 : index
    %272 = vector.load %arg4[%c2_406, %c1_407, %c0_408, %c0_409] : memref<3x3x32x64xbf16, #tpu.memory_space<vmem>>, vector<1x1x32x64xbf16>
    %273 = vector.shape_cast %272 : vector<1x1x32x64xbf16> to vector<32x64xbf16>
    %cst_410 = arith.constant dense<0.000000e+00> : vector<16x64xf32>
    %274 = tpu.matmul %271, %273, %cst_410 {dimension_numbers = #tpu.dot_dimension_numbers<[1], [0], [0], [1], [0, 0, 1, 1], [], []>} : vector<16x32xbf16>, vector<32x64xbf16>, vector<16x64xf32> -> vector<16x64xf32>
    %c0_411 = arith.constant 0 : index
    %c0_412 = arith.constant 0 : index
    %275 = vector.load %arg19[%c0_411, %c0_412] : memref<16x64xf32, #tpu.memory_space<vmem>>, vector<16x64xf32>
    %276 = arith.addf %275, %274 : vector<16x64xf32>
    %c0_413 = arith.constant 0 : index
    %c0_414 = arith.constant 0 : index
    %277 = vector.load %arg19[%c0_413, %c0_414] : memref<16x64xf32, #tpu.memory_space<vmem>>, vector<16x64xf32>
    tpu.vector_store %arg19[%c0_413, %c0_414], %276 {strides = array<i32>} : memref<16x64xf32, #tpu.memory_space<vmem>>, vector<16x64xf32>,
    %c0_415 = arith.constant 0 : index
    %c2_416 = arith.constant 2 : index
    %c2_417 = arith.constant 2 : index
    %c0_418 = arith.constant 0 : index
    %278 = vector.load %arg15[%c0_415, %c2_416, %c2_417, %c0_418] : memref<1x6x6x32xf32, #tpu.memory_space<vmem>>, vector<1x4x4x32xf32>
    %279 = vector.shape_cast %278 : vector<1x4x4x32xf32> to vector<16x32xf32>
    %280 = arith.truncf %279 : vector<16x32xf32> to vector<16x32xbf16>
    %c2_419 = arith.constant 2 : index
    %c2_420 = arith.constant 2 : index
    %c0_421 = arith.constant 0 : index
    %c0_422 = arith.constant 0 : index
    %281 = vector.load %arg4[%c2_419, %c2_420, %c0_421, %c0_422] : memref<3x3x32x64xbf16, #tpu.memory_space<vmem>>, vector<1x1x32x64xbf16>
    %282 = vector.shape_cast %281 : vector<1x1x32x64xbf16> to vector<32x64xbf16>
    %cst_423 = arith.constant dense<0.000000e+00> : vector<16x64xf32>
    %283 = tpu.matmul %280, %282, %cst_423 {dimension_numbers = #tpu.dot_dimension_numbers<[1], [0], [0], [1], [0, 0, 1, 1], [], []>} : vector<16x32xbf16>, vector<32x64xbf16>, vector<16x64xf32> -> vector<16x64xf32>
    %c0_424 = arith.constant 0 : index
    %c0_425 = arith.constant 0 : index
    %284 = vector.load %arg19[%c0_424, %c0_425] : memref<16x64xf32, #tpu.memory_space<vmem>>, vector<16x64xf32>
    %285 = arith.addf %284, %283 : vector<16x64xf32>
    %c0_426 = arith.constant 0 : index
    %c0_427 = arith.constant 0 : index
    %286 = vector.load %arg19[%c0_426, %c0_427] : memref<16x64xf32, #tpu.memory_space<vmem>>, vector<16x64xf32>
    tpu.vector_store %arg19[%c0_426, %c0_427], %285 {strides = array<i32>} : memref<16x64xf32, #tpu.memory_space<vmem>>, vector<16x64xf32>,
    %c0_428 = arith.constant 0 : index
    %c0_429 = arith.constant 0 : index
    %287 = vector.load %arg19[%c0_428, %c0_429] : memref<16x64xf32, #tpu.memory_space<vmem>>, vector<16x64xf32>
    %c0_430 = arith.constant 0 : index
    %c0_431 = arith.constant 0 : index
    %288 = vector.load %arg8[%c0_430, %c0_431] : memref<1x64xf32, #tpu.memory_space<vmem>>, vector<1x64xf32>
    %289 = vector.broadcast %288 : vector<1x64xf32> to vector<16x64xf32>
    %290 = arith.addf %287, %289 : vector<16x64xf32>
    %cst_432 = arith.constant 0.000000e+00 : f32
    %291 = vector.broadcast %cst_432 : f32 to vector<16x64xf32>
    %292 = arith.maximumf %290, %291 : vector<16x64xf32>
    %293 = vector.shape_cast %292 : vector<16x64xf32> to vector<8x2x64xf32>
    %cst_433 = arith.constant dense<0xFF800000> : vector<8x64xf32>
    %294 = vector.multi_reduction <maximumf>, %293, %cst_433 [1] : vector<8x2x64xf32> to vector<8x64xf32>
    %295 = vector.shape_cast %294 : vector<8x64xf32> to vector<2x2x2x64xf32>
    %cst_434 = arith.constant dense<0xFF800000> : vector<2x2x64xf32>
    %296 = vector.multi_reduction <maximumf>, %295, %cst_434 [1] : vector<2x2x2x64xf32> to vector<2x2x64xf32>
    %297 = vector.shape_cast %296 : vector<2x2x64xf32> to vector<1x2x2x64xf32>
    %cst_435 = arith.constant 0.000000e+00 : f32
    %298 = vector.broadcast %cst_435 : f32 to vector<1x1x4x64xf32>
    %c0_436 = arith.constant 0 : index
    %c0_437 = arith.constant 0 : index
    %c0_438 = arith.constant 0 : index
    %c0_439 = arith.constant 0 : index
    %299 = vector.load %arg16[%c0_436, %c0_437, %c0_438, %c0_439] : memref<1x4x4x64xf32, #tpu.memory_space<vmem>>, vector<1x1x4x64xf32>
    tpu.vector_store %arg16[%c0_436, %c0_437, %c0_438, %c0_439], %298 {strides = array<i32>} : memref<1x4x4x64xf32, #tpu.memory_space<vmem>>, vector<1x1x4x64xf32>,
    %cst_440 = arith.constant 0.000000e+00 : f32
    %300 = vector.broadcast %cst_440 : f32 to vector<1x1x4x64xf32>
    %c0_441 = arith.constant 0 : index
    %c3 = arith.constant 3 : index
    %c0_442 = arith.constant 0 : index
    %c0_443 = arith.constant 0 : index
    %301 = vector.load %arg16[%c0_441, %c3, %c0_442, %c0_443] : memref<1x4x4x64xf32, #tpu.memory_space<vmem>>, vector<1x1x4x64xf32>
    tpu.vector_store %arg16[%c0_441, %c3, %c0_442, %c0_443], %300 {strides = array<i32>} : memref<1x4x4x64xf32, #tpu.memory_space<vmem>>, vector<1x1x4x64xf32>,
    %cst_444 = arith.constant 0.000000e+00 : f32
    %302 = vector.broadcast %cst_444 : f32 to vector<1x4x1x64xf32>
    %c0_445 = arith.constant 0 : index
    %c0_446 = arith.constant 0 : index
    %c0_447 = arith.constant 0 : index
    %c0_448 = arith.constant 0 : index
    %303 = vector.load %arg16[%c0_445, %c0_446, %c0_447, %c0_448] : memref<1x4x4x64xf32, #tpu.memory_space<vmem>>, vector<1x4x1x64xf32>
    tpu.vector_store %arg16[%c0_445, %c0_446, %c0_447, %c0_448], %302 {strides = array<i32>} : memref<1x4x4x64xf32, #tpu.memory_space<vmem>>, vector<1x4x1x64xf32>,
    %cst_449 = arith.constant 0.000000e+00 : f32
    %304 = vector.broadcast %cst_449 : f32 to vector<1x4x1x64xf32>
    %c0_450 = arith.constant 0 : index
    %c0_451 = arith.constant 0 : index
    %c3_452 = arith.constant 3 : index
    %c0_453 = arith.constant 0 : index
    %305 = vector.load %arg16[%c0_450, %c0_451, %c3_452, %c0_453] : memref<1x4x4x64xf32, #tpu.memory_space<vmem>>, vector<1x4x1x64xf32>
    tpu.vector_store %arg16[%c0_450, %c0_451, %c3_452, %c0_453], %304 {strides = array<i32>} : memref<1x4x4x64xf32, #tpu.memory_space<vmem>>, vector<1x4x1x64xf32>,
    %c0_454 = arith.constant 0 : index
    %c1_455 = arith.constant 1 : index
    %c1_456 = arith.constant 1 : index
    %c0_457 = arith.constant 0 : index
    %306 = vector.load %arg16[%c0_454, %c1_455, %c1_456, %c0_457] : memref<1x4x4x64xf32, #tpu.memory_space<vmem>>, vector<1x2x2x64xf32>
    tpu.vector_store %arg16[%c0_454, %c1_455, %c1_456, %c0_457], %297 {strides = array<i32>} : memref<1x4x4x64xf32, #tpu.memory_space<vmem>>, vector<1x2x2x64xf32>,
    %c0_458 = arith.constant 0 : index
    %c0_459 = arith.constant 0 : index
    %c0_460 = arith.constant 0 : index
    %c0_461 = arith.constant 0 : index
    %307 = vector.load %arg16[%c0_458, %c0_459, %c0_460, %c0_461] : memref<1x4x4x64xf32, #tpu.memory_space<vmem>>, vector<1x2x2x64xf32>
    %308 = vector.shape_cast %307 : vector<1x2x2x64xf32> to vector<4x64xf32>
    %309 = arith.truncf %308 : vector<4x64xf32> to vector<4x64xbf16>
    %c0_462 = arith.constant 0 : index
    %c0_463 = arith.constant 0 : index
    %c0_464 = arith.constant 0 : index
    %c0_465 = arith.constant 0 : index
    %310 = vector.load %arg5[%c0_462, %c0_463, %c0_464, %c0_465] : memref<3x3x64x128xbf16, #tpu.memory_space<vmem>>, vector<1x1x64x128xbf16>
    %311 = vector.shape_cast %310 : vector<1x1x64x128xbf16> to vector<64x128xbf16>
    %cst_466 = arith.constant dense<0.000000e+00> : vector<4x128xf32>
    %312 = tpu.matmul %309, %311, %cst_466 {dimension_numbers = #tpu.dot_dimension_numbers<[1], [0], [0], [1], [0, 0, 1, 1], [], []>} : vector<4x64xbf16>, vector<64x128xbf16>, vector<4x128xf32> -> vector<4x128xf32>
    %c0_467 = arith.constant 0 : index
    %c0_468 = arith.constant 0 : index
    %313 = vector.load %arg20[%c0_467, %c0_468] : memref<4x128xf32, #tpu.memory_space<vmem>>, vector<4x128xf32>
    tpu.vector_store %arg20[%c0_467, %c0_468], %312 {strides = array<i32>} : memref<4x128xf32, #tpu.memory_space<vmem>>, vector<4x128xf32>,
    %c0_469 = arith.constant 0 : index
    %c0_470 = arith.constant 0 : index
    %c1_471 = arith.constant 1 : index
    %c0_472 = arith.constant 0 : index
    %314 = vector.load %arg16[%c0_469, %c0_470, %c1_471, %c0_472] : memref<1x4x4x64xf32, #tpu.memory_space<vmem>>, vector<1x2x2x64xf32>
    %315 = vector.shape_cast %314 : vector<1x2x2x64xf32> to vector<4x64xf32>
    %316 = arith.truncf %315 : vector<4x64xf32> to vector<4x64xbf16>
    %c0_473 = arith.constant 0 : index
    %c1_474 = arith.constant 1 : index
    %c0_475 = arith.constant 0 : index
    %c0_476 = arith.constant 0 : index
    %317 = vector.load %arg5[%c0_473, %c1_474, %c0_475, %c0_476] : memref<3x3x64x128xbf16, #tpu.memory_space<vmem>>, vector<1x1x64x128xbf16>
    %318 = vector.shape_cast %317 : vector<1x1x64x128xbf16> to vector<64x128xbf16>
    %cst_477 = arith.constant dense<0.000000e+00> : vector<4x128xf32>
    %319 = tpu.matmul %316, %318, %cst_477 {dimension_numbers = #tpu.dot_dimension_numbers<[1], [0], [0], [1], [0, 0, 1, 1], [], []>} : vector<4x64xbf16>, vector<64x128xbf16>, vector<4x128xf32> -> vector<4x128xf32>
    %c0_478 = arith.constant 0 : index
    %c0_479 = arith.constant 0 : index
    %320 = vector.load %arg20[%c0_478, %c0_479] : memref<4x128xf32, #tpu.memory_space<vmem>>, vector<4x128xf32>
    %321 = arith.addf %320, %319 : vector<4x128xf32>
    %c0_480 = arith.constant 0 : index
    %c0_481 = arith.constant 0 : index
    %322 = vector.load %arg20[%c0_480, %c0_481] : memref<4x128xf32, #tpu.memory_space<vmem>>, vector<4x128xf32>
    tpu.vector_store %arg20[%c0_480, %c0_481], %321 {strides = array<i32>} : memref<4x128xf32, #tpu.memory_space<vmem>>, vector<4x128xf32>,
    %c0_482 = arith.constant 0 : index
    %c0_483 = arith.constant 0 : index
    %c2_484 = arith.constant 2 : index
    %c0_485 = arith.constant 0 : index
    %323 = vector.load %arg16[%c0_482, %c0_483, %c2_484, %c0_485] : memref<1x4x4x64xf32, #tpu.memory_space<vmem>>, vector<1x2x2x64xf32>
    %324 = vector.shape_cast %323 : vector<1x2x2x64xf32> to vector<4x64xf32>
    %325 = arith.truncf %324 : vector<4x64xf32> to vector<4x64xbf16>
    %c0_486 = arith.constant 0 : index
    %c2_487 = arith.constant 2 : index
    %c0_488 = arith.constant 0 : index
    %c0_489 = arith.constant 0 : index
    %326 = vector.load %arg5[%c0_486, %c2_487, %c0_488, %c0_489] : memref<3x3x64x128xbf16, #tpu.memory_space<vmem>>, vector<1x1x64x128xbf16>
    %327 = vector.shape_cast %326 : vector<1x1x64x128xbf16> to vector<64x128xbf16>
    %cst_490 = arith.constant dense<0.000000e+00> : vector<4x128xf32>
    %328 = tpu.matmul %325, %327, %cst_490 {dimension_numbers = #tpu.dot_dimension_numbers<[1], [0], [0], [1], [0, 0, 1, 1], [], []>} : vector<4x64xbf16>, vector<64x128xbf16>, vector<4x128xf32> -> vector<4x128xf32>
    %c0_491 = arith.constant 0 : index
    %c0_492 = arith.constant 0 : index
    %329 = vector.load %arg20[%c0_491, %c0_492] : memref<4x128xf32, #tpu.memory_space<vmem>>, vector<4x128xf32>
    %330 = arith.addf %329, %328 : vector<4x128xf32>
    %c0_493 = arith.constant 0 : index
    %c0_494 = arith.constant 0 : index
    %331 = vector.load %arg20[%c0_493, %c0_494] : memref<4x128xf32, #tpu.memory_space<vmem>>, vector<4x128xf32>
    tpu.vector_store %arg20[%c0_493, %c0_494], %330 {strides = array<i32>} : memref<4x128xf32, #tpu.memory_space<vmem>>, vector<4x128xf32>,
    %c0_495 = arith.constant 0 : index
    %c1_496 = arith.constant 1 : index
    %c0_497 = arith.constant 0 : index
    %c0_498 = arith.constant 0 : index
    %332 = vector.load %arg16[%c0_495, %c1_496, %c0_497, %c0_498] : memref<1x4x4x64xf32, #tpu.memory_space<vmem>>, vector<1x2x2x64xf32>
    %333 = vector.shape_cast %332 : vector<1x2x2x64xf32> to vector<4x64xf32>
    %334 = arith.truncf %333 : vector<4x64xf32> to vector<4x64xbf16>
    %c1_499 = arith.constant 1 : index
    %c0_500 = arith.constant 0 : index
    %c0_501 = arith.constant 0 : index
    %c0_502 = arith.constant 0 : index
    %335 = vector.load %arg5[%c1_499, %c0_500, %c0_501, %c0_502] : memref<3x3x64x128xbf16, #tpu.memory_space<vmem>>, vector<1x1x64x128xbf16>
    %336 = vector.shape_cast %335 : vector<1x1x64x128xbf16> to vector<64x128xbf16>
    %cst_503 = arith.constant dense<0.000000e+00> : vector<4x128xf32>
    %337 = tpu.matmul %334, %336, %cst_503 {dimension_numbers = #tpu.dot_dimension_numbers<[1], [0], [0], [1], [0, 0, 1, 1], [], []>} : vector<4x64xbf16>, vector<64x128xbf16>, vector<4x128xf32> -> vector<4x128xf32>
    %c0_504 = arith.constant 0 : index
    %c0_505 = arith.constant 0 : index
    %338 = vector.load %arg20[%c0_504, %c0_505] : memref<4x128xf32, #tpu.memory_space<vmem>>, vector<4x128xf32>
    %339 = arith.addf %338, %337 : vector<4x128xf32>
    %c0_506 = arith.constant 0 : index
    %c0_507 = arith.constant 0 : index
    %340 = vector.load %arg20[%c0_506, %c0_507] : memref<4x128xf32, #tpu.memory_space<vmem>>, vector<4x128xf32>
    tpu.vector_store %arg20[%c0_506, %c0_507], %339 {strides = array<i32>} : memref<4x128xf32, #tpu.memory_space<vmem>>, vector<4x128xf32>,
    %c0_508 = arith.constant 0 : index
    %c1_509 = arith.constant 1 : index
    %c1_510 = arith.constant 1 : index
    %c0_511 = arith.constant 0 : index
    %341 = vector.load %arg16[%c0_508, %c1_509, %c1_510, %c0_511] : memref<1x4x4x64xf32, #tpu.memory_space<vmem>>, vector<1x2x2x64xf32>
    %342 = vector.shape_cast %341 : vector<1x2x2x64xf32> to vector<4x64xf32>
    %343 = arith.truncf %342 : vector<4x64xf32> to vector<4x64xbf16>
    %c1_512 = arith.constant 1 : index
    %c1_513 = arith.constant 1 : index
    %c0_514 = arith.constant 0 : index
    %c0_515 = arith.constant 0 : index
    %344 = vector.load %arg5[%c1_512, %c1_513, %c0_514, %c0_515] : memref<3x3x64x128xbf16, #tpu.memory_space<vmem>>, vector<1x1x64x128xbf16>
    %345 = vector.shape_cast %344 : vector<1x1x64x128xbf16> to vector<64x128xbf16>
    %cst_516 = arith.constant dense<0.000000e+00> : vector<4x128xf32>
    %346 = tpu.matmul %343, %345, %cst_516 {dimension_numbers = #tpu.dot_dimension_numbers<[1], [0], [0], [1], [0, 0, 1, 1], [], []>} : vector<4x64xbf16>, vector<64x128xbf16>, vector<4x128xf32> -> vector<4x128xf32>
    %c0_517 = arith.constant 0 : index
    %c0_518 = arith.constant 0 : index
    %347 = vector.load %arg20[%c0_517, %c0_518] : memref<4x128xf32, #tpu.memory_space<vmem>>, vector<4x128xf32>
    %348 = arith.addf %347, %346 : vector<4x128xf32>
    %c0_519 = arith.constant 0 : index
    %c0_520 = arith.constant 0 : index
    %349 = vector.load %arg20[%c0_519, %c0_520] : memref<4x128xf32, #tpu.memory_space<vmem>>, vector<4x128xf32>
    tpu.vector_store %arg20[%c0_519, %c0_520], %348 {strides = array<i32>} : memref<4x128xf32, #tpu.memory_space<vmem>>, vector<4x128xf32>,
    %c0_521 = arith.constant 0 : index
    %c1_522 = arith.constant 1 : index
    %c2_523 = arith.constant 2 : index
    %c0_524 = arith.constant 0 : index
    %350 = vector.load %arg16[%c0_521, %c1_522, %c2_523, %c0_524] : memref<1x4x4x64xf32, #tpu.memory_space<vmem>>, vector<1x2x2x64xf32>
    %351 = vector.shape_cast %350 : vector<1x2x2x64xf32> to vector<4x64xf32>
    %352 = arith.truncf %351 : vector<4x64xf32> to vector<4x64xbf16>
    %c1_525 = arith.constant 1 : index
    %c2_526 = arith.constant 2 : index
    %c0_527 = arith.constant 0 : index
    %c0_528 = arith.constant 0 : index
    %353 = vector.load %arg5[%c1_525, %c2_526, %c0_527, %c0_528] : memref<3x3x64x128xbf16, #tpu.memory_space<vmem>>, vector<1x1x64x128xbf16>
    %354 = vector.shape_cast %353 : vector<1x1x64x128xbf16> to vector<64x128xbf16>
    %cst_529 = arith.constant dense<0.000000e+00> : vector<4x128xf32>
    %355 = tpu.matmul %352, %354, %cst_529 {dimension_numbers = #tpu.dot_dimension_numbers<[1], [0], [0], [1], [0, 0, 1, 1], [], []>} : vector<4x64xbf16>, vector<64x128xbf16>, vector<4x128xf32> -> vector<4x128xf32>
    %c0_530 = arith.constant 0 : index
    %c0_531 = arith.constant 0 : index
    %356 = vector.load %arg20[%c0_530, %c0_531] : memref<4x128xf32, #tpu.memory_space<vmem>>, vector<4x128xf32>
    %357 = arith.addf %356, %355 : vector<4x128xf32>
    %c0_532 = arith.constant 0 : index
    %c0_533 = arith.constant 0 : index
    %358 = vector.load %arg20[%c0_532, %c0_533] : memref<4x128xf32, #tpu.memory_space<vmem>>, vector<4x128xf32>
    tpu.vector_store %arg20[%c0_532, %c0_533], %357 {strides = array<i32>} : memref<4x128xf32, #tpu.memory_space<vmem>>, vector<4x128xf32>,
    %c0_534 = arith.constant 0 : index
    %c2_535 = arith.constant 2 : index
    %c0_536 = arith.constant 0 : index
    %c0_537 = arith.constant 0 : index
    %359 = vector.load %arg16[%c0_534, %c2_535, %c0_536, %c0_537] : memref<1x4x4x64xf32, #tpu.memory_space<vmem>>, vector<1x2x2x64xf32>
    %360 = vector.shape_cast %359 : vector<1x2x2x64xf32> to vector<4x64xf32>
    %361 = arith.truncf %360 : vector<4x64xf32> to vector<4x64xbf16>
    %c2_538 = arith.constant 2 : index
    %c0_539 = arith.constant 0 : index
    %c0_540 = arith.constant 0 : index
    %c0_541 = arith.constant 0 : index
    %362 = vector.load %arg5[%c2_538, %c0_539, %c0_540, %c0_541] : memref<3x3x64x128xbf16, #tpu.memory_space<vmem>>, vector<1x1x64x128xbf16>
    %363 = vector.shape_cast %362 : vector<1x1x64x128xbf16> to vector<64x128xbf16>
    %cst_542 = arith.constant dense<0.000000e+00> : vector<4x128xf32>
    %364 = tpu.matmul %361, %363, %cst_542 {dimension_numbers = #tpu.dot_dimension_numbers<[1], [0], [0], [1], [0, 0, 1, 1], [], []>} : vector<4x64xbf16>, vector<64x128xbf16>, vector<4x128xf32> -> vector<4x128xf32>
    %c0_543 = arith.constant 0 : index
    %c0_544 = arith.constant 0 : index
    %365 = vector.load %arg20[%c0_543, %c0_544] : memref<4x128xf32, #tpu.memory_space<vmem>>, vector<4x128xf32>
    %366 = arith.addf %365, %364 : vector<4x128xf32>
    %c0_545 = arith.constant 0 : index
    %c0_546 = arith.constant 0 : index
    %367 = vector.load %arg20[%c0_545, %c0_546] : memref<4x128xf32, #tpu.memory_space<vmem>>, vector<4x128xf32>
    tpu.vector_store %arg20[%c0_545, %c0_546], %366 {strides = array<i32>} : memref<4x128xf32, #tpu.memory_space<vmem>>, vector<4x128xf32>,
    %c0_547 = arith.constant 0 : index
    %c2_548 = arith.constant 2 : index
    %c1_549 = arith.constant 1 : index
    %c0_550 = arith.constant 0 : index
    %368 = vector.load %arg16[%c0_547, %c2_548, %c1_549, %c0_550] : memref<1x4x4x64xf32, #tpu.memory_space<vmem>>, vector<1x2x2x64xf32>
    %369 = vector.shape_cast %368 : vector<1x2x2x64xf32> to vector<4x64xf32>
    %370 = arith.truncf %369 : vector<4x64xf32> to vector<4x64xbf16>
    %c2_551 = arith.constant 2 : index
    %c1_552 = arith.constant 1 : index
    %c0_553 = arith.constant 0 : index
    %c0_554 = arith.constant 0 : index
    %371 = vector.load %arg5[%c2_551, %c1_552, %c0_553, %c0_554] : memref<3x3x64x128xbf16, #tpu.memory_space<vmem>>, vector<1x1x64x128xbf16>
    %372 = vector.shape_cast %371 : vector<1x1x64x128xbf16> to vector<64x128xbf16>
    %cst_555 = arith.constant dense<0.000000e+00> : vector<4x128xf32>
    %373 = tpu.matmul %370, %372, %cst_555 {dimension_numbers = #tpu.dot_dimension_numbers<[1], [0], [0], [1], [0, 0, 1, 1], [], []>} : vector<4x64xbf16>, vector<64x128xbf16>, vector<4x128xf32> -> vector<4x128xf32>
    %c0_556 = arith.constant 0 : index
    %c0_557 = arith.constant 0 : index
    %374 = vector.load %arg20[%c0_556, %c0_557] : memref<4x128xf32, #tpu.memory_space<vmem>>, vector<4x128xf32>
    %375 = arith.addf %374, %373 : vector<4x128xf32>
    %c0_558 = arith.constant 0 : index
    %c0_559 = arith.constant 0 : index
    %376 = vector.load %arg20[%c0_558, %c0_559] : memref<4x128xf32, #tpu.memory_space<vmem>>, vector<4x128xf32>
    tpu.vector_store %arg20[%c0_558, %c0_559], %375 {strides = array<i32>} : memref<4x128xf32, #tpu.memory_space<vmem>>, vector<4x128xf32>,
    %c0_560 = arith.constant 0 : index
    %c2_561 = arith.constant 2 : index
    %c2_562 = arith.constant 2 : index
    %c0_563 = arith.constant 0 : index
    %377 = vector.load %arg16[%c0_560, %c2_561, %c2_562, %c0_563] : memref<1x4x4x64xf32, #tpu.memory_space<vmem>>, vector<1x2x2x64xf32>
    %378 = vector.shape_cast %377 : vector<1x2x2x64xf32> to vector<4x64xf32>
    %379 = arith.truncf %378 : vector<4x64xf32> to vector<4x64xbf16>
    %c2_564 = arith.constant 2 : index
    %c2_565 = arith.constant 2 : index
    %c0_566 = arith.constant 0 : index
    %c0_567 = arith.constant 0 : index
    %380 = vector.load %arg5[%c2_564, %c2_565, %c0_566, %c0_567] : memref<3x3x64x128xbf16, #tpu.memory_space<vmem>>, vector<1x1x64x128xbf16>
    %381 = vector.shape_cast %380 : vector<1x1x64x128xbf16> to vector<64x128xbf16>
    %cst_568 = arith.constant dense<0.000000e+00> : vector<4x128xf32>
    %382 = tpu.matmul %379, %381, %cst_568 {dimension_numbers = #tpu.dot_dimension_numbers<[1], [0], [0], [1], [0, 0, 1, 1], [], []>} : vector<4x64xbf16>, vector<64x128xbf16>, vector<4x128xf32> -> vector<4x128xf32>
    %c0_569 = arith.constant 0 : index
    %c0_570 = arith.constant 0 : index
    %383 = vector.load %arg20[%c0_569, %c0_570] : memref<4x128xf32, #tpu.memory_space<vmem>>, vector<4x128xf32>
    %384 = arith.addf %383, %382 : vector<4x128xf32>
    %c0_571 = arith.constant 0 : index
    %c0_572 = arith.constant 0 : index
    %385 = vector.load %arg20[%c0_571, %c0_572] : memref<4x128xf32, #tpu.memory_space<vmem>>, vector<4x128xf32>
    tpu.vector_store %arg20[%c0_571, %c0_572], %384 {strides = array<i32>} : memref<4x128xf32, #tpu.memory_space<vmem>>, vector<4x128xf32>,
    %c0_573 = arith.constant 0 : index
    %c0_574 = arith.constant 0 : index
    %386 = vector.load %arg20[%c0_573, %c0_574] : memref<4x128xf32, #tpu.memory_space<vmem>>, vector<4x128xf32>
    %c0_575 = arith.constant 0 : index
    %c0_576 = arith.constant 0 : index
    %387 = vector.load %arg9[%c0_575, %c0_576] : memref<1x128xf32, #tpu.memory_space<vmem>>, vector<1x128xf32>
    %388 = vector.broadcast %387 : vector<1x128xf32> to vector<4x128xf32>
    %389 = arith.addf %386, %388 : vector<4x128xf32>
    %cst_577 = arith.constant 0.000000e+00 : f32
    %390 = vector.broadcast %cst_577 : f32 to vector<4x128xf32>
    %391 = arith.maximumf %389, %390 : vector<4x128xf32>
    %392 = vector.shape_cast %391 : vector<4x128xf32> to vector<2x2x128xf32>
    %cst_578 = arith.constant dense<0xFF800000> : vector<2x128xf32>
    %393 = vector.multi_reduction <maximumf>, %392, %cst_578 [1] : vector<2x2x128xf32> to vector<2x128xf32>
    %394 = vector.shape_cast %393 : vector<2x128xf32> to vector<1x2x1x128xf32>
    %cst_579 = arith.constant dense<0xFF800000> : vector<1x1x128xf32>
    %395 = vector.multi_reduction <maximumf>, %394, %cst_579 [1] : vector<1x2x1x128xf32> to vector<1x1x128xf32>
    %396 = vector.shape_cast %395 : vector<1x1x128xf32> to vector<1x1x1x128xf32>
    %397 = vector.shape_cast %396 : vector<1x1x1x128xf32> to vector<1x1x128xf32>
    %cst_580 = arith.constant dense<0.000000e+00> : vector<1x128xf32>
    %398 = vector.multi_reduction <add>, %397, %cst_580 [1] : vector<1x1x128xf32> to vector<1x128xf32>
    %cst_581 = arith.constant 1.000000e+00 : f32
    %399 = vector.broadcast %cst_581 : f32 to vector<1x128xf32>
    %400 = arith.mulf %398, %399 : vector<1x128xf32>
    %401 = arith.truncf %400 : vector<1x128xf32> to vector<1x128xbf16>
    %c0_582 = arith.constant 0 : index
    %c0_583 = arith.constant 0 : index
    %402 = vector.load %arg10[%c0_582, %c0_583] : memref<128x10xbf16, #tpu.memory_space<vmem>>, vector<128x10xbf16>
    %cst_584 = arith.constant dense<0.000000e+00> : vector<1x10xf32>
    %403 = tpu.matmul %401, %402, %cst_584 {dimension_numbers = #tpu.dot_dimension_numbers<[1], [0], [0], [1], [0, 0, 1, 1], [], []>} : vector<1x128xbf16>, vector<128x10xbf16>, vector<1x10xf32> -> vector<1x10xf32>
    %c0_585 = arith.constant 0 : index
    %c0_586 = arith.constant 0 : index
    %404 = vector.load %arg11[%c0_585, %c0_586] : memref<1x10xf32, #tpu.memory_space<vmem>>, vector<1x10xf32>
    %405 = arith.addf %403, %404 : vector<1x10xf32>
    %406 = vector.shape_cast %405 : vector<1x10xf32> to vector<1x1x10xf32>
    %c0_587 = arith.constant 0 : index
    %c0_588 = arith.constant 0 : index
    %c0_589 = arith.constant 0 : index
    %407 = vector.load %arg12[%c0_587, %c0_588, %c0_589] : memref<1x1x10xf32, #tpu.memory_space<vmem>>, vector<1x1x10xf32>
    tpu.vector_store %arg12[%c0_587, %c0_588, %c0_589], %406 {strides = array<i32>} : memref<1x1x10xf32, #tpu.memory_space<vmem>>, vector<1x1x10xf32>,
    return
  }
  func.func @transform_0(%arg0: i32) -> (i32, i32, i32, i32) {
    %c0_i32 = arith.constant 0 : i32
    %c0_i32_0 = arith.constant 0 : i32
    %c0_i32_1 = arith.constant 0 : i32
    %c0_i32_2 = arith.constant 0 : i32
    return %arg0, %c0_i32, %c0_i32_0, %c0_i32_1 : i32, i32, i32, i32
  }
  func.func @transform_1(%arg0: i32) -> (i32, i32, i32, i32) {
    %c0_i32 = arith.constant 0 : i32
    %c0_i32_0 = arith.constant 0 : i32
    %c0_i32_1 = arith.constant 0 : i32
    %c0_i32_2 = arith.constant 0 : i32
    %c0_i32_3 = arith.constant 0 : i32
    return %c0_i32, %c0_i32_0, %c0_i32_1, %c0_i32_2 : i32, i32, i32, i32
  }
  func.func @transform_2(%arg0: i32) -> (i32, i32, i32, i32) {
    %c0_i32 = arith.constant 0 : i32
    %c0_i32_0 = arith.constant 0 : i32
    %c0_i32_1 = arith.constant 0 : i32
    %c0_i32_2 = arith.constant 0 : i32
    %c0_i32_3 = arith.constant 0 : i32
    return %c0_i32, %c0_i32_0, %c0_i32_1, %c0_i32_2 : i32, i32, i32, i32
  }
  func.func @transform_3(%arg0: i32) -> (i32, i32, i32, i32) {
    %c0_i32 = arith.constant 0 : i32
    %c0_i32_0 = arith.constant 0 : i32
    %c0_i32_1 = arith.constant 0 : i32
    %c0_i32_2 = arith.constant 0 : i32
    %c0_i32_3 = arith.constant 0 : i32
    return %c0_i32, %c0_i32_0, %c0_i32_1, %c0_i32_2 : i32, i32, i32, i32
  }
  func.func @transform_4(%arg0: i32) -> (i32, i32, i32, i32) {
    %c0_i32 = arith.constant 0 : i32
    %c0_i32_0 = arith.constant 0 : i32
    %c0_i32_1 = arith.constant 0 : i32
    %c0_i32_2 = arith.constant 0 : i32
    %c0_i32_3 = arith.constant 0 : i32
    return %c0_i32, %c0_i32_0, %c0_i32_1, %c0_i32_2 : i32, i32, i32, i32
  }
  func.func @transform_5(%arg0: i32) -> (i32, i32) {
    %c0_i32 = arith.constant 0 : i32
    %c0_i32_0 = arith.constant 0 : i32
    %c0_i32_1 = arith.constant 0 : i32
    return %c0_i32, %c0_i32_0 : i32, i32
  }
  func.func @transform_6(%arg0: i32) -> (i32, i32) {
    %c0_i32 = arith.constant 0 : i32
    %c0_i32_0 = arith.constant 0 : i32
    %c0_i32_1 = arith.constant 0 : i32
    return %c0_i32, %c0_i32_0 : i32, i32
  }
  func.func @transform_7(%arg0: i32) -> (i32, i32) {
    %c0_i32 = arith.constant 0 : i32
    %c0_i32_0 = arith.constant 0 : i32
    %c0_i32_1 = arith.constant 0 : i32
    return %c0_i32, %c0_i32_0 : i32, i32
  }
  func.func @transform_8(%arg0: i32) -> (i32, i32) {
    %c0_i32 = arith.constant 0 : i32
    %c0_i32_0 = arith.constant 0 : i32
    %c0_i32_1 = arith.constant 0 : i32
    return %c0_i32, %c0_i32_0 : i32, i32
  }
  func.func @transform_9(%arg0: i32) -> (i32, i32) {
    %c0_i32 = arith.constant 0 : i32
    %c0_i32_0 = arith.constant 0 : i32
    %c0_i32_1 = arith.constant 0 : i32
    return %c0_i32, %c0_i32_0 : i32, i32
  }
  func.func @transform_10(%arg0: i32) -> (i32, i32) {
    %c0_i32 = arith.constant 0 : i32
    %c0_i32_0 = arith.constant 0 : i32
    %c0_i32_1 = arith.constant 0 : i32
    return %c0_i32, %c0_i32_0 : i32, i32
  }
  func.func @transform_11(%arg0: i32) -> (i32, i32, i32) {
    %c0_i32 = arith.constant 0 : i32
    %c0_i32_0 = arith.constant 0 : i32
    %c0_i32_1 = arith.constant 0 : i32
    return %arg0, %c0_i32, %c0_i32_0 : i32, i32, i32
  }
}

</mosaic_0001>

<llo_original>
// kernel: block_forward.1
$region0: #{block_forward.1}
  #allocation0 [shape = 'u32[]', space=smem, size = 0x4, offset = 0x4, fixed_abs, tag = 'smem constant byte address 0x4 - core index']
  #allocation1 [shape = 'u32[144,128]{1,0:T(1,128)}', space=vmem, size = 0x12000, scoped, tag = 'internal scratch']
  #allocation2 [shape = 'f32[1,18,18,3]{3,2,1,0:T(8,128)}', space=vmem, size = 0x36000, scoped, tag = 'scratch operand']
  #allocation3 [shape = 'f32[1,10,10,16]{3,2,1,0:T(8,128)}', space=vmem, size = 0x14000, scoped, tag = 'scratch operand']
  #allocation4 [shape = 'f32[1,6,6,32]{3,2,1,0:T(8,128)}', space=vmem, size = 0x6000, scoped, tag = 'scratch operand']
  #allocation5 [shape = 'f32[1,4,4,64]{3,2,1,0:T(4,128)}', space=vmem, size = 0x2000, scoped, tag = 'scratch operand']
  #allocation6 [shape = 'f32[256,16]{1,0:T(8,128)}', space=vmem, size = 0x20000, scoped, tag = 'scratch operand']
  #allocation7 [shape = 'f32[64,32]{1,0:T(8,128)}', space=vmem, size = 0x8000, scoped, tag = 'scratch operand']
  #allocation8 [shape = 'f32[16,64]{1,0:T(8,128)}', space=vmem, size = 0x2000, scoped, tag = 'scratch operand']
  #allocation9 [shape = 'f32[4,128]{1,0:T(4,128)}', space=vmem, size = 0x800, scoped, tag = 'scratch operand']
  %s0 = inlined_call_operand.vmem [shape: f32[2,16,16,3], index: 0, kind: input, shape index: {}]
  %s1 = inlined_call_operand.vmem [shape: bf16[3,3,3,16], index: 1, kind: input, shape index: {}]
  %s2 = inlined_call_operand.vmem [shape: bf16[3,3,16,32], index: 2, kind: input, shape index: {}]
  %s3 = inlined_call_operand.vmem [shape: bf16[3,3,32,64], index: 3, kind: input, shape index: {}]
  %s4 = inlined_call_operand.vmem [shape: bf16[3,3,64,128], index: 4, kind: input, shape index: {}]
  %s5 = inlined_call_operand.vmem [shape: f32[1,16], index: 5, kind: input, shape index: {}]
  %s6 = inlined_call_operand.vmem [shape: f32[1,32], index: 6, kind: input, shape index: {}]
  %s7 = inlined_call_operand.vmem [shape: f32[1,64], index: 7, kind: input, shape index: {}]
  %s8 = inlined_call_operand.vmem [shape: f32[1,128], index: 8, kind: input, shape index: {}]
  %s9 = inlined_call_operand.vmem [shape: bf16[128,10], index: 9, kind: input, shape index: {}]
  %s10 = inlined_call_operand.vmem [shape: f32[1,10], index: 10, kind: input, shape index: {}]
  %s11 = inlined_call_operand.hbm [shape: f32[2,1,10], index: 11, kind: output, shape index: {}]
  %s12 = sld [smem:[#allocation0]]
  $region77: #{block_forward.1} parent=0
    _
  %s14 = ssub.s32 1, %s12
  %s15 = scalar_select 0, %s14, %s12
  $region1: #{block_forward.1} parent=0
    #allocation10 [shape = 'u8[1024]{0}', space=vmem, size = 0x400, scoped, tag = 'output window, operand 0']
    #allocation11 [shape = 's32[2]{0}', space=sflag, size = 0x8, scoped, tag = 'scoped memory for block_forward.1']
    %16 = vsyncpa [#allocation11], 0
    %s17 = scalar_lea.sflag [#allocation11], 1
    %18 = vsyncpa %s17, 0
    loop: start=0, step=1, limit=4
    $region2: #{block_forward.1} parent=1 // loop_pre_header
      _
    $region3: #{block_forward.1} parent=1 // loop_header
      %s20 = sphi 0, %s24
      %p21 = scmp.ge.s32.totalorder %s20, 4
      %s30 = sphi 0, %s32
      %s33 = sphi 0, %s30
      %s34 = sphi 0, %s33
      %s50 = sphi 0, %s34
      %s54 = sphi 0, %s54
      %s56 = sphi 0, %s54
      %s57 = sphi 0, %s56
      %s71 = sphi 0, %s57
      %s75 = sphi 0, %s75
      %s77 = sphi 0, %s75
      %s78 = sphi 0, %s77
      %s92 = sphi 0, %s78
      %s96 = sphi 0, %s96
      %s98 = sphi 0, %s96
      %s99 = sphi 0, %s98
      %s113 = sphi 0, %s99
      %s117 = sphi 0, %s117
      %s119 = sphi 0, %s117
      %s120 = sphi 0, %s119
      %s134 = sphi 0, %s120
      %s138 = sphi 0, %s138
      %s140 = sphi 0, %s138
      %s141 = sphi 0, %s140
      %s155 = sphi 0, %s141
      %s159 = sphi 0, %s159
      %s161 = sphi 0, %s159
      %s162 = sphi 0, %s161
      %s176 = sphi 0, %s162
      %s180 = sphi 0, %s180
      %s182 = sphi 0, %s180
      %s183 = sphi 0, %s182
      %s197 = sphi 0, %s183
      %s201 = sphi 0, %s201
      %s203 = sphi 0, %s201
      %s204 = sphi 0, %s203
      %s218 = sphi 0, %s204
      %s222 = sphi 0, %s222
      %s224 = sphi 0, %s222
      %s225 = sphi 0, %s224
      %s239 = sphi 0, %s225
      %s243 = sphi 0, %s243
      %s245 = sphi 0, %s243
      %s246 = sphi 0, %s245
      %s260 = sphi 0, %s246
      %s266 = sphi 0, %s268
      %s269 = sphi 0, %s266
      %s270 = sphi 0, %s269
      %s286 = sphi 0, %s270
    $region4: #{block_forward.1} parent=1 // loop_header_branch
      %23 = sbr.rel (%p21) target = $region8
    $region5: #{block_forward.1} parent=1 // loop_body
      %s25 = ssub.s32 %s20, 1
      %s26 = ssub.s32 %s20, 2
      %s27 = sadd.s32 %s20, 1
      %s28 = ssub.s32 %s20, %s27
      %p29 = scmp.eq.s32.totalorder %s28, 0
      %s31 = sadd.s32 %s30, 1
      %s32 = scalar_select %p29, %s30, %s31
      %p35 = pneg %p29
      %p36 = scmp.eq.s32.totalorder %s20, 1
      %p37 = por %p35, %p36
      %p38 = scmp.ne.s32.totalorder %s30, %s33
      %p39 = scmp.eq.s32.totalorder %s20, 0
      %p40 = por %p38, %p39
      %p41 = scmp.ne.s32.totalorder %s30, %s33
      %p42 = scmp.eq.s32.totalorder %s25, 1
      %p43 = por %p41, %p42
      %p44 = scmp.ne.s32.totalorder %s33, %s34
      %p45 = scmp.eq.s32.totalorder %s25, 0
      %p46 = por %p44, %p45
      %p47 = scmp.ne.s32.totalorder %s33, %s34
      %p48 = scmp.eq.s32.totalorder %s26, 1
      %p49 = por %p47, %p48
      %p51 = scmp.ne.s32.totalorder %s34, %s50
      %p52 = scmp.eq.s32.totalorder %s26, 0
      %p53 = por %p51, %p52
      %s55 = sadd.s32 %s54, 1
      %p58 = scmp.eq.s32.totalorder %s20, 1
      %p59 = scmp.ne.s32.totalorder %s54, %s56
      %p60 = scmp.eq.s32.totalorder %s20, 0
      %p61 = por %p59, %p60
      %p62 = scmp.ne.s32.totalorder %s54, %s56
      %p63 = scmp.eq.s32.totalorder %s25, 1
      %p64 = por %p62, %p63
      %p65 = scmp.ne.s32.totalorder %s56, %s57
      %p66 = scmp.eq.s32.totalorder %s25, 0
      %p67 = por %p65, %p66
      %p68 = scmp.ne.s32.totalorder %s56, %s57
      %p69 = scmp.eq.s32.totalorder %s26, 1
      %p70 = por %p68, %p69
      %p72 = scmp.ne.s32.totalorder %s57, %s71
      %p73 = scmp.eq.s32.totalorder %s26, 0
      %p74 = por %p72, %p73
      %s76 = sadd.s32 %s75, 1
      %p79 = scmp.eq.s32.totalorder %s20, 1
      %p80 = scmp.ne.s32.totalorder %s75, %s77
      %p81 = scmp.eq.s32.totalorder %s20, 0
      %p82 = por %p80, %p81
      %p83 = scmp.ne.s32.totalorder %s75, %s77
      %p84 = scmp.eq.s32.totalorder %s25, 1
      %p85 = por %p83, %p84
      %p86 = scmp.ne.s32.totalorder %s77, %s78
      %p87 = scmp.eq.s32.totalorder %s25, 0
      %p88 = por %p86, %p87
      %p89 = scmp.ne.s32.totalorder %s77, %s78
      %p90 = scmp.eq.s32.totalorder %s26, 1
      %p91 = por %p89, %p90
      %p93 = scmp.ne.s32.totalorder %s78, %s92
      %p94 = scmp.eq.s32.totalorder %s26, 0
      %p95 = por %p93, %p94
      %s97 = sadd.s32 %s96, 1
      %p100 = scmp.eq.s32.totalorder %s20, 1
      %p101 = scmp.ne.s32.totalorder %s96, %s98
      %p102 = scmp.eq.s32.totalorder %s20, 0
      %p103 = por %p101, %p102
      %p104 = scmp.ne.s32.totalorder %s96, %s98
      %p105 = scmp.eq.s32.totalorder %s25, 1
      %p106 = por %p104, %p105
      %p107 = scmp.ne.s32.totalorder %s98, %s99
      %p108 = scmp.eq.s32.totalorder %s25, 0
      %p109 = por %p107, %p108
      %p110 = scmp.ne.s32.totalorder %s98, %s99
      %p111 = scmp.eq.s32.totalorder %s26, 1
      %p112 = por %p110, %p111
      %p114 = scmp.ne.s32.totalorder %s99, %s113
      %p115 = scmp.eq.s32.totalorder %s26, 0
      %p116 = por %p114, %p115
      %s118 = sadd.s32 %s117, 1
      %p121 = scmp.eq.s32.totalorder %s20, 1
      %p122 = scmp.ne.s32.totalorder %s117, %s119
      %p123 = scmp.eq.s32.totalorder %s20, 0
      %p124 = por %p122, %p123
      %p125 = scmp.ne.s32.totalorder %s117, %s119
      %p126 = scmp.eq.s32.totalorder %s25, 1
      %p127 = por %p125, %p126
      %p128 = scmp.ne.s32.totalorder %s119, %s120
      %p129 = scmp.eq.s32.totalorder %s25, 0
      %p130 = por %p128, %p129
      %p131 = scmp.ne.s32.totalorder %s119, %s120
      %p132 = scmp.eq.s32.totalorder %s26, 1
      %p133 = por %p131, %p132
      %p135 = scmp.ne.s32.totalorder %s120, %s134
      %p136 = scmp.eq.s32.totalorder %s26, 0
      %p137 = por %p135, %p136
      %s139 = sadd.s32 %s138, 1
      %p142 = scmp.eq.s32.totalorder %s20, 1
      %p143 = scmp.ne.s32.totalorder %s138, %s140
      %p144 = scmp.eq.s32.totalorder %s20, 0
      %p145 = por %p143, %p144
      %p146 = scmp.ne.s32.totalorder %s138, %s140
      %p147 = scmp.eq.s32.totalorder %s25, 1
      %p148 = por %p146, %p147
      %p149 = scmp.ne.s32.totalorder %s140, %s141
      %p150 = scmp.eq.s32.totalorder %s25, 0
      %p151 = por %p149, %p150
      %p152 = scmp.ne.s32.totalorder %s140, %s141
      %p153 = scmp.eq.s32.totalorder %s26, 1
      %p154 = por %p152, %p153
      %p156 = scmp.ne.s32.totalorder %s141, %s155
      %p157 = scmp.eq.s32.totalorder %s26, 0
      %p158 = por %p156, %p157
      %s160 = sadd.s32 %s159, 1
      %p163 = scmp.eq.s32.totalorder %s20, 1
      %p164 = scmp.ne.s32.totalorder %s159, %s161
      %p165 = scmp.eq.s32.totalorder %s20, 0
      %p166 = por %p164, %p165
      %p167 = scmp.ne.s32.totalorder %s159, %s161
      %p168 = scmp.eq.s32.totalorder %s25, 1
      %p169 = por %p167, %p168
      %p170 = scmp.ne.s32.totalorder %s161, %s162
      %p171 = scmp.eq.s32.totalorder %s25, 0
      %p172 = por %p170, %p171
      %p173 = scmp.ne.s32.totalorder %s161, %s162
      %p174 = scmp.eq.s32.totalorder %s26, 1
      %p175 = por %p173, %p174
      %p177 = scmp.ne.s32.totalorder %s162, %s176
      %p178 = scmp.eq.s32.totalorder %s26, 0
      %p179 = por %p177, %p178
      %s181 = sadd.s32 %s180, 1
      %p184 = scmp.eq.s32.totalorder %s20, 1
      %p185 = scmp.ne.s32.totalorder %s180, %s182
      %p186 = scmp.eq.s32.totalorder %s20, 0
      %p187 = por %p185, %p186
      %p188 = scmp.ne.s32.totalorder %s180, %s182
      %p189 = scmp.eq.s32.totalorder %s25, 1
      %p190 = por %p188, %p189
      %p191 = scmp.ne.s32.totalorder %s182, %s183
      %p192 = scmp.eq.s32.totalorder %s25, 0
      %p193 = por %p191, %p192
      %p194 = scmp.ne.s32.totalorder %s182, %s183
      %p195 = scmp.eq.s32.totalorder %s26, 1
      %p196 = por %p194, %p195
      %p198 = scmp.ne.s32.totalorder %s183, %s197
      %p199 = scmp.eq.s32.totalorder %s26, 0
      %p200 = por %p198, %p199
      %s202 = sadd.s32 %s201, 1
      %p205 = scmp.eq.s32.totalorder %s20, 1
      %p206 = scmp.ne.s32.totalorder %s201, %s203
      %p207 = scmp.eq.s32.totalorder %s20, 0
      %p208 = por %p206, %p207
      %p209 = scmp.ne.s32.totalorder %s201, %s203
      %p210 = scmp.eq.s32.totalorder %s25, 1
      %p211 = por %p209, %p210
      %p212 = scmp.ne.s32.totalorder %s203, %s204
      %p213 = scmp.eq.s32.totalorder %s25, 0
      %p214 = por %p212, %p213
      %p215 = scmp.ne.s32.totalorder %s203, %s204
      %p216 = scmp.eq.s32.totalorder %s26, 1
      %p217 = por %p215, %p216
      %p219 = scmp.ne.s32.totalorder %s204, %s218
      %p220 = scmp.eq.s32.totalorder %s26, 0
      %p221 = por %p219, %p220
      %s223 = sadd.s32 %s222, 1
      %p226 = scmp.eq.s32.totalorder %s20, 1
      %p227 = scmp.ne.s32.totalorder %s222, %s224
      %p228 = scmp.eq.s32.totalorder %s20, 0
      %p229 = por %p227, %p228
      %p230 = scmp.ne.s32.totalorder %s222, %s224
      %p231 = scmp.eq.s32.totalorder %s25, 1
      %p232 = por %p230, %p231
      %p233 = scmp.ne.s32.totalorder %s224, %s225
      %p234 = scmp.eq.s32.totalorder %s25, 0
      %p235 = por %p233, %p234
      %p236 = scmp.ne.s32.totalorder %s224, %s225
      %p237 = scmp.eq.s32.totalorder %s26, 1
      %p238 = por %p236, %p237
      %p240 = scmp.ne.s32.totalorder %s225, %s239
      %p241 = scmp.eq.s32.totalorder %s26, 0
      %p242 = por %p240, %p241
      %s244 = sadd.s32 %s243, 1
      %p247 = scmp.eq.s32.totalorder %s20, 1
      %p248 = scmp.ne.s32.totalorder %s243, %s245
      %p249 = scmp.eq.s32.totalorder %s20, 0
      %p250 = por %p248, %p249
      %p251 = scmp.ne.s32.totalorder %s243, %s245
      %p252 = scmp.eq.s32.totalorder %s25, 1
      %p253 = por %p251, %p252
      %p254 = scmp.ne.s32.totalorder %s245, %s246
      %p255 = scmp.eq.s32.totalorder %s25, 0
      %p256 = por %p254, %p255
      %p257 = scmp.ne.s32.totalorder %s245, %s246
      %p258 = scmp.eq.s32.totalorder %s26, 1
      %p259 = por %p257, %p258
      %p261 = scmp.ne.s32.totalorder %s246, %s260
      %p262 = scmp.eq.s32.totalorder %s26, 0
      %p263 = por %p261, %p262
      %s264 = ssub.s32 %s20, %s27
      %p265 = scmp.eq.s32.totalorder %s264, 0
      %s267 = sadd.s32 %s266, 1
      %s268 = scalar_select %p265, %s266, %s267
      %p271 = pneg %p265
      %p272 = scmp.eq.s32.totalorder %s20, 1
      %p273 = por %p271, %p272
      %p274 = scmp.ne.s32.totalorder %s266, %s269
      %p275 = scmp.eq.s32.totalorder %s20, 0
      %p276 = por %p274, %p275
      %p277 = scmp.ne.s32.totalorder %s266, %s269
      %p278 = scmp.eq.s32.totalorder %s25, 1
      %p279 = por %p277, %p278
      %p280 = scmp.ne.s32.totalorder %s269, %s270
      %p281 = scmp.eq.s32.totalorder %s25, 0
      %p282 = por %p280, %p281
      %p283 = scmp.ne.s32.totalorder %s269, %s270
      %p284 = scmp.eq.s32.totalorder %s26, 1
      %p285 = por %p283, %p284
      %p287 = scmp.ne.s32.totalorder %s270, %s286
      %p288 = scmp.eq.s32.totalorder %s26, 0
      %p289 = por %p287, %p288
      %p290 = scmp.le.s32.totalorder 1, %s20
      %p291 = scmp.lt.s32.totalorder %s20, 3
      %p292 = pnand %p290, %p291
      %p293 = pneg %p292
      // Predicated region
      $region9: #{block_forward.1} parent=5 // pred_check
        _
      $region10: #{block_forward.1} parent=5 // pred_check_branch
        %295 = sbr.rel (%p292) target = $region12
      $region11: #{block_forward.1} parent=5 // pred_region
        %s296 = ssub.s32 %s20, 1
        // Predicated region
        $region13: #{block_forward.1} parent=11 // pred_check
          %p297 = pneg %p67
        $region14: #{block_forward.1} parent=11 // pred_check_branch
          %299 = sbr.rel (%p297) target = $region16
        $region15: #{block_forward.1} parent=11 // pred_region
          _
        $region16: #{block_forward.1} parent=11 // pred_fallthru
          _
        // Predicated region
        $region17: #{block_forward.1} parent=11 // pred_check
          %p300 = pneg %p88
        $region18: #{block_forward.1} parent=11 // pred_check_branch
          %302 = sbr.rel (%p300) target = $region20
        $region19: #{block_forward.1} parent=11 // pred_region
          _
        $region20: #{block_forward.1} parent=11 // pred_fallthru
          _
        // Predicated region
        $region21: #{block_forward.1} parent=11 // pred_check
          %p303 = pneg %p109
        $region22: #{block_forward.1} parent=11 // pred_check_branch
          %305 = sbr.rel (%p303) target = $region24
        $region23: #{block_forward.1} parent=11 // pred_region
          _
        $region24: #{block_forward.1} parent=11 // pred_fallthru
          _
        // Predicated region
        $region25: #{block_forward.1} parent=11 // pred_check
          %p306 = pneg %p130
        $region26: #{block_forward.1} parent=11 // pred_check_branch
          %308 = sbr.rel (%p306) target = $region28
        $region27: #{block_forward.1} parent=11 // pred_region
          _
        $region28: #{block_forward.1} parent=11 // pred_fallthru
          _
        // Predicated region
        $region29: #{block_forward.1} parent=11 // pred_check
          %p309 = pneg %p151
        $region30: #{block_forward.1} parent=11 // pred_check_branch
          %311 = sbr.rel (%p309) target = $region32
        $region31: #{block_forward.1} parent=11 // pred_region
          _
        $region32: #{block_forward.1} parent=11 // pred_fallthru
          _
        // Predicated region
        $region33: #{block_forward.1} parent=11 // pred_check
          %p312 = pneg %p172
        $region34: #{block_forward.1} parent=11 // pred_check_branch
          %314 = sbr.rel (%p312) target = $region36
        $region35: #{block_forward.1} parent=11 // pred_region
          _
        $region36: #{block_forward.1} parent=11 // pred_fallthru
          _
        // Predicated region
        $region37: #{block_forward.1} parent=11 // pred_check
          %p315 = pneg %p193
        $region38: #{block_forward.1} parent=11 // pred_check_branch
          %317 = sbr.rel (%p315) target = $region40
        $region39: #{block_forward.1} parent=11 // pred_region
          _
        $region40: #{block_forward.1} parent=11 // pred_fallthru
          _
        // Predicated region
        $region41: #{block_forward.1} parent=11 // pred_check
          %p318 = pneg %p214
        $region42: #{block_forward.1} parent=11 // pred_check_branch
          %320 = sbr.rel (%p318) target = $region44
        $region43: #{block_forward.1} parent=11 // pred_region
          _
        $region44: #{block_forward.1} parent=11 // pred_fallthru
          _
        // Predicated region
        $region45: #{block_forward.1} parent=11 // pred_check
          %p321 = pneg %p235
        $region46: #{block_forward.1} parent=11 // pred_check_branch
          %323 = sbr.rel (%p321) target = $region48
        $region47: #{block_forward.1} parent=11 // pred_region
          _
        $region48: #{block_forward.1} parent=11 // pred_fallthru
          _
        // Predicated region
        $region49: #{block_forward.1} parent=11 // pred_check
          %p324 = pneg %p256
        $region50: #{block_forward.1} parent=11 // pred_check_branch
          %326 = sbr.rel (%p324) target = $region52
        $region51: #{block_forward.1} parent=11 // pred_region
          _
        $region52: #{block_forward.1} parent=11 // pred_fallthru
          _
      $region12: #{block_forward.1} parent=5 // pred_fallthru
        _
      %p327 = scmp.lt.s32.totalorder %s20, 2
      // Predicated region
      $region53: #{block_forward.1} parent=5 // pred_check
        %p328 = pneg %p327
      $region54: #{block_forward.1} parent=5 // pred_check_branch
        %330 = sbr.rel (%p328) target = $region56
      $region55: #{block_forward.1} parent=5 // pred_region
        // Predicated region
        $region57: #{block_forward.1} parent=55 // pred_check
          %p331 = pneg %p40
        $region58: #{block_forward.1} parent=55 // pred_check_branch
          %333 = sbr.rel (%p331) target = $region60
        $region59: #{block_forward.1} parent=55 // pred_region
          %p334 = scmp.lt.s32.totalorder %s20, 1
          %s335 = scalar_select %p334, %s20, 1
          %s336 = smul.addr %s335, 32
          %s337 = smul.addr %s336, 8
          %s338 = scalar_lea.vmem %s0, %s337
        $region60: #{block_forward.1} parent=55 // pred_fallthru
          _
      $region56: #{block_forward.1} parent=5 // pred_fallthru
        _
      %p339 = scmp.le.s32.totalorder 1, %s20
      %p340 = scmp.lt.s32.totalorder %s20, 3
      %p341 = pnand %p339, %p340
      %p342 = pneg %p341
      // Predicated region
      $region61: #{block_forward.1} parent=5 // pred_check
        _
      $region62: #{block_forward.1} parent=5 // pred_check_branch
        %344 = sbr.rel (%p341) target = $region64
      $region63: #{block_forward.1} parent=5 // pred_region
        %s345 = ssub.s32 %s20, 1
        %p346 = scmp.lt.s32.totalorder %s25, 1
        %s347 = scalar_select %p346, %s25, 1
        %s348 = smul.addr %s347, 32
        %s349 = smul.addr %s348, 8
        %s350 = scalar_lea.vmem %s0, %s349
        %p351 = pneg %p46
        %p352 = pneg %p43
        %p353 = pneg %p67
        %p354 = pneg %p64
        %p355 = pneg %p88
        %p356 = pneg %p85
        %p357 = pneg %p109
        %p358 = pneg %p106
        %p359 = pneg %p130
        %p360 = pneg %p127
        %p361 = pneg %p151
        %p362 = pneg %p148
        %p363 = pneg %p172
        %p364 = pneg %p169
        %p365 = pneg %p193
        %p366 = pneg %p190
        %p367 = pneg %p214
        %p368 = pneg %p211
        %p369 = pneg %p235
        %p370 = pneg %p232
        %p371 = pneg %p256
        %p372 = pneg %p253
        %p373 = pneg %p282
        %p374 = pneg %p279
        %s375 = sand.u32 %s269, 1
        %s376 = scalar_lea.sflag [#allocation11], %s375
        %s377 = sand.u32 %s269, 1
        %s378 = scalar_lea.vmem [#allocation10], %s377
        %p379 = scmp.lt.s32.totalorder %s25, 1
        %s380 = scalar_select %p379, %s25, 1
        %s381 = smul.addr %s380, 32
        %s382 = smul.addr %s381, 8
        %s383 = scalar_lea.vmem %s0, %s382
        %v385 = vld [vmem:[%s383] sm:$0xff]
        %v386 = vld [vmem:[%s383 + $0x8] sm:$0xff]
        %v387 = vld [vmem:[%s383 + $0x10] sm:$0xff]
        %v388 = vld [vmem:[%s383 + $0x18] sm:$0xff]
        %v389 = vld [vmem:[%s383 + $0x20] sm:$0xff]
        %v390 = vld [vmem:[%s383 + $0x28] sm:$0xff]
        %v391 = vld [vmem:[%s383 + $0x30] sm:$0xff]
        %v392 = vld [vmem:[%s383 + $0x38] sm:$0xff]
        %v393 = vld [vmem:[%s383 + $0x40] sm:$0xff]
        %v394 = vld [vmem:[%s383 + $0x48] sm:$0xff]
        %v395 = vld [vmem:[%s383 + $0x50] sm:$0xff]
        %v396 = vld [vmem:[%s383 + $0x58] sm:$0xff]
        %v397 = vld [vmem:[%s383 + $0x60] sm:$0xff]
        %v398 = vld [vmem:[%s383 + $0x68] sm:$0xff]
        %v399 = vld [vmem:[%s383 + $0x70] sm:$0xff]
        %v400 = vld [vmem:[%s383 + $0x78] sm:$0xff]
        %v401 = vld [vmem:[%s383 + $0x80] sm:$0xff]
        %v402 = vld [vmem:[%s383 + $0x88] sm:$0xff]
        %v403 = vld [vmem:[%s383 + $0x90] sm:$0xff]
        %v404 = vld [vmem:[%s383 + $0x98] sm:$0xff]
        %v405 = vld [vmem:[%s383 + $0xa0] sm:$0xff]
        %v406 = vld [vmem:[%s383 + $0xa8] sm:$0xff]
        %v407 = vld [vmem:[%s383 + $0xb0] sm:$0xff]
        %v408 = vld [vmem:[%s383 + $0xb8] sm:$0xff]
        %v409 = vld [vmem:[%s383 + $0xc0] sm:$0xff]
        %v410 = vld [vmem:[%s383 + $0xc8] sm:$0xff]
        %v411 = vld [vmem:[%s383 + $0xd0] sm:$0xff]
        %v412 = vld [vmem:[%s383 + $0xd8] sm:$0xff]
        %v413 = vld [vmem:[%s383 + $0xe0] sm:$0xff]
        %v414 = vld [vmem:[%s383 + $0xe8] sm:$0xff]
        %v415 = vld [vmem:[%s383 + $0xf0] sm:$0xff]
        %v416 = vld [vmem:[%s383 + $0xf8] sm:$0xff]
        %vm417 = vcmask 23552
        %418 = vst.msk [vmem:[#allocation2] sm:$0xff] %vm417, 0.0
        %419 = vst.msk [vmem:[#allocation2 + $0x8] sm:$0xff] %vm417, 0.0
        %vm420 = vcmask 17408
        %421 = vst.msk [vmem:[#allocation2 + $0x10] sm:$0x3] %vm420, 0.0
        %s422 = scalar_lea.vmem [#allocation2], 408
        %423 = vst.msk [vmem:[%s422] sm:$0xff] %vm417, 0.0
        %424 = vst.msk [vmem:[%s422 + $0x8] sm:$0xff] %vm417, 0.0
        %425 = vst.msk [vmem:[%s422 + $0x10] sm:$0x3] %vm420, 0.0
        %vm426 = vcmask 16384
        %427 = vst.msk [vmem:[#allocation2] sm:$0x1] %vm426, 0.0
        %428 = vst.msk [vmem:[#allocation2 + $0x18] sm:$0x1] %vm426, 0.0
        %429 = vst.msk [vmem:[#allocation2 + $0x30] sm:$0x1] %vm426, 0.0
        %430 = vst.msk [vmem:[#allocation2 + $0x48] sm:$0x1] %vm426, 0.0
        %431 = vst.msk [vmem:[#allocation2 + $0x60] sm:$0x1] %vm426, 0.0
        %432 = vst.msk [vmem:[#allocation2 + $0x78] sm:$0x1] %vm426, 0.0
        %433 = vst.msk [vmem:[#allocation2 + $0x90] sm:$0x1] %vm426, 0.0
        %434 = vst.msk [vmem:[#allocation2 + $0xa8] sm:$0x1] %vm426, 0.0
        %435 = vst.msk [vmem:[#allocation2 + $0xc0] sm:$0x1] %vm426, 0.0
        %436 = vst.msk [vmem:[#allocation2 + $0xd8] sm:$0x1] %vm426, 0.0
        %437 = vst.msk [vmem:[#allocation2 + $0xf0] sm:$0x1] %vm426, 0.0
        %438 = vst.msk [vmem:[#allocation2 + $0x108] sm:$0x1] %vm426, 0.0
        %439 = vst.msk [vmem:[#allocation2 + $0x120] sm:$0x1] %vm426, 0.0
        %440 = vst.msk [vmem:[#allocation2 + $0x138] sm:$0x1] %vm426, 0.0
        %441 = vst.msk [vmem:[#allocation2 + $0x150] sm:$0x1] %vm426, 0.0
        %442 = vst.msk [vmem:[#allocation2 + $0x168] sm:$0x1] %vm426, 0.0
        %443 = vst.msk [vmem:[#allocation2 + $0x180] sm:$0x1] %vm426, 0.0
        %444 = vst.msk [vmem:[#allocation2 + $0x198] sm:$0x1] %vm426, 0.0
        %445 = vst.msk [vmem:[#allocation2 + $0x11] sm:$0x1] %vm426, 0.0
        %446 = vst.msk [vmem:[#allocation2 + $0x29] sm:$0x1] %vm426, 0.0
        %447 = vst.msk [vmem:[#allocation2 + $0x41] sm:$0x1] %vm426, 0.0
        %448 = vst.msk [vmem:[#allocation2 + $0x59] sm:$0x1] %vm426, 0.0
        %449 = vst.msk [vmem:[#allocation2 + $0x71] sm:$0x1] %vm426, 0.0
        %450 = vst.msk [vmem:[#allocation2 + $0x89] sm:$0x1] %vm426, 0.0
        %451 = vst.msk [vmem:[#allocation2 + $0xa1] sm:$0x1] %vm426, 0.0
        %452 = vst.msk [vmem:[#allocation2 + $0xb9] sm:$0x1] %vm426, 0.0
        %453 = vst.msk [vmem:[#allocation2 + $0xd1] sm:$0x1] %vm426, 0.0
        %454 = vst.msk [vmem:[#allocation2 + $0xe9] sm:$0x1] %vm426, 0.0
        %455 = vst.msk [vmem:[#allocation2 + $0x101] sm:$0x1] %vm426, 0.0
        %456 = vst.msk [vmem:[#allocation2 + $0x119] sm:$0x1] %vm426, 0.0
        %457 = vst.msk [vmem:[#allocation2 + $0x131] sm:$0x1] %vm426, 0.0
        %458 = vst.msk [vmem:[#allocation2 + $0x149] sm:$0x1] %vm426, 0.0
        %459 = vst.msk [vmem:[#allocation2 + $0x161] sm:$0x1] %vm426, 0.0
        %460 = vst.msk [vmem:[#allocation2 + $0x179] sm:$0x1] %vm426, 0.0
        %461 = vst.msk [vmem:[#allocation2 + $0x191] sm:$0x1] %vm426, 0.0
        %462 = vst.msk [vmem:[#allocation2 + $0x1a9] sm:$0x1] %vm426, 0.0
        %s463 = scalar_lea.vmem [#allocation2], 24
        %464 = vst.msk [vmem:[%s463 + $0x1] sm:$0xff] %vm417, %v385
        %465 = vst.msk [vmem:[%s463 + $0x9] sm:$0xff] %vm417, %v386
        %466 = vst.msk [vmem:[%s463 + $0x19] sm:$0xff] %vm417, %v387
        %467 = vst.msk [vmem:[%s463 + $0x21] sm:$0xff] %vm417, %v388
        %468 = vst.msk [vmem:[%s463 + $0x31] sm:$0xff] %vm417, %v389
        %469 = vst.msk [vmem:[%s463 + $0x39] sm:$0xff] %vm417, %v390
        %470 = vst.msk [vmem:[%s463 + $0x49] sm:$0xff] %vm417, %v391
        %471 = vst.msk [vmem:[%s463 + $0x51] sm:$0xff] %vm417, %v392
        %472 = vst.msk [vmem:[%s463 + $0x61] sm:$0xff] %vm417, %v393
        %473 = vst.msk [vmem:[%s463 + $0x69] sm:$0xff] %vm417, %v394
        %474 = vst.msk [vmem:[%s463 + $0x79] sm:$0xff] %vm417, %v395
        %475 = vst.msk [vmem:[%s463 + $0x81] sm:$0xff] %vm417, %v396
        %476 = vst.msk [vmem:[%s463 + $0x91] sm:$0xff] %vm417, %v397
        %477 = vst.msk [vmem:[%s463 + $0x99] sm:$0xff] %vm417, %v398
        %478 = vst.msk [vmem:[%s463 + $0xa9] sm:$0xff] %vm417, %v399
        %479 = vst.msk [vmem:[%s463 + $0xb1] sm:$0xff] %vm417, %v400
        %480 = vst.msk [vmem:[%s463 + $0xc1] sm:$0xff] %vm417, %v401
        %481 = vst.msk [vmem:[%s463 + $0xc9] sm:$0xff] %vm417, %v402
        %482 = vst.msk [vmem:[%s463 + $0xd9] sm:$0xff] %vm417, %v403
        %483 = vst.msk [vmem:[%s463 + $0xe1] sm:$0xff] %vm417, %v404
        %484 = vst.msk [vmem:[%s463 + $0xf1] sm:$0xff] %vm417, %v405
        %485 = vst.msk [vmem:[%s463 + $0xf9] sm:$0xff] %vm417, %v406
        %486 = vst.msk [vmem:[%s463 + $0x109] sm:$0xff] %vm417, %v407
        %487 = vst.msk [vmem:[%s463 + $0x111] sm:$0xff] %vm417, %v408
        %488 = vst.msk [vmem:[%s463 + $0x121] sm:$0xff] %vm417, %v409
        %489 = vst.msk [vmem:[%s463 + $0x129] sm:$0xff] %vm417, %v410
        %490 = vst.msk [vmem:[%s463 + $0x139] sm:$0xff] %vm417, %v411
        %491 = vst.msk [vmem:[%s463 + $0x141] sm:$0xff] %vm417, %v412
        %492 = vst.msk [vmem:[%s463 + $0x151] sm:$0xff] %vm417, %v413
        %493 = vst.msk [vmem:[%s463 + $0x159] sm:$0xff] %vm417, %v414
        %494 = vst.msk [vmem:[%s463 + $0x169] sm:$0xff] %vm417, %v415
        %495 = vst.msk [vmem:[%s463 + $0x171] sm:$0xff] %vm417, %v416
        %v496 = vld [vmem:[#allocation2] sm:$0xff]
        %v497 = vld [vmem:[#allocation2 + $0x8] sm:$0xff]
        %v498 = vld [vmem:[#allocation2 + $0x18] sm:$0xff]
        %v499 = vld [vmem:[#allocation2 + $0x20] sm:$0xff]
        %v500 = vld [vmem:[#allocation2 + $0x30] sm:$0xff]
        %v501 = vld [vmem:[#allocation2 + $0x38] sm:$0xff]
        %v502 = vld [vmem:[#allocation2 + $0x48] sm:$0xff]
        %v503 = vld [vmem:[#allocation2 + $0x50] sm:$0xff]
        %v504 = vld [vmem:[#allocation2 + $0x60] sm:$0xff]
        %v505 = vld [vmem:[#allocation2 + $0x68] sm:$0xff]
        %v506 = vld [vmem:[#allocation2 + $0x78] sm:$0xff]
        %v507 = vld [vmem:[#allocation2 + $0x80] sm:$0xff]
        %v508 = vld [vmem:[#allocation2 + $0x90] sm:$0xff]
        %v509 = vld [vmem:[#allocation2 + $0x98] sm:$0xff]
        %v510 = vld [vmem:[#allocation2 + $0xa8] sm:$0xff]
        %v511 = vld [vmem:[#allocation2 + $0xb0] sm:$0xff]
        %v512 = vld [vmem:[#allocation2 + $0xc0] sm:$0xff]
        %v513 = vld [vmem:[#allocation2 + $0xc8] sm:$0xff]
        %v514 = vld [vmem:[#allocation2 + $0xd8] sm:$0xff]
        %v515 = vld [vmem:[#allocation2 + $0xe0] sm:$0xff]
        %v516 = vld [vmem:[#allocation2 + $0xf0] sm:$0xff]
        %v517 = vld [vmem:[#allocation2 + $0xf8] sm:$0xff]
        %v518 = vld [vmem:[#allocation2 + $0x108] sm:$0xff]
        %v519 = vld [vmem:[#allocation2 + $0x110] sm:$0xff]
        %v520 = vld [vmem:[#allocation2 + $0x120] sm:$0xff]
        %v521 = vld [vmem:[#allocation2 + $0x128] sm:$0xff]
        %v522 = vld [vmem:[#allocation2 + $0x138] sm:$0xff]
        %v523 = vld [vmem:[#allocation2 + $0x140] sm:$0xff]
        %v524 = vld [vmem:[#allocation2 + $0x150] sm:$0xff]
        %v525 = vld [vmem:[#allocation2 + $0x158] sm:$0xff]
        %v526 = vld [vmem:[#allocation2 + $0x168] sm:$0xff]
        %v527 = vld [vmem:[#allocation2 + $0x170] sm:$0xff]
        %v528 = vpack.c.bf16 %v497, %v496
        %v529 = vpack.c.bf16 %v499, %v498
        %v530 = vpack.c.bf16 %v501, %v500
        %v531 = vpack.c.bf16 %v503, %v502
        %v532 = vpack.c.bf16 %v505, %v504
        %v533 = vpack.c.bf16 %v507, %v506
        %v534 = vpack.c.bf16 %v509, %v508
        %v535 = vpack.c.bf16 %v511, %v510
        %v536 = vpack.c.bf16 %v513, %v512
        %v537 = vpack.c.bf16 %v515, %v514
        %v538 = vpack.c.bf16 %v517, %v516
        %v539 = vpack.c.bf16 %v519, %v518
        %v540 = vpack.c.bf16 %v521, %v520
        %v541 = vpack.c.bf16 %v523, %v522
        %v542 = vpack.c.bf16 %v525, %v524
        %v543 = vpack.c.bf16 %v527, %v526
        %v544 = vld [vmem:[%s1] sm:$0x3]
        %v546 = vsel %vm417, %v528, 0
        %v549 = vsel %vm417, %v529, 0
        %v552 = vsel %vm417, %v530, 0
        %v555 = vsel %vm417, %v531, 0
        %v558 = vsel %vm417, %v532, 0
        %v561 = vsel %vm417, %v533, 0
        %v564 = vsel %vm417, %v534, 0
        %v567 = vsel %vm417, %v535, 0
        %v570 = vsel %vm417, %v536, 0
        %v573 = vsel %vm417, %v537, 0
        %v576 = vsel %vm417, %v538, 0
        %v579 = vsel %vm417, %v539, 0
        %v582 = vsel %vm417, %v540, 0
        %v585 = vsel %vm417, %v541, 0
        %v588 = vsel %vm417, %v542, 0
        %v591 = vsel %vm417, %v543, 0
        %vm593 = vcmask 1040384
        %vm594 = vcmask 1041408
        %v595 = vsel %vm593, 4294967295, 65535
        %v596 = vsel %vm594, %v595, 0
        %v598 = vand.u32 %v544, %v596
        %600 = vmatprep.subr.bf16.mxu0 0
        %601 = vmatpush1.bf16.msra.mxu0 %v598
        %602 = vmatprep.subr.bf16.mxu0 0
        %603 = vmatpush1.bf16.msra.mxu0 0
        %604 = vmatprep.subr.bf16.mxu0 0
        %605 = vmatpush1.bf16.msra.mxu0 0
        %606 = vmatprep.subr.bf16.mxu0 0
        %607 = vmatpush1.bf16.msra.mxu0 0
        %608 = vmatprep.subr.bf16.mxu0 0
        %609 = vmatpush1.bf16.msra.mxu0 0
        %610 = vmatprep.subr.bf16.mxu0 0
        %611 = vmatpush1.bf16.msra.mxu0 0
        %612 = vmatprep.subr.bf16.mxu0 0
        %613 = vmatpush1.bf16.msra.mxu0 0
        %614 = vmatprep.subr.bf16.mxu0 0
        %615 = vmatpush1.bf16.msra.mxu0 0
        %616 = vmatprep.subr.bf16.mxu0 0
        %617 = vmatpush1.bf16.msra.mxu0 0
        %618 = vmatprep.subr.bf16.mxu0 0
        %619 = vmatpush1.bf16.msra.mxu0 0
        %620 = vmatprep.subr.bf16.mxu0 0
        %621 = vmatpush1.bf16.msra.mxu0 0
        %622 = vmatprep.subr.bf16.mxu0 0
        %623 = vmatpush1.bf16.msra.mxu0 0
        %624 = vmatprep.subr.bf16.mxu0 0
        %625 = vmatpush1.bf16.msra.mxu0 0
        %626 = vmatprep.subr.bf16.mxu0 0
        %627 = vmatpush1.bf16.msra.mxu0 0
        %628 = vmatprep.subr.bf16.mxu0 0
        %629 = vmatpush1.bf16.msra.mxu0 0
        %630 = vmatprep.subr.bf16.mxu0 0
        %631 = vmatpush1.bf16.msra.mxu0 0
        %632 = vmatprep.mubr.bf16.mxu0 0
        %633 = vmatmul.mubr.bf16.gmra.mrb[0].mxu0 %v546
        %v634 = vpop.f32.mrb[0].mxu0
        %v635 = vadd.f32 0.0, %v634
        %v636 = vpop.f32.mrb[0].mxu0
        %v637 = vpop.f32.mrb[0].mxu0
        %v638 = vadd.f32 0.0, %v637
        %v639 = vpop.f32.mrb[0].mxu0
        %640 = vmatprep.mubr.bf16.mxu0 0
        %641 = vmatmul.mubr.bf16.gmra.mrb[0].mxu0 %v549
        %v642 = vpop.f32.mrb[0].mxu0
        %v643 = vadd.f32 0.0, %v642
        %v644 = vpop.f32.mrb[0].mxu0
        %v645 = vpop.f32.mrb[0].mxu0
        %v646 = vadd.f32 0.0, %v645
        %v647 = vpop.f32.mrb[0].mxu0
        %648 = vmatprep.mubr.bf16.mxu0 0
        %649 = vmatmul.mubr.bf16.gmra.mrb[0].mxu0 %v552
        %v650 = vpop.f32.mrb[0].mxu0
        %v651 = vadd.f32 0.0, %v650
        %v652 = vpop.f32.mrb[0].mxu0
        %v653 = vpop.f32.mrb[0].mxu0
        %v654 = vadd.f32 0.0, %v653
        %v655 = vpop.f32.mrb[0].mxu0
        %656 = vmatprep.mubr.bf16.mxu0 0
        %657 = vmatmul.mubr.bf16.gmra.mrb[0].mxu0 %v555
        %v658 = vpop.f32.mrb[0].mxu0
        %v659 = vadd.f32 0.0, %v658
        %v660 = vpop.f32.mrb[0].mxu0
        %v661 = vpop.f32.mrb[0].mxu0
        %v662 = vadd.f32 0.0, %v661
        %v663 = vpop.f32.mrb[0].mxu0
        %664 = vmatprep.mubr.bf16.mxu0 0
        %665 = vmatmul.mubr.bf16.gmra.mrb[0].mxu0 %v558
        %v666 = vpop.f32.mrb[0].mxu0
        %v667 = vadd.f32 0.0, %v666
        %v668 = vpop.f32.mrb[0].mxu0
        %v669 = vpop.f32.mrb[0].mxu0
        %v670 = vadd.f32 0.0, %v669
        %v671 = vpop.f32.mrb[0].mxu0
        %672 = vmatprep.mubr.bf16.mxu0 0
        %673 = vmatmul.mubr.bf16.gmra.mrb[0].mxu0 %v561
        %v674 = vpop.f32.mrb[0].mxu0
        %v675 = vadd.f32 0.0, %v674
        %v676 = vpop.f32.mrb[0].mxu0
        %v677 = vpop.f32.mrb[0].mxu0
        %v678 = vadd.f32 0.0, %v677
        %v679 = vpop.f32.mrb[0].mxu0
        %680 = vmatprep.mubr.bf16.mxu0 0
        %681 = vmatmul.mubr.bf16.gmra.mrb[0].mxu0 %v564
        %v682 = vpop.f32.mrb[0].mxu0
        %v683 = vadd.f32 0.0, %v682
        %v684 = vpop.f32.mrb[0].mxu0
        %v685 = vpop.f32.mrb[0].mxu0
        %v686 = vadd.f32 0.0, %v685
        %v687 = vpop.f32.mrb[0].mxu0
        %688 = vmatprep.mubr.bf16.mxu0 0
        %689 = vmatmul.mubr.bf16.gmra.mrb[0].mxu0 %v567
        %v690 = vpop.f32.mrb[0].mxu0
        %v691 = vadd.f32 0.0, %v690
        %v692 = vpop.f32.mrb[0].mxu0
        %v693 = vpop.f32.mrb[0].mxu0
        %v694 = vadd.f32 0.0, %v693
        %v695 = vpop.f32.mrb[0].mxu0
        %696 = vmatprep.mubr.bf16.mxu0 0
        %697 = vmatmul.mubr.bf16.gmra.mrb[0].mxu0 %v570
        %v698 = vpop.f32.mrb[0].mxu0
        %v699 = vadd.f32 0.0, %v698
        %v700 = vpop.f32.mrb[0].mxu0
        %v701 = vpop.f32.mrb[0].mxu0
        %v702 = vadd.f32 0.0, %v701
        %v703 = vpop.f32.mrb[0].mxu0
        %704 = vmatprep.mubr.bf16.mxu0 0
        %705 = vmatmul.mubr.bf16.gmra.mrb[0].mxu0 %v573
        %v706 = vpop.f32.mrb[0].mxu0
        %v707 = vadd.f32 0.0, %v706
        %v708 = vpop.f32.mrb[0].mxu0
        %v709 = vpop.f32.mrb[0].mxu0
        %v710 = vadd.f32 0.0, %v709
        %v711 = vpop.f32.mrb[0].mxu0
        %712 = vmatprep.mubr.bf16.mxu0 0
        %713 = vmatmul.mubr.bf16.gmra.mrb[0].mxu0 %v576
        %v714 = vpop.f32.mrb[0].mxu0
        %v715 = vadd.f32 0.0, %v714
        %v716 = vpop.f32.mrb[0].mxu0
        %v717 = vpop.f32.mrb[0].mxu0
        %v718 = vadd.f32 0.0, %v717
        %v719 = vpop.f32.mrb[0].mxu0
        %720 = vmatprep.mubr.bf16.mxu0 0
        %721 = vmatmul.mubr.bf16.gmra.mrb[0].mxu0 %v579
        %v722 = vpop.f32.mrb[0].mxu0
        %v723 = vadd.f32 0.0, %v722
        %v724 = vpop.f32.mrb[0].mxu0
        %v725 = vpop.f32.mrb[0].mxu0
        %v726 = vadd.f32 0.0, %v725
        %v727 = vpop.f32.mrb[0].mxu0
        %728 = vmatprep.mubr.bf16.mxu0 0
        %729 = vmatmul.mubr.bf16.gmra.mrb[0].mxu0 %v582
        %v730 = vpop.f32.mrb[0].mxu0
        %v731 = vadd.f32 0.0, %v730
        %v732 = vpop.f32.mrb[0].mxu0
        %v733 = vpop.f32.mrb[0].mxu0
        %v734 = vadd.f32 0.0, %v733
        %v735 = vpop.f32.mrb[0].mxu0
        %736 = vmatprep.mubr.bf16.mxu0 0
        %737 = vmatmul.mubr.bf16.gmra.mrb[0].mxu0 %v585
        %v738 = vpop.f32.mrb[0].mxu0
        %v739 = vadd.f32 0.0, %v738
        %v740 = vpop.f32.mrb[0].mxu0
        %v741 = vpop.f32.mrb[0].mxu0
        %v742 = vadd.f32 0.0, %v741
        %v743 = vpop.f32.mrb[0].mxu0
        %744 = vmatprep.mubr.bf16.mxu0 0
        %745 = vmatmul.mubr.bf16.gmra.mrb[0].mxu0 %v588
        %v746 = vpop.f32.mrb[0].mxu0
        %v747 = vadd.f32 0.0, %v746
        %v748 = vpop.f32.mrb[0].mxu0
        %v749 = vpop.f32.mrb[0].mxu0
        %v750 = vadd.f32 0.0, %v749
        %v751 = vpop.f32.mrb[0].mxu0
        %752 = vmatprep.mubr.bf16.mxu0 0
        %753 = vmatmul.mubr.bf16.gmra.mrb[0].mxu0 %v591
        %v754 = vpop.f32.mrb[0].mxu0
        %v755 = vadd.f32 0.0, %v754
        %v756 = vpop.f32.mrb[0].mxu0
        %v757 = vpop.f32.mrb[0].mxu0
        %v758 = vadd.f32 0.0, %v757
        %v759 = vpop.f32.mrb[0].mxu0
        %760 = vdwg.mxu0
        %vm761 = vcmask 130048
        %762 = vst.msk [vmem:[#allocation6] sm:$0xff] %vm761, %v635
        %763 = vst.msk [vmem:[#allocation6 + $0x8] sm:$0xff] %vm761, %v638
        %764 = vst.msk [vmem:[#allocation6 + $0x10] sm:$0xff] %vm761, %v643
        %765 = vst.msk [vmem:[#allocation6 + $0x18] sm:$0xff] %vm761, %v646
        %766 = vst.msk [vmem:[#allocation6 + $0x20] sm:$0xff] %vm761, %v651
        %767 = vst.msk [vmem:[#allocation6 + $0x28] sm:$0xff] %vm761, %v654
        %768 = vst.msk [vmem:[#allocation6 + $0x30] sm:$0xff] %vm761, %v659
        %769 = vst.msk [vmem:[#allocation6 + $0x38] sm:$0xff] %vm761, %v662
        %770 = vst.msk [vmem:[#allocation6 + $0x40] sm:$0xff] %vm761, %v667
        %771 = vst.msk [vmem:[#allocation6 + $0x48] sm:$0xff] %vm761, %v670
        %772 = vst.msk [vmem:[#allocation6 + $0x50] sm:$0xff] %vm761, %v675
        %773 = vst.msk [vmem:[#allocation6 + $0x58] sm:$0xff] %vm761, %v678
        %774 = vst.msk [vmem:[#allocation6 + $0x60] sm:$0xff] %vm761, %v683
        %775 = vst.msk [vmem:[#allocation6 + $0x68] sm:$0xff] %vm761, %v686
        %776 = vst.msk [vmem:[#allocation6 + $0x70] sm:$0xff] %vm761, %v691
        %777 = vst.msk [vmem:[#allocation6 + $0x78] sm:$0xff] %vm761, %v694
        %778 = vst.msk [vmem:[#allocation6 + $0x80] sm:$0xff] %vm761, %v699
        %779 = vst.msk [vmem:[#allocation6 + $0x88] sm:$0xff] %vm761, %v702
        %780 = vst.msk [vmem:[#allocation6 + $0x90] sm:$0xff] %vm761, %v707
        %781 = vst.msk [vmem:[#allocation6 + $0x98] sm:$0xff] %vm761, %v710
        %782 = vst.msk [vmem:[#allocation6 + $0xa0] sm:$0xff] %vm761, %v715
        %783 = vst.msk [vmem:[#allocation6 + $0xa8] sm:$0xff] %vm761, %v718
        %784 = vst.msk [vmem:[#allocation6 + $0xb0] sm:$0xff] %vm761, %v723
        %785 = vst.msk [vmem:[#allocation6 + $0xb8] sm:$0xff] %vm761, %v726
        %786 = vst.msk [vmem:[#allocation6 + $0xc0] sm:$0xff] %vm761, %v731
        %787 = vst.msk [vmem:[#allocation6 + $0xc8] sm:$0xff] %vm761, %v734
        %788 = vst.msk [vmem:[#allocation6 + $0xd0] sm:$0xff] %vm761, %v739
        %789 = vst.msk [vmem:[#allocation6 + $0xd8] sm:$0xff] %vm761, %v742
        %790 = vst.msk [vmem:[#allocation6 + $0xe0] sm:$0xff] %vm761, %v747
        %791 = vst.msk [vmem:[#allocation6 + $0xe8] sm:$0xff] %vm761, %v750
        %792 = vst.msk [vmem:[#allocation6 + $0xf0] sm:$0xff] %vm761, %v755
        %793 = vst.msk [vmem:[#allocation6 + $0xf8] sm:$0xff] %vm761, %v758
        %v794 = vld [vmem:[#allocation2 + $0x1] sm:$0xff]
        %v795 = vld [vmem:[#allocation2 + $0x9] sm:$0xff]
        %v796 = vld [vmem:[#allocation2 + $0x19] sm:$0xff]
        %v797 = vld [vmem:[#allocation2 + $0x21] sm:$0xff]
        %v798 = vld [vmem:[#allocation2 + $0x31] sm:$0xff]
        %v799 = vld [vmem:[#allocation2 + $0x39] sm:$0xff]
        %v800 = vld [vmem:[#allocation2 + $0x49] sm:$0xff]
        %v801 = vld [vmem:[#allocation2 + $0x51] sm:$0xff]
        %v802 = vld [vmem:[#allocation2 + $0x61] sm:$0xff]
        %v803 = vld [vmem:[#allocation2 + $0x69] sm:$0xff]
        %v804 = vld [vmem:[#allocation2 + $0x79] sm:$0xff]
        %v805 = vld [vmem:[#allocation2 + $0x81] sm:$0xff]
        %v806 = vld [vmem:[#allocation2 + $0x91] sm:$0xff]
        %v807 = vld [vmem:[#allocation2 + $0x99] sm:$0xff]
        %v808 = vld [vmem:[#allocation2 + $0xa9] sm:$0xff]
        %v809 = vld [vmem:[#allocation2 + $0xb1] sm:$0xff]
        %v810 = vld [vmem:[#allocation2 + $0xc1] sm:$0xff]
        %v811 = vld [vmem:[#allocation2 + $0xc9] sm:$0xff]
        %v812 = vld [vmem:[#allocation2 + $0xd9] sm:$0xff]
        %v813 = vld [vmem:[#allocation2 + $0xe1] sm:$0xff]
        %v814 = vld [vmem:[#allocation2 + $0xf1] sm:$0xff]
        %v815 = vld [vmem:[#allocation2 + $0xf9] sm:$0xff]
        %v816 = vld [vmem:[#allocation2 + $0x109] sm:$0xff]
        %v817 = vld [vmem:[#allocation2 + $0x111] sm:$0xff]
        %v818 = vld [vmem:[#allocation2 + $0x121] sm:$0xff]
        %v819 = vld [vmem:[#allocation2 + $0x129] sm:$0xff]
        %v820 = vld [vmem:[#allocation2 + $0x139] sm:$0xff]
        %v821 = vld [vmem:[#allocation2 + $0x141] sm:$0xff]
        %v822 = vld [vmem:[#allocation2 + $0x151] sm:$0xff]
        %v823 = vld [vmem:[#allocation2 + $0x159] sm:$0xff]
        %v824 = vld [vmem:[#allocation2 + $0x169] sm:$0xff]
        %v825 = vld [vmem:[#allocation2 + $0x171] sm:$0xff]
        %v826 = vpack.c.bf16 %v795, %v794
        %v827 = vpack.c.bf16 %v797, %v796
        %v828 = vpack.c.bf16 %v799, %v798
        %v829 = vpack.c.bf16 %v801, %v800
        %v830 = vpack.c.bf16 %v803, %v802
        %v831 = vpack.c.bf16 %v805, %v804
        %v832 = vpack.c.bf16 %v807, %v806
        %v833 = vpack.c.bf16 %v809, %v808
        %v834 = vpack.c.bf16 %v811, %v810
        %v835 = vpack.c.bf16 %v813, %v812
        %v836 = vpack.c.bf16 %v815, %v814
        %v837 = vpack.c.bf16 %v817, %v816
        %v838 = vpack.c.bf16 %v819, %v818
        %v839 = vpack.c.bf16 %v821, %v820
        %v840 = vpack.c.bf16 %v823, %v822
        %v841 = vpack.c.bf16 %v825, %v824
        %s842 = scalar_lea.vmem %s1, 2
        %v843 = vld [vmem:[%s842] sm:$0x3]
        %v845 = vsel %vm417, %v826, 0
        %v848 = vsel %vm417, %v827, 0
        %v851 = vsel %vm417, %v828, 0
        %v854 = vsel %vm417, %v829, 0
        %v857 = vsel %vm417, %v830, 0
        %v860 = vsel %vm417, %v831, 0
        %v863 = vsel %vm417, %v832, 0
        %v866 = vsel %vm417, %v833, 0
        %v869 = vsel %vm417, %v834, 0
        %v872 = vsel %vm417, %v835, 0
        %v875 = vsel %vm417, %v836, 0
        %v878 = vsel %vm417, %v837, 0
        %v881 = vsel %vm417, %v838, 0
        %v884 = vsel %vm417, %v839, 0
        %v887 = vsel %vm417, %v840, 0
        %v890 = vsel %vm417, %v841, 0
        %v893 = vand.u32 %v843, %v596
        %895 = vmatprep.subr.bf16.mxu0 0
        %896 = vmatpush1.bf16.msra.mxu0 %v893
        %897 = vmatprep.subr.bf16.mxu0 0
        %898 = vmatpush1.bf16.msra.mxu0 0
        %899 = vmatprep.subr.bf16.mxu0 0
        %900 = vmatpush1.bf16.msra.mxu0 0
        %901 = vmatprep.subr.bf16.mxu0 0
        %902 = vmatpush1.bf16.msra.mxu0 0
        %903 = vmatprep.subr.bf16.mxu0 0
        %904 = vmatpush1.bf16.msra.mxu0 0
        %905 = vmatprep.subr.bf16.mxu0 0
        %906 = vmatpush1.bf16.msra.mxu0 0
        %907 = vmatprep.subr.bf16.mxu0 0
        %908 = vmatpush1.bf16.msra.mxu0 0
        %909 = vmatprep.subr.bf16.mxu0 0
        %910 = vmatpush1.bf16.msra.mxu0 0
        %911 = vmatprep.subr.bf16.mxu0 0
        %912 = vmatpush1.bf16.msra.mxu0 0
        %913 = vmatprep.subr.bf16.mxu0 0
        %914 = vmatpush1.bf16.msra.mxu0 0
        %915 = vmatprep.subr.bf16.mxu0 0
        %916 = vmatpush1.bf16.msra.mxu0 0
        %917 = vmatprep.subr.bf16.mxu0 0
        %918 = vmatpush1.bf16.msra.mxu0 0
        %919 = vmatprep.subr.bf16.mxu0 0
        %920 = vmatpush1.bf16.msra.mxu0 0
        %921 = vmatprep.subr.bf16.mxu0 0
        %922 = vmatpush1.bf16.msra.mxu0 0
        %923 = vmatprep.subr.bf16.mxu0 0
        %924 = vmatpush1.bf16.msra.mxu0 0
        %925 = vmatprep.subr.bf16.mxu0 0
        %926 = vmatpush1.bf16.msra.mxu0 0
        %927 = vmatprep.mubr.bf16.mxu0 0
        %928 = vmatmul.mubr.bf16.gmra.mrb[0].mxu0 %v845
        %v929 = vpop.f32.mrb[0].mxu0
        %v930 = vadd.f32 0.0, %v929
        %v931 = vpop.f32.mrb[0].mxu0
        %v932 = vpop.f32.mrb[0].mxu0
        %v933 = vadd.f32 0.0, %v932
        %v934 = vpop.f32.mrb[0].mxu0
        %935 = vmatprep.mubr.bf16.mxu0 0
        %936 = vmatmul.mubr.bf16.gmra.mrb[0].mxu0 %v848
        %v937 = vpop.f32.mrb[0].mxu0
        %v938 = vadd.f32 0.0, %v937
        %v939 = vpop.f32.mrb[0].mxu0
        %v940 = vpop.f32.mrb[0].mxu0
        %v941 = vadd.f32 0.0, %v940
        %v942 = vpop.f32.mrb[0].mxu0
        %943 = vmatprep.mubr.bf16.mxu0 0
        %944 = vmatmul.mubr.bf16.gmra.mrb[0].mxu0 %v851
        %v945 = vpop.f32.mrb[0].mxu0
        %v946 = vadd.f32 0.0, %v945
        %v947 = vpop.f32.mrb[0].mxu0
        %v948 = vpop.f32.mrb[0].mxu0
        %v949 = vadd.f32 0.0, %v948
        %v950 = vpop.f32.mrb[0].mxu0
        %951 = vmatprep.mubr.bf16.mxu0 0
        %952 = vmatmul.mubr.bf16.gmra.mrb[0].mxu0 %v854
        %v953 = vpop.f32.mrb[0].mxu0
        %v954 = vadd.f32 0.0, %v953
        %v955 = vpop.f32.mrb[0].mxu0
        %v956 = vpop.f32.mrb[0].mxu0
        %v957 = vadd.f32 0.0, %v956
        %v958 = vpop.f32.mrb[0].mxu0
        %959 = vmatprep.mubr.bf16.mxu0 0
        %960 = vmatmul.mubr.bf16.gmra.mrb[0].mxu0 %v857
        %v961 = vpop.f32.mrb[0].mxu0
        %v962 = vadd.f32 0.0, %v961
        %v963 = vpop.f32.mrb[0].mxu0
        %v964 = vpop.f32.mrb[0].mxu0
        %v965 = vadd.f32 0.0, %v964
        %v966 = vpop.f32.mrb[0].mxu0
        %967 = vmatprep.mubr.bf16.mxu0 0
        %968 = vmatmul.mubr.bf16.gmra.mrb[0].mxu0 %v860
        %v969 = vpop.f32.mrb[0].mxu0
        %v970 = vadd.f32 0.0, %v969
        %v971 = vpop.f32.mrb[0].mxu0
        %v972 = vpop.f32.mrb[0].mxu0
        %v973 = vadd.f32 0.0, %v972
        %v974 = vpop.f32.mrb[0].mxu0
        %975 = vmatprep.mubr.bf16.mxu0 0
        %976 = vmatmul.mubr.bf16.gmra.mrb[0].mxu0 %v863
        %v977 = vpop.f32.mrb[0].mxu0
        %v978 = vadd.f32 0.0, %v977
        %v979 = vpop.f32.mrb[0].mxu0
        %v980 = vpop.f32.mrb[0].mxu0
        %v981 = vadd.f32 0.0, %v980
        %v982 = vpop.f32.mrb[0].mxu0
        %983 = vmatprep.mubr.bf16.mxu0 0
        %984 = vmatmul.mubr.bf16.gmra.mrb[0].mxu0 %v866
        %v985 = vpop.f32.mrb[0].mxu0
        %v986 = vadd.f32 0.0, %v985
        %v987 = vpop.f32.mrb[0].mxu0
        %v988 = vpop.f32.mrb[0].mxu0
        %v989 = vadd.f32 0.0, %v988
        %v990 = vpop.f32.mrb[0].mxu0
        %991 = vmatprep.mubr.bf16.mxu0 0
        %992 = vmatmul.mubr.bf16.gmra.mrb[0].mxu0 %v869
        %v993 = vpop.f32.mrb[0].mxu0
        %v994 = vadd.f32 0.0, %v993
        %v995 = vpop.f32.mrb[0].mxu0
        %v996 = vpop.f32.mrb[0].mxu0
        %v997 = vadd.f32 0.0, %v996
        %v998 = vpop.f32.mrb[0].mxu0
        %999 = vmatprep.mubr.bf16.mxu0 0
        %1000 = vmatmul.mubr.bf16.gmra.mrb[0].mxu0 %v872
        %v1001 = vpop.f32.mrb[0].mxu0
        %v1002 = vadd.f32 0.0, %v1001
        %v1003 = vpop.f32.mrb[0].mxu0
        %v1004 = vpop.f32.mrb[0].mxu0
        %v1005 = vadd.f32 0.0, %v1004
        %v1006 = vpop.f32.mrb[0].mxu0
        %1007 = vmatprep.mubr.bf16.mxu0 0
        %1008 = vmatmul.mubr.bf16.gmra.mrb[0].mxu0 %v875
        %v1009 = vpop.f32.mrb[0].mxu0
        %v1010 = vadd.f32 0.0, %v1009
        %v1011 = vpop.f32.mrb[0].mxu0
        %v1012 = vpop.f32.mrb[0].mxu0
        %v1013 = vadd.f32 0.0, %v1012
        %v1014 = vpop.f32.mrb[0].mxu0
        %1015 = vmatprep.mubr.bf16.mxu0 0
        %1016 = vmatmul.mubr.bf16.gmra.mrb[0].mxu0 %v878
        %v1017 = vpop.f32.mrb[0].mxu0
        %v1018 = vadd.f32 0.0, %v1017
        %v1019 = vpop.f32.mrb[0].mxu0
        %v1020 = vpop.f32.mrb[0].mxu0
        %v1021 = vadd.f32 0.0, %v1020
        %v1022 = vpop.f32.mrb[0].mxu0
        %1023 = vmatprep.mubr.bf16.mxu0 0
        %1024 = vmatmul.mubr.bf16.gmra.mrb[0].mxu0 %v881
        %v1025 = vpop.f32.mrb[0].mxu0
        %v1026 = vadd.f32 0.0, %v1025
        %v1027 = vpop.f32.mrb[0].mxu0
        %v1028 = vpop.f32.mrb[0].mxu0
        %v1029 = vadd.f32 0.0, %v1028
        %v1030 = vpop.f32.mrb[0].mxu0
        %1031 = vmatprep.mubr.bf16.mxu0 0
        %1032 = vmatmul.mubr.bf16.gmra.mrb[0].mxu0 %v884
        %v1033 = vpop.f32.mrb[0].mxu0
        %v1034 = vadd.f32 0.0, %v1033
        %v1035 = vpop.f32.mrb[0].mxu0
        %v1036 = vpop.f32.mrb[0].mxu0
        %v1037 = vadd.f32 0.0, %v1036
        %v1038 = vpop.f32.mrb[0].mxu0
        %1039 = vmatprep.mubr.bf16.mxu0 0
        %1040 = vmatmul.mubr.bf16.gmra.mrb[0].mxu0 %v887
        %v1041 = vpop.f32.mrb[0].mxu0
        %v1042 = vadd.f32 0.0, %v1041
        %v1043 = vpop.f32.mrb[0].mxu0
        %v1044 = vpop.f32.mrb[0].mxu0
        %v1045 = vadd.f32 0.0, %v1044
        %v1046 = vpop.f32.mrb[0].mxu0
        %1047 = vmatprep.mubr.bf16.mxu0 0
        %1048 = vmatmul.mubr.bf16.gmra.mrb[0].mxu0 %v890
        %v1049 = vpop.f32.mrb[0].mxu0
        %v1050 = vadd.f32 0.0, %v1049
        %v1051 = vpop.f32.mrb[0].mxu0
        %v1052 = vpop.f32.mrb[0].mxu0
        %v1053 = vadd.f32 0.0, %v1052
        %v1054 = vpop.f32.mrb[0].mxu0
        %1055 = vdwg.mxu0
        %v1056 = vld [vmem:[#allocation6] sm:$0xff]
        %v1057 = vld [vmem:[#allocation6 + $0x8] sm:$0xff]
        %v1058 = vld [vmem:[#allocation6 + $0x10] sm:$0xff]
        %v1059 = vld [vmem:[#allocation6 + $0x18] sm:$0xff]
        %v1060 = vld [vmem:[#allocation6 + $0x20] sm:$0xff]
        %v1061 = vld [vmem:[#allocation6 + $0x28] sm:$0xff]
        %v1062 = vld [vmem:[#allocation6 + $0x30] sm:$0xff]
        %v1063 = vld [vmem:[#allocation6 + $0x38] sm:$0xff]
        %v1064 = vld [vmem:[#allocation6 + $0x40] sm:$0xff]
        %v1065 = vld [vmem:[#allocation6 + $0x48] sm:$0xff]
        %v1066 = vld [vmem:[#allocation6 + $0x50] sm:$0xff]
        %v1067 = vld [vmem:[#allocation6 + $0x58] sm:$0xff]
        %v1068 = vld [vmem:[#allocation6 + $0x60] sm:$0xff]
        %v1069 = vld [vmem:[#allocation6 + $0x68] sm:$0xff]
        %v1070 = vld [vmem:[#allocation6 + $0x70] sm:$0xff]
        %v1071 = vld [vmem:[#allocation6 + $0x78] sm:$0xff]
        %v1072 = vld [vmem:[#allocation6 + $0x80] sm:$0xff]
        %v1073 = vld [vmem:[#allocation6 + $0x88] sm:$0xff]
        %v1074 = vld [vmem:[#allocation6 + $0x90] sm:$0xff]
        %v1075 = vld [vmem:[#allocation6 + $0x98] sm:$0xff]
        %v1076 = vld [vmem:[#allocation6 + $0xa0] sm:$0xff]
        %v1077 = vld [vmem:[#allocation6 + $0xa8] sm:$0xff]
        %v1078 = vld [vmem:[#allocation6 + $0xb0] sm:$0xff]
        %v1079 = vld [vmem:[#allocation6 + $0xb8] sm:$0xff]
        %v1080 = vld [vmem:[#allocation6 + $0xc0] sm:$0xff]
        %v1081 = vld [vmem:[#allocation6 + $0xc8] sm:$0xff]
        %v1082 = vld [vmem:[#allocation6 + $0xd0] sm:$0xff]
        %v1083 = vld [vmem:[#allocation6 + $0xd8] sm:$0xff]
        %v1084 = vld [vmem:[#allocation6 + $0xe0] sm:$0xff]
        %v1085 = vld [vmem:[#allocation6 + $0xe8] sm:$0xff]
        %v1086 = vld [vmem:[#allocation6 + $0xf0] sm:$0xff]
        %v1087 = vld [vmem:[#allocation6 + $0xf8] sm:$0xff]
        %v1088 = vadd.f32 %v1056, %v930
        %v1089 = vadd.f32 %v1057, %v933
        %v1090 = vadd.f32 %v1058, %v938
        %v1091 = vadd.f32 %v1059, %v941
        %v1092 = vadd.f32 %v1060, %v946
        %v1093 = vadd.f32 %v1061, %v949
        %v1094 = vadd.f32 %v1062, %v954
        %v1095 = vadd.f32 %v1063, %v957
        %v1096 = vadd.f32 %v1064, %v962
        %v1097 = vadd.f32 %v1065, %v965
        %v1098 = vadd.f32 %v1066, %v970
        %v1099 = vadd.f32 %v1067, %v973
        %v1100 = vadd.f32 %v1068, %v978
        %v1101 = vadd.f32 %v1069, %v981
        %v1102 = vadd.f32 %v1070, %v986
        %v1103 = vadd.f32 %v1071, %v989
        %v1104 = vadd.f32 %v1072, %v994
        %v1105 = vadd.f32 %v1073, %v997
        %v1106 = vadd.f32 %v1074, %v1002
        %v1107 = vadd.f32 %v1075, %v1005
        %v1108 = vadd.f32 %v1076, %v1010
        %v1109 = vadd.f32 %v1077, %v1013
        %v1110 = vadd.f32 %v1078, %v1018
        %v1111 = vadd.f32 %v1079, %v1021
        %v1112 = vadd.f32 %v1080, %v1026
        %v1113 = vadd.f32 %v1081, %v1029
        %v1114 = vadd.f32 %v1082, %v1034
        %v1115 = vadd.f32 %v1083, %v1037
        %v1116 = vadd.f32 %v1084, %v1042
        %v1117 = vadd.f32 %v1085, %v1045
        %v1118 = vadd.f32 %v1086, %v1050
        %v1119 = vadd.f32 %v1087, %v1053
        %1120 = vst.msk [vmem:[#allocation6] sm:$0xff] %vm761, %v1088
        %1121 = vst.msk [vmem:[#allocation6 + $0x8] sm:$0xff] %vm761, %v1089
        %1122 = vst.msk [vmem:[#allocation6 + $0x10] sm:$0xff] %vm761, %v1090
        %1123 = vst.msk [vmem:[#allocation6 + $0x18] sm:$0xff] %vm761, %v1091
        %1124 = vst.msk [vmem:[#allocation6 + $0x20] sm:$0xff] %vm761, %v1092
        %1125 = vst.msk [vmem:[#allocation6 + $0x28] sm:$0xff] %vm761, %v1093
        %1126 = vst.msk [vmem:[#allocation6 + $0x30] sm:$0xff] %vm761, %v1094
        %1127 = vst.msk [vmem:[#allocation6 + $0x38] sm:$0xff] %vm761, %v1095
        %1128 = vst.msk [vmem:[#allocation6 + $0x40] sm:$0xff] %vm761, %v1096
        %1129 = vst.msk [vmem:[#allocation6 + $0x48] sm:$0xff] %vm761, %v1097
        %1130 = vst.msk [vmem:[#allocation6 + $0x50] sm:$0xff] %vm761, %v1098
        %1131 = vst.msk [vmem:[#allocation6 + $0x58] sm:$0xff] %vm761, %v1099
        %1132 = vst.msk [vmem:[#allocation6 + $0x60] sm:$0xff] %vm761, %v1100
        %1133 = vst.msk [vmem:[#allocation6 + $0x68] sm:$0xff] %vm761, %v1101
        %1134 = vst.msk [vmem:[#allocation6 + $0x70] sm:$0xff] %vm761, %v1102
        %1135 = vst.msk [vmem:[#allocation6 + $0x78] sm:$0xff] %vm761, %v1103
        %1136 = vst.msk [vmem:[#allocation6 + $0x80] sm:$0xff] %vm761, %v1104
        %1137 = vst.msk [vmem:[#allocation6 + $0x88] sm:$0xff] %vm761, %v1105
        %1138 = vst.msk [vmem:[#allocation6 + $0x90] sm:$0xff] %vm761, %v1106
        %1139 = vst.msk [vmem:[#allocation6 + $0x98] sm:$0xff] %vm761, %v1107
        %1140 = vst.msk [vmem:[#allocation6 + $0xa0] sm:$0xff] %vm761, %v1108
        %1141 = vst.msk [vmem:[#allocation6 + $0xa8] sm:$0xff] %vm761, %v1109
        %1142 = vst.msk [vmem:[#allocation6 + $0xb0] sm:$0xff] %vm761, %v1110
        %1143 = vst.msk [vmem:[#allocation6 + $0xb8] sm:$0xff] %vm761, %v1111
        %1144 = vst.msk [vmem:[#allocation6 + $0xc0] sm:$0xff] %vm761, %v1112
        %1145 = vst.msk [vmem:[#allocation6 + $0xc8] sm:$0xff] %vm761, %v1113
        %1146 = vst.msk [vmem:[#allocation6 + $0xd0] sm:$0xff] %vm761, %v1114
        %1147 = vst.msk [vmem:[#allocation6 + $0xd8] sm:$0xff] %vm761, %v1115
        %1148 = vst.msk [vmem:[#allocation6 + $0xe0] sm:$0xff] %vm761, %v1116
        %1149 = vst.msk [vmem:[#allocation6 + $0xe8] sm:$0xff] %vm761, %v1117
        %1150 = vst.msk [vmem:[#allocation6 + $0xf0] sm:$0xff] %vm761, %v1118
        %1151 = vst.msk [vmem:[#allocation6 + $0xf8] sm:$0xff] %vm761, %v1119
        %v1152 = vld [vmem:[#allocation2 + $0x2] sm:$0xff]
        %v1153 = vld [vmem:[#allocation2 + $0xa] sm:$0xff]
        %v1154 = vld [vmem:[#allocation2 + $0x1a] sm:$0xff]
        %v1155 = vld [vmem:[#allocation2 + $0x22] sm:$0xff]
        %v1156 = vld [vmem:[#allocation2 + $0x32] sm:$0xff]
        %v1157 = vld [vmem:[#allocation2 + $0x3a] sm:$0xff]
        %v1158 = vld [vmem:[#allocation2 + $0x4a] sm:$0xff]
        %v1159 = vld [vmem:[#allocation2 + $0x52] sm:$0xff]
        %v1160 = vld [vmem:[#allocation2 + $0x62] sm:$0xff]
        %v1161 = vld [vmem:[#allocation2 + $0x6a] sm:$0xff]
        %v1162 = vld [vmem:[#allocation2 + $0x7a] sm:$0xff]
        %v1163 = vld [vmem:[#allocation2 + $0x82] sm:$0xff]
        %v1164 = vld [vmem:[#allocation2 + $0x92] sm:$0xff]
        %v1165 = vld [vmem:[#allocation2 + $0x9a] sm:$0xff]
        %v1166 = vld [vmem:[#allocation2 + $0xaa] sm:$0xff]
        %v1167 = vld [vmem:[#allocation2 + $0xb2] sm:$0xff]
        %v1168 = vld [vmem:[#allocation2 + $0xc2] sm:$0xff]
        %v1169 = vld [vmem:[#allocation2 + $0xca] sm:$0xff]
        %v1170 = vld [vmem:[#allocation2 + $0xda] sm:$0xff]
        %v1171 = vld [vmem:[#allocation2 + $0xe2] sm:$0xff]
        %v1172 = vld [vmem:[#allocation2 + $0xf2] sm:$0xff]
        %v1173 = vld [vmem:[#allocation2 + $0xfa] sm:$0xff]
        %v1174 = vld [vmem:[#allocation2 + $0x10a] sm:$0xff]
        %v1175 = vld [vmem:[#allocation2 + $0x112] sm:$0xff]
        %v1176 = vld [vmem:[#allocation2 + $0x122] sm:$0xff]
        %v1177 = vld [vmem:[#allocation2 + $0x12a] sm:$0xff]
        %v1178 = vld [vmem:[#allocation2 + $0x13a] sm:$0xff]
        %v1179 = vld [vmem:[#allocation2 + $0x142] sm:$0xff]
        %v1180 = vld [vmem:[#allocation2 + $0x152] sm:$0xff]
        %v1181 = vld [vmem:[#allocation2 + $0x15a] sm:$0xff]
        %v1182 = vld [vmem:[#allocation2 + $0x16a] sm:$0xff]
        %v1183 = vld [vmem:[#allocation2 + $0x172] sm:$0xff]
        %v1184 = vpack.c.bf16 %v1153, %v1152
        %v1185 = vpack.c.bf16 %v1155, %v1154
        %v1186 = vpack.c.bf16 %v1157, %v1156
        %v1187 = vpack.c.bf16 %v1159, %v1158
        %v1188 = vpack.c.bf16 %v1161, %v1160
        %v1189 = vpack.c.bf16 %v1163, %v1162
        %v1190 = vpack.c.bf16 %v1165, %v1164
        %v1191 = vpack.c.bf16 %v1167, %v1166
        %v1192 = vpack.c.bf16 %v1169, %v1168
        %v1193 = vpack.c.bf16 %v1171, %v1170
        %v1194 = vpack.c.bf16 %v1173, %v1172
        %v1195 = vpack.c.bf16 %v1175, %v1174
        %v1196 = vpack.c.bf16 %v1177, %v1176
        %v1197 = vpack.c.bf16 %v1179, %v1178
        %v1198 = vpack.c.bf16 %v1181, %v1180
        %v1199 = vpack.c.bf16 %v1183, %v1182
        %s1200 = scalar_lea.vmem %s1, 4
        %v1201 = vld [vmem:[%s1200] sm:$0x3]
        %v1203 = vsel %vm417, %v1184, 0
        %v1206 = vsel %vm417, %v1185, 0
        %v1209 = vsel %vm417, %v1186, 0
        %v1212 = vsel %vm417, %v1187, 0
        %v1215 = vsel %vm417, %v1188, 0
        %v1218 = vsel %vm417, %v1189, 0
        %v1221 = vsel %vm417, %v1190, 0
        %v1224 = vsel %vm417, %v1191, 0
        %v1227 = vsel %vm417, %v1192, 0
        %v1230 = vsel %vm417, %v1193, 0
        %v1233 = vsel %vm417, %v1194, 0
        %v1236 = vsel %vm417, %v1195, 0
        %v1239 = vsel %vm417, %v1196, 0
        %v1242 = vsel %vm417, %v1197, 0
        %v1245 = vsel %vm417, %v1198, 0
        %v1248 = vsel %vm417, %v1199, 0
        %v1251 = vand.u32 %v1201, %v596
        %1253 = vmatprep.subr.bf16.mxu0 0
        %1254 = vmatpush1.bf16.msra.mxu0 %v1251
        %1255 = vmatprep.subr.bf16.mxu0 0
        %1256 = vmatpush1.bf16.msra.mxu0 0
        %1257 = vmatprep.subr.bf16.mxu0 0
        %1258 = vmatpush1.bf16.msra.mxu0 0
        %1259 = vmatprep.subr.bf16.mxu0 0
        %1260 = vmatpush1.bf16.msra.mxu0 0
        %1261 = vmatprep.subr.bf16.mxu0 0
        %1262 = vmatpush1.bf16.msra.mxu0 0
        %1263 = vmatprep.subr.bf16.mxu0 0
        %1264 = vmatpush1.bf16.msra.mxu0 0
        %1265 = vmatprep.subr.bf16.mxu0 0
        %1266 = vmatpush1.bf16.msra.mxu0 0
        %1267 = vmatprep.subr.bf16.mxu0 0
        %1268 = vmatpush1.bf16.msra.mxu0 0
        %1269 = vmatprep.subr.bf16.mxu0 0
        %1270 = vmatpush1.bf16.msra.mxu0 0
        %1271 = vmatprep.subr.bf16.mxu0 0
        %1272 = vmatpush1.bf16.msra.mxu0 0
        %1273 = vmatprep.subr.bf16.mxu0 0
        %1274 = vmatpush1.bf16.msra.mxu0 0
        %1275 = vmatprep.subr.bf16.mxu0 0
        %1276 = vmatpush1.bf16.msra.mxu0 0
        %1277 = vmatprep.subr.bf16.mxu0 0
        %1278 = vmatpush1.bf16.msra.mxu0 0
        %1279 = vmatprep.subr.bf16.mxu0 0
        %1280 = vmatpush1.bf16.msra.mxu0 0
        %1281 = vmatprep.subr.bf16.mxu0 0
        %1282 = vmatpush1.bf16.msra.mxu0 0
        %1283 = vmatprep.subr.bf16.mxu0 0
        %1284 = vmatpush1.bf16.msra.mxu0 0
        %1285 = vmatprep.mubr.bf16.mxu0 0
        %1286 = vmatmul.mubr.bf16.gmra.mrb[0].mxu0 %v1203
        %v1287 = vpop.f32.mrb[0].mxu0
        %v1288 = vadd.f32 0.0, %v1287
        %v1289 = vpop.f32.mrb[0].mxu0
        %v1290 = vpop.f32.mrb[0].mxu0
        %v1291 = vadd.f32 0.0, %v1290
        %v1292 = vpop.f32.mrb[0].mxu0
        %1293 = vmatprep.mubr.bf16.mxu0 0
        %1294 = vmatmul.mubr.bf16.gmra.mrb[0].mxu0 %v1206
        %v1295 = vpop.f32.mrb[0].mxu0
        %v1296 = vadd.f32 0.0, %v1295
        %v1297 = vpop.f32.mrb[0].mxu0
        %v1298 = vpop.f32.mrb[0].mxu0
        %v1299 = vadd.f32 0.0, %v1298
        %v1300 = vpop.f32.mrb[0].mxu0
        %1301 = vmatprep.mubr.bf16.mxu0 0
        %1302 = vmatmul.mubr.bf16.gmra.mrb[0].mxu0 %v1209
        %v1303 = vpop.f32.mrb[0].mxu0
        %v1304 = vadd.f32 0.0, %v1303
        %v1305 = vpop.f32.mrb[0].mxu0
        %v1306 = vpop.f32.mrb[0].mxu0
        %v1307 = vadd.f32 0.0, %v1306
        %v1308 = vpop.f32.mrb[0].mxu0
        %1309 = vmatprep.mubr.bf16.mxu0 0
        %1310 = vmatmul.mubr.bf16.gmra.mrb[0].mxu0 %v1212
        %v1311 = vpop.f32.mrb[0].mxu0
        %v1312 = vadd.f32 0.0, %v1311
        %v1313 = vpop.f32.mrb[0].mxu0
        %v1314 = vpop.f32.mrb[0].mxu0
        %v1315 = vadd.f32 0.0, %v1314
        %v1316 = vpop.f32.mrb[0].mxu0
        %1317 = vmatprep.mubr.bf16.mxu0 0
        %1318 = vmatmul.mubr.bf16.gmra.mrb[0].mxu0 %v1215
        %v1319 = vpop.f32.mrb[0].mxu0
        %v1320 = vadd.f32 0.0, %v1319
        %v1321 = vpop.f32.mrb[0].mxu0
        %v1322 = vpop.f32.mrb[0].mxu0
        %v1323 = vadd.f32 0.0, %v1322
        %v1324 = vpop.f32.mrb[0].mxu0
        %1325 = vmatprep.mubr.bf16.mxu0 0
        %1326 = vmatmul.mubr.bf16.gmra.mrb[0].mxu0 %v1218
        %v1327 = vpop.f32.mrb[0].mxu0
        %v1328 = vadd.f32 0.0, %v1327
        %v1329 = vpop.f32.mrb[0].mxu0
        %v1330 = vpop.f32.mrb[0].mxu0
        %v1331 = vadd.f32 0.0, %v1330
        %v1332 = vpop.f32.mrb[0].mxu0
        %1333 = vmatprep.mubr.bf16.mxu0 0
        %1334 = vmatmul.mubr.bf16.gmra.mrb[0].mxu0 %v1221
        %v1335 = vpop.f32.mrb[0].mxu0
        %v1336 = vadd.f32 0.0, %v1335
        %v1337 = vpop.f32.mrb[0].mxu0
        %v1338 = vpop.f32.mrb[0].mxu0
        %v1339 = vadd.f32 0.0, %v1338
        %v1340 = vpop.f32.mrb[0].mxu0
        %1341 = vmatprep.mubr.bf16.mxu0 0
        %1342 = vmatmul.mubr.bf16.gmra.mrb[0].mxu0 %v1224
        %v1343 = vpop.f32.mrb[0].mxu0
        %v1344 = vadd.f32 0.0, %v1343
        %v1345 = vpop.f32.mrb[0].mxu0
        %v1346 = vpop.f32.mrb[0].mxu0
        %v1347 = vadd.f32 0.0, %v1346
        %v1348 = vpop.f32.mrb[0].mxu0
        %1349 = vmatprep.mubr.bf16.mxu0 0
        %1350 = vmatmul.mubr.bf16.gmra.mrb[0].mxu0 %v1227
        %v1351 = vpop.f32.mrb[0].mxu0
        %v1352 = vadd.f32 0.0, %v1351
        %v1353 = vpop.f32.mrb[0].mxu0
        %v1354 = vpop.f32.mrb[0].mxu0
        %v1355 = vadd.f32 0.0, %v1354
        %v1356 = vpop.f32.mrb[0].mxu0
        %1357 = vmatprep.mubr.bf16.mxu0 0
        %1358 = vmatmul.mubr.bf16.gmra.mrb[0].mxu0 %v1230
        %v1359 = vpop.f32.mrb[0].mxu0
        %v1360 = vadd.f32 0.0, %v1359
        %v1361 = vpop.f32.mrb[0].mxu0
        %v1362 = vpop.f32.mrb[0].mxu0
        %v1363 = vadd.f32 0.0, %v1362
        %v1364 = vpop.f32.mrb[0].mxu0
        %1365 = vmatprep.mubr.bf16.mxu0 0
        %1366 = vmatmul.mubr.bf16.gmra.mrb[0].mxu0 %v1233
        %v1367 = vpop.f32.mrb[0].mxu0
        %v1368 = vadd.f32 0.0, %v1367
        %v1369 = vpop.f32.mrb[0].mxu0
        %v1370 = vpop.f32.mrb[0].mxu0
        %v1371 = vadd.f32 0.0, %v1370
        %v1372 = vpop.f32.mrb[0].mxu0
        %1373 = vmatprep.mubr.bf16.mxu0 0
        %1374 = vmatmul.mubr.bf16.gmra.mrb[0].mxu0 %v1236
        %v1375 = vpop.f32.mrb[0].mxu0
        %v1376 = vadd.f32 0.0, %v1375
        %v1377 = vpop.f32.mrb[0].mxu0
        %v1378 = vpop.f32.mrb[0].mxu0
        %v1379 = vadd.f32 0.0, %v1378
        %v1380 = vpop.f32.mrb[0].mxu0
        %1381 = vmatprep.mubr.bf16.mxu0 0
        %1382 = vmatmul.mubr.bf16.gmra.mrb[0].mxu0 %v1239
        %v1383 = vpop.f32.mrb[0].mxu0
        %v1384 = vadd.f32 0.0, %v1383
        %v1385 = vpop.f32.mrb[0].mxu0
        %v1386 = vpop.f32.mrb[0].mxu0
        %v1387 = vadd.f32 0.0, %v1386
        %v1388 = vpop.f32.mrb[0].mxu0
        %1389 = vmatprep.mubr.bf16.mxu0 0
        %1390 = vmatmul.mubr.bf16.gmra.mrb[0].mxu0 %v1242
        %v1391 = vpop.f32.mrb[0].mxu0
        %v1392 = vadd.f32 0.0, %v1391
        %v1393 = vpop.f32.mrb[0].mxu0
        %v1394 = vpop.f32.mrb[0].mxu0
        %v1395 = vadd.f32 0.0, %v1394
        %v1396 = vpop.f32.mrb[0].mxu0
        %1397 = vmatprep.mubr.bf16.mxu0 0
        %1398 = vmatmul.mubr.bf16.gmra.mrb[0].mxu0 %v1245
        %v1399 = vpop.f32.mrb[0].mxu0
        %v1400 = vadd.f32 0.0, %v1399
        %v1401 = vpop.f32.mrb[0].mxu0
        %v1402 = vpop.f32.mrb[0].mxu0
        %v1403 = vadd.f32 0.0, %v1402
        %v1404 = vpop.f32.mrb[0].mxu0
        %1405 = vmatprep.mubr.bf16.mxu0 0
        %1406 = vmatmul.mubr.bf16.gmra.mrb[0].mxu0 %v1248
        %v1407 = vpop.f32.mrb[0].mxu0
        %v1408 = vadd.f32 0.0, %v1407
        %v1409 = vpop.f32.mrb[0].mxu0
        %v1410 = vpop.f32.mrb[0].mxu0
        %v1411 = vadd.f32 0.0, %v1410
        %v1412 = vpop.f32.mrb[0].mxu0
        %1413 = vdwg.mxu0
        %v1414 = vld [vmem:[#allocation6] sm:$0xff]
        %v1415 = vld [vmem:[#allocation6 + $0x8] sm:$0xff]
        %v1416 = vld [vmem:[#allocation6 + $0x10] sm:$0xff]
        %v1417 = vld [vmem:[#allocation6 + $0x18] sm:$0xff]
        %v1418 = vld [vmem:[#allocation6 + $0x20] sm:$0xff]
        %v1419 = vld [vmem:[#allocation6 + $0x28] sm:$0xff]
        %v1420 = vld [vmem:[#allocation6 + $0x30] sm:$0xff]
        %v1421 = vld [vmem:[#allocation6 + $0x38] sm:$0xff]
        %v1422 = vld [vmem:[#allocation6 + $0x40] sm:$0xff]
        %v1423 = vld [vmem:[#allocation6 + $0x48] sm:$0xff]
        %v1424 = vld [vmem:[#allocation6 + $0x50] sm:$0xff]
        %v1425 = vld [vmem:[#allocation6 + $0x58] sm:$0xff]
        %v1426 = vld [vmem:[#allocation6 + $0x60] sm:$0xff]
        %v1427 = vld [vmem:[#allocation6 + $0x68] sm:$0xff]
        %v1428 = vld [vmem:[#allocation6 + $0x70] sm:$0xff]
        %v1429 = vld [vmem:[#allocation6 + $0x78] sm:$0xff]
        %v1430 = vld [vmem:[#allocation6 + $0x80] sm:$0xff]
        %v1431 = vld [vmem:[#allocation6 + $0x88] sm:$0xff]
        %v1432 = vld [vmem:[#allocation6 + $0x90] sm:$0xff]
        %v1433 = vld [vmem:[#allocation6 + $0x98] sm:$0xff]
        %v1434 = vld [vmem:[#allocation6 + $0xa0] sm:$0xff]
        %v1435 = vld [vmem:[#allocation6 + $0xa8] sm:$0xff]
        %v1436 = vld [vmem:[#allocation6 + $0xb0] sm:$0xff]
        %v1437 = vld [vmem:[#allocation6 + $0xb8] sm:$0xff]
        %v1438 = vld [vmem:[#allocation6 + $0xc0] sm:$0xff]
        %v1439 = vld [vmem:[#allocation6 + $0xc8] sm:$0xff]
        %v1440 = vld [vmem:[#allocation6 + $0xd0] sm:$0xff]
        %v1441 = vld [vmem:[#allocation6 + $0xd8] sm:$0xff]
        %v1442 = vld [vmem:[#allocation6 + $0xe0] sm:$0xff]
        %v1443 = vld [vmem:[#allocation6 + $0xe8] sm:$0xff]
        %v1444 = vld [vmem:[#allocation6 + $0xf0] sm:$0xff]
        %v1445 = vld [vmem:[#allocation6 + $0xf8] sm:$0xff]
        %v1446 = vadd.f32 %v1414, %v1288
        %v1447 = vadd.f32 %v1415, %v1291
        %v1448 = vadd.f32 %v1416, %v1296
        %v1449 = vadd.f32 %v1417, %v1299
        %v1450 = vadd.f32 %v1418, %v1304
        %v1451 = vadd.f32 %v1419, %v1307
        %v1452 = vadd.f32 %v1420, %v1312
        %v1453 = vadd.f32 %v1421, %v1315
        %v1454 = vadd.f32 %v1422, %v1320
        %v1455 = vadd.f32 %v1423, %v1323
        %v1456 = vadd.f32 %v1424, %v1328
        %v1457 = vadd.f32 %v1425, %v1331
        %v1458 = vadd.f32 %v1426, %v1336
        %v1459 = vadd.f32 %v1427, %v1339
        %v1460 = vadd.f32 %v1428, %v1344
        %v1461 = vadd.f32 %v1429, %v1347
        %v1462 = vadd.f32 %v1430, %v1352
        %v1463 = vadd.f32 %v1431, %v1355
        %v1464 = vadd.f32 %v1432, %v1360
        %v1465 = vadd.f32 %v1433, %v1363
        %v1466 = vadd.f32 %v1434, %v1368
        %v1467 = vadd.f32 %v1435, %v1371
        %v1468 = vadd.f32 %v1436, %v1376
        %v1469 = vadd.f32 %v1437, %v1379
        %v1470 = vadd.f32 %v1438, %v1384
        %v1471 = vadd.f32 %v1439, %v1387
        %v1472 = vadd.f32 %v1440, %v1392
        %v1473 = vadd.f32 %v1441, %v1395
        %v1474 = vadd.f32 %v1442, %v1400
        %v1475 = vadd.f32 %v1443, %v1403
        %v1476 = vadd.f32 %v1444, %v1408
        %v1477 = vadd.f32 %v1445, %v1411
        %1478 = vst.msk [vmem:[#allocation6] sm:$0xff] %vm761, %v1446
        %1479 = vst.msk [vmem:[#allocation6 + $0x8] sm:$0xff] %vm761, %v1447
        %1480 = vst.msk [vmem:[#allocation6 + $0x10] sm:$0xff] %vm761, %v1448
        %1481 = vst.msk [vmem:[#allocation6 + $0x18] sm:$0xff] %vm761, %v1449
        %1482 = vst.msk [vmem:[#allocation6 + $0x20] sm:$0xff] %vm761, %v1450
        %1483 = vst.msk [vmem:[#allocation6 + $0x28] sm:$0xff] %vm761, %v1451
        %1484 = vst.msk [vmem:[#allocation6 + $0x30] sm:$0xff] %vm761, %v1452
        %1485 = vst.msk [vmem:[#allocation6 + $0x38] sm:$0xff] %vm761, %v1453
        %1486 = vst.msk [vmem:[#allocation6 + $0x40] sm:$0xff] %vm761, %v1454
        %1487 = vst.msk [vmem:[#allocation6 + $0x48] sm:$0xff] %vm761, %v1455
        %1488 = vst.msk [vmem:[#allocation6 + $0x50] sm:$0xff] %vm761, %v1456
        %1489 = vst.msk [vmem:[#allocation6 + $0x58] sm:$0xff] %vm761, %v1457
        %1490 = vst.msk [vmem:[#allocation6 + $0x60] sm:$0xff] %vm761, %v1458
        %1491 = vst.msk [vmem:[#allocation6 + $0x68] sm:$0xff] %vm761, %v1459
        %1492 = vst.msk [vmem:[#allocation6 + $0x70] sm:$0xff] %vm761, %v1460
        %1493 = vst.msk [vmem:[#allocation6 + $0x78] sm:$0xff] %vm761, %v1461
        %1494 = vst.msk [vmem:[#allocation6 + $0x80] sm:$0xff] %vm761, %v1462
        %1495 = vst.msk [vmem:[#allocation6 + $0x88] sm:$0xff] %vm761, %v1463
        %1496 = vst.msk [vmem:[#allocation6 + $0x90] sm:$0xff] %vm761, %v1464
        %1497 = vst.msk [vmem:[#allocation6 + $0x98] sm:$0xff] %vm761, %v1465
        %1498 = vst.msk [vmem:[#allocation6 + $0xa0] sm:$0xff] %vm761, %v1466
        %1499 = vst.msk [vmem:[#allocation6 + $0xa8] sm:$0xff] %vm761, %v1467
        %1500 = vst.msk [vmem:[#allocation6 + $0xb0] sm:$0xff] %vm761, %v1468
        %1501 = vst.msk [vmem:[#allocation6 + $0xb8] sm:$0xff] %vm761, %v1469
        %1502 = vst.msk [vmem:[#allocation6 + $0xc0] sm:$0xff] %vm761, %v1470
        %1503 = vst.msk [vmem:[#allocation6 + $0xc8] sm:$0xff] %vm761, %v1471
        %1504 = vst.msk [vmem:[#allocation6 + $0xd0] sm:$0xff] %vm761, %v1472
        %1505 = vst.msk [vmem:[#allocation6 + $0xd8] sm:$0xff] %vm761, %v1473
        %1506 = vst.msk [vmem:[#allocation6 + $0xe0] sm:$0xff] %vm761, %v1474
        %1507 = vst.msk [vmem:[#allocation6 + $0xe8] sm:$0xff] %vm761, %v1475
        %1508 = vst.msk [vmem:[#allocation6 + $0xf0] sm:$0xff] %vm761, %v1476
        %1509 = vst.msk [vmem:[#allocation6 + $0xf8] sm:$0xff] %vm761, %v1477
        %v1510 = vld [vmem:[%s463] sm:$0xff]
        %v1511 = vld [vmem:[%s463 + $0x8] sm:$0xff]
        %v1512 = vld [vmem:[%s463 + $0x18] sm:$0xff]
        %v1513 = vld [vmem:[%s463 + $0x20] sm:$0xff]
        %v1514 = vld [vmem:[%s463 + $0x30] sm:$0xff]
        %v1515 = vld [vmem:[%s463 + $0x38] sm:$0xff]
        %v1516 = vld [vmem:[%s463 + $0x48] sm:$0xff]
        %v1517 = vld [vmem:[%s463 + $0x50] sm:$0xff]
        %v1518 = vld [vmem:[%s463 + $0x60] sm:$0xff]
        %v1519 = vld [vmem:[%s463 + $0x68] sm:$0xff]
        %v1520 = vld [vmem:[%s463 + $0x78] sm:$0xff]
        %v1521 = vld [vmem:[%s463 + $0x80] sm:$0xff]
        %v1522 = vld [vmem:[%s463 + $0x90] sm:$0xff]
        %v1523 = vld [vmem:[%s463 + $0x98] sm:$0xff]
        %v1524 = vld [vmem:[%s463 + $0xa8] sm:$0xff]
        %v1525 = vld [vmem:[%s463 + $0xb0] sm:$0xff]
        %v1526 = vld [vmem:[%s463 + $0xc0] sm:$0xff]
        %v1527 = vld [vmem:[%s463 + $0xc8] sm:$0xff]
        %v1528 = vld [vmem:[%s463 + $0xd8] sm:$0xff]
        %v1529 = vld [vmem:[%s463 + $0xe0] sm:$0xff]
        %v1530 = vld [vmem:[%s463 + $0xf0] sm:$0xff]
        %v1531 = vld [vmem:[%s463 + $0xf8] sm:$0xff]
        %v1532 = vld [vmem:[%s463 + $0x108] sm:$0xff]
        %v1533 = vld [vmem:[%s463 + $0x110] sm:$0xff]
        %v1534 = vld [vmem:[%s463 + $0x120] sm:$0xff]
        %v1535 = vld [vmem:[%s463 + $0x128] sm:$0xff]
        %v1536 = vld [vmem:[%s463 + $0x138] sm:$0xff]
        %v1537 = vld [vmem:[%s463 + $0x140] sm:$0xff]
        %v1538 = vld [vmem:[%s463 + $0x150] sm:$0xff]
        %v1539 = vld [vmem:[%s463 + $0x158] sm:$0xff]
        %v1540 = vld [vmem:[%s463 + $0x168] sm:$0xff]
        %v1541 = vld [vmem:[%s463 + $0x170] sm:$0xff]
        %v1542 = vpack.c.bf16 %v1511, %v1510
        %v1543 = vpack.c.bf16 %v1513, %v1512
        %v1544 = vpack.c.bf16 %v1515, %v1514
        %v1545 = vpack.c.bf16 %v1517, %v1516
        %v1546 = vpack.c.bf16 %v1519, %v1518
        %v1547 = vpack.c.bf16 %v1521, %v1520
        %v1548 = vpack.c.bf16 %v1523, %v1522
        %v1549 = vpack.c.bf16 %v1525, %v1524
        %v1550 = vpack.c.bf16 %v1527, %v1526
        %v1551 = vpack.c.bf16 %v1529, %v1528
        %v1552 = vpack.c.bf16 %v1531, %v1530
        %v1553 = vpack.c.bf16 %v1533, %v1532
        %v1554 = vpack.c.bf16 %v1535, %v1534
        %v1555 = vpack.c.bf16 %v1537, %v1536
        %v1556 = vpack.c.bf16 %v1539, %v1538
        %v1557 = vpack.c.bf16 %v1541, %v1540
        %s1558 = scalar_lea.vmem %s1, 6
        %v1559 = vld [vmem:[%s1558] sm:$0x3]
        %v1561 = vsel %vm417, %v1542, 0
        %v1564 = vsel %vm417, %v1543, 0
        %v1567 = vsel %vm417, %v1544, 0
        %v1570 = vsel %vm417, %v1545, 0
        %v1573 = vsel %vm417, %v1546, 0
        %v1576 = vsel %vm417, %v1547, 0
        %v1579 = vsel %vm417, %v1548, 0
        %v1582 = vsel %vm417, %v1549, 0
        %v1585 = vsel %vm417, %v1550, 0
        %v1588 = vsel %vm417, %v1551, 0
        %v1591 = vsel %vm417, %v1552, 0
        %v1594 = vsel %vm417, %v1553, 0
        %v1597 = vsel %vm417, %v1554, 0
        %v1600 = vsel %vm417, %v1555, 0
        %v1603 = vsel %vm417, %v1556, 0
        %v1606 = vsel %vm417, %v1557, 0
        %v1609 = vand.u32 %v1559, %v596
        %1611 = vmatprep.subr.bf16.mxu0 0
        %1612 = vmatpush1.bf16.msra.mxu0 %v1609
        %1613 = vmatprep.subr.bf16.mxu0 0
        %1614 = vmatpush1.bf16.msra.mxu0 0
        %1615 = vmatprep.subr.bf16.mxu0 0
        %1616 = vmatpush1.bf16.msra.mxu0 0
        %1617 = vmatprep.subr.bf16.mxu0 0
        %1618 = vmatpush1.bf16.msra.mxu0 0
        %1619 = vmatprep.subr.bf16.mxu0 0
        %1620 = vmatpush1.bf16.msra.mxu0 0
        %1621 = vmatprep.subr.bf16.mxu0 0
        %1622 = vmatpush1.bf16.msra.mxu0 0
        %1623 = vmatprep.subr.bf16.mxu0 0
        %1624 = vmatpush1.bf16.msra.mxu0 0
        %1625 = vmatprep.subr.bf16.mxu0 0
        %1626 = vmatpush1.bf16.msra.mxu0 0
        %1627 = vmatprep.subr.bf16.mxu0 0
        %1628 = vmatpush1.bf16.msra.mxu0 0
        %1629 = vmatprep.subr.bf16.mxu0 0
        %1630 = vmatpush1.bf16.msra.mxu0 0
        %1631 = vmatprep.subr.bf16.mxu0 0
        %1632 = vmatpush1.bf16.msra.mxu0 0
        %1633 = vmatprep.subr.bf16.mxu0 0
        %1634 = vmatpush1.bf16.msra.mxu0 0
        %1635 = vmatprep.subr.bf16.mxu0 0
        %1636 = vmatpush1.bf16.msra.mxu0 0
        %1637 = vmatprep.subr.bf16.mxu0 0
        %1638 = vmatpush1.bf16.msra.mxu0 0
        %1639 = vmatprep.subr.bf16.mxu0 0
        %1640 = vmatpush1.bf16.msra.mxu0 0
        %1641 = vmatprep.subr.bf16.mxu0 0
        %1642 = vmatpush1.bf16.msra.mxu0 0
        %1643 = vmatprep.mubr.bf16.mxu0 0
        %1644 = vmatmul.mubr.bf16.gmra.mrb[0].mxu0 %v1561
        %v1645 = vpop.f32.mrb[0].mxu0
        %v1646 = vadd.f32 0.0, %v1645
        %v1647 = vpop.f32.mrb[0].mxu0
        %v1648 = vpop.f32.mrb[0].mxu0
        %v1649 = vadd.f32 0.0, %v1648
        %v1650 = vpop.f32.mrb[0].mxu0
        %1651 = vmatprep.mubr.bf16.mxu0 0
        %1652 = vmatmul.mubr.bf16.gmra.mrb[0].mxu0 %v1564
        %v1653 = vpop.f32.mrb[0].mxu0
        %v1654 = vadd.f32 0.0, %v1653
        %v1655 = vpop.f32.mrb[0].mxu0
        %v1656 = vpop.f32.mrb[0].mxu0
        %v1657 = vadd.f32 0.0, %v1656
        %v1658 = vpop.f32.mrb[0].mxu0
        %1659 = vmatprep.mubr.bf16.mxu0 0
        %1660 = vmatmul.mubr.bf16.gmra.mrb[0].mxu0 %v1567
        %v1661 = vpop.f32.mrb[0].mxu0
        %v1662 = vadd.f32 0.0, %v1661
        %v1663 = vpop.f32.mrb[0].mxu0
        %v1664 = vpop.f32.mrb[0].mxu0
        %v1665 = vadd.f32 0.0, %v1664
        %v1666 = vpop.f32.mrb[0].mxu0
        %1667 = vmatprep.mubr.bf16.mxu0 0
        %1668 = vmatmul.mubr.bf16.gmra.mrb[0].mxu0 %v1570
        %v1669 = vpop.f32.mrb[0].mxu0
        %v1670 = vadd.f32 0.0, %v1669
        %v1671 = vpop.f32.mrb[0].mxu0
        %v1672 = vpop.f32.mrb[0].mxu0
        %v1673 = vadd.f32 0.0, %v1672
        %v1674 = vpop.f32.mrb[0].mxu0
        %1675 = vmatprep.mubr.bf16.mxu0 0
        %1676 = vmatmul.mubr.bf16.gmra.mrb[0].mxu0 %v1573
        %v1677 = vpop.f32.mrb[0].mxu0
        %v1678 = vadd.f32 0.0, %v1677
        %v1679 = vpop.f32.mrb[0].mxu0
        %v1680 = vpop.f32.mrb[0].mxu0
        %v1681 = vadd.f32 0.0, %v1680
        %v1682 = vpop.f32.mrb[0].mxu0
        %1683 = vmatprep.mubr.bf16.mxu0 0
        %1684 = vmatmul.mubr.bf16.gmra.mrb[0].mxu0 %v1576
        %v1685 = vpop.f32.mrb[0].mxu0
        %v1686 = vadd.f32 0.0, %v1685
        %v1687 = vpop.f32.mrb[0].mxu0
        %v1688 = vpop.f32.mrb[0].mxu0
        %v1689 = vadd.f32 0.0, %v1688
        %v1690 = vpop.f32.mrb[0].mxu0
        %1691 = vmatprep.mubr.bf16.mxu0 0
        %1692 = vmatmul.mubr.bf16.gmra.mrb[0].mxu0 %v1579
        %v1693 = vpop.f32.mrb[0].mxu0
        %v1694 = vadd.f32 0.0, %v1693
        %v1695 = vpop.f32.mrb[0].mxu0
        %v1696 = vpop.f32.mrb[0].mxu0
        %v1697 = vadd.f32 0.0, %v1696
        %v1698 = vpop.f32.mrb[0].mxu0
        %1699 = vmatprep.mubr.bf16.mxu0 0
        %1700 = vmatmul.mubr.bf16.gmra.mrb[0].mxu0 %v1582
        %v1701 = vpop.f32.mrb[0].mxu0
        %v1702 = vadd.f32 0.0, %v1701
        %v1703 = vpop.f32.mrb[0].mxu0
        %v1704 = vpop.f32.mrb[0].mxu0
        %v1705 = vadd.f32 0.0, %v1704
        %v1706 = vpop.f32.mrb[0].mxu0
        %1707 = vmatprep.mubr.bf16.mxu0 0
        %1708 = vmatmul.mubr.bf16.gmra.mrb[0].mxu0 %v1585
        %v1709 = vpop.f32.mrb[0].mxu0
        %v1710 = vadd.f32 0.0, %v1709
        %v1711 = vpop.f32.mrb[0].mxu0
        %v1712 = vpop.f32.mrb[0].mxu0
        %v1713 = vadd.f32 0.0, %v1712
        %v1714 = vpop.f32.mrb[0].mxu0
        %1715 = vmatprep.mubr.bf16.mxu0 0
        %1716 = vmatmul.mubr.bf16.gmra.mrb[0].mxu0 %v1588
        %v1717 = vpop.f32.mrb[0].mxu0
        %v1718 = vadd.f32 0.0, %v1717
        %v1719 = vpop.f32.mrb[0].mxu0
        %v1720 = vpop.f32.mrb[0].mxu0
        %v1721 = vadd.f32 0.0, %v1720
        %v1722 = vpop.f32.mrb[0].mxu0
        %1723 = vmatprep.mubr.bf16.mxu0 0
        %1724 = vmatmul.mubr.bf16.gmra.mrb[0].mxu0 %v1591
        %v1725 = vpop.f32.mrb[0].mxu0
        %v1726 = vadd.f32 0.0, %v1725
        %v1727 = vpop.f32.mrb[0].mxu0
        %v1728 = vpop.f32.mrb[0].mxu0
        %v1729 = vadd.f32 0.0, %v1728
        %v1730 = vpop.f32.mrb[0].mxu0
        %1731 = vmatprep.mubr.bf16.mxu0 0
        %1732 = vmatmul.mubr.bf16.gmra.mrb[0].mxu0 %v1594
        %v1733 = vpop.f32.mrb[0].mxu0
        %v1734 = vadd.f32 0.0, %v1733
        %v1735 = vpop.f32.mrb[0].mxu0
        %v1736 = vpop.f32.mrb[0].mxu0
        %v1737 = vadd.f32 0.0, %v1736
        %v1738 = vpop.f32.mrb[0].mxu0
        %1739 = vmatprep.mubr.bf16.mxu0 0
        %1740 = vmatmul.mubr.bf16.gmra.mrb[0].mxu0 %v1597
        %v1741 = vpop.f32.mrb[0].mxu0
        %v1742 = vadd.f32 0.0, %v1741
        %v1743 = vpop.f32.mrb[0].mxu0
        %v1744 = vpop.f32.mrb[0].mxu0
        %v1745 = vadd.f32 0.0, %v1744
        %v1746 = vpop.f32.mrb[0].mxu0
        %1747 = vmatprep.mubr.bf16.mxu0 0
        %1748 = vmatmul.mubr.bf16.gmra.mrb[0].mxu0 %v1600
        %v1749 = vpop.f32.mrb[0].mxu0
        %v1750 = vadd.f32 0.0, %v1749
        %v1751 = vpop.f32.mrb[0].mxu0
        %v1752 = vpop.f32.mrb[0].mxu0
        %v1753 = vadd.f32 0.0, %v1752
        %v1754 = vpop.f32.mrb[0].mxu0
        %1755 = vmatprep.mubr.bf16.mxu0 0
        %1756 = vmatmul.mubr.bf16.gmra.mrb[0].mxu0 %v1603
        %v1757 = vpop.f32.mrb[0].mxu0
        %v1758 = vadd.f32 0.0, %v1757
        %v1759 = vpop.f32.mrb[0].mxu0
        %v1760 = vpop.f32.mrb[0].mxu0
        %v1761 = vadd.f32 0.0, %v1760
        %v1762 = vpop.f32.mrb[0].mxu0
        %1763 = vmatprep.mubr.bf16.mxu0 0
        %1764 = vmatmul.mubr.bf16.gmra.mrb[0].mxu0 %v1606
        %v1765 = vpop.f32.mrb[0].mxu0
        %v1766 = vadd.f32 0.0, %v1765
        %v1767 = vpop.f32.mrb[0].mxu0
        %v1768 = vpop.f32.mrb[0].mxu0
        %v1769 = vadd.f32 0.0, %v1768
        %v1770 = vpop.f32.mrb[0].mxu0
        %1771 = vdwg.mxu0
        %v1772 = vld [vmem:[#allocation6] sm:$0xff]
        %v1773 = vld [vmem:[#allocation6 + $0x8] sm:$0xff]
        %v1774 = vld [vmem:[#allocation6 + $0x10] sm:$0xff]
        %v1775 = vld [vmem:[#allocation6 + $0x18] sm:$0xff]
        %v1776 = vld [vmem:[#allocation6 + $0x20] sm:$0xff]
        %v1777 = vld [vmem:[#allocation6 + $0x28] sm:$0xff]
        %v1778 = vld [vmem:[#allocation6 + $0x30] sm:$0xff]
        %v1779 = vld [vmem:[#allocation6 + $0x38] sm:$0xff]
        %v1780 = vld [vmem:[#allocation6 + $0x40] sm:$0xff]
        %v1781 = vld [vmem:[#allocation6 + $0x48] sm:$0xff]
        %v1782 = vld [vmem:[#allocation6 + $0x50] sm:$0xff]
        %v1783 = vld [vmem:[#allocation6 + $0x58] sm:$0xff]
        %v1784 = vld [vmem:[#allocation6 + $0x60] sm:$0xff]
        %v1785 = vld [vmem:[#allocation6 + $0x68] sm:$0xff]
        %v1786 = vld [vmem:[#allocation6 + $0x70] sm:$0xff]
        %v1787 = vld [vmem:[#allocation6 + $0x78] sm:$0xff]
        %v1788 = vld [vmem:[#allocation6 + $0x80] sm:$0xff]
        %v1789 = vld [vmem:[#allocation6 + $0x88] sm:$0xff]
        %v1790 = vld [vmem:[#allocation6 + $0x90] sm:$0xff]
        %v1791 = vld [vmem:[#allocation6 + $0x98] sm:$0xff]
        %v1792 = vld [vmem:[#allocation6 + $0xa0] sm:$0xff]
        %v1793 = vld [vmem:[#allocation6 + $0xa8] sm:$0xff]
        %v1794 = vld [vmem:[#allocation6 + $0xb0] sm:$0xff]
        %v1795 = vld [vmem:[#allocation6 + $0xb8] sm:$0xff]
        %v1796 = vld [vmem:[#allocation6 + $0xc0] sm:$0xff]
        %v1797 = vld [vmem:[#allocation6 + $0xc8] sm:$0xff]
        %v1798 = vld [vmem:[#allocation6 + $0xd0] sm:$0xff]
        %v1799 = vld [vmem:[#allocation6 + $0xd8] sm:$0xff]
        %v1800 = vld [vmem:[#allocation6 + $0xe0] sm:$0xff]
        %v1801 = vld [vmem:[#allocation6 + $0xe8] sm:$0xff]
        %v1802 = vld [vmem:[#allocation6 + $0xf0] sm:$0xff]
        %v1803 = vld [vmem:[#allocation6 + $0xf8] sm:$0xff]
        %v1804 = vadd.f32 %v1772, %v1646
        %v1805 = vadd.f32 %v1773, %v1649
        %v1806 = vadd.f32 %v1774, %v1654
        %v1807 = vadd.f32 %v1775, %v1657
        %v1808 = vadd.f32 %v1776, %v1662
        %v1809 = vadd.f32 %v1777, %v1665
        %v1810 = vadd.f32 %v1778, %v1670
        %v1811 = vadd.f32 %v1779, %v1673
        %v1812 = vadd.f32 %v1780, %v1678
        %v1813 = vadd.f32 %v1781, %v1681
        %v1814 = vadd.f32 %v1782, %v1686
        %v1815 = vadd.f32 %v1783, %v1689
        %v1816 = vadd.f32 %v1784, %v1694
        %v1817 = vadd.f32 %v1785, %v1697
        %v1818 = vadd.f32 %v1786, %v1702
        %v1819 = vadd.f32 %v1787, %v1705
        %v1820 = vadd.f32 %v1788, %v1710
        %v1821 = vadd.f32 %v1789, %v1713
        %v1822 = vadd.f32 %v1790, %v1718
        %v1823 = vadd.f32 %v1791, %v1721
        %v1824 = vadd.f32 %v1792, %v1726
        %v1825 = vadd.f32 %v1793, %v1729
        %v1826 = vadd.f32 %v1794, %v1734
        %v1827 = vadd.f32 %v1795, %v1737
        %v1828 = vadd.f32 %v1796, %v1742
        %v1829 = vadd.f32 %v1797, %v1745
        %v1830 = vadd.f32 %v1798, %v1750
        %v1831 = vadd.f32 %v1799, %v1753
        %v1832 = vadd.f32 %v1800, %v1758
        %v1833 = vadd.f32 %v1801, %v1761
        %v1834 = vadd.f32 %v1802, %v1766
        %v1835 = vadd.f32 %v1803, %v1769
        %1836 = vst.msk [vmem:[#allocation6] sm:$0xff] %vm761, %v1804
        %1837 = vst.msk [vmem:[#allocation6 + $0x8] sm:$0xff] %vm761, %v1805
        %1838 = vst.msk [vmem:[#allocation6 + $0x10] sm:$0xff] %vm761, %v1806
        %1839 = vst.msk [vmem:[#allocation6 + $0x18] sm:$0xff] %vm761, %v1807
        %1840 = vst.msk [vmem:[#allocation6 + $0x20] sm:$0xff] %vm761, %v1808
        %1841 = vst.msk [vmem:[#allocation6 + $0x28] sm:$0xff] %vm761, %v1809
        %1842 = vst.msk [vmem:[#allocation6 + $0x30] sm:$0xff] %vm761, %v1810
        %1843 = vst.msk [vmem:[#allocation6 + $0x38] sm:$0xff] %vm761, %v1811
        %1844 = vst.msk [vmem:[#allocation6 + $0x40] sm:$0xff] %vm761, %v1812
        %1845 = vst.msk [vmem:[#allocation6 + $0x48] sm:$0xff] %vm761, %v1813
        %1846 = vst.msk [vmem:[#allocation6 + $0x50] sm:$0xff] %vm761, %v1814
        %1847 = vst.msk [vmem:[#allocation6 + $0x58] sm:$0xff] %vm761, %v1815
        %1848 = vst.msk [vmem:[#allocation6 + $0x60] sm:$0xff] %vm761, %v1816
        %1849 = vst.msk [vmem:[#allocation6 + $0x68] sm:$0xff] %vm761, %v1817
        %1850 = vst.msk [vmem:[#allocation6 + $0x70] sm:$0xff] %vm761, %v1818
        %1851 = vst.msk [vmem:[#allocation6 + $0x78] sm:$0xff] %vm761, %v1819
        %1852 = vst.msk [vmem:[#allocation6 + $0x80] sm:$0xff] %vm761, %v1820
        %1853 = vst.msk [vmem:[#allocation6 + $0x88] sm:$0xff] %vm761, %v1821
        %1854 = vst.msk [vmem:[#allocation6 + $0x90] sm:$0xff] %vm761, %v1822
        %1855 = vst.msk [vmem:[#allocation6 + $0x98] sm:$0xff] %vm761, %v1823
        %1856 = vst.msk [vmem:[#allocation6 + $0xa0] sm:$0xff] %vm761, %v1824
        %1857 = vst.msk [vmem:[#allocation6 + $0xa8] sm:$0xff] %vm761, %v1825
        %1858 = vst.msk [vmem:[#allocation6 + $0xb0] sm:$0xff] %vm761, %v1826
        %1859 = vst.msk [vmem:[#allocation6 + $0xb8] sm:$0xff] %vm761, %v1827
        %1860 = vst.msk [vmem:[#allocation6 + $0xc0] sm:$0xff] %vm761, %v1828
        %1861 = vst.msk [vmem:[#allocation6 + $0xc8] sm:$0xff] %vm761, %v1829
        %1862 = vst.msk [vmem:[#allocation6 + $0xd0] sm:$0xff] %vm761, %v1830
        %1863 = vst.msk [vmem:[#allocation6 + $0xd8] sm:$0xff] %vm761, %v1831
        %1864 = vst.msk [vmem:[#allocation6 + $0xe0] sm:$0xff] %vm761, %v1832
        %1865 = vst.msk [vmem:[#allocation6 + $0xe8] sm:$0xff] %vm761, %v1833
        %1866 = vst.msk [vmem:[#allocation6 + $0xf0] sm:$0xff] %vm761, %v1834
        %1867 = vst.msk [vmem:[#allocation6 + $0xf8] sm:$0xff] %vm761, %v1835
        %v1868 = vld [vmem:[%s463 + $0x1] sm:$0xff]
        %v1869 = vld [vmem:[%s463 + $0x9] sm:$0xff]
        %v1870 = vld [vmem:[%s463 + $0x19] sm:$0xff]
        %v1871 = vld [vmem:[%s463 + $0x21] sm:$0xff]
        %v1872 = vld [vmem:[%s463 + $0x31] sm:$0xff]
        %v1873 = vld [vmem:[%s463 + $0x39] sm:$0xff]
        %v1874 = vld [vmem:[%s463 + $0x49] sm:$0xff]
        %v1875 = vld [vmem:[%s463 + $0x51] sm:$0xff]
        %v1876 = vld [vmem:[%s463 + $0x61] sm:$0xff]
        %v1877 = vld [vmem:[%s463 + $0x69] sm:$0xff]
        %v1878 = vld [vmem:[%s463 + $0x79] sm:$0xff]
        %v1879 = vld [vmem:[%s463 + $0x81] sm:$0xff]
        %v1880 = vld [vmem:[%s463 + $0x91] sm:$0xff]
        %v1881 = vld [vmem:[%s463 + $0x99] sm:$0xff]
        %v1882 = vld [vmem:[%s463 + $0xa9] sm:$0xff]
        %v1883 = vld [vmem:[%s463 + $0xb1] sm:$0xff]
        %v1884 = vld [vmem:[%s463 + $0xc1] sm:$0xff]
        %v1885 = vld [vmem:[%s463 + $0xc9] sm:$0xff]
        %v1886 = vld [vmem:[%s463 + $0xd9] sm:$0xff]
        %v1887 = vld [vmem:[%s463 + $0xe1] sm:$0xff]
        %v1888 = vld [vmem:[%s463 + $0xf1] sm:$0xff]
        %v1889 = vld [vmem:[%s463 + $0xf9] sm:$0xff]
        %v1890 = vld [vmem:[%s463 + $0x109] sm:$0xff]
        %v1891 = vld [vmem:[%s463 + $0x111] sm:$0xff]
        %v1892 = vld [vmem:[%s463 + $0x121] sm:$0xff]
        %v1893 = vld [vmem:[%s463 + $0x129] sm:$0xff]
        %v1894 = vld [vmem:[%s463 + $0x139] sm:$0xff]
        %v1895 = vld [vmem:[%s463 + $0x141] sm:$0xff]
        %v1896 = vld [vmem:[%s463 + $0x151] sm:$0xff]
        %v1897 = vld [vmem:[%s463 + $0x159] sm:$0xff]
        %v1898 = vld [vmem:[%s463 + $0x169] sm:$0xff]
        %v1899 = vld [vmem:[%s463 + $0x171] sm:$0xff]
        %v1900 = vpack.c.bf16 %v1869, %v1868
        %v1901 = vpack.c.bf16 %v1871, %v1870
        %v1902 = vpack.c.bf16 %v1873, %v1872
        %v1903 = vpack.c.bf16 %v1875, %v1874
        %v1904 = vpack.c.bf16 %v1877, %v1876
        %v1905 = vpack.c.bf16 %v1879, %v1878
        %v1906 = vpack.c.bf16 %v1881, %v1880
        %v1907 = vpack.c.bf16 %v1883, %v1882
        %v1908 = vpack.c.bf16 %v1885, %v1884
        %v1909 = vpack.c.bf16 %v1887, %v1886
        %v1910 = vpack.c.bf16 %v1889, %v1888
        %v1911 = vpack.c.bf16 %v1891, %v1890
        %v1912 = vpack.c.bf16 %v1893, %v1892
        %v1913 = vpack.c.bf16 %v1895, %v1894
        %v1914 = vpack.c.bf16 %v1897, %v1896
        %v1915 = vpack.c.bf16 %v1899, %v1898
        %s1916 = scalar_lea.vmem %s1, 8
        %v1917 = vld [vmem:[%s1916] sm:$0x3]
        %v1919 = vsel %vm417, %v1900, 0
        %v1922 = vsel %vm417, %v1901, 0
        %v1925 = vsel %vm417, %v1902, 0
        %v1928 = vsel %vm417, %v1903, 0
        %v1931 = vsel %vm417, %v1904, 0
        %v1934 = vsel %vm417, %v1905, 0
        %v1937 = vsel %vm417, %v1906, 0
        %v1940 = vsel %vm417, %v1907, 0
        %v1943 = vsel %vm417, %v1908, 0
        %v1946 = vsel %vm417, %v1909, 0
        %v1949 = vsel %vm417, %v1910, 0
        %v1952 = vsel %vm417, %v1911, 0
        %v1955 = vsel %vm417, %v1912, 0
        %v1958 = vsel %vm417, %v1913, 0
        %v1961 = vsel %vm417, %v1914, 0
        %v1964 = vsel %vm417, %v1915, 0
        %v1967 = vand.u32 %v1917, %v596
        %1969 = vmatprep.subr.bf16.mxu0 0
        %1970 = vmatpush1.bf16.msra.mxu0 %v1967
        %1971 = vmatprep.subr.bf16.mxu0 0
        %1972 = vmatpush1.bf16.msra.mxu0 0
        %1973 = vmatprep.subr.bf16.mxu0 0
        %1974 = vmatpush1.bf16.msra.mxu0 0
        %1975 = vmatprep.subr.bf16.mxu0 0
        %1976 = vmatpush1.bf16.msra.mxu0 0
        %1977 = vmatprep.subr.bf16.mxu0 0
        %1978 = vmatpush1.bf16.msra.mxu0 0
        %1979 = vmatprep.subr.bf16.mxu0 0
        %1980 = vmatpush1.bf16.msra.mxu0 0
        %1981 = vmatprep.subr.bf16.mxu0 0
        %1982 = vmatpush1.bf16.msra.mxu0 0
        %1983 = vmatprep.subr.bf16.mxu0 0
        %1984 = vmatpush1.bf16.msra.mxu0 0
        %1985 = vmatprep.subr.bf16.mxu0 0
        %1986 = vmatpush1.bf16.msra.mxu0 0
        %1987 = vmatprep.subr.bf16.mxu0 0
        %1988 = vmatpush1.bf16.msra.mxu0 0
        %1989 = vmatprep.subr.bf16.mxu0 0
        %1990 = vmatpush1.bf16.msra.mxu0 0
        %1991 = vmatprep.subr.bf16.mxu0 0
        %1992 = vmatpush1.bf16.msra.mxu0 0
        %1993 = vmatprep.subr.bf16.mxu0 0
        %1994 = vmatpush1.bf16.msra.mxu0 0
        %1995 = vmatprep.subr.bf16.mxu0 0
        %1996 = vmatpush1.bf16.msra.mxu0 0
        %1997 = vmatprep.subr.bf16.mxu0 0
        %1998 = vmatpush1.bf16.msra.mxu0 0
        %1999 = vmatprep.subr.bf16.mxu0 0
        %2000 = vmatpush1.bf16.msra.mxu0 0
        %2001 = vmatprep.mubr.bf16.mxu0 0
        %2002 = vmatmul.mubr.bf16.gmra.mrb[0].mxu0 %v1919
        %v2003 = vpop.f32.mrb[0].mxu0
        %v2004 = vadd.f32 0.0, %v2003
        %v2005 = vpop.f32.mrb[0].mxu0
        %v2006 = vpop.f32.mrb[0].mxu0
        %v2007 = vadd.f32 0.0, %v2006
        %v2008 = vpop.f32.mrb[0].mxu0
        %2009 = vmatprep.mubr.bf16.mxu0 0
        %2010 = vmatmul.mubr.bf16.gmra.mrb[0].mxu0 %v1922
        %v2011 = vpop.f32.mrb[0].mxu0
        %v2012 = vadd.f32 0.0, %v2011
        %v2013 = vpop.f32.mrb[0].mxu0
        %v2014 = vpop.f32.mrb[0].mxu0
        %v2015 = vadd.f32 0.0, %v2014
        %v2016 = vpop.f32.mrb[0].mxu0
        %2017 = vmatprep.mubr.bf16.mxu0 0
        %2018 = vmatmul.mubr.bf16.gmra.mrb[0].mxu0 %v1925
        %v2019 = vpop.f32.mrb[0].mxu0
        %v2020 = vadd.f32 0.0, %v2019
        %v2021 = vpop.f32.mrb[0].mxu0
        %v2022 = vpop.f32.mrb[0].mxu0
        %v2023 = vadd.f32 0.0, %v2022
        %v2024 = vpop.f32.mrb[0].mxu0
        %2025 = vmatprep.mubr.bf16.mxu0 0
        %2026 = vmatmul.mubr.bf16.gmra.mrb[0].mxu0 %v1928
        %v2027 = vpop.f32.mrb[0].mxu0
        %v2028 = vadd.f32 0.0, %v2027
        %v2029 = vpop.f32.mrb[0].mxu0
        %v2030 = vpop.f32.mrb[0].mxu0
        %v2031 = vadd.f32 0.0, %v2030
        %v2032 = vpop.f32.mrb[0].mxu0
        %2033 = vmatprep.mubr.bf16.mxu0 0
        %2034 = vmatmul.mubr.bf16.gmra.mrb[0].mxu0 %v1931
        %v2035 = vpop.f32.mrb[0].mxu0
        %v2036 = vadd.f32 0.0, %v2035
        %v2037 = vpop.f32.mrb[0].mxu0
        %v2038 = vpop.f32.mrb[0].mxu0
        %v2039 = vadd.f32 0.0, %v2038
        %v2040 = vpop.f32.mrb[0].mxu0
        %2041 = vmatprep.mubr.bf16.mxu0 0
        %2042 = vmatmul.mubr.bf16.gmra.mrb[0].mxu0 %v1934
        %v2043 = vpop.f32.mrb[0].mxu0
        %v2044 = vadd.f32 0.0, %v2043
        %v2045 = vpop.f32.mrb[0].mxu0
        %v2046 = vpop.f32.mrb[0].mxu0
        %v2047 = vadd.f32 0.0, %v2046
        %v2048 = vpop.f32.mrb[0].mxu0
        %2049 = vmatprep.mubr.bf16.mxu0 0
        %2050 = vmatmul.mubr.bf16.gmra.mrb[0].mxu0 %v1937
        %v2051 = vpop.f32.mrb[0].mxu0
        %v2052 = vadd.f32 0.0, %v2051
        %v2053 = vpop.f32.mrb[0].mxu0
        %v2054 = vpop.f32.mrb[0].mxu0
        %v2055 = vadd.f32 0.0, %v2054
        %v2056 = vpop.f32.mrb[0].mxu0
        %2057 = vmatprep.mubr.bf16.mxu0 0
        %2058 = vmatmul.mubr.bf16.gmra.mrb[0].mxu0 %v1940
        %v2059 = vpop.f32.mrb[0].mxu0
        %v2060 = vadd.f32 0.0, %v2059
        %v2061 = vpop.f32.mrb[0].mxu0
        %v2062 = vpop.f32.mrb[0].mxu0
        %v2063 = vadd.f32 0.0, %v2062
        %v2064 = vpop.f32.mrb[0].mxu0
        %2065 = vmatprep.mubr.bf16.mxu0 0
        %2066 = vmatmul.mubr.bf16.gmra.mrb[0].mxu0 %v1943
        %v2067 = vpop.f32.mrb[0].mxu0
        %v2068 = vadd.f32 0.0, %v2067
        %v2069 = vpop.f32.mrb[0].mxu0
        %v2070 = vpop.f32.mrb[0].mxu0
        %v2071 = vadd.f32 0.0, %v2070
        %v2072 = vpop.f32.mrb[0].mxu0
        %2073 = vmatprep.mubr.bf16.mxu0 0
        %2074 = vmatmul.mubr.bf16.gmra.mrb[0].mxu0 %v1946
        %v2075 = vpop.f32.mrb[0].mxu0
        %v2076 = vadd.f32 0.0, %v2075
        %v2077 = vpop.f32.mrb[0].mxu0
        %v2078 = vpop.f32.mrb[0].mxu0
        %v2079 = vadd.f32 0.0, %v2078
        %v2080 = vpop.f32.mrb[0].mxu0
        %2081 = vmatprep.mubr.bf16.mxu0 0
        %2082 = vmatmul.mubr.bf16.gmra.mrb[0].mxu0 %v1949
        %v2083 = vpop.f32.mrb[0].mxu0
        %v2084 = vadd.f32 0.0, %v2083
        %v2085 = vpop.f32.mrb[0].mxu0
        %v2086 = vpop.f32.mrb[0].mxu0
        %v2087 = vadd.f32 0.0, %v2086
        %v2088 = vpop.f32.mrb[0].mxu0
        %2089 = vmatprep.mubr.bf16.mxu0 0
        %2090 = vmatmul.mubr.bf16.gmra.mrb[0].mxu0 %v1952
        %v2091 = vpop.f32.mrb[0].mxu0
        %v2092 = vadd.f32 0.0, %v2091
        %v2093 = vpop.f32.mrb[0].mxu0
        %v2094 = vpop.f32.mrb[0].mxu0
        %v2095 = vadd.f32 0.0, %v2094
        %v2096 = vpop.f32.mrb[0].mxu0
        %2097 = vmatprep.mubr.bf16.mxu0 0
        %2098 = vmatmul.mubr.bf16.gmra.mrb[0].mxu0 %v1955
        %v2099 = vpop.f32.mrb[0].mxu0
        %v2100 = vadd.f32 0.0, %v2099
        %v2101 = vpop.f32.mrb[0].mxu0
        %v2102 = vpop.f32.mrb[0].mxu0
        %v2103 = vadd.f32 0.0, %v2102
        %v2104 = vpop.f32.mrb[0].mxu0
        %2105 = vmatprep.mubr.bf16.mxu0 0
        %2106 = vmatmul.mubr.bf16.gmra.mrb[0].mxu0 %v1958
        %v2107 = vpop.f32.mrb[0].mxu0
        %v2108 = vadd.f32 0.0, %v2107
        %v2109 = vpop.f32.mrb[0].mxu0
        %v2110 = vpop.f32.mrb[0].mxu0
        %v2111 = vadd.f32 0.0, %v2110
        %v2112 = vpop.f32.mrb[0].mxu0
        %2113 = vmatprep.mubr.bf16.mxu0 0
        %2114 = vmatmul.mubr.bf16.gmra.mrb[0].mxu0 %v1961
        %v2115 = vpop.f32.mrb[0].mxu0
        %v2116 = vadd.f32 0.0, %v2115
        %v2117 = vpop.f32.mrb[0].mxu0
        %v2118 = vpop.f32.mrb[0].mxu0
        %v2119 = vadd.f32 0.0, %v2118
        %v2120 = vpop.f32.mrb[0].mxu0
        %2121 = vmatprep.mubr.bf16.mxu0 0
        %2122 = vmatmul.mubr.bf16.gmra.mrb[0].mxu0 %v1964
        %v2123 = vpop.f32.mrb[0].mxu0
        %v2124 = vadd.f32 0.0, %v2123
        %v2125 = vpop.f32.mrb[0].mxu0
        %v2126 = vpop.f32.mrb[0].mxu0
        %v2127 = vadd.f32 0.0, %v2126
        %v2128 = vpop.f32.mrb[0].mxu0
        %2129 = vdwg.mxu0
        %v2130 = vld [vmem:[#allocation6] sm:$0xff]
        %v2131 = vld [vmem:[#allocation6 + $0x8] sm:$0xff]
        %v2132 = vld [vmem:[#allocation6 + $0x10] sm:$0xff]
        %v2133 = vld [vmem:[#allocation6 + $0x18] sm:$0xff]
        %v2134 = vld [vmem:[#allocation6 + $0x20] sm:$0xff]
        %v2135 = vld [vmem:[#allocation6 + $0x28] sm:$0xff]
        %v2136 = vld [vmem:[#allocation6 + $0x30] sm:$0xff]
        %v2137 = vld [vmem:[#allocation6 + $0x38] sm:$0xff]
        %v2138 = vld [vmem:[#allocation6 + $0x40] sm:$0xff]
        %v2139 = vld [vmem:[#allocation6 + $0x48] sm:$0xff]
        %v2140 = vld [vmem:[#allocation6 + $0x50] sm:$0xff]
        %v2141 = vld [vmem:[#allocation6 + $0x58] sm:$0xff]
        %v2142 = vld [vmem:[#allocation6 + $0x60] sm:$0xff]
        %v2143 = vld [vmem:[#allocation6 + $0x68] sm:$0xff]
        %v2144 = vld [vmem:[#allocation6 + $0x70] sm:$0xff]
        %v2145 = vld [vmem:[#allocation6 + $0x78] sm:$0xff]
        %v2146 = vld [vmem:[#allocation6 + $0x80] sm:$0xff]
        %v2147 = vld [vmem:[#allocation6 + $0x88] sm:$0xff]
        %v2148 = vld [vmem:[#allocation6 + $0x90] sm:$0xff]
        %v2149 = vld [vmem:[#allocation6 + $0x98] sm:$0xff]
        %v2150 = vld [vmem:[#allocation6 + $0xa0] sm:$0xff]
        %v2151 = vld [vmem:[#allocation6 + $0xa8] sm:$0xff]
        %v2152 = vld [vmem:[#allocation6 + $0xb0] sm:$0xff]
        %v2153 = vld [vmem:[#allocation6 + $0xb8] sm:$0xff]
        %v2154 = vld [vmem:[#allocation6 + $0xc0] sm:$0xff]
        %v2155 = vld [vmem:[#allocation6 + $0xc8] sm:$0xff]
        %v2156 = vld [vmem:[#allocation6 + $0xd0] sm:$0xff]
        %v2157 = vld [vmem:[#allocation6 + $0xd8] sm:$0xff]
        %v2158 = vld [vmem:[#allocation6 + $0xe0] sm:$0xff]
        %v2159 = vld [vmem:[#allocation6 + $0xe8] sm:$0xff]
        %v2160 = vld [vmem:[#allocation6 + $0xf0] sm:$0xff]
        %v2161 = vld [vmem:[#allocation6 + $0xf8] sm:$0xff]
        %v2162 = vadd.f32 %v2130, %v2004
        %v2163 = vadd.f32 %v2131, %v2007
        %v2164 = vadd.f32 %v2132, %v2012
        %v2165 = vadd.f32 %v2133, %v2015
        %v2166 = vadd.f32 %v2134, %v2020
        %v2167 = vadd.f32 %v2135, %v2023
        %v2168 = vadd.f32 %v2136, %v2028
        %v2169 = vadd.f32 %v2137, %v2031
        %v2170 = vadd.f32 %v2138, %v2036
        %v2171 = vadd.f32 %v2139, %v2039
        %v2172 = vadd.f32 %v2140, %v2044
        %v2173 = vadd.f32 %v2141, %v2047
        %v2174 = vadd.f32 %v2142, %v2052
        %v2175 = vadd.f32 %v2143, %v2055
        %v2176 = vadd.f32 %v2144, %v2060
        %v2177 = vadd.f32 %v2145, %v2063
        %v2178 = vadd.f32 %v2146, %v2068
        %v2179 = vadd.f32 %v2147, %v2071
        %v2180 = vadd.f32 %v2148, %v2076
        %v2181 = vadd.f32 %v2149, %v2079
        %v2182 = vadd.f32 %v2150, %v2084
        %v2183 = vadd.f32 %v2151, %v2087
        %v2184 = vadd.f32 %v2152, %v2092
        %v2185 = vadd.f32 %v2153, %v2095
        %v2186 = vadd.f32 %v2154, %v2100
        %v2187 = vadd.f32 %v2155, %v2103
        %v2188 = vadd.f32 %v2156, %v2108
        %v2189 = vadd.f32 %v2157, %v2111
        %v2190 = vadd.f32 %v2158, %v2116
        %v2191 = vadd.f32 %v2159, %v2119
        %v2192 = vadd.f32 %v2160, %v2124
        %v2193 = vadd.f32 %v2161, %v2127
        %2194 = vst.msk [vmem:[#allocation6] sm:$0xff] %vm761, %v2162
        %2195 = vst.msk [vmem:[#allocation6 + $0x8] sm:$0xff] %vm761, %v2163
        %2196 = vst.msk [vmem:[#allocation6 + $0x10] sm:$0xff] %vm761, %v2164
        %2197 = vst.msk [vmem:[#allocation6 + $0x18] sm:$0xff] %vm761, %v2165
        %2198 = vst.msk [vmem:[#allocation6 + $0x20] sm:$0xff] %vm761, %v2166
        %2199 = vst.msk [vmem:[#allocation6 + $0x28] sm:$0xff] %vm761, %v2167
        %2200 = vst.msk [vmem:[#allocation6 + $0x30] sm:$0xff] %vm761, %v2168
        %2201 = vst.msk [vmem:[#allocation6 + $0x38] sm:$0xff] %vm761, %v2169
        %2202 = vst.msk [vmem:[#allocation6 + $0x40] sm:$0xff] %vm761, %v2170
        %2203 = vst.msk [vmem:[#allocation6 + $0x48] sm:$0xff] %vm761, %v2171
        %2204 = vst.msk [vmem:[#allocation6 + $0x50] sm:$0xff] %vm761, %v2172
        %2205 = vst.msk [vmem:[#allocation6 + $0x58] sm:$0xff] %vm761, %v2173
        %2206 = vst.msk [vmem:[#allocation6 + $0x60] sm:$0xff] %vm761, %v2174
        %2207 = vst.msk [vmem:[#allocation6 + $0x68] sm:$0xff] %vm761, %v2175
        %2208 = vst.msk [vmem:[#allocation6 + $0x70] sm:$0xff] %vm761, %v2176
        %2209 = vst.msk [vmem:[#allocation6 + $0x78] sm:$0xff] %vm761, %v2177
        %2210 = vst.msk [vmem:[#allocation6 + $0x80] sm:$0xff] %vm761, %v2178
        %2211 = vst.msk [vmem:[#allocation6 + $0x88] sm:$0xff] %vm761, %v2179
        %2212 = vst.msk [vmem:[#allocation6 + $0x90] sm:$0xff] %vm761, %v2180
        %2213 = vst.msk [vmem:[#allocation6 + $0x98] sm:$0xff] %vm761, %v2181
        %2214 = vst.msk [vmem:[#allocation6 + $0xa0] sm:$0xff] %vm761, %v2182
        %2215 = vst.msk [vmem:[#allocation6 + $0xa8] sm:$0xff] %vm761, %v2183
        %2216 = vst.msk [vmem:[#allocation6 + $0xb0] sm:$0xff] %vm761, %v2184
        %2217 = vst.msk [vmem:[#allocation6 + $0xb8] sm:$0xff] %vm761, %v2185
        %2218 = vst.msk [vmem:[#allocation6 + $0xc0] sm:$0xff] %vm761, %v2186
        %2219 = vst.msk [vmem:[#allocation6 + $0xc8] sm:$0xff] %vm761, %v2187
        %2220 = vst.msk [vmem:[#allocation6 + $0xd0] sm:$0xff] %vm761, %v2188
        %2221 = vst.msk [vmem:[#allocation6 + $0xd8] sm:$0xff] %vm761, %v2189
        %2222 = vst.msk [vmem:[#allocation6 + $0xe0] sm:$0xff] %vm761, %v2190
        %2223 = vst.msk [vmem:[#allocation6 + $0xe8] sm:$0xff] %vm761, %v2191
        %2224 = vst.msk [vmem:[#allocation6 + $0xf0] sm:$0xff] %vm761, %v2192
        %2225 = vst.msk [vmem:[#allocation6 + $0xf8] sm:$0xff] %vm761, %v2193
        %v2226 = vld [vmem:[%s463 + $0x2] sm:$0xff]
        %v2227 = vld [vmem:[%s463 + $0xa] sm:$0xff]
        %v2228 = vld [vmem:[%s463 + $0x1a] sm:$0xff]
        %v2229 = vld [vmem:[%s463 + $0x22] sm:$0xff]
        %v2230 = vld [vmem:[%s463 + $0x32] sm:$0xff]
        %v2231 = vld [vmem:[%s463 + $0x3a] sm:$0xff]
        %v2232 = vld [vmem:[%s463 + $0x4a] sm:$0xff]
        %v2233 = vld [vmem:[%s463 + $0x52] sm:$0xff]
        %v2234 = vld [vmem:[%s463 + $0x62] sm:$0xff]
        %v2235 = vld [vmem:[%s463 + $0x6a] sm:$0xff]
        %v2236 = vld [vmem:[%s463 + $0x7a] sm:$0xff]
        %v2237 = vld [vmem:[%s463 + $0x82] sm:$0xff]
        %v2238 = vld [vmem:[%s463 + $0x92] sm:$0xff]
        %v2239 = vld [vmem:[%s463 + $0x9a] sm:$0xff]
        %v2240 = vld [vmem:[%s463 + $0xaa] sm:$0xff]
        %v2241 = vld [vmem:[%s463 + $0xb2] sm:$0xff]
        %v2242 = vld [vmem:[%s463 + $0xc2] sm:$0xff]
        %v2243 = vld [vmem:[%s463 + $0xca] sm:$0xff]
        %v2244 = vld [vmem:[%s463 + $0xda] sm:$0xff]
        %v2245 = vld [vmem:[%s463 + $0xe2] sm:$0xff]
        %v2246 = vld [vmem:[%s463 + $0xf2] sm:$0xff]
        %v2247 = vld [vmem:[%s463 + $0xfa] sm:$0xff]
        %v2248 = vld [vmem:[%s463 + $0x10a] sm:$0xff]
        %v2249 = vld [vmem:[%s463 + $0x112] sm:$0xff]
        %v2250 = vld [vmem:[%s463 + $0x122] sm:$0xff]
        %v2251 = vld [vmem:[%s463 + $0x12a] sm:$0xff]
        %v2252 = vld [vmem:[%s463 + $0x13a] sm:$0xff]
        %v2253 = vld [vmem:[%s463 + $0x142] sm:$0xff]
        %v2254 = vld [vmem:[%s463 + $0x152] sm:$0xff]
        %v2255 = vld [vmem:[%s463 + $0x15a] sm:$0xff]
        %v2256 = vld [vmem:[%s463 + $0x16a] sm:$0xff]
        %v2257 = vld [vmem:[%s463 + $0x172] sm:$0xff]
        %v2258 = vpack.c.bf16 %v2227, %v2226
        %v2259 = vpack.c.bf16 %v2229, %v2228
        %v2260 = vpack.c.bf16 %v2231, %v2230
        %v2261 = vpack.c.bf16 %v2233, %v2232
        %v2262 = vpack.c.bf16 %v2235, %v2234
        %v2263 = vpack.c.bf16 %v2237, %v2236
        %v2264 = vpack.c.bf16 %v2239, %v2238
        %v2265 = vpack.c.bf16 %v2241, %v2240
        %v2266 = vpack.c.bf16 %v2243, %v2242
        %v2267 = vpack.c.bf16 %v2245, %v2244
        %v2268 = vpack.c.bf16 %v2247, %v2246
        %v2269 = vpack.c.bf16 %v2249, %v2248
        %v2270 = vpack.c.bf16 %v2251, %v2250
        %v2271 = vpack.c.bf16 %v2253, %v2252
        %v2272 = vpack.c.bf16 %v2255, %v2254
        %v2273 = vpack.c.bf16 %v2257, %v2256
        %s2274 = scalar_lea.vmem %s1, 10
        %v2275 = vld [vmem:[%s2274] sm:$0x3]
        %v2277 = vsel %vm417, %v2258, 0
        %v2280 = vsel %vm417, %v2259, 0
        %v2283 = vsel %vm417, %v2260, 0
        %v2286 = vsel %vm417, %v2261, 0
        %v2289 = vsel %vm417, %v2262, 0
        %v2292 = vsel %vm417, %v2263, 0
        %v2295 = vsel %vm417, %v2264, 0
        %v2298 = vsel %vm417, %v2265, 0
        %v2301 = vsel %vm417, %v2266, 0
        %v2304 = vsel %vm417, %v2267, 0
        %v2307 = vsel %vm417, %v2268, 0
        %v2310 = vsel %vm417, %v2269, 0
        %v2313 = vsel %vm417, %v2270, 0
        %v2316 = vsel %vm417, %v2271, 0
        %v2319 = vsel %vm417, %v2272, 0
        %v2322 = vsel %vm417, %v2273, 0
        %v2325 = vand.u32 %v2275, %v596
        %2327 = vmatprep.subr.bf16.mxu0 0
        %2328 = vmatpush1.bf16.msra.mxu0 %v2325
        %2329 = vmatprep.subr.bf16.mxu0 0
        %2330 = vmatpush1.bf16.msra.mxu0 0
        %2331 = vmatprep.subr.bf16.mxu0 0
        %2332 = vmatpush1.bf16.msra.mxu0 0
        %2333 = vmatprep.subr.bf16.mxu0 0
        %2334 = vmatpush1.bf16.msra.mxu0 0
        %2335 = vmatprep.subr.bf16.mxu0 0
        %2336 = vmatpush1.bf16.msra.mxu0 0
        %2337 = vmatprep.subr.bf16.mxu0 0
        %2338 = vmatpush1.bf16.msra.mxu0 0
        %2339 = vmatprep.subr.bf16.mxu0 0
        %2340 = vmatpush1.bf16.msra.mxu0 0
        %2341 = vmatprep.subr.bf16.mxu0 0
        %2342 = vmatpush1.bf16.msra.mxu0 0
        %2343 = vmatprep.subr.bf16.mxu0 0
        %2344 = vmatpush1.bf16.msra.mxu0 0
        %2345 = vmatprep.subr.bf16.mxu0 0
        %2346 = vmatpush1.bf16.msra.mxu0 0
        %2347 = vmatprep.subr.bf16.mxu0 0
        %2348 = vmatpush1.bf16.msra.mxu0 0
        %2349 = vmatprep.subr.bf16.mxu0 0
        %2350 = vmatpush1.bf16.msra.mxu0 0
        %2351 = vmatprep.subr.bf16.mxu0 0
        %2352 = vmatpush1.bf16.msra.mxu0 0
        %2353 = vmatprep.subr.bf16.mxu0 0
        %2354 = vmatpush1.bf16.msra.mxu0 0
        %2355 = vmatprep.subr.bf16.mxu0 0
        %2356 = vmatpush1.bf16.msra.mxu0 0
        %2357 = vmatprep.subr.bf16.mxu0 0
        %2358 = vmatpush1.bf16.msra.mxu0 0
        %2359 = vmatprep.mubr.bf16.mxu0 0
        %2360 = vmatmul.mubr.bf16.gmra.mrb[0].mxu0 %v2277
        %v2361 = vpop.f32.mrb[0].mxu0
        %v2362 = vadd.f32 0.0, %v2361
        %v2363 = vpop.f32.mrb[0].mxu0
        %v2364 = vpop.f32.mrb[0].mxu0
        %v2365 = vadd.f32 0.0, %v2364
        %v2366 = vpop.f32.mrb[0].mxu0
        %2367 = vmatprep.mubr.bf16.mxu0 0
        %2368 = vmatmul.mubr.bf16.gmra.mrb[0].mxu0 %v2280
        %v2369 = vpop.f32.mrb[0].mxu0
        %v2370 = vadd.f32 0.0, %v2369
        %v2371 = vpop.f32.mrb[0].mxu0
        %v2372 = vpop.f32.mrb[0].mxu0
        %v2373 = vadd.f32 0.0, %v2372
        %v2374 = vpop.f32.mrb[0].mxu0
        %2375 = vmatprep.mubr.bf16.mxu0 0
        %2376 = vmatmul.mubr.bf16.gmra.mrb[0].mxu0 %v2283
        %v2377 = vpop.f32.mrb[0].mxu0
        %v2378 = vadd.f32 0.0, %v2377
        %v2379 = vpop.f32.mrb[0].mxu0
        %v2380 = vpop.f32.mrb[0].mxu0
        %v2381 = vadd.f32 0.0, %v2380
        %v2382 = vpop.f32.mrb[0].mxu0
        %2383 = vmatprep.mubr.bf16.mxu0 0
        %2384 = vmatmul.mubr.bf16.gmra.mrb[0].mxu0 %v2286
        %v2385 = vpop.f32.mrb[0].mxu0
        %v2386 = vadd.f32 0.0, %v2385
        %v2387 = vpop.f32.mrb[0].mxu0
        %v2388 = vpop.f32.mrb[0].mxu0
        %v2389 = vadd.f32 0.0, %v2388
        %v2390 = vpop.f32.mrb[0].mxu0
        %2391 = vmatprep.mubr.bf16.mxu0 0
        %2392 = vmatmul.mubr.bf16.gmra.mrb[0].mxu0 %v2289
        %v2393 = vpop.f32.mrb[0].mxu0
        %v2394 = vadd.f32 0.0, %v2393
        %v2395 = vpop.f32.mrb[0].mxu0
        %v2396 = vpop.f32.mrb[0].mxu0
        %v2397 = vadd.f32 0.0, %v2396
        %v2398 = vpop.f32.mrb[0].mxu0
        %2399 = vmatprep.mubr.bf16.mxu0 0
        %2400 = vmatmul.mubr.bf16.gmra.mrb[0].mxu0 %v2292
        %v2401 = vpop.f32.mrb[0].mxu0
        %v2402 = vadd.f32 0.0, %v2401
        %v2403 = vpop.f32.mrb[0].mxu0
        %v2404 = vpop.f32.mrb[0].mxu0
        %v2405 = vadd.f32 0.0, %v2404
        %v2406 = vpop.f32.mrb[0].mxu0
        %2407 = vmatprep.mubr.bf16.mxu0 0
        %2408 = vmatmul.mubr.bf16.gmra.mrb[0].mxu0 %v2295
        %v2409 = vpop.f32.mrb[0].mxu0
        %v2410 = vadd.f32 0.0, %v2409
        %v2411 = vpop.f32.mrb[0].mxu0
        %v2412 = vpop.f32.mrb[0].mxu0
        %v2413 = vadd.f32 0.0, %v2412
        %v2414 = vpop.f32.mrb[0].mxu0
        %2415 = vmatprep.mubr.bf16.mxu0 0
        %2416 = vmatmul.mubr.bf16.gmra.mrb[0].mxu0 %v2298
        %v2417 = vpop.f32.mrb[0].mxu0
        %v2418 = vadd.f32 0.0, %v2417
        %v2419 = vpop.f32.mrb[0].mxu0
        %v2420 = vpop.f32.mrb[0].mxu0
        %v2421 = vadd.f32 0.0, %v2420
        %v2422 = vpop.f32.mrb[0].mxu0
        %2423 = vmatprep.mubr.bf16.mxu0 0
        %2424 = vmatmul.mubr.bf16.gmra.mrb[0].mxu0 %v2301
        %v2425 = vpop.f32.mrb[0].mxu0
        %v2426 = vadd.f32 0.0, %v2425
        %v2427 = vpop.f32.mrb[0].mxu0
        %v2428 = vpop.f32.mrb[0].mxu0
        %v2429 = vadd.f32 0.0, %v2428
        %v2430 = vpop.f32.mrb[0].mxu0
        %2431 = vmatprep.mubr.bf16.mxu0 0
        %2432 = vmatmul.mubr.bf16.gmra.mrb[0].mxu0 %v2304
        %v2433 = vpop.f32.mrb[0].mxu0
        %v2434 = vadd.f32 0.0, %v2433
        %v2435 = vpop.f32.mrb[0].mxu0
        %v2436 = vpop.f32.mrb[0].mxu0
        %v2437 = vadd.f32 0.0, %v2436
        %v2438 = vpop.f32.mrb[0].mxu0
        %2439 = vmatprep.mubr.bf16.mxu0 0
        %2440 = vmatmul.mubr.bf16.gmra.mrb[0].mxu0 %v2307
        %v2441 = vpop.f32.mrb[0].mxu0
        %v2442 = vadd.f32 0.0, %v2441
        %v2443 = vpop.f32.mrb[0].mxu0
        %v2444 = vpop.f32.mrb[0].mxu0
        %v2445 = vadd.f32 0.0, %v2444
        %v2446 = vpop.f32.mrb[0].mxu0
        %2447 = vmatprep.mubr.bf16.mxu0 0
        %2448 = vmatmul.mubr.bf16.gmra.mrb[0].mxu0 %v2310
        %v2449 = vpop.f32.mrb[0].mxu0
        %v2450 = vadd.f32 0.0, %v2449
        %v2451 = vpop.f32.mrb[0].mxu0
        %v2452 = vpop.f32.mrb[0].mxu0
        %v2453 = vadd.f32 0.0, %v2452
        %v2454 = vpop.f32.mrb[0].mxu0
        %2455 = vmatprep.mubr.bf16.mxu0 0
        %2456 = vmatmul.mubr.bf16.gmra.mrb[0].mxu0 %v2313
        %v2457 = vpop.f32.mrb[0].mxu0
        %v2458 = vadd.f32 0.0, %v2457
        %v2459 = vpop.f32.mrb[0].mxu0
        %v2460 = vpop.f32.mrb[0].mxu0
        %v2461 = vadd.f32 0.0, %v2460
        %v2462 = vpop.f32.mrb[0].mxu0
        %2463 = vmatprep.mubr.bf16.mxu0 0
        %2464 = vmatmul.mubr.bf16.gmra.mrb[0].mxu0 %v2316
        %v2465 = vpop.f32.mrb[0].mxu0
        %v2466 = vadd.f32 0.0, %v2465
        %v2467 = vpop.f32.mrb[0].mxu0
        %v2468 = vpop.f32.mrb[0].mxu0
        %v2469 = vadd.f32 0.0, %v2468
        %v2470 = vpop.f32.mrb[0].mxu0
        %2471 = vmatprep.mubr.bf16.mxu0 0
        %2472 = vmatmul.mubr.bf16.gmra.mrb[0].mxu0 %v2319
        %v2473 = vpop.f32.mrb[0].mxu0
        %v2474 = vadd.f32 0.0, %v2473
        %v2475 = vpop.f32.mrb[0].mxu0
        %v2476 = vpop.f32.mrb[0].mxu0
        %v2477 = vadd.f32 0.0, %v2476
        %v2478 = vpop.f32.mrb[0].mxu0
        %2479 = vmatprep.mubr.bf16.mxu0 0
        %2480 = vmatmul.mubr.bf16.gmra.mrb[0].mxu0 %v2322
        %v2481 = vpop.f32.mrb[0].mxu0
        %v2482 = vadd.f32 0.0, %v2481
        %v2483 = vpop.f32.mrb[0].mxu0
        %v2484 = vpop.f32.mrb[0].mxu0
        %v2485 = vadd.f32 0.0, %v2484
        %v2486 = vpop.f32.mrb[0].mxu0
        %2487 = vdwg.mxu0
        %v2488 = vld [vmem:[#allocation6] sm:$0xff]
        %v2489 = vld [vmem:[#allocation6 + $0x8] sm:$0xff]
        %v2490 = vld [vmem:[#allocation6 + $0x10] sm:$0xff]
        %v2491 = vld [vmem:[#allocation6 + $0x18] sm:$0xff]
        %v2492 = vld [vmem:[#allocation6 + $0x20] sm:$0xff]
        %v2493 = vld [vmem:[#allocation6 + $0x28] sm:$0xff]
        %v2494 = vld [vmem:[#allocation6 + $0x30] sm:$0xff]
        %v2495 = vld [vmem:[#allocation6 + $0x38] sm:$0xff]
        %v2496 = vld [vmem:[#allocation6 + $0x40] sm:$0xff]
        %v2497 = vld [vmem:[#allocation6 + $0x48] sm:$0xff]
        %v2498 = vld [vmem:[#allocation6 + $0x50] sm:$0xff]
        %v2499 = vld [vmem:[#allocation6 + $0x58] sm:$0xff]
        %v2500 = vld [vmem:[#allocation6 + $0x60] sm:$0xff]
        %v2501 = vld [vmem:[#allocation6 + $0x68] sm:$0xff]
        %v2502 = vld [vmem:[#allocation6 + $0x70] sm:$0xff]
        %v2503 = vld [vmem:[#allocation6 + $0x78] sm:$0xff]
        %v2504 = vld [vmem:[#allocation6 + $0x80] sm:$0xff]
        %v2505 = vld [vmem:[#allocation6 + $0x88] sm:$0xff]
        %v2506 = vld [vmem:[#allocation6 + $0x90] sm:$0xff]
        %v2507 = vld [vmem:[#allocation6 + $0x98] sm:$0xff]
        %v2508 = vld [vmem:[#allocation6 + $0xa0] sm:$0xff]
        %v2509 = vld [vmem:[#allocation6 + $0xa8] sm:$0xff]
        %v2510 = vld [vmem:[#allocation6 + $0xb0] sm:$0xff]
        %v2511 = vld [vmem:[#allocation6 + $0xb8] sm:$0xff]
        %v2512 = vld [vmem:[#allocation6 + $0xc0] sm:$0xff]
        %v2513 = vld [vmem:[#allocation6 + $0xc8] sm:$0xff]
        %v2514 = vld [vmem:[#allocation6 + $0xd0] sm:$0xff]
        %v2515 = vld [vmem:[#allocation6 + $0xd8] sm:$0xff]
        %v2516 = vld [vmem:[#allocation6 + $0xe0] sm:$0xff]
        %v2517 = vld [vmem:[#allocation6 + $0xe8] sm:$0xff]
        %v2518 = vld [vmem:[#allocation6 + $0xf0] sm:$0xff]
        %v2519 = vld [vmem:[#allocation6 + $0xf8] sm:$0xff]
        %v2520 = vadd.f32 %v2488, %v2362
        %v2521 = vadd.f32 %v2489, %v2365
        %v2522 = vadd.f32 %v2490, %v2370
        %v2523 = vadd.f32 %v2491, %v2373
        %v2524 = vadd.f32 %v2492, %v2378
        %v2525 = vadd.f32 %v2493, %v2381
        %v2526 = vadd.f32 %v2494, %v2386
        %v2527 = vadd.f32 %v2495, %v2389
        %v2528 = vadd.f32 %v2496, %v2394
        %v2529 = vadd.f32 %v2497, %v2397
        %v2530 = vadd.f32 %v2498, %v2402
        %v2531 = vadd.f32 %v2499, %v2405
        %v2532 = vadd.f32 %v2500, %v2410
        %v2533 = vadd.f32 %v2501, %v2413
        %v2534 = vadd.f32 %v2502, %v2418
        %v2535 = vadd.f32 %v2503, %v2421
        %v2536 = vadd.f32 %v2504, %v2426
        %v2537 = vadd.f32 %v2505, %v2429
        %v2538 = vadd.f32 %v2506, %v2434
        %v2539 = vadd.f32 %v2507, %v2437
        %v2540 = vadd.f32 %v2508, %v2442
        %v2541 = vadd.f32 %v2509, %v2445
        %v2542 = vadd.f32 %v2510, %v2450
        %v2543 = vadd.f32 %v2511, %v2453
        %v2544 = vadd.f32 %v2512, %v2458
        %v2545 = vadd.f32 %v2513, %v2461
        %v2546 = vadd.f32 %v2514, %v2466
        %v2547 = vadd.f32 %v2515, %v2469
        %v2548 = vadd.f32 %v2516, %v2474
        %v2549 = vadd.f32 %v2517, %v2477
        %v2550 = vadd.f32 %v2518, %v2482
        %v2551 = vadd.f32 %v2519, %v2485
        %2552 = vst.msk [vmem:[#allocation6] sm:$0xff] %vm761, %v2520
        %2553 = vst.msk [vmem:[#allocation6 + $0x8] sm:$0xff] %vm761, %v2521
        %2554 = vst.msk [vmem:[#allocation6 + $0x10] sm:$0xff] %vm761, %v2522
        %2555 = vst.msk [vmem:[#allocation6 + $0x18] sm:$0xff] %vm761, %v2523
        %2556 = vst.msk [vmem:[#allocation6 + $0x20] sm:$0xff] %vm761, %v2524
        %2557 = vst.msk [vmem:[#allocation6 + $0x28] sm:$0xff] %vm761, %v2525
        %2558 = vst.msk [vmem:[#allocation6 + $0x30] sm:$0xff] %vm761, %v2526
        %2559 = vst.msk [vmem:[#allocation6 + $0x38] sm:$0xff] %vm761, %v2527
        %2560 = vst.msk [vmem:[#allocation6 + $0x40] sm:$0xff] %vm761, %v2528
        %2561 = vst.msk [vmem:[#allocation6 + $0x48] sm:$0xff] %vm761, %v2529
        %2562 = vst.msk [vmem:[#allocation6 + $0x50] sm:$0xff] %vm761, %v2530
        %2563 = vst.msk [vmem:[#allocation6 + $0x58] sm:$0xff] %vm761, %v2531
        %2564 = vst.msk [vmem:[#allocation6 + $0x60] sm:$0xff] %vm761, %v2532
        %2565 = vst.msk [vmem:[#allocation6 + $0x68] sm:$0xff] %vm761, %v2533
        %2566 = vst.msk [vmem:[#allocation6 + $0x70] sm:$0xff] %vm761, %v2534
        %2567 = vst.msk [vmem:[#allocation6 + $0x78] sm:$0xff] %vm761, %v2535
        %2568 = vst.msk [vmem:[#allocation6 + $0x80] sm:$0xff] %vm761, %v2536
        %2569 = vst.msk [vmem:[#allocation6 + $0x88] sm:$0xff] %vm761, %v2537
        %2570 = vst.msk [vmem:[#allocation6 + $0x90] sm:$0xff] %vm761, %v2538
        %2571 = vst.msk [vmem:[#allocation6 + $0x98] sm:$0xff] %vm761, %v2539
        %2572 = vst.msk [vmem:[#allocation6 + $0xa0] sm:$0xff] %vm761, %v2540
        %2573 = vst.msk [vmem:[#allocation6 + $0xa8] sm:$0xff] %vm761, %v2541
        %2574 = vst.msk [vmem:[#allocation6 + $0xb0] sm:$0xff] %vm761, %v2542
        %2575 = vst.msk [vmem:[#allocation6 + $0xb8] sm:$0xff] %vm761, %v2543
        %2576 = vst.msk [vmem:[#allocation6 + $0xc0] sm:$0xff] %vm761, %v2544
        %2577 = vst.msk [vmem:[#allocation6 + $0xc8] sm:$0xff] %vm761, %v2545
        %2578 = vst.msk [vmem:[#allocation6 + $0xd0] sm:$0xff] %vm761, %v2546
        %2579 = vst.msk [vmem:[#allocation6 + $0xd8] sm:$0xff] %vm761, %v2547
        %2580 = vst.msk [vmem:[#allocation6 + $0xe0] sm:$0xff] %vm761, %v2548
        %2581 = vst.msk [vmem:[#allocation6 + $0xe8] sm:$0xff] %vm761, %v2549
        %2582 = vst.msk [vmem:[#allocation6 + $0xf0] sm:$0xff] %vm761, %v2550
        %2583 = vst.msk [vmem:[#allocation6 + $0xf8] sm:$0xff] %vm761, %v2551
        %s2584 = scalar_lea.vmem [#allocation2], 48
        %v2585 = vld [vmem:[%s2584] sm:$0xff]
        %v2586 = vld [vmem:[%s2584 + $0x8] sm:$0xff]
        %v2587 = vld [vmem:[%s2584 + $0x18] sm:$0xff]
        %v2588 = vld [vmem:[%s2584 + $0x20] sm:$0xff]
        %v2589 = vld [vmem:[%s2584 + $0x30] sm:$0xff]
        %v2590 = vld [vmem:[%s2584 + $0x38] sm:$0xff]
        %v2591 = vld [vmem:[%s2584 + $0x48] sm:$0xff]
        %v2592 = vld [vmem:[%s2584 + $0x50] sm:$0xff]
        %v2593 = vld [vmem:[%s2584 + $0x60] sm:$0xff]
        %v2594 = vld [vmem:[%s2584 + $0x68] sm:$0xff]
        %v2595 = vld [vmem:[%s2584 + $0x78] sm:$0xff]
        %v2596 = vld [vmem:[%s2584 + $0x80] sm:$0xff]
        %v2597 = vld [vmem:[%s2584 + $0x90] sm:$0xff]
        %v2598 = vld [vmem:[%s2584 + $0x98] sm:$0xff]
        %v2599 = vld [vmem:[%s2584 + $0xa8] sm:$0xff]
        %v2600 = vld [vmem:[%s2584 + $0xb0] sm:$0xff]
        %v2601 = vld [vmem:[%s2584 + $0xc0] sm:$0xff]
        %v2602 = vld [vmem:[%s2584 + $0xc8] sm:$0xff]
        %v2603 = vld [vmem:[%s2584 + $0xd8] sm:$0xff]
        %v2604 = vld [vmem:[%s2584 + $0xe0] sm:$0xff]
        %v2605 = vld [vmem:[%s2584 + $0xf0] sm:$0xff]
        %v2606 = vld [vmem:[%s2584 + $0xf8] sm:$0xff]
        %v2607 = vld [vmem:[%s2584 + $0x108] sm:$0xff]
        %v2608 = vld [vmem:[%s2584 + $0x110] sm:$0xff]
        %v2609 = vld [vmem:[%s2584 + $0x120] sm:$0xff]
        %v2610 = vld [vmem:[%s2584 + $0x128] sm:$0xff]
        %v2611 = vld [vmem:[%s2584 + $0x138] sm:$0xff]
        %v2612 = vld [vmem:[%s2584 + $0x140] sm:$0xff]
        %v2613 = vld [vmem:[%s2584 + $0x150] sm:$0xff]
        %v2614 = vld [vmem:[%s2584 + $0x158] sm:$0xff]
        %v2615 = vld [vmem:[%s2584 + $0x168] sm:$0xff]
        %v2616 = vld [vmem:[%s2584 + $0x170] sm:$0xff]
        %v2617 = vpack.c.bf16 %v2586, %v2585
        %v2618 = vpack.c.bf16 %v2588, %v2587
        %v2619 = vpack.c.bf16 %v2590, %v2589
        %v2620 = vpack.c.bf16 %v2592, %v2591
        %v2621 = vpack.c.bf16 %v2594, %v2593
        %v2622 = vpack.c.bf16 %v2596, %v2595
        %v2623 = vpack.c.bf16 %v2598, %v2597
        %v2624 = vpack.c.bf16 %v2600, %v2599
        %v2625 = vpack.c.bf16 %v2602, %v2601
        %v2626 = vpack.c.bf16 %v2604, %v2603
        %v2627 = vpack.c.bf16 %v2606, %v2605
        %v2628 = vpack.c.bf16 %v2608, %v2607
        %v2629 = vpack.c.bf16 %v2610, %v2609
        %v2630 = vpack.c.bf16 %v2612, %v2611
        %v2631 = vpack.c.bf16 %v2614, %v2613
        %v2632 = vpack.c.bf16 %v2616, %v2615
        %s2633 = scalar_lea.vmem %s1, 12
        %v2634 = vld [vmem:[%s2633] sm:$0x3]
        %v2636 = vsel %vm417, %v2617, 0
        %v2639 = vsel %vm417, %v2618, 0
        %v2642 = vsel %vm417, %v2619, 0
        %v2645 = vsel %vm417, %v2620, 0
        %v2648 = vsel %vm417, %v2621, 0
        %v2651 = vsel %vm417, %v2622, 0
        %v2654 = vsel %vm417, %v2623, 0
        %v2657 = vsel %vm417, %v2624, 0
        %v2660 = vsel %vm417, %v2625, 0
        %v2663 = vsel %vm417, %v2626, 0
        %v2666 = vsel %vm417, %v2627, 0
        %v2669 = vsel %vm417, %v2628, 0
        %v2672 = vsel %vm417, %v2629, 0
        %v2675 = vsel %vm417, %v2630, 0
        %v2678 = vsel %vm417, %v2631, 0
        %v2681 = vsel %vm417, %v2632, 0
        %v2684 = vand.u32 %v2634, %v596
        %2686 = vmatprep.subr.bf16.mxu0 0
        %2687 = vmatpush1.bf16.msra.mxu0 %v2684
        %2688 = vmatprep.subr.bf16.mxu0 0
        %2689 = vmatpush1.bf16.msra.mxu0 0
        %2690 = vmatprep.subr.bf16.mxu0 0
        %2691 = vmatpush1.bf16.msra.mxu0 0
        %2692 = vmatprep.subr.bf16.mxu0 0
        %2693 = vmatpush1.bf16.msra.mxu0 0
        %2694 = vmatprep.subr.bf16.mxu0 0
        %2695 = vmatpush1.bf16.msra.mxu0 0
        %2696 = vmatprep.subr.bf16.mxu0 0
        %2697 = vmatpush1.bf16.msra.mxu0 0
        %2698 = vmatprep.subr.bf16.mxu0 0
        %2699 = vmatpush1.bf16.msra.mxu0 0
        %2700 = vmatprep.subr.bf16.mxu0 0
        %2701 = vmatpush1.bf16.msra.mxu0 0
        %2702 = vmatprep.subr.bf16.mxu0 0
        %2703 = vmatpush1.bf16.msra.mxu0 0
        %2704 = vmatprep.subr.bf16.mxu0 0
        %2705 = vmatpush1.bf16.msra.mxu0 0
        %2706 = vmatprep.subr.bf16.mxu0 0
        %2707 = vmatpush1.bf16.msra.mxu0 0
        %2708 = vmatprep.subr.bf16.mxu0 0
        %2709 = vmatpush1.bf16.msra.mxu0 0
        %2710 = vmatprep.subr.bf16.mxu0 0
        %2711 = vmatpush1.bf16.msra.mxu0 0
        %2712 = vmatprep.subr.bf16.mxu0 0
        %2713 = vmatpush1.bf16.msra.mxu0 0
        %2714 = vmatprep.subr.bf16.mxu0 0
        %2715 = vmatpush1.bf16.msra.mxu0 0
        %2716 = vmatprep.subr.bf16.mxu0 0
        %2717 = vmatpush1.bf16.msra.mxu0 0
        %2718 = vmatprep.mubr.bf16.mxu0 0
        %2719 = vmatmul.mubr.bf16.gmra.mrb[0].mxu0 %v2636
        %v2720 = vpop.f32.mrb[0].mxu0
        %v2721 = vadd.f32 0.0, %v2720
        %v2722 = vpop.f32.mrb[0].mxu0
        %v2723 = vpop.f32.mrb[0].mxu0
        %v2724 = vadd.f32 0.0, %v2723
        %v2725 = vpop.f32.mrb[0].mxu0
        %2726 = vmatprep.mubr.bf16.mxu0 0
        %2727 = vmatmul.mubr.bf16.gmra.mrb[0].mxu0 %v2639
        %v2728 = vpop.f32.mrb[0].mxu0
        %v2729 = vadd.f32 0.0, %v2728
        %v2730 = vpop.f32.mrb[0].mxu0
        %v2731 = vpop.f32.mrb[0].mxu0
        %v2732 = vadd.f32 0.0, %v2731
        %v2733 = vpop.f32.mrb[0].mxu0
        %2734 = vmatprep.mubr.bf16.mxu0 0
        %2735 = vmatmul.mubr.bf16.gmra.mrb[0].mxu0 %v2642
        %v2736 = vpop.f32.mrb[0].mxu0
        %v2737 = vadd.f32 0.0, %v2736
        %v2738 = vpop.f32.mrb[0].mxu0
        %v2739 = vpop.f32.mrb[0].mxu0
        %v2740 = vadd.f32 0.0, %v2739
        %v2741 = vpop.f32.mrb[0].mxu0
        %2742 = vmatprep.mubr.bf16.mxu0 0
        %2743 = vmatmul.mubr.bf16.gmra.mrb[0].mxu0 %v2645
        %v2744 = vpop.f32.mrb[0].mxu0
        %v2745 = vadd.f32 0.0, %v2744
        %v2746 = vpop.f32.mrb[0].mxu0
        %v2747 = vpop.f32.mrb[0].mxu0
        %v2748 = vadd.f32 0.0, %v2747
        %v2749 = vpop.f32.mrb[0].mxu0
        %2750 = vmatprep.mubr.bf16.mxu0 0
        %2751 = vmatmul.mubr.bf16.gmra.mrb[0].mxu0 %v2648
        %v2752 = vpop.f32.mrb[0].mxu0
        %v2753 = vadd.f32 0.0, %v2752
        %v2754 = vpop.f32.mrb[0].mxu0
        %v2755 = vpop.f32.mrb[0].mxu0
        %v2756 = vadd.f32 0.0, %v2755
        %v2757 = vpop.f32.mrb[0].mxu0
        %2758 = vmatprep.mubr.bf16.mxu0 0
        %2759 = vmatmul.mubr.bf16.gmra.mrb[0].mxu0 %v2651
        %v2760 = vpop.f32.mrb[0].mxu0
        %v2761 = vadd.f32 0.0, %v2760
        %v2762 = vpop.f32.mrb[0].mxu0
        %v2763 = vpop.f32.mrb[0].mxu0
        %v2764 = vadd.f32 0.0, %v2763
        %v2765 = vpop.f32.mrb[0].mxu0
        %2766 = vmatprep.mubr.bf16.mxu0 0
        %2767 = vmatmul.mubr.bf16.gmra.mrb[0].mxu0 %v2654
        %v2768 = vpop.f32.mrb[0].mxu0
        %v2769 = vadd.f32 0.0, %v2768
        %v2770 = vpop.f32.mrb[0].mxu0
        %v2771 = vpop.f32.mrb[0].mxu0
        %v2772 = vadd.f32 0.0, %v2771
        %v2773 = vpop.f32.mrb[0].mxu0
        %2774 = vmatprep.mubr.bf16.mxu0 0
        %2775 = vmatmul.mubr.bf16.gmra.mrb[0].mxu0 %v2657
        %v2776 = vpop.f32.mrb[0].mxu0
        %v2777 = vadd.f32 0.0, %v2776
        %v2778 = vpop.f32.mrb[0].mxu0
        %v2779 = vpop.f32.mrb[0].mxu0
        %v2780 = vadd.f32 0.0, %v2779
        %v2781 = vpop.f32.mrb[0].mxu0
        %2782 = vmatprep.mubr.bf16.mxu0 0
        %2783 = vmatmul.mubr.bf16.gmra.mrb[0].mxu0 %v2660
        %v2784 = vpop.f32.mrb[0].mxu0
        %v2785 = vadd.f32 0.0, %v2784
        %v2786 = vpop.f32.mrb[0].mxu0
        %v2787 = vpop.f32.mrb[0].mxu0
        %v2788 = vadd.f32 0.0, %v2787
        %v2789 = vpop.f32.mrb[0].mxu0
        %2790 = vmatprep.mubr.bf16.mxu0 0
        %2791 = vmatmul.mubr.bf16.gmra.mrb[0].mxu0 %v2663
        %v2792 = vpop.f32.mrb[0].mxu0
        %v2793 = vadd.f32 0.0, %v2792
        %v2794 = vpop.f32.mrb[0].mxu0
        %v2795 = vpop.f32.mrb[0].mxu0
        %v2796 = vadd.f32 0.0, %v2795
        %v2797 = vpop.f32.mrb[0].mxu0
        %2798 = vmatprep.mubr.bf16.mxu0 0
        %2799 = vmatmul.mubr.bf16.gmra.mrb[0].mxu0 %v2666
        %v2800 = vpop.f32.mrb[0].mxu0
        %v2801 = vadd.f32 0.0, %v2800
        %v2802 = vpop.f32.mrb[0].mxu0
        %v2803 = vpop.f32.mrb[0].mxu0
        %v2804 = vadd.f32 0.0, %v2803
        %v2805 = vpop.f32.mrb[0].mxu0
        %2806 = vmatprep.mubr.bf16.mxu0 0
        %2807 = vmatmul.mubr.bf16.gmra.mrb[0].mxu0 %v2669
        %v2808 = vpop.f32.mrb[0].mxu0
        %v2809 = vadd.f32 0.0, %v2808
        %v2810 = vpop.f32.mrb[0].mxu0
        %v2811 = vpop.f32.mrb[0].mxu0
        %v2812 = vadd.f32 0.0, %v2811
        %v2813 = vpop.f32.mrb[0].mxu0
        %2814 = vmatprep.mubr.bf16.mxu0 0
        %2815 = vmatmul.mubr.bf16.gmra.mrb[0].mxu0 %v2672
        %v2816 = vpop.f32.mrb[0].mxu0
        %v2817 = vadd.f32 0.0, %v2816
        %v2818 = vpop.f32.mrb[0].mxu0
        %v2819 = vpop.f32.mrb[0].mxu0
        %v2820 = vadd.f32 0.0, %v2819
        %v2821 = vpop.f32.mrb[0].mxu0
        %2822 = vmatprep.mubr.bf16.mxu0 0
        %2823 = vmatmul.mubr.bf16.gmra.mrb[0].mxu0 %v2675
        %v2824 = vpop.f32.mrb[0].mxu0
        %v2825 = vadd.f32 0.0, %v2824
        %v2826 = vpop.f32.mrb[0].mxu0
        %v2827 = vpop.f32.mrb[0].mxu0
        %v2828 = vadd.f32 0.0, %v2827
        %v2829 = vpop.f32.mrb[0].mxu0
        %2830 = vmatprep.mubr.bf16.mxu0 0
        %2831 = vmatmul.mubr.bf16.gmra.mrb[0].mxu0 %v2678
        %v2832 = vpop.f32.mrb[0].mxu0
        %v2833 = vadd.f32 0.0, %v2832
        %v2834 = vpop.f32.mrb[0].mxu0
        %v2835 = vpop.f32.mrb[0].mxu0
        %v2836 = vadd.f32 0.0, %v2835
        %v2837 = vpop.f32.mrb[0].mxu0
        %2838 = vmatprep.mubr.bf16.mxu0 0
        %2839 = vmatmul.mubr.bf16.gmra.mrb[0].mxu0 %v2681
        %v2840 = vpop.f32.mrb[0].mxu0
        %v2841 = vadd.f32 0.0, %v2840
        %v2842 = vpop.f32.mrb[0].mxu0
        %v2843 = vpop.f32.mrb[0].mxu0
        %v2844 = vadd.f32 0.0, %v2843
        %v2845 = vpop.f32.mrb[0].mxu0
        %2846 = vdwg.mxu0
        %v2847 = vld [vmem:[#allocation6] sm:$0xff]
        %v2848 = vld [vmem:[#allocation6 + $0x8] sm:$0xff]
        %v2849 = vld [vmem:[#allocation6 + $0x10] sm:$0xff]
        %v2850 = vld [vmem:[#allocation6 + $0x18] sm:$0xff]
        %v2851 = vld [vmem:[#allocation6 + $0x20] sm:$0xff]
        %v2852 = vld [vmem:[#allocation6 + $0x28] sm:$0xff]
        %v2853 = vld [vmem:[#allocation6 + $0x30] sm:$0xff]
        %v2854 = vld [vmem:[#allocation6 + $0x38] sm:$0xff]
        %v2855 = vld [vmem:[#allocation6 + $0x40] sm:$0xff]
        %v2856 = vld [vmem:[#allocation6 + $0x48] sm:$0xff]
        %v2857 = vld [vmem:[#allocation6 + $0x50] sm:$0xff]
        %v2858 = vld [vmem:[#allocation6 + $0x58] sm:$0xff]
        %v2859 = vld [vmem:[#allocation6 + $0x60] sm:$0xff]
        %v2860 = vld [vmem:[#allocation6 + $0x68] sm:$0xff]
        %v2861 = vld [vmem:[#allocation6 + $0x70] sm:$0xff]
        %v2862 = vld [vmem:[#allocation6 + $0x78] sm:$0xff]
        %v2863 = vld [vmem:[#allocation6 + $0x80] sm:$0xff]
        %v2864 = vld [vmem:[#allocation6 + $0x88] sm:$0xff]
        %v2865 = vld [vmem:[#allocation6 + $0x90] sm:$0xff]
        %v2866 = vld [vmem:[#allocation6 + $0x98] sm:$0xff]
        %v2867 = vld [vmem:[#allocation6 + $0xa0] sm:$0xff]
        %v2868 = vld [vmem:[#allocation6 + $0xa8] sm:$0xff]
        %v2869 = vld [vmem:[#allocation6 + $0xb0] sm:$0xff]
        %v2870 = vld [vmem:[#allocation6 + $0xb8] sm:$0xff]
        %v2871 = vld [vmem:[#allocation6 + $0xc0] sm:$0xff]
        %v2872 = vld [vmem:[#allocation6 + $0xc8] sm:$0xff]
        %v2873 = vld [vmem:[#allocation6 + $0xd0] sm:$0xff]
        %v2874 = vld [vmem:[#allocation6 + $0xd8] sm:$0xff]
        %v2875 = vld [vmem:[#allocation6 + $0xe0] sm:$0xff]
        %v2876 = vld [vmem:[#allocation6 + $0xe8] sm:$0xff]
        %v2877 = vld [vmem:[#allocation6 + $0xf0] sm:$0xff]
        %v2878 = vld [vmem:[#allocation6 + $0xf8] sm:$0xff]
        %v2879 = vadd.f32 %v2847, %v2721
        %v2880 = vadd.f32 %v2848, %v2724
        %v2881 = vadd.f32 %v2849, %v2729
        %v2882 = vadd.f32 %v2850, %v2732
        %v2883 = vadd.f32 %v2851, %v2737
        %v2884 = vadd.f32 %v2852, %v2740
        %v2885 = vadd.f32 %v2853, %v2745
        %v2886 = vadd.f32 %v2854, %v2748
        %v2887 = vadd.f32 %v2855, %v2753
        %v2888 = vadd.f32 %v2856, %v2756
        %v2889 = vadd.f32 %v2857, %v2761
        %v2890 = vadd.f32 %v2858, %v2764
        %v2891 = vadd.f32 %v2859, %v2769
        %v2892 = vadd.f32 %v2860, %v2772
        %v2893 = vadd.f32 %v2861, %v2777
        %v2894 = vadd.f32 %v2862, %v2780
        %v2895 = vadd.f32 %v2863, %v2785
        %v2896 = vadd.f32 %v2864, %v2788
        %v2897 = vadd.f32 %v2865, %v2793
        %v2898 = vadd.f32 %v2866, %v2796
        %v2899 = vadd.f32 %v2867, %v2801
        %v2900 = vadd.f32 %v2868, %v2804
        %v2901 = vadd.f32 %v2869, %v2809
        %v2902 = vadd.f32 %v2870, %v2812
        %v2903 = vadd.f32 %v2871, %v2817
        %v2904 = vadd.f32 %v2872, %v2820
        %v2905 = vadd.f32 %v2873, %v2825
        %v2906 = vadd.f32 %v2874, %v2828
        %v2907 = vadd.f32 %v2875, %v2833
        %v2908 = vadd.f32 %v2876, %v2836
        %v2909 = vadd.f32 %v2877, %v2841
        %v2910 = vadd.f32 %v2878, %v2844
        %2911 = vst.msk [vmem:[#allocation6] sm:$0xff] %vm761, %v2879
        %2912 = vst.msk [vmem:[#allocation6 + $0x8] sm:$0xff] %vm761, %v2880
        %2913 = vst.msk [vmem:[#allocation6 + $0x10] sm:$0xff] %vm761, %v2881
        %2914 = vst.msk [vmem:[#allocation6 + $0x18] sm:$0xff] %vm761, %v2882
        %2915 = vst.msk [vmem:[#allocation6 + $0x20] sm:$0xff] %vm761, %v2883
        %2916 = vst.msk [vmem:[#allocation6 + $0x28] sm:$0xff] %vm761, %v2884
        %2917 = vst.msk [vmem:[#allocation6 + $0x30] sm:$0xff] %vm761, %v2885
        %2918 = vst.msk [vmem:[#allocation6 + $0x38] sm:$0xff] %vm761, %v2886
        %2919 = vst.msk [vmem:[#allocation6 + $0x40] sm:$0xff] %vm761, %v2887
        %2920 = vst.msk [vmem:[#allocation6 + $0x48] sm:$0xff] %vm761, %v2888
        %2921 = vst.msk [vmem:[#allocation6 + $0x50] sm:$0xff] %vm761, %v2889
        %2922 = vst.msk [vmem:[#allocation6 + $0x58] sm:$0xff] %vm761, %v2890
        %2923 = vst.msk [vmem:[#allocation6 + $0x60] sm:$0xff] %vm761, %v2891
        %2924 = vst.msk [vmem:[#allocation6 + $0x68] sm:$0xff] %vm761, %v2892
        %2925 = vst.msk [vmem:[#allocation6 + $0x70] sm:$0xff] %vm761, %v2893
        %2926 = vst.msk [vmem:[#allocation6 + $0x78] sm:$0xff] %vm761, %v2894
        %2927 = vst.msk [vmem:[#allocation6 + $0x80] sm:$0xff] %vm761, %v2895
        %2928 = vst.msk [vmem:[#allocation6 + $0x88] sm:$0xff] %vm761, %v2896
        %2929 = vst.msk [vmem:[#allocation6 + $0x90] sm:$0xff] %vm761, %v2897
        %2930 = vst.msk [vmem:[#allocation6 + $0x98] sm:$0xff] %vm761, %v2898
        %2931 = vst.msk [vmem:[#allocation6 + $0xa0] sm:$0xff] %vm761, %v2899
        %2932 = vst.msk [vmem:[#allocation6 + $0xa8] sm:$0xff] %vm761, %v2900
        %2933 = vst.msk [vmem:[#allocation6 + $0xb0] sm:$0xff] %vm761, %v2901
        %2934 = vst.msk [vmem:[#allocation6 + $0xb8] sm:$0xff] %vm761, %v2902
        %2935 = vst.msk [vmem:[#allocation6 + $0xc0] sm:$0xff] %vm761, %v2903
        %2936 = vst.msk [vmem:[#allocation6 + $0xc8] sm:$0xff] %vm761, %v2904
        %2937 = vst.msk [vmem:[#allocation6 + $0xd0] sm:$0xff] %vm761, %v2905
        %2938 = vst.msk [vmem:[#allocation6 + $0xd8] sm:$0xff] %vm761, %v2906
        %2939 = vst.msk [vmem:[#allocation6 + $0xe0] sm:$0xff] %vm761, %v2907
        %2940 = vst.msk [vmem:[#allocation6 + $0xe8] sm:$0xff] %vm761, %v2908
        %2941 = vst.msk [vmem:[#allocation6 + $0xf0] sm:$0xff] %vm761, %v2909
        %2942 = vst.msk [vmem:[#allocation6 + $0xf8] sm:$0xff] %vm761, %v2910
        %v2943 = vld [vmem:[%s2584 + $0x1] sm:$0xff]
        %v2944 = vld [vmem:[%s2584 + $0x9] sm:$0xff]
        %v2945 = vld [vmem:[%s2584 + $0x19] sm:$0xff]
        %v2946 = vld [vmem:[%s2584 + $0x21] sm:$0xff]
        %v2947 = vld [vmem:[%s2584 + $0x31] sm:$0xff]
        %v2948 = vld [vmem:[%s2584 + $0x39] sm:$0xff]
        %v2949 = vld [vmem:[%s2584 + $0x49] sm:$0xff]
        %v2950 = vld [vmem:[%s2584 + $0x51] sm:$0xff]
        %v2951 = vld [vmem:[%s2584 + $0x61] sm:$0xff]
        %v2952 = vld [vmem:[%s2584 + $0x69] sm:$0xff]
        %v2953 = vld [vmem:[%s2584 + $0x79] sm:$0xff]
        %v2954 = vld [vmem:[%s2584 + $0x81] sm:$0xff]
        %v2955 = vld [vmem:[%s2584 + $0x91] sm:$0xff]
        %v2956 = vld [vmem:[%s2584 + $0x99] sm:$0xff]
        %v2957 = vld [vmem:[%s2584 + $0xa9] sm:$0xff]
        %v2958 = vld [vmem:[%s2584 + $0xb1] sm:$0xff]
        %v2959 = vld [vmem:[%s2584 + $0xc1] sm:$0xff]
        %v2960 = vld [vmem:[%s2584 + $0xc9] sm:$0xff]
        %v2961 = vld [vmem:[%s2584 + $0xd9] sm:$0xff]
        %v2962 = vld [vmem:[%s2584 + $0xe1] sm:$0xff]
        %v2963 = vld [vmem:[%s2584 + $0xf1] sm:$0xff]
        %v2964 = vld [vmem:[%s2584 + $0xf9] sm:$0xff]
        %v2965 = vld [vmem:[%s2584 + $0x109] sm:$0xff]
        %v2966 = vld [vmem:[%s2584 + $0x111] sm:$0xff]
        %v2967 = vld [vmem:[%s2584 + $0x121] sm:$0xff]
        %v2968 = vld [vmem:[%s2584 + $0x129] sm:$0xff]
        %v2969 = vld [vmem:[%s2584 + $0x139] sm:$0xff]
        %v2970 = vld [vmem:[%s2584 + $0x141] sm:$0xff]
        %v2971 = vld [vmem:[%s2584 + $0x151] sm:$0xff]
        %v2972 = vld [vmem:[%s2584 + $0x159] sm:$0xff]
        %v2973 = vld [vmem:[%s2584 + $0x169] sm:$0xff]
        %v2974 = vld [vmem:[%s2584 + $0x171] sm:$0xff]
        %v2975 = vpack.c.bf16 %v2944, %v2943
        %v2976 = vpack.c.bf16 %v2946, %v2945
        %v2977 = vpack.c.bf16 %v2948, %v2947
        %v2978 = vpack.c.bf16 %v2950, %v2949
        %v2979 = vpack.c.bf16 %v2952, %v2951
        %v2980 = vpack.c.bf16 %v2954, %v2953
        %v2981 = vpack.c.bf16 %v2956, %v2955
        %v2982 = vpack.c.bf16 %v2958, %v2957
        %v2983 = vpack.c.bf16 %v2960, %v2959
        %v2984 = vpack.c.bf16 %v2962, %v2961
        %v2985 = vpack.c.bf16 %v2964, %v2963
        %v2986 = vpack.c.bf16 %v2966, %v2965
        %v2987 = vpack.c.bf16 %v2968, %v2967
        %v2988 = vpack.c.bf16 %v2970, %v2969
        %v2989 = vpack.c.bf16 %v2972, %v2971
        %v2990 = vpack.c.bf16 %v2974, %v2973
        %s2991 = scalar_lea.vmem %s1, 14
        %v2992 = vld [vmem:[%s2991] sm:$0x3]
        %v2994 = vsel %vm417, %v2975, 0
        %v2997 = vsel %vm417, %v2976, 0
        %v3000 = vsel %vm417, %v2977, 0
        %v3003 = vsel %vm417, %v2978, 0
        %v3006 = vsel %vm417, %v2979, 0
        %v3009 = vsel %vm417, %v2980, 0
        %v3012 = vsel %vm417, %v2981, 0
        %v3015 = vsel %vm417, %v2982, 0
        %v3018 = vsel %vm417, %v2983, 0
        %v3021 = vsel %vm417, %v2984, 0
        %v3024 = vsel %vm417, %v2985, 0
        %v3027 = vsel %vm417, %v2986, 0
        %v3030 = vsel %vm417, %v2987, 0
        %v3033 = vsel %vm417, %v2988, 0
        %v3036 = vsel %vm417, %v2989, 0
        %v3039 = vsel %vm417, %v2990, 0
        %v3042 = vand.u32 %v2992, %v596
        %3044 = vmatprep.subr.bf16.mxu0 0
        %3045 = vmatpush1.bf16.msra.mxu0 %v3042
        %3046 = vmatprep.subr.bf16.mxu0 0
        %3047 = vmatpush1.bf16.msra.mxu0 0
        %3048 = vmatprep.subr.bf16.mxu0 0
        %3049 = vmatpush1.bf16.msra.mxu0 0
        %3050 = vmatprep.subr.bf16.mxu0 0
        %3051 = vmatpush1.bf16.msra.mxu0 0
        %3052 = vmatprep.subr.bf16.mxu0 0
        %3053 = vmatpush1.bf16.msra.mxu0 0
        %3054 = vmatprep.subr.bf16.mxu0 0
        %3055 = vmatpush1.bf16.msra.mxu0 0
        %3056 = vmatprep.subr.bf16.mxu0 0
        %3057 = vmatpush1.bf16.msra.mxu0 0
        %3058 = vmatprep.subr.bf16.mxu0 0
        %3059 = vmatpush1.bf16.msra.mxu0 0
        %3060 = vmatprep.subr.bf16.mxu0 0
        %3061 = vmatpush1.bf16.msra.mxu0 0
        %3062 = vmatprep.subr.bf16.mxu0 0
        %3063 = vmatpush1.bf16.msra.mxu0 0
        %3064 = vmatprep.subr.bf16.mxu0 0
        %3065 = vmatpush1.bf16.msra.mxu0 0
        %3066 = vmatprep.subr.bf16.mxu0 0
        %3067 = vmatpush1.bf16.msra.mxu0 0
        %3068 = vmatprep.subr.bf16.mxu0 0
        %3069 = vmatpush1.bf16.msra.mxu0 0
        %3070 = vmatprep.subr.bf16.mxu0 0
        %3071 = vmatpush1.bf16.msra.mxu0 0
        %3072 = vmatprep.subr.bf16.mxu0 0
        %3073 = vmatpush1.bf16.msra.mxu0 0
        %3074 = vmatprep.subr.bf16.mxu0 0
        %3075 = vmatpush1.bf16.msra.mxu0 0
        %3076 = vmatprep.mubr.bf16.mxu0 0
        %3077 = vmatmul.mubr.bf16.gmra.mrb[0].mxu0 %v2994
        %v3078 = vpop.f32.mrb[0].mxu0
        %v3079 = vadd.f32 0.0, %v3078
        %v3080 = vpop.f32.mrb[0].mxu0
        %v3081 = vpop.f32.mrb[0].mxu0
        %v3082 = vadd.f32 0.0, %v3081
        %v3083 = vpop.f32.mrb[0].mxu0
        %3084 = vmatprep.mubr.bf16.mxu0 0
        %3085 = vmatmul.mubr.bf16.gmra.mrb[0].mxu0 %v2997
        %v3086 = vpop.f32.mrb[0].mxu0
        %v3087 = vadd.f32 0.0, %v3086
        %v3088 = vpop.f32.mrb[0].mxu0
        %v3089 = vpop.f32.mrb[0].mxu0
        %v3090 = vadd.f32 0.0, %v3089
        %v3091 = vpop.f32.mrb[0].mxu0
        %3092 = vmatprep.mubr.bf16.mxu0 0
        %3093 = vmatmul.mubr.bf16.gmra.mrb[0].mxu0 %v3000
        %v3094 = vpop.f32.mrb[0].mxu0
        %v3095 = vadd.f32 0.0, %v3094
        %v3096 = vpop.f32.mrb[0].mxu0
        %v3097 = vpop.f32.mrb[0].mxu0
        %v3098 = vadd.f32 0.0, %v3097
        %v3099 = vpop.f32.mrb[0].mxu0
        %3100 = vmatprep.mubr.bf16.mxu0 0
        %3101 = vmatmul.mubr.bf16.gmra.mrb[0].mxu0 %v3003
        %v3102 = vpop.f32.mrb[0].mxu0
        %v3103 = vadd.f32 0.0, %v3102
        %v3104 = vpop.f32.mrb[0].mxu0
        %v3105 = vpop.f32.mrb[0].mxu0
        %v3106 = vadd.f32 0.0, %v3105
        %v3107 = vpop.f32.mrb[0].mxu0
        %3108 = vmatprep.mubr.bf16.mxu0 0
        %3109 = vmatmul.mubr.bf16.gmra.mrb[0].mxu0 %v3006
        %v3110 = vpop.f32.mrb[0].mxu0
        %v3111 = vadd.f32 0.0, %v3110
        %v3112 = vpop.f32.mrb[0].mxu0
        %v3113 = vpop.f32.mrb[0].mxu0
        %v3114 = vadd.f32 0.0, %v3113
        %v3115 = vpop.f32.mrb[0].mxu0
        %3116 = vmatprep.mubr.bf16.mxu0 0
        %3117 = vmatmul.mubr.bf16.gmra.mrb[0].mxu0 %v3009
        %v3118 = vpop.f32.mrb[0].mxu0
        %v3119 = vadd.f32 0.0, %v3118
        %v3120 = vpop.f32.mrb[0].mxu0
        %v3121 = vpop.f32.mrb[0].mxu0
        %v3122 = vadd.f32 0.0, %v3121
        %v3123 = vpop.f32.mrb[0].mxu0
        %3124 = vmatprep.mubr.bf16.mxu0 0
        %3125 = vmatmul.mubr.bf16.gmra.mrb[0].mxu0 %v3012
        %v3126 = vpop.f32.mrb[0].mxu0
        %v3127 = vadd.f32 0.0, %v3126
        %v3128 = vpop.f32.mrb[0].mxu0
        %v3129 = vpop.f32.mrb[0].mxu0
        %v3130 = vadd.f32 0.0, %v3129
        %v3131 = vpop.f32.mrb[0].mxu0
        %3132 = vmatprep.mubr.bf16.mxu0 0
        %3133 = vmatmul.mubr.bf16.gmra.mrb[0].mxu0 %v3015
        %v3134 = vpop.f32.mrb[0].mxu0
        %v3135 = vadd.f32 0.0, %v3134
        %v3136 = vpop.f32.mrb[0].mxu0
        %v3137 = vpop.f32.mrb[0].mxu0
        %v3138 = vadd.f32 0.0, %v3137
        %v3139 = vpop.f32.mrb[0].mxu0
        %3140 = vmatprep.mubr.bf16.mxu0 0
        %3141 = vmatmul.mubr.bf16.gmra.mrb[0].mxu0 %v3018
        %v3142 = vpop.f32.mrb[0].mxu0
        %v3143 = vadd.f32 0.0, %v3142
        %v3144 = vpop.f32.mrb[0].mxu0
        %v3145 = vpop.f32.mrb[0].mxu0
        %v3146 = vadd.f32 0.0, %v3145
        %v3147 = vpop.f32.mrb[0].mxu0
        %3148 = vmatprep.mubr.bf16.mxu0 0
        %3149 = vmatmul.mubr.bf16.gmra.mrb[0].mxu0 %v3021
        %v3150 = vpop.f32.mrb[0].mxu0
        %v3151 = vadd.f32 0.0, %v3150
        %v3152 = vpop.f32.mrb[0].mxu0
        %v3153 = vpop.f32.mrb[0].mxu0
        %v3154 = vadd.f32 0.0, %v3153
        %v3155 = vpop.f32.mrb[0].mxu0
        %3156 = vmatprep.mubr.bf16.mxu0 0
        %3157 = vmatmul.mubr.bf16.gmra.mrb[0].mxu0 %v3024
        %v3158 = vpop.f32.mrb[0].mxu0
        %v3159 = vadd.f32 0.0, %v3158
        %v3160 = vpop.f32.mrb[0].mxu0
        %v3161 = vpop.f32.mrb[0].mxu0
        %v3162 = vadd.f32 0.0, %v3161
        %v3163 = vpop.f32.mrb[0].mxu0
        %3164 = vmatprep.mubr.bf16.mxu0 0
        %3165 = vmatmul.mubr.bf16.gmra.mrb[0].mxu0 %v3027
        %v3166 = vpop.f32.mrb[0].mxu0
        %v3167 = vadd.f32 0.0, %v3166
        %v3168 = vpop.f32.mrb[0].mxu0
        %v3169 = vpop.f32.mrb[0].mxu0
        %v3170 = vadd.f32 0.0, %v3169
        %v3171 = vpop.f32.mrb[0].mxu0
        %3172 = vmatprep.mubr.bf16.mxu0 0
        %3173 = vmatmul.mubr.bf16.gmra.mrb[0].mxu0 %v3030
        %v3174 = vpop.f32.mrb[0].mxu0
        %v3175 = vadd.f32 0.0, %v3174
        %v3176 = vpop.f32.mrb[0].mxu0
        %v3177 = vpop.f32.mrb[0].mxu0
        %v3178 = vadd.f32 0.0, %v3177
        %v3179 = vpop.f32.mrb[0].mxu0
        %3180 = vmatprep.mubr.bf16.mxu0 0
        %3181 = vmatmul.mubr.bf16.gmra.mrb[0].mxu0 %v3033
        %v3182 = vpop.f32.mrb[0].mxu0
        %v3183 = vadd.f32 0.0, %v3182
        %v3184 = vpop.f32.mrb[0].mxu0
        %v3185 = vpop.f32.mrb[0].mxu0
        %v3186 = vadd.f32 0.0, %v3185
        %v3187 = vpop.f32.mrb[0].mxu0
        %3188 = vmatprep.mubr.bf16.mxu0 0
        %3189 = vmatmul.mubr.bf16.gmra.mrb[0].mxu0 %v3036
        %v3190 = vpop.f32.mrb[0].mxu0
        %v3191 = vadd.f32 0.0, %v3190
        %v3192 = vpop.f32.mrb[0].mxu0
        %v3193 = vpop.f32.mrb[0].mxu0
        %v3194 = vadd.f32 0.0, %v3193
        %v3195 = vpop.f32.mrb[0].mxu0
        %3196 = vmatprep.mubr.bf16.mxu0 0
        %3197 = vmatmul.mubr.bf16.gmra.mrb[0].mxu0 %v3039
        %v3198 = vpop.f32.mrb[0].mxu0
        %v3199 = vadd.f32 0.0, %v3198
        %v3200 = vpop.f32.mrb[0].mxu0
        %v3201 = vpop.f32.mrb[0].mxu0
        %v3202 = vadd.f32 0.0, %v3201
        %v3203 = vpop.f32.mrb[0].mxu0
        %3204 = vdwg.mxu0
        %v3205 = vld [vmem:[#allocation6] sm:$0xff]
        %v3206 = vld [vmem:[#allocation6 + $0x8] sm:$0xff]
        %v3207 = vld [vmem:[#allocation6 + $0x10] sm:$0xff]
        %v3208 = vld [vmem:[#allocation6 + $0x18] sm:$0xff]
        %v3209 = vld [vmem:[#allocation6 + $0x20] sm:$0xff]
        %v3210 = vld [vmem:[#allocation6 + $0x28] sm:$0xff]
        %v3211 = vld [vmem:[#allocation6 + $0x30] sm:$0xff]
        %v3212 = vld [vmem:[#allocation6 + $0x38] sm:$0xff]
        %v3213 = vld [vmem:[#allocation6 + $0x40] sm:$0xff]
        %v3214 = vld [vmem:[#allocation6 + $0x48] sm:$0xff]
        %v3215 = vld [vmem:[#allocation6 + $0x50] sm:$0xff]
        %v3216 = vld [vmem:[#allocation6 + $0x58] sm:$0xff]
        %v3217 = vld [vmem:[#allocation6 + $0x60] sm:$0xff]
        %v3218 = vld [vmem:[#allocation6 + $0x68] sm:$0xff]
        %v3219 = vld [vmem:[#allocation6 + $0x70] sm:$0xff]
        %v3220 = vld [vmem:[#allocation6 + $0x78] sm:$0xff]
        %v3221 = vld [vmem:[#allocation6 + $0x80] sm:$0xff]
        %v3222 = vld [vmem:[#allocation6 + $0x88] sm:$0xff]
        %v3223 = vld [vmem:[#allocation6 + $0x90] sm:$0xff]
        %v3224 = vld [vmem:[#allocation6 + $0x98] sm:$0xff]
        %v3225 = vld [vmem:[#allocation6 + $0xa0] sm:$0xff]
        %v3226 = vld [vmem:[#allocation6 + $0xa8] sm:$0xff]
        %v3227 = vld [vmem:[#allocation6 + $0xb0] sm:$0xff]
        %v3228 = vld [vmem:[#allocation6 + $0xb8] sm:$0xff]
        %v3229 = vld [vmem:[#allocation6 + $0xc0] sm:$0xff]
        %v3230 = vld [vmem:[#allocation6 + $0xc8] sm:$0xff]
        %v3231 = vld [vmem:[#allocation6 + $0xd0] sm:$0xff]
        %v3232 = vld [vmem:[#allocation6 + $0xd8] sm:$0xff]
        %v3233 = vld [vmem:[#allocation6 + $0xe0] sm:$0xff]
        %v3234 = vld [vmem:[#allocation6 + $0xe8] sm:$0xff]
        %v3235 = vld [vmem:[#allocation6 + $0xf0] sm:$0xff]
        %v3236 = vld [vmem:[#allocation6 + $0xf8] sm:$0xff]
        %v3237 = vadd.f32 %v3205, %v3079
        %v3238 = vadd.f32 %v3206, %v3082
        %v3239 = vadd.f32 %v3207, %v3087
        %v3240 = vadd.f32 %v3208, %v3090
        %v3241 = vadd.f32 %v3209, %v3095
        %v3242 = vadd.f32 %v3210, %v3098
        %v3243 = vadd.f32 %v3211, %v3103
        %v3244 = vadd.f32 %v3212, %v3106
        %v3245 = vadd.f32 %v3213, %v3111
        %v3246 = vadd.f32 %v3214, %v3114
        %v3247 = vadd.f32 %v3215, %v3119
        %v3248 = vadd.f32 %v3216, %v3122
        %v3249 = vadd.f32 %v3217, %v3127
        %v3250 = vadd.f32 %v3218, %v3130
        %v3251 = vadd.f32 %v3219, %v3135
        %v3252 = vadd.f32 %v3220, %v3138
        %v3253 = vadd.f32 %v3221, %v3143
        %v3254 = vadd.f32 %v3222, %v3146
        %v3255 = vadd.f32 %v3223, %v3151
        %v3256 = vadd.f32 %v3224, %v3154
        %v3257 = vadd.f32 %v3225, %v3159
        %v3258 = vadd.f32 %v3226, %v3162
        %v3259 = vadd.f32 %v3227, %v3167
        %v3260 = vadd.f32 %v3228, %v3170
        %v3261 = vadd.f32 %v3229, %v3175
        %v3262 = vadd.f32 %v3230, %v3178
        %v3263 = vadd.f32 %v3231, %v3183
        %v3264 = vadd.f32 %v3232, %v3186
        %v3265 = vadd.f32 %v3233, %v3191
        %v3266 = vadd.f32 %v3234, %v3194
        %v3267 = vadd.f32 %v3235, %v3199
        %v3268 = vadd.f32 %v3236, %v3202
        %3269 = vst.msk [vmem:[#allocation6] sm:$0xff] %vm761, %v3237
        %3270 = vst.msk [vmem:[#allocation6 + $0x8] sm:$0xff] %vm761, %v3238
        %3271 = vst.msk [vmem:[#allocation6 + $0x10] sm:$0xff] %vm761, %v3239
        %3272 = vst.msk [vmem:[#allocation6 + $0x18] sm:$0xff] %vm761, %v3240
        %3273 = vst.msk [vmem:[#allocation6 + $0x20] sm:$0xff] %vm761, %v3241
        %3274 = vst.msk [vmem:[#allocation6 + $0x28] sm:$0xff] %vm761, %v3242
        %3275 = vst.msk [vmem:[#allocation6 + $0x30] sm:$0xff] %vm761, %v3243
        %3276 = vst.msk [vmem:[#allocation6 + $0x38] sm:$0xff] %vm761, %v3244
        %3277 = vst.msk [vmem:[#allocation6 + $0x40] sm:$0xff] %vm761, %v3245
        %3278 = vst.msk [vmem:[#allocation6 + $0x48] sm:$0xff] %vm761, %v3246
        %3279 = vst.msk [vmem:[#allocation6 + $0x50] sm:$0xff] %vm761, %v3247
        %3280 = vst.msk [vmem:[#allocation6 + $0x58] sm:$0xff] %vm761, %v3248
        %3281 = vst.msk [vmem:[#allocation6 + $0x60] sm:$0xff] %vm761, %v3249
        %3282 = vst.msk [vmem:[#allocation6 + $0x68] sm:$0xff] %vm761, %v3250
        %3283 = vst.msk [vmem:[#allocation6 + $0x70] sm:$0xff] %vm761, %v3251
        %3284 = vst.msk [vmem:[#allocation6 + $0x78] sm:$0xff] %vm761, %v3252
        %3285 = vst.msk [vmem:[#allocation6 + $0x80] sm:$0xff] %vm761, %v3253
        %3286 = vst.msk [vmem:[#allocation6 + $0x88] sm:$0xff] %vm761, %v3254
        %3287 = vst.msk [vmem:[#allocation6 + $0x90] sm:$0xff] %vm761, %v3255
        %3288 = vst.msk [vmem:[#allocation6 + $0x98] sm:$0xff] %vm761, %v3256
        %3289 = vst.msk [vmem:[#allocation6 + $0xa0] sm:$0xff] %vm761, %v3257
        %3290 = vst.msk [vmem:[#allocation6 + $0xa8] sm:$0xff] %vm761, %v3258
        %3291 = vst.msk [vmem:[#allocation6 + $0xb0] sm:$0xff] %vm761, %v3259
        %3292 = vst.msk [vmem:[#allocation6 + $0xb8] sm:$0xff] %vm761, %v3260
        %3293 = vst.msk [vmem:[#allocation6 + $0xc0] sm:$0xff] %vm761, %v3261
        %3294 = vst.msk [vmem:[#allocation6 + $0xc8] sm:$0xff] %vm761, %v3262
        %3295 = vst.msk [vmem:[#allocation6 + $0xd0] sm:$0xff] %vm761, %v3263
        %3296 = vst.msk [vmem:[#allocation6 + $0xd8] sm:$0xff] %vm761, %v3264
        %3297 = vst.msk [vmem:[#allocation6 + $0xe0] sm:$0xff] %vm761, %v3265
        %3298 = vst.msk [vmem:[#allocation6 + $0xe8] sm:$0xff] %vm761, %v3266
        %3299 = vst.msk [vmem:[#allocation6 + $0xf0] sm:$0xff] %vm761, %v3267
        %3300 = vst.msk [vmem:[#allocation6 + $0xf8] sm:$0xff] %vm761, %v3268
        %v3301 = vld [vmem:[%s2584 + $0x2] sm:$0xff]
        %v3302 = vld [vmem:[%s2584 + $0xa] sm:$0xff]
        %v3303 = vld [vmem:[%s2584 + $0x1a] sm:$0xff]
        %v3304 = vld [vmem:[%s2584 + $0x22] sm:$0xff]
        %v3305 = vld [vmem:[%s2584 + $0x32] sm:$0xff]
        %v3306 = vld [vmem:[%s2584 + $0x3a] sm:$0xff]
        %v3307 = vld [vmem:[%s2584 + $0x4a] sm:$0xff]
        %v3308 = vld [vmem:[%s2584 + $0x52] sm:$0xff]
        %v3309 = vld [vmem:[%s2584 + $0x62] sm:$0xff]
        %v3310 = vld [vmem:[%s2584 + $0x6a] sm:$0xff]
        %v3311 = vld [vmem:[%s2584 + $0x7a] sm:$0xff]
        %v3312 = vld [vmem:[%s2584 + $0x82] sm:$0xff]
        %v3313 = vld [vmem:[%s2584 + $0x92] sm:$0xff]
        %v3314 = vld [vmem:[%s2584 + $0x9a] sm:$0xff]
        %v3315 = vld [vmem:[%s2584 + $0xaa] sm:$0xff]
        %v3316 = vld [vmem:[%s2584 + $0xb2] sm:$0xff]
        %v3317 = vld [vmem:[%s2584 + $0xc2] sm:$0xff]
        %v3318 = vld [vmem:[%s2584 + $0xca] sm:$0xff]
        %v3319 = vld [vmem:[%s2584 + $0xda] sm:$0xff]
        %v3320 = vld [vmem:[%s2584 + $0xe2] sm:$0xff]
        %v3321 = vld [vmem:[%s2584 + $0xf2] sm:$0xff]
        %v3322 = vld [vmem:[%s2584 + $0xfa] sm:$0xff]
        %v3323 = vld [vmem:[%s2584 + $0x10a] sm:$0xff]
        %v3324 = vld [vmem:[%s2584 + $0x112] sm:$0xff]
        %v3325 = vld [vmem:[%s2584 + $0x122] sm:$0xff]
        %v3326 = vld [vmem:[%s2584 + $0x12a] sm:$0xff]
        %v3327 = vld [vmem:[%s2584 + $0x13a] sm:$0xff]
        %v3328 = vld [vmem:[%s2584 + $0x142] sm:$0xff]
        %v3329 = vld [vmem:[%s2584 + $0x152] sm:$0xff]
        %v3330 = vld [vmem:[%s2584 + $0x15a] sm:$0xff]
        %v3331 = vld [vmem:[%s2584 + $0x16a] sm:$0xff]
        %v3332 = vld [vmem:[%s2584 + $0x172] sm:$0xff]
        %v3333 = vpack.c.bf16 %v3302, %v3301
        %v3334 = vpack.c.bf16 %v3304, %v3303
        %v3335 = vpack.c.bf16 %v3306, %v3305
        %v3336 = vpack.c.bf16 %v3308, %v3307
        %v3337 = vpack.c.bf16 %v3310, %v3309
        %v3338 = vpack.c.bf16 %v3312, %v3311
        %v3339 = vpack.c.bf16 %v3314, %v3313
        %v3340 = vpack.c.bf16 %v3316, %v3315
        %v3341 = vpack.c.bf16 %v3318, %v3317
        %v3342 = vpack.c.bf16 %v3320, %v3319
        %v3343 = vpack.c.bf16 %v3322, %v3321
        %v3344 = vpack.c.bf16 %v3324, %v3323
        %v3345 = vpack.c.bf16 %v3326, %v3325
        %v3346 = vpack.c.bf16 %v3328, %v3327
        %v3347 = vpack.c.bf16 %v3330, %v3329
        %v3348 = vpack.c.bf16 %v3332, %v3331
        %s3349 = scalar_lea.vmem %s1, 16
        %v3350 = vld [vmem:[%s3349] sm:$0x3]
        %v3352 = vsel %vm417, %v3333, 0
        %v3355 = vsel %vm417, %v3334, 0
        %v3358 = vsel %vm417, %v3335, 0
        %v3361 = vsel %vm417, %v3336, 0
        %v3364 = vsel %vm417, %v3337, 0
        %v3367 = vsel %vm417, %v3338, 0
        %v3370 = vsel %vm417, %v3339, 0
        %v3373 = vsel %vm417, %v3340, 0
        %v3376 = vsel %vm417, %v3341, 0
        %v3379 = vsel %vm417, %v3342, 0
        %v3382 = vsel %vm417, %v3343, 0
        %v3385 = vsel %vm417, %v3344, 0
        %v3388 = vsel %vm417, %v3345, 0
        %v3391 = vsel %vm417, %v3346, 0
        %v3394 = vsel %vm417, %v3347, 0
        %v3397 = vsel %vm417, %v3348, 0
        %v3400 = vand.u32 %v3350, %v596
        %3402 = vmatprep.subr.bf16.mxu0 0
        %3403 = vmatpush1.bf16.msra.mxu0 %v3400
        %3404 = vmatprep.subr.bf16.mxu0 0
        %3405 = vmatpush1.bf16.msra.mxu0 0
        %3406 = vmatprep.subr.bf16.mxu0 0
        %3407 = vmatpush1.bf16.msra.mxu0 0
        %3408 = vmatprep.subr.bf16.mxu0 0
        %3409 = vmatpush1.bf16.msra.mxu0 0
        %3410 = vmatprep.subr.bf16.mxu0 0
        %3411 = vmatpush1.bf16.msra.mxu0 0
        %3412 = vmatprep.subr.bf16.mxu0 0
        %3413 = vmatpush1.bf16.msra.mxu0 0
        %3414 = vmatprep.subr.bf16.mxu0 0
        %3415 = vmatpush1.bf16.msra.mxu0 0
        %3416 = vmatprep.subr.bf16.mxu0 0
        %3417 = vmatpush1.bf16.msra.mxu0 0
        %3418 = vmatprep.subr.bf16.mxu0 0
        %3419 = vmatpush1.bf16.msra.mxu0 0
        %3420 = vmatprep.subr.bf16.mxu0 0
        %3421 = vmatpush1.bf16.msra.mxu0 0
        %3422 = vmatprep.subr.bf16.mxu0 0
        %3423 = vmatpush1.bf16.msra.mxu0 0
        %3424 = vmatprep.subr.bf16.mxu0 0
        %3425 = vmatpush1.bf16.msra.mxu0 0
        %3426 = vmatprep.subr.bf16.mxu0 0
        %3427 = vmatpush1.bf16.msra.mxu0 0
        %3428 = vmatprep.subr.bf16.mxu0 0
        %3429 = vmatpush1.bf16.msra.mxu0 0
        %3430 = vmatprep.subr.bf16.mxu0 0
        %3431 = vmatpush1.bf16.msra.mxu0 0
        %3432 = vmatprep.subr.bf16.mxu0 0
        %3433 = vmatpush1.bf16.msra.mxu0 0
        %3434 = vmatprep.mubr.bf16.mxu0 0
        %3435 = vmatmul.mubr.bf16.gmra.mrb[0].mxu0 %v3352
        %v3436 = vpop.f32.mrb[0].mxu0
        %v3437 = vadd.f32 0.0, %v3436
        %v3438 = vpop.f32.mrb[0].mxu0
        %v3439 = vpop.f32.mrb[0].mxu0
        %v3440 = vadd.f32 0.0, %v3439
        %v3441 = vpop.f32.mrb[0].mxu0
        %3442 = vmatprep.mubr.bf16.mxu0 0
        %3443 = vmatmul.mubr.bf16.gmra.mrb[0].mxu0 %v3355
        %v3444 = vpop.f32.mrb[0].mxu0
        %v3445 = vadd.f32 0.0, %v3444
        %v3446 = vpop.f32.mrb[0].mxu0
        %v3447 = vpop.f32.mrb[0].mxu0
        %v3448 = vadd.f32 0.0, %v3447
        %v3449 = vpop.f32.mrb[0].mxu0
        %3450 = vmatprep.mubr.bf16.mxu0 0
        %3451 = vmatmul.mubr.bf16.gmra.mrb[0].mxu0 %v3358
        %v3452 = vpop.f32.mrb[0].mxu0
        %v3453 = vadd.f32 0.0, %v3452
        %v3454 = vpop.f32.mrb[0].mxu0
        %v3455 = vpop.f32.mrb[0].mxu0
        %v3456 = vadd.f32 0.0, %v3455
        %v3457 = vpop.f32.mrb[0].mxu0
        %3458 = vmatprep.mubr.bf16.mxu0 0
        %3459 = vmatmul.mubr.bf16.gmra.mrb[0].mxu0 %v3361
        %v3460 = vpop.f32.mrb[0].mxu0
        %v3461 = vadd.f32 0.0, %v3460
        %v3462 = vpop.f32.mrb[0].mxu0
        %v3463 = vpop.f32.mrb[0].mxu0
        %v3464 = vadd.f32 0.0, %v3463
        %v3465 = vpop.f32.mrb[0].mxu0
        %3466 = vmatprep.mubr.bf16.mxu0 0
        %3467 = vmatmul.mubr.bf16.gmra.mrb[0].mxu0 %v3364
        %v3468 = vpop.f32.mrb[0].mxu0
        %v3469 = vadd.f32 0.0, %v3468
        %v3470 = vpop.f32.mrb[0].mxu0
        %v3471 = vpop.f32.mrb[0].mxu0
        %v3472 = vadd.f32 0.0, %v3471
        %v3473 = vpop.f32.mrb[0].mxu0
        %3474 = vmatprep.mubr.bf16.mxu0 0
        %3475 = vmatmul.mubr.bf16.gmra.mrb[0].mxu0 %v3367
        %v3476 = vpop.f32.mrb[0].mxu0
        %v3477 = vadd.f32 0.0, %v3476
        %v3478 = vpop.f32.mrb[0].mxu0
        %v3479 = vpop.f32.mrb[0].mxu0
        %v3480 = vadd.f32 0.0, %v3479
        %v3481 = vpop.f32.mrb[0].mxu0
        %3482 = vmatprep.mubr.bf16.mxu0 0
        %3483 = vmatmul.mubr.bf16.gmra.mrb[0].mxu0 %v3370
        %v3484 = vpop.f32.mrb[0].mxu0
        %v3485 = vadd.f32 0.0, %v3484
        %v3486 = vpop.f32.mrb[0].mxu0
        %v3487 = vpop.f32.mrb[0].mxu0
        %v3488 = vadd.f32 0.0, %v3487
        %v3489 = vpop.f32.mrb[0].mxu0
        %3490 = vmatprep.mubr.bf16.mxu0 0
        %3491 = vmatmul.mubr.bf16.gmra.mrb[0].mxu0 %v3373
        %v3492 = vpop.f32.mrb[0].mxu0
        %v3493 = vadd.f32 0.0, %v3492
        %v3494 = vpop.f32.mrb[0].mxu0
        %v3495 = vpop.f32.mrb[0].mxu0
        %v3496 = vadd.f32 0.0, %v3495
        %v3497 = vpop.f32.mrb[0].mxu0
        %3498 = vmatprep.mubr.bf16.mxu0 0
        %3499 = vmatmul.mubr.bf16.gmra.mrb[0].mxu0 %v3376
        %v3500 = vpop.f32.mrb[0].mxu0
        %v3501 = vadd.f32 0.0, %v3500
        %v3502 = vpop.f32.mrb[0].mxu0
        %v3503 = vpop.f32.mrb[0].mxu0
        %v3504 = vadd.f32 0.0, %v3503
        %v3505 = vpop.f32.mrb[0].mxu0
        %3506 = vmatprep.mubr.bf16.mxu0 0
        %3507 = vmatmul.mubr.bf16.gmra.mrb[0].mxu0 %v3379
        %v3508 = vpop.f32.mrb[0].mxu0
        %v3509 = vadd.f32 0.0, %v3508
        %v3510 = vpop.f32.mrb[0].mxu0
        %v3511 = vpop.f32.mrb[0].mxu0
        %v3512 = vadd.f32 0.0, %v3511
        %v3513 = vpop.f32.mrb[0].mxu0
        %3514 = vmatprep.mubr.bf16.mxu0 0
        %3515 = vmatmul.mubr.bf16.gmra.mrb[0].mxu0 %v3382
        %v3516 = vpop.f32.mrb[0].mxu0
        %v3517 = vadd.f32 0.0, %v3516
        %v3518 = vpop.f32.mrb[0].mxu0
        %v3519 = vpop.f32.mrb[0].mxu0
        %v3520 = vadd.f32 0.0, %v3519
        %v3521 = vpop.f32.mrb[0].mxu0
        %3522 = vmatprep.mubr.bf16.mxu0 0
        %3523 = vmatmul.mubr.bf16.gmra.mrb[0].mxu0 %v3385
        %v3524 = vpop.f32.mrb[0].mxu0
        %v3525 = vadd.f32 0.0, %v3524
        %v3526 = vpop.f32.mrb[0].mxu0
        %v3527 = vpop.f32.mrb[0].mxu0
        %v3528 = vadd.f32 0.0, %v3527
        %v3529 = vpop.f32.mrb[0].mxu0
        %3530 = vmatprep.mubr.bf16.mxu0 0
        %3531 = vmatmul.mubr.bf16.gmra.mrb[0].mxu0 %v3388
        %v3532 = vpop.f32.mrb[0].mxu0
        %v3533 = vadd.f32 0.0, %v3532
        %v3534 = vpop.f32.mrb[0].mxu0
        %v3535 = vpop.f32.mrb[0].mxu0
        %v3536 = vadd.f32 0.0, %v3535
        %v3537 = vpop.f32.mrb[0].mxu0
        %3538 = vmatprep.mubr.bf16.mxu0 0
        %3539 = vmatmul.mubr.bf16.gmra.mrb[0].mxu0 %v3391
        %v3540 = vpop.f32.mrb[0].mxu0
        %v3541 = vadd.f32 0.0, %v3540
        %v3542 = vpop.f32.mrb[0].mxu0
        %v3543 = vpop.f32.mrb[0].mxu0
        %v3544 = vadd.f32 0.0, %v3543
        %v3545 = vpop.f32.mrb[0].mxu0
        %3546 = vmatprep.mubr.bf16.mxu0 0
        %3547 = vmatmul.mubr.bf16.gmra.mrb[0].mxu0 %v3394
        %v3548 = vpop.f32.mrb[0].mxu0
        %v3549 = vadd.f32 0.0, %v3548
        %v3550 = vpop.f32.mrb[0].mxu0
        %v3551 = vpop.f32.mrb[0].mxu0
        %v3552 = vadd.f32 0.0, %v3551
        %v3553 = vpop.f32.mrb[0].mxu0
        %3554 = vmatprep.mubr.bf16.mxu0 0
        %3555 = vmatmul.mubr.bf16.gmra.mrb[0].mxu0 %v3397
        %v3556 = vpop.f32.mrb[0].mxu0
        %v3557 = vadd.f32 0.0, %v3556
        %v3558 = vpop.f32.mrb[0].mxu0
        %v3559 = vpop.f32.mrb[0].mxu0
        %v3560 = vadd.f32 0.0, %v3559
        %v3561 = vpop.f32.mrb[0].mxu0
        %3562 = vdwg.mxu0
        %v3563 = vld [vmem:[#allocation6] sm:$0xff]
        %v3564 = vld [vmem:[#allocation6 + $0x8] sm:$0xff]
        %v3565 = vld [vmem:[#allocation6 + $0x10] sm:$0xff]
        %v3566 = vld [vmem:[#allocation6 + $0x18] sm:$0xff]
        %v3567 = vld [vmem:[#allocation6 + $0x20] sm:$0xff]
        %v3568 = vld [vmem:[#allocation6 + $0x28] sm:$0xff]
        %v3569 = vld [vmem:[#allocation6 + $0x30] sm:$0xff]
        %v3570 = vld [vmem:[#allocation6 + $0x38] sm:$0xff]
        %v3571 = vld [vmem:[#allocation6 + $0x40] sm:$0xff]
        %v3572 = vld [vmem:[#allocation6 + $0x48] sm:$0xff]
        %v3573 = vld [vmem:[#allocation6 + $0x50] sm:$0xff]
        %v3574 = vld [vmem:[#allocation6 + $0x58] sm:$0xff]
        %v3575 = vld [vmem:[#allocation6 + $0x60] sm:$0xff]
        %v3576 = vld [vmem:[#allocation6 + $0x68] sm:$0xff]
        %v3577 = vld [vmem:[#allocation6 + $0x70] sm:$0xff]
        %v3578 = vld [vmem:[#allocation6 + $0x78] sm:$0xff]
        %v3579 = vld [vmem:[#allocation6 + $0x80] sm:$0xff]
        %v3580 = vld [vmem:[#allocation6 + $0x88] sm:$0xff]
        %v3581 = vld [vmem:[#allocation6 + $0x90] sm:$0xff]
        %v3582 = vld [vmem:[#allocation6 + $0x98] sm:$0xff]
        %v3583 = vld [vmem:[#allocation6 + $0xa0] sm:$0xff]
        %v3584 = vld [vmem:[#allocation6 + $0xa8] sm:$0xff]
        %v3585 = vld [vmem:[#allocation6 + $0xb0] sm:$0xff]
        %v3586 = vld [vmem:[#allocation6 + $0xb8] sm:$0xff]
        %v3587 = vld [vmem:[#allocation6 + $0xc0] sm:$0xff]
        %v3588 = vld [vmem:[#allocation6 + $0xc8] sm:$0xff]
        %v3589 = vld [vmem:[#allocation6 + $0xd0] sm:$0xff]
        %v3590 = vld [vmem:[#allocation6 + $0xd8] sm:$0xff]
        %v3591 = vld [vmem:[#allocation6 + $0xe0] sm:$0xff]
        %v3592 = vld [vmem:[#allocation6 + $0xe8] sm:$0xff]
        %v3593 = vld [vmem:[#allocation6 + $0xf0] sm:$0xff]
        %v3594 = vld [vmem:[#allocation6 + $0xf8] sm:$0xff]
        %v3595 = vadd.f32 %v3563, %v3437
        %v3596 = vadd.f32 %v3564, %v3440
        %v3597 = vadd.f32 %v3565, %v3445
        %v3598 = vadd.f32 %v3566, %v3448
        %v3599 = vadd.f32 %v3567, %v3453
        %v3600 = vadd.f32 %v3568, %v3456
        %v3601 = vadd.f32 %v3569, %v3461
        %v3602 = vadd.f32 %v3570, %v3464
        %v3603 = vadd.f32 %v3571, %v3469
        %v3604 = vadd.f32 %v3572, %v3472
        %v3605 = vadd.f32 %v3573, %v3477
        %v3606 = vadd.f32 %v3574, %v3480
        %v3607 = vadd.f32 %v3575, %v3485
        %v3608 = vadd.f32 %v3576, %v3488
        %v3609 = vadd.f32 %v3577, %v3493
        %v3610 = vadd.f32 %v3578, %v3496
        %v3611 = vadd.f32 %v3579, %v3501
        %v3612 = vadd.f32 %v3580, %v3504
        %v3613 = vadd.f32 %v3581, %v3509
        %v3614 = vadd.f32 %v3582, %v3512
        %v3615 = vadd.f32 %v3583, %v3517
        %v3616 = vadd.f32 %v3584, %v3520
        %v3617 = vadd.f32 %v3585, %v3525
        %v3618 = vadd.f32 %v3586, %v3528
        %v3619 = vadd.f32 %v3587, %v3533
        %v3620 = vadd.f32 %v3588, %v3536
        %v3621 = vadd.f32 %v3589, %v3541
        %v3622 = vadd.f32 %v3590, %v3544
        %v3623 = vadd.f32 %v3591, %v3549
        %v3624 = vadd.f32 %v3592, %v3552
        %v3625 = vadd.f32 %v3593, %v3557
        %v3626 = vadd.f32 %v3594, %v3560
        %3627 = vst.msk [vmem:[#allocation6] sm:$0xff] %vm761, %v3595
        %3628 = vst.msk [vmem:[#allocation6 + $0x8] sm:$0xff] %vm761, %v3596
        %3629 = vst.msk [vmem:[#allocation6 + $0x10] sm:$0xff] %vm761, %v3597
        %3630 = vst.msk [vmem:[#allocation6 + $0x18] sm:$0xff] %vm761, %v3598
        %3631 = vst.msk [vmem:[#allocation6 + $0x20] sm:$0xff] %vm761, %v3599
        %3632 = vst.msk [vmem:[#allocation6 + $0x28] sm:$0xff] %vm761, %v3600
        %3633 = vst.msk [vmem:[#allocation6 + $0x30] sm:$0xff] %vm761, %v3601
        %3634 = vst.msk [vmem:[#allocation6 + $0x38] sm:$0xff] %vm761, %v3602
        %3635 = vst.msk [vmem:[#allocation6 + $0x40] sm:$0xff] %vm761, %v3603
        %3636 = vst.msk [vmem:[#allocation6 + $0x48] sm:$0xff] %vm761, %v3604
        %3637 = vst.msk [vmem:[#allocation6 + $0x50] sm:$0xff] %vm761, %v3605
        %3638 = vst.msk [vmem:[#allocation6 + $0x58] sm:$0xff] %vm761, %v3606
        %3639 = vst.msk [vmem:[#allocation6 + $0x60] sm:$0xff] %vm761, %v3607
        %3640 = vst.msk [vmem:[#allocation6 + $0x68] sm:$0xff] %vm761, %v3608
        %3641 = vst.msk [vmem:[#allocation6 + $0x70] sm:$0xff] %vm761, %v3609
        %3642 = vst.msk [vmem:[#allocation6 + $0x78] sm:$0xff] %vm761, %v3610
        %3643 = vst.msk [vmem:[#allocation6 + $0x80] sm:$0xff] %vm761, %v3611
        %3644 = vst.msk [vmem:[#allocation6 + $0x88] sm:$0xff] %vm761, %v3612
        %3645 = vst.msk [vmem:[#allocation6 + $0x90] sm:$0xff] %vm761, %v3613
        %3646 = vst.msk [vmem:[#allocation6 + $0x98] sm:$0xff] %vm761, %v3614
        %3647 = vst.msk [vmem:[#allocation6 + $0xa0] sm:$0xff] %vm761, %v3615
        %3648 = vst.msk [vmem:[#allocation6 + $0xa8] sm:$0xff] %vm761, %v3616
        %3649 = vst.msk [vmem:[#allocation6 + $0xb0] sm:$0xff] %vm761, %v3617
        %3650 = vst.msk [vmem:[#allocation6 + $0xb8] sm:$0xff] %vm761, %v3618
        %3651 = vst.msk [vmem:[#allocation6 + $0xc0] sm:$0xff] %vm761, %v3619
        %3652 = vst.msk [vmem:[#allocation6 + $0xc8] sm:$0xff] %vm761, %v3620
        %3653 = vst.msk [vmem:[#allocation6 + $0xd0] sm:$0xff] %vm761, %v3621
        %3654 = vst.msk [vmem:[#allocation6 + $0xd8] sm:$0xff] %vm761, %v3622
        %3655 = vst.msk [vmem:[#allocation6 + $0xe0] sm:$0xff] %vm761, %v3623
        %3656 = vst.msk [vmem:[#allocation6 + $0xe8] sm:$0xff] %vm761, %v3624
        %3657 = vst.msk [vmem:[#allocation6 + $0xf0] sm:$0xff] %vm761, %v3625
        %3658 = vst.msk [vmem:[#allocation6 + $0xf8] sm:$0xff] %vm761, %v3626
        %v3659 = vld [vmem:[#allocation6] sm:$0xff]
        %v3660 = vld [vmem:[#allocation6 + $0x8] sm:$0xff]
        %v3661 = vld [vmem:[#allocation6 + $0x10] sm:$0xff]
        %v3662 = vld [vmem:[#allocation6 + $0x18] sm:$0xff]
        %v3663 = vld [vmem:[#allocation6 + $0x20] sm:$0xff]
        %v3664 = vld [vmem:[#allocation6 + $0x28] sm:$0xff]
        %v3665 = vld [vmem:[#allocation6 + $0x30] sm:$0xff]
        %v3666 = vld [vmem:[#allocation6 + $0x38] sm:$0xff]
        %v3667 = vld [vmem:[#allocation6 + $0x40] sm:$0xff]
        %v3668 = vld [vmem:[#allocation6 + $0x48] sm:$0xff]
        %v3669 = vld [vmem:[#allocation6 + $0x50] sm:$0xff]
        %v3670 = vld [vmem:[#allocation6 + $0x58] sm:$0xff]
        %v3671 = vld [vmem:[#allocation6 + $0x60] sm:$0xff]
        %v3672 = vld [vmem:[#allocation6 + $0x68] sm:$0xff]
        %v3673 = vld [vmem:[#allocation6 + $0x70] sm:$0xff]
        %v3674 = vld [vmem:[#allocation6 + $0x78] sm:$0xff]
        %v3675 = vld [vmem:[#allocation6 + $0x80] sm:$0xff]
        %v3676 = vld [vmem:[#allocation6 + $0x88] sm:$0xff]
        %v3677 = vld [vmem:[#allocation6 + $0x90] sm:$0xff]
        %v3678 = vld [vmem:[#allocation6 + $0x98] sm:$0xff]
        %v3679 = vld [vmem:[#allocation6 + $0xa0] sm:$0xff]
        %v3680 = vld [vmem:[#allocation6 + $0xa8] sm:$0xff]
        %v3681 = vld [vmem:[#allocation6 + $0xb0] sm:$0xff]
        %v3682 = vld [vmem:[#allocation6 + $0xb8] sm:$0xff]
        %v3683 = vld [vmem:[#allocation6 + $0xc0] sm:$0xff]
        %v3684 = vld [vmem:[#allocation6 + $0xc8] sm:$0xff]
        %v3685 = vld [vmem:[#allocation6 + $0xd0] sm:$0xff]
        %v3686 = vld [vmem:[#allocation6 + $0xd8] sm:$0xff]
        %v3687 = vld [vmem:[#allocation6 + $0xe0] sm:$0xff]
        %v3688 = vld [vmem:[#allocation6 + $0xe8] sm:$0xff]
        %v3689 = vld [vmem:[#allocation6 + $0xf0] sm:$0xff]
        %v3690 = vld [vmem:[#allocation6 + $0xf8] sm:$0xff]
        %v3691 = vld [vmem:[%s5] sm:$0x1]
        %v3693 = vlaneseq
        %v3694 = vshrl.u32 %v3693, 7
        %v3695 = vsub.s32 0, %v3694
        %v3696 = vrot.slane %v3691, %v3695
        %v3698 = vadd.f32 %v3659, %v3696
        %v3699 = vadd.f32 %v3660, %v3696
        %v3700 = vadd.f32 %v3661, %v3696
        %v3701 = vadd.f32 %v3662, %v3696
        %v3702 = vadd.f32 %v3663, %v3696
        %v3703 = vadd.f32 %v3664, %v3696
        %v3704 = vadd.f32 %v3665, %v3696
        %v3705 = vadd.f32 %v3666, %v3696
        %v3706 = vadd.f32 %v3667, %v3696
        %v3707 = vadd.f32 %v3668, %v3696
        %v3708 = vadd.f32 %v3669, %v3696
        %v3709 = vadd.f32 %v3670, %v3696
        %v3710 = vadd.f32 %v3671, %v3696
        %v3711 = vadd.f32 %v3672, %v3696
        %v3712 = vadd.f32 %v3673, %v3696
        %v3713 = vadd.f32 %v3674, %v3696
        %v3714 = vadd.f32 %v3675, %v3696
        %v3715 = vadd.f32 %v3676, %v3696
        %v3716 = vadd.f32 %v3677, %v3696
        %v3717 = vadd.f32 %v3678, %v3696
        %v3718 = vadd.f32 %v3679, %v3696
        %v3719 = vadd.f32 %v3680, %v3696
        %v3720 = vadd.f32 %v3681, %v3696
        %v3721 = vadd.f32 %v3682, %v3696
        %v3722 = vadd.f32 %v3683, %v3696
        %v3723 = vadd.f32 %v3684, %v3696
        %v3724 = vadd.f32 %v3685, %v3696
        %v3725 = vadd.f32 %v3686, %v3696
        %v3726 = vadd.f32 %v3687, %v3696
        %v3727 = vadd.f32 %v3688, %v3696
        %v3728 = vadd.f32 %v3689, %v3696
        %v3729 = vadd.f32 %v3690, %v3696
        %v3730 = vmax.f32 %v3698, 0.0
        %v3731 = vmax.f32 %v3699, 0.0
        %v3732 = vmax.f32 %v3700, 0.0
        %v3733 = vmax.f32 %v3701, 0.0
        %v3734 = vmax.f32 %v3702, 0.0
        %v3735 = vmax.f32 %v3703, 0.0
        %v3736 = vmax.f32 %v3704, 0.0
        %v3737 = vmax.f32 %v3705, 0.0
        %v3738 = vmax.f32 %v3706, 0.0
        %v3739 = vmax.f32 %v3707, 0.0
        %v3740 = vmax.f32 %v3708, 0.0
        %v3741 = vmax.f32 %v3709, 0.0
        %v3742 = vmax.f32 %v3710, 0.0
        %v3743 = vmax.f32 %v3711, 0.0
        %v3744 = vmax.f32 %v3712, 0.0
        %v3745 = vmax.f32 %v3713, 0.0
        %v3746 = vmax.f32 %v3714, 0.0
        %v3747 = vmax.f32 %v3715, 0.0
        %v3748 = vmax.f32 %v3716, 0.0
        %v3749 = vmax.f32 %v3717, 0.0
        %v3750 = vmax.f32 %v3718, 0.0
        %v3751 = vmax.f32 %v3719, 0.0
        %v3752 = vmax.f32 %v3720, 0.0
        %v3753 = vmax.f32 %v3721, 0.0
        %v3754 = vmax.f32 %v3722, 0.0
        %v3755 = vmax.f32 %v3723, 0.0
        %v3756 = vmax.f32 %v3724, 0.0
        %v3757 = vmax.f32 %v3725, 0.0
        %v3758 = vmax.f32 %v3726, 0.0
        %v3759 = vmax.f32 %v3727, 0.0
        %v3760 = vmax.f32 %v3728, 0.0
        %v3761 = vmax.f32 %v3729, 0.0
        %v3794 = vcombine.high %v3730, %v3730
        %v3796 = vunpack.c.l.s4 1983009808
        %v3797 = vunpack.c.0.s8 %v3796
        %v3798 = vlaneseq
        %v3799 = vshrl.u32 %v3798, 7
        %v3800 = vsub.s32 %v3797, %v3799
        %v3801 = vrot.slane %v3730, %v3800
        %v3803 = vunpack.c.l.s4 1983009808
        %v3804 = vunpack.c.0.s8 %v3803
        %v3805 = vlaneseq
        %v3806 = vshrl.u32 %v3805, 7
        %v3807 = vsub.s32 %v3804, %v3806
        %v3808 = vrot.slane %v3794, %v3807
        %v3809 = vcombine.high %v3801, %v3801
        %v3810 = vcombine.high %v3808, %v3808
        %v3811 = vcombine.high %v3731, %v3731
        %v3813 = vunpack.c.l.s4 1983009808
        %v3814 = vunpack.c.0.s8 %v3813
        %v3815 = vlaneseq
        %v3816 = vshrl.u32 %v3815, 7
        %v3817 = vsub.s32 %v3814, %v3816
        %v3818 = vrot.slane %v3731, %v3817
        %v3820 = vunpack.c.l.s4 1983009808
        %v3821 = vunpack.c.0.s8 %v3820
        %v3822 = vlaneseq
        %v3823 = vshrl.u32 %v3822, 7
        %v3824 = vsub.s32 %v3821, %v3823
        %v3825 = vrot.slane %v3811, %v3824
        %v3826 = vcombine.high %v3818, %v3818
        %v3827 = vcombine.high %v3825, %v3825
        %v3828 = vcombine.high %v3732, %v3732
        %v3830 = vunpack.c.l.s4 1983009808
        %v3831 = vunpack.c.0.s8 %v3830
        %v3832 = vlaneseq
        %v3833 = vshrl.u32 %v3832, 7
        %v3834 = vsub.s32 %v3831, %v3833
        %v3835 = vrot.slane %v3732, %v3834
        %v3837 = vunpack.c.l.s4 1983009808
        %v3838 = vunpack.c.0.s8 %v3837
        %v3839 = vlaneseq
        %v3840 = vshrl.u32 %v3839, 7
        %v3841 = vsub.s32 %v3838, %v3840
        %v3842 = vrot.slane %v3828, %v3841
        %v3843 = vcombine.high %v3835, %v3835
        %v3844 = vcombine.high %v3842, %v3842
        %v3845 = vcombine.high %v3733, %v3733
        %v3847 = vunpack.c.l.s4 1983009808
        %v3848 = vunpack.c.0.s8 %v3847
        %v3849 = vlaneseq
        %v3850 = vshrl.u32 %v3849, 7
        %v3851 = vsub.s32 %v3848, %v3850
        %v3852 = vrot.slane %v3733, %v3851
        %v3854 = vunpack.c.l.s4 1983009808
        %v3855 = vunpack.c.0.s8 %v3854
        %v3856 = vlaneseq
        %v3857 = vshrl.u32 %v3856, 7
        %v3858 = vsub.s32 %v3855, %v3857
        %v3859 = vrot.slane %v3845, %v3858
        %v3860 = vcombine.high %v3852, %v3852
        %v3861 = vcombine.high %v3859, %v3859
        %v3862 = vcombine.high %v3734, %v3734
        %v3864 = vunpack.c.l.s4 1983009808
        %v3865 = vunpack.c.0.s8 %v3864
        %v3866 = vlaneseq
        %v3867 = vshrl.u32 %v3866, 7
        %v3868 = vsub.s32 %v3865, %v3867
        %v3869 = vrot.slane %v3734, %v3868
        %v3871 = vunpack.c.l.s4 1983009808
        %v3872 = vunpack.c.0.s8 %v3871
        %v3873 = vlaneseq
        %v3874 = vshrl.u32 %v3873, 7
        %v3875 = vsub.s32 %v3872, %v3874
        %v3876 = vrot.slane %v3862, %v3875
        %v3877 = vcombine.high %v3869, %v3869
        %v3878 = vcombine.high %v3876, %v3876
        %v3879 = vcombine.high %v3735, %v3735
        %v3881 = vunpack.c.l.s4 1983009808
        %v3882 = vunpack.c.0.s8 %v3881
        %v3883 = vlaneseq
        %v3884 = vshrl.u32 %v3883, 7
        %v3885 = vsub.s32 %v3882, %v3884
        %v3886 = vrot.slane %v3735, %v3885
        %v3888 = vunpack.c.l.s4 1983009808
        %v3889 = vunpack.c.0.s8 %v3888
        %v3890 = vlaneseq
        %v3891 = vshrl.u32 %v3890, 7
        %v3892 = vsub.s32 %v3889, %v3891
        %v3893 = vrot.slane %v3879, %v3892
        %v3894 = vcombine.high %v3886, %v3886
        %v3895 = vcombine.high %v3893, %v3893
        %v3896 = vcombine.high %v3736, %v3736
        %v3898 = vunpack.c.l.s4 1983009808
        %v3899 = vunpack.c.0.s8 %v3898
        %v3900 = vlaneseq
        %v3901 = vshrl.u32 %v3900, 7
        %v3902 = vsub.s32 %v3899, %v3901
        %v3903 = vrot.slane %v3736, %v3902
        %v3905 = vunpack.c.l.s4 1983009808
        %v3906 = vunpack.c.0.s8 %v3905
        %v3907 = vlaneseq
        %v3908 = vshrl.u32 %v3907, 7
        %v3909 = vsub.s32 %v3906, %v3908
        %v3910 = vrot.slane %v3896, %v3909
        %v3911 = vcombine.high %v3903, %v3903
        %v3912 = vcombine.high %v3910, %v3910
        %v3913 = vcombine.high %v3737, %v3737
        %v3915 = vunpack.c.l.s4 1983009808
        %v3916 = vunpack.c.0.s8 %v3915
        %v3917 = vlaneseq
        %v3918 = vshrl.u32 %v3917, 7
        %v3919 = vsub.s32 %v3916, %v3918
        %v3920 = vrot.slane %v3737, %v3919
        %v3922 = vunpack.c.l.s4 1983009808
        %v3923 = vunpack.c.0.s8 %v3922
        %v3924 = vlaneseq
        %v3925 = vshrl.u32 %v3924, 7
        %v3926 = vsub.s32 %v3923, %v3925
        %v3927 = vrot.slane %v3913, %v3926
        %v3928 = vcombine.high %v3920, %v3920
        %v3929 = vcombine.high %v3927, %v3927
        %v3930 = vcombine.high %v3738, %v3738
        %v3932 = vunpack.c.l.s4 1983009808
        %v3933 = vunpack.c.0.s8 %v3932
        %v3934 = vlaneseq
        %v3935 = vshrl.u32 %v3934, 7
        %v3936 = vsub.s32 %v3933, %v3935
        %v3937 = vrot.slane %v3738, %v3936
        %v3939 = vunpack.c.l.s4 1983009808
        %v3940 = vunpack.c.0.s8 %v3939
        %v3941 = vlaneseq
        %v3942 = vshrl.u32 %v3941, 7
        %v3943 = vsub.s32 %v3940, %v3942
        %v3944 = vrot.slane %v3930, %v3943
        %v3945 = vcombine.high %v3937, %v3937
        %v3946 = vcombine.high %v3944, %v3944
        %v3947 = vcombine.high %v3739, %v3739
        %v3949 = vunpack.c.l.s4 1983009808
        %v3950 = vunpack.c.0.s8 %v3949
        %v3951 = vlaneseq
        %v3952 = vshrl.u32 %v3951, 7
        %v3953 = vsub.s32 %v3950, %v3952
        %v3954 = vrot.slane %v3739, %v3953
        %v3956 = vunpack.c.l.s4 1983009808
        %v3957 = vunpack.c.0.s8 %v3956
        %v3958 = vlaneseq
        %v3959 = vshrl.u32 %v3958, 7
        %v3960 = vsub.s32 %v3957, %v3959
        %v3961 = vrot.slane %v3947, %v3960
        %v3962 = vcombine.high %v3954, %v3954
        %v3963 = vcombine.high %v3961, %v3961
        %v3964 = vcombine.high %v3740, %v3740
        %v3966 = vunpack.c.l.s4 1983009808
        %v3967 = vunpack.c.0.s8 %v3966
        %v3968 = vlaneseq
        %v3969 = vshrl.u32 %v3968, 7
        %v3970 = vsub.s32 %v3967, %v3969
        %v3971 = vrot.slane %v3740, %v3970
        %v3973 = vunpack.c.l.s4 1983009808
        %v3974 = vunpack.c.0.s8 %v3973
        %v3975 = vlaneseq
        %v3976 = vshrl.u32 %v3975, 7
        %v3977 = vsub.s32 %v3974, %v3976
        %v3978 = vrot.slane %v3964, %v3977
        %v3979 = vcombine.high %v3971, %v3971
        %v3980 = vcombine.high %v3978, %v3978
        %v3981 = vcombine.high %v3741, %v3741
        %v3983 = vunpack.c.l.s4 1983009808
        %v3984 = vunpack.c.0.s8 %v3983
        %v3985 = vlaneseq
        %v3986 = vshrl.u32 %v3985, 7
        %v3987 = vsub.s32 %v3984, %v3986
        %v3988 = vrot.slane %v3741, %v3987
        %v3990 = vunpack.c.l.s4 1983009808
        %v3991 = vunpack.c.0.s8 %v3990
        %v3992 = vlaneseq
        %v3993 = vshrl.u32 %v3992, 7
        %v3994 = vsub.s32 %v3991, %v3993
        %v3995 = vrot.slane %v3981, %v3994
        %v3996 = vcombine.high %v3988, %v3988
        %v3997 = vcombine.high %v3995, %v3995
        %v3998 = vcombine.high %v3742, %v3742
        %v4000 = vunpack.c.l.s4 1983009808
        %v4001 = vunpack.c.0.s8 %v4000
        %v4002 = vlaneseq
        %v4003 = vshrl.u32 %v4002, 7
        %v4004 = vsub.s32 %v4001, %v4003
        %v4005 = vrot.slane %v3742, %v4004
        %v4007 = vunpack.c.l.s4 1983009808
        %v4008 = vunpack.c.0.s8 %v4007
        %v4009 = vlaneseq
        %v4010 = vshrl.u32 %v4009, 7
        %v4011 = vsub.s32 %v4008, %v4010
        %v4012 = vrot.slane %v3998, %v4011
        %v4013 = vcombine.high %v4005, %v4005
        %v4014 = vcombine.high %v4012, %v4012
        %v4015 = vcombine.high %v3743, %v3743
        %v4017 = vunpack.c.l.s4 1983009808
        %v4018 = vunpack.c.0.s8 %v4017
        %v4019 = vlaneseq
        %v4020 = vshrl.u32 %v4019, 7
        %v4021 = vsub.s32 %v4018, %v4020
        %v4022 = vrot.slane %v3743, %v4021
        %v4024 = vunpack.c.l.s4 1983009808
        %v4025 = vunpack.c.0.s8 %v4024
        %v4026 = vlaneseq
        %v4027 = vshrl.u32 %v4026, 7
        %v4028 = vsub.s32 %v4025, %v4027
        %v4029 = vrot.slane %v4015, %v4028
        %v4030 = vcombine.high %v4022, %v4022
        %v4031 = vcombine.high %v4029, %v4029
        %v4032 = vcombine.high %v3744, %v3744
        %v4034 = vunpack.c.l.s4 1983009808
        %v4035 = vunpack.c.0.s8 %v4034
        %v4036 = vlaneseq
        %v4037 = vshrl.u32 %v4036, 7
        %v4038 = vsub.s32 %v4035, %v4037
        %v4039 = vrot.slane %v3744, %v4038
        %v4041 = vunpack.c.l.s4 1983009808
        %v4042 = vunpack.c.0.s8 %v4041
        %v4043 = vlaneseq
        %v4044 = vshrl.u32 %v4043, 7
        %v4045 = vsub.s32 %v4042, %v4044
        %v4046 = vrot.slane %v4032, %v4045
        %v4047 = vcombine.high %v4039, %v4039
        %v4048 = vcombine.high %v4046, %v4046
        %v4049 = vcombine.high %v3745, %v3745
        %v4051 = vunpack.c.l.s4 1983009808
        %v4052 = vunpack.c.0.s8 %v4051
        %v4053 = vlaneseq
        %v4054 = vshrl.u32 %v4053, 7
        %v4055 = vsub.s32 %v4052, %v4054
        %v4056 = vrot.slane %v3745, %v4055
        %v4058 = vunpack.c.l.s4 1983009808
        %v4059 = vunpack.c.0.s8 %v4058
        %v4060 = vlaneseq
        %v4061 = vshrl.u32 %v4060, 7
        %v4062 = vsub.s32 %v4059, %v4061
        %v4063 = vrot.slane %v4049, %v4062
        %v4064 = vcombine.high %v4056, %v4056
        %v4065 = vcombine.high %v4063, %v4063
        %v4066 = vcombine.high %v3746, %v3746
        %v4068 = vunpack.c.l.s4 1983009808
        %v4069 = vunpack.c.0.s8 %v4068
        %v4070 = vlaneseq
        %v4071 = vshrl.u32 %v4070, 7
        %v4072 = vsub.s32 %v4069, %v4071
        %v4073 = vrot.slane %v3746, %v4072
        %v4075 = vunpack.c.l.s4 1983009808
        %v4076 = vunpack.c.0.s8 %v4075
        %v4077 = vlaneseq
        %v4078 = vshrl.u32 %v4077, 7
        %v4079 = vsub.s32 %v4076, %v4078
        %v4080 = vrot.slane %v4066, %v4079
        %v4081 = vcombine.high %v4073, %v4073
        %v4082 = vcombine.high %v4080, %v4080
        %v4083 = vcombine.high %v3747, %v3747
        %v4085 = vunpack.c.l.s4 1983009808
        %v4086 = vunpack.c.0.s8 %v4085
        %v4087 = vlaneseq
        %v4088 = vshrl.u32 %v4087, 7
        %v4089 = vsub.s32 %v4086, %v4088
        %v4090 = vrot.slane %v3747, %v4089
        %v4092 = vunpack.c.l.s4 1983009808
        %v4093 = vunpack.c.0.s8 %v4092
        %v4094 = vlaneseq
        %v4095 = vshrl.u32 %v4094, 7
        %v4096 = vsub.s32 %v4093, %v4095
        %v4097 = vrot.slane %v4083, %v4096
        %v4098 = vcombine.high %v4090, %v4090
        %v4099 = vcombine.high %v4097, %v4097
        %v4100 = vcombine.high %v3748, %v3748
        %v4102 = vunpack.c.l.s4 1983009808
        %v4103 = vunpack.c.0.s8 %v4102
        %v4104 = vlaneseq
        %v4105 = vshrl.u32 %v4104, 7
        %v4106 = vsub.s32 %v4103, %v4105
        %v4107 = vrot.slane %v3748, %v4106
        %v4109 = vunpack.c.l.s4 1983009808
        %v4110 = vunpack.c.0.s8 %v4109
        %v4111 = vlaneseq
        %v4112 = vshrl.u32 %v4111, 7
        %v4113 = vsub.s32 %v4110, %v4112
        %v4114 = vrot.slane %v4100, %v4113
        %v4115 = vcombine.high %v4107, %v4107
        %v4116 = vcombine.high %v4114, %v4114
        %v4117 = vcombine.high %v3749, %v3749
        %v4119 = vunpack.c.l.s4 1983009808
        %v4120 = vunpack.c.0.s8 %v4119
        %v4121 = vlaneseq
        %v4122 = vshrl.u32 %v4121, 7
        %v4123 = vsub.s32 %v4120, %v4122
        %v4124 = vrot.slane %v3749, %v4123
        %v4126 = vunpack.c.l.s4 1983009808
        %v4127 = vunpack.c.0.s8 %v4126
        %v4128 = vlaneseq
        %v4129 = vshrl.u32 %v4128, 7
        %v4130 = vsub.s32 %v4127, %v4129
        %v4131 = vrot.slane %v4117, %v4130
        %v4132 = vcombine.high %v4124, %v4124
        %v4133 = vcombine.high %v4131, %v4131
        %v4134 = vcombine.high %v3750, %v3750
        %v4136 = vunpack.c.l.s4 1983009808
        %v4137 = vunpack.c.0.s8 %v4136
        %v4138 = vlaneseq
        %v4139 = vshrl.u32 %v4138, 7
        %v4140 = vsub.s32 %v4137, %v4139
        %v4141 = vrot.slane %v3750, %v4140
        %v4143 = vunpack.c.l.s4 1983009808
        %v4144 = vunpack.c.0.s8 %v4143
        %v4145 = vlaneseq
        %v4146 = vshrl.u32 %v4145, 7
        %v4147 = vsub.s32 %v4144, %v4146
        %v4148 = vrot.slane %v4134, %v4147
        %v4149 = vcombine.high %v4141, %v4141
        %v4150 = vcombine.high %v4148, %v4148
        %v4151 = vcombine.high %v3751, %v3751
        %v4153 = vunpack.c.l.s4 1983009808
        %v4154 = vunpack.c.0.s8 %v4153
        %v4155 = vlaneseq
        %v4156 = vshrl.u32 %v4155, 7
        %v4157 = vsub.s32 %v4154, %v4156
        %v4158 = vrot.slane %v3751, %v4157
        %v4160 = vunpack.c.l.s4 1983009808
        %v4161 = vunpack.c.0.s8 %v4160
        %v4162 = vlaneseq
        %v4163 = vshrl.u32 %v4162, 7
        %v4164 = vsub.s32 %v4161, %v4163
        %v4165 = vrot.slane %v4151, %v4164
        %v4166 = vcombine.high %v4158, %v4158
        %v4167 = vcombine.high %v4165, %v4165
        %v4168 = vcombine.high %v3752, %v3752
        %v4170 = vunpack.c.l.s4 1983009808
        %v4171 = vunpack.c.0.s8 %v4170
        %v4172 = vlaneseq
        %v4173 = vshrl.u32 %v4172, 7
        %v4174 = vsub.s32 %v4171, %v4173
        %v4175 = vrot.slane %v3752, %v4174
        %v4177 = vunpack.c.l.s4 1983009808
        %v4178 = vunpack.c.0.s8 %v4177
        %v4179 = vlaneseq
        %v4180 = vshrl.u32 %v4179, 7
        %v4181 = vsub.s32 %v4178, %v4180
        %v4182 = vrot.slane %v4168, %v4181
        %v4183 = vcombine.high %v4175, %v4175
        %v4184 = vcombine.high %v4182, %v4182
        %v4185 = vcombine.high %v3753, %v3753
        %v4187 = vunpack.c.l.s4 1983009808
        %v4188 = vunpack.c.0.s8 %v4187
        %v4189 = vlaneseq
        %v4190 = vshrl.u32 %v4189, 7
        %v4191 = vsub.s32 %v4188, %v4190
        %v4192 = vrot.slane %v3753, %v4191
        %v4194 = vunpack.c.l.s4 1983009808
        %v4195 = vunpack.c.0.s8 %v4194
        %v4196 = vlaneseq
        %v4197 = vshrl.u32 %v4196, 7
        %v4198 = vsub.s32 %v4195, %v4197
        %v4199 = vrot.slane %v4185, %v4198
        %v4200 = vcombine.high %v4192, %v4192
        %v4201 = vcombine.high %v4199, %v4199
        %v4202 = vcombine.high %v3754, %v3754
        %v4204 = vunpack.c.l.s4 1983009808
        %v4205 = vunpack.c.0.s8 %v4204
        %v4206 = vlaneseq
        %v4207 = vshrl.u32 %v4206, 7
        %v4208 = vsub.s32 %v4205, %v4207
        %v4209 = vrot.slane %v3754, %v4208
        %v4211 = vunpack.c.l.s4 1983009808
        %v4212 = vunpack.c.0.s8 %v4211
        %v4213 = vlaneseq
        %v4214 = vshrl.u32 %v4213, 7
        %v4215 = vsub.s32 %v4212, %v4214
        %v4216 = vrot.slane %v4202, %v4215
        %v4217 = vcombine.high %v4209, %v4209
        %v4218 = vcombine.high %v4216, %v4216
        %v4219 = vcombine.high %v3755, %v3755
        %v4221 = vunpack.c.l.s4 1983009808
        %v4222 = vunpack.c.0.s8 %v4221
        %v4223 = vlaneseq
        %v4224 = vshrl.u32 %v4223, 7
        %v4225 = vsub.s32 %v4222, %v4224
        %v4226 = vrot.slane %v3755, %v4225
        %v4228 = vunpack.c.l.s4 1983009808
        %v4229 = vunpack.c.0.s8 %v4228
        %v4230 = vlaneseq
        %v4231 = vshrl.u32 %v4230, 7
        %v4232 = vsub.s32 %v4229, %v4231
        %v4233 = vrot.slane %v4219, %v4232
        %v4234 = vcombine.high %v4226, %v4226
        %v4235 = vcombine.high %v4233, %v4233
        %v4236 = vcombine.high %v3756, %v3756
        %v4238 = vunpack.c.l.s4 1983009808
        %v4239 = vunpack.c.0.s8 %v4238
        %v4240 = vlaneseq
        %v4241 = vshrl.u32 %v4240, 7
        %v4242 = vsub.s32 %v4239, %v4241
        %v4243 = vrot.slane %v3756, %v4242
        %v4245 = vunpack.c.l.s4 1983009808
        %v4246 = vunpack.c.0.s8 %v4245
        %v4247 = vlaneseq
        %v4248 = vshrl.u32 %v4247, 7
        %v4249 = vsub.s32 %v4246, %v4248
        %v4250 = vrot.slane %v4236, %v4249
        %v4251 = vcombine.high %v4243, %v4243
        %v4252 = vcombine.high %v4250, %v4250
        %v4253 = vcombine.high %v3757, %v3757
        %v4255 = vunpack.c.l.s4 1983009808
        %v4256 = vunpack.c.0.s8 %v4255
        %v4257 = vlaneseq
        %v4258 = vshrl.u32 %v4257, 7
        %v4259 = vsub.s32 %v4256, %v4258
        %v4260 = vrot.slane %v3757, %v4259
        %v4262 = vunpack.c.l.s4 1983009808
        %v4263 = vunpack.c.0.s8 %v4262
        %v4264 = vlaneseq
        %v4265 = vshrl.u32 %v4264, 7
        %v4266 = vsub.s32 %v4263, %v4265
        %v4267 = vrot.slane %v4253, %v4266
        %v4268 = vcombine.high %v4260, %v4260
        %v4269 = vcombine.high %v4267, %v4267
        %v4270 = vcombine.high %v3758, %v3758
        %v4272 = vunpack.c.l.s4 1983009808
        %v4273 = vunpack.c.0.s8 %v4272
        %v4274 = vlaneseq
        %v4275 = vshrl.u32 %v4274, 7
        %v4276 = vsub.s32 %v4273, %v4275
        %v4277 = vrot.slane %v3758, %v4276
        %v4279 = vunpack.c.l.s4 1983009808
        %v4280 = vunpack.c.0.s8 %v4279
        %v4281 = vlaneseq
        %v4282 = vshrl.u32 %v4281, 7
        %v4283 = vsub.s32 %v4280, %v4282
        %v4284 = vrot.slane %v4270, %v4283
        %v4285 = vcombine.high %v4277, %v4277
        %v4286 = vcombine.high %v4284, %v4284
        %v4287 = vcombine.high %v3759, %v3759
        %v4289 = vunpack.c.l.s4 1983009808
        %v4290 = vunpack.c.0.s8 %v4289
        %v4291 = vlaneseq
        %v4292 = vshrl.u32 %v4291, 7
        %v4293 = vsub.s32 %v4290, %v4292
        %v4294 = vrot.slane %v3759, %v4293
        %v4296 = vunpack.c.l.s4 1983009808
        %v4297 = vunpack.c.0.s8 %v4296
        %v4298 = vlaneseq
        %v4299 = vshrl.u32 %v4298, 7
        %v4300 = vsub.s32 %v4297, %v4299
        %v4301 = vrot.slane %v4287, %v4300
        %v4302 = vcombine.high %v4294, %v4294
        %v4303 = vcombine.high %v4301, %v4301
        %v4304 = vcombine.high %v3760, %v3760
        %v4306 = vunpack.c.l.s4 1983009808
        %v4307 = vunpack.c.0.s8 %v4306
        %v4308 = vlaneseq
        %v4309 = vshrl.u32 %v4308, 7
        %v4310 = vsub.s32 %v4307, %v4309
        %v4311 = vrot.slane %v3760, %v4310
        %v4313 = vunpack.c.l.s4 1983009808
        %v4314 = vunpack.c.0.s8 %v4313
        %v4315 = vlaneseq
        %v4316 = vshrl.u32 %v4315, 7
        %v4317 = vsub.s32 %v4314, %v4316
        %v4318 = vrot.slane %v4304, %v4317
        %v4319 = vcombine.high %v4311, %v4311
        %v4320 = vcombine.high %v4318, %v4318
        %v4321 = vcombine.high %v3761, %v3761
        %v4323 = vunpack.c.l.s4 1983009808
        %v4324 = vunpack.c.0.s8 %v4323
        %v4325 = vlaneseq
        %v4326 = vshrl.u32 %v4325, 7
        %v4327 = vsub.s32 %v4324, %v4326
        %v4328 = vrot.slane %v3761, %v4327
        %v4330 = vunpack.c.l.s4 1983009808
        %v4331 = vunpack.c.0.s8 %v4330
        %v4332 = vlaneseq
        %v4333 = vshrl.u32 %v4332, 7
        %v4334 = vsub.s32 %v4331, %v4333
        %v4335 = vrot.slane %v4321, %v4334
        %v4336 = vcombine.high %v4328, %v4328
        %v4337 = vcombine.high %v4335, %v4335
        %vm4466 = vcmask 123904
        %v4467 = vsel %vm4466, %v3801, -inf
        %v4468 = vrot.slane %v4467, 4
        %v4469 = vmax.f32 %v4467, %v4468
        %v4470 = vrot.slane %v4469, 2
        %v4471 = vmax.f32 %v4469, %v4470
        %v4472 = vrot.slane %v4471, 1
        %v4473 = vmax.f32 %v4471, %v4472
        %v4474 = vsel %vm4466, %v3809, -inf
        %v4475 = vrot.slane %v4474, 4
        %v4476 = vmax.f32 %v4474, %v4475
        %v4477 = vrot.slane %v4476, 2
        %v4478 = vmax.f32 %v4476, %v4477
        %v4479 = vrot.slane %v4478, 1
        %v4480 = vmax.f32 %v4478, %v4479
        %v4481 = vsel %vm4466, %v3808, -inf
        %v4482 = vrot.slane %v4481, 4
        %v4483 = vmax.f32 %v4481, %v4482
        %v4484 = vrot.slane %v4483, 2
        %v4485 = vmax.f32 %v4483, %v4484
        %v4486 = vrot.slane %v4485, 1
        %v4487 = vmax.f32 %v4485, %v4486
        %v4488 = vsel %vm4466, %v3810, -inf
        %v4489 = vrot.slane %v4488, 4
        %v4490 = vmax.f32 %v4488, %v4489
        %v4491 = vrot.slane %v4490, 2
        %v4492 = vmax.f32 %v4490, %v4491
        %v4493 = vrot.slane %v4492, 1
        %v4494 = vmax.f32 %v4492, %v4493
        %v4495 = vsel %vm4466, %v3818, -inf
        %v4496 = vrot.slane %v4495, 4
        %v4497 = vmax.f32 %v4495, %v4496
        %v4498 = vrot.slane %v4497, 2
        %v4499 = vmax.f32 %v4497, %v4498
        %v4500 = vrot.slane %v4499, 1
        %v4501 = vmax.f32 %v4499, %v4500
        %v4502 = vsel %vm4466, %v3826, -inf
        %v4503 = vrot.slane %v4502, 4
        %v4504 = vmax.f32 %v4502, %v4503
        %v4505 = vrot.slane %v4504, 2
        %v4506 = vmax.f32 %v4504, %v4505
        %v4507 = vrot.slane %v4506, 1
        %v4508 = vmax.f32 %v4506, %v4507
        %v4509 = vsel %vm4466, %v3825, -inf
        %v4510 = vrot.slane %v4509, 4
        %v4511 = vmax.f32 %v4509, %v4510
        %v4512 = vrot.slane %v4511, 2
        %v4513 = vmax.f32 %v4511, %v4512
        %v4514 = vrot.slane %v4513, 1
        %v4515 = vmax.f32 %v4513, %v4514
        %v4516 = vsel %vm4466, %v3827, -inf
        %v4517 = vrot.slane %v4516, 4
        %v4518 = vmax.f32 %v4516, %v4517
        %v4519 = vrot.slane %v4518, 2
        %v4520 = vmax.f32 %v4518, %v4519
        %v4521 = vrot.slane %v4520, 1
        %v4522 = vmax.f32 %v4520, %v4521
        %v4523 = vsel %vm4466, %v3835, -inf
        %v4524 = vrot.slane %v4523, 4
        %v4525 = vmax.f32 %v4523, %v4524
        %v4526 = vrot.slane %v4525, 2
        %v4527 = vmax.f32 %v4525, %v4526
        %v4528 = vrot.slane %v4527, 1
        %v4529 = vmax.f32 %v4527, %v4528
        %v4530 = vsel %vm4466, %v3843, -inf
        %v4531 = vrot.slane %v4530, 4
        %v4532 = vmax.f32 %v4530, %v4531
        %v4533 = vrot.slane %v4532, 2
        %v4534 = vmax.f32 %v4532, %v4533
        %v4535 = vrot.slane %v4534, 1
        %v4536 = vmax.f32 %v4534, %v4535
        %v4537 = vsel %vm4466, %v3842, -inf
        %v4538 = vrot.slane %v4537, 4
        %v4539 = vmax.f32 %v4537, %v4538
        %v4540 = vrot.slane %v4539, 2
        %v4541 = vmax.f32 %v4539, %v4540
        %v4542 = vrot.slane %v4541, 1
        %v4543 = vmax.f32 %v4541, %v4542
        %v4544 = vsel %vm4466, %v3844, -inf
        %v4545 = vrot.slane %v4544, 4
        %v4546 = vmax.f32 %v4544, %v4545
        %v4547 = vrot.slane %v4546, 2
        %v4548 = vmax.f32 %v4546, %v4547
        %v4549 = vrot.slane %v4548, 1
        %v4550 = vmax.f32 %v4548, %v4549
        %v4551 = vsel %vm4466, %v3852, -inf
        %v4552 = vrot.slane %v4551, 4
        %v4553 = vmax.f32 %v4551, %v4552
        %v4554 = vrot.slane %v4553, 2
        %v4555 = vmax.f32 %v4553, %v4554
        %v4556 = vrot.slane %v4555, 1
        %v4557 = vmax.f32 %v4555, %v4556
        %v4558 = vsel %vm4466, %v3860, -inf
        %v4559 = vrot.slane %v4558, 4
        %v4560 = vmax.f32 %v4558, %v4559
        %v4561 = vrot.slane %v4560, 2
        %v4562 = vmax.f32 %v4560, %v4561
        %v4563 = vrot.slane %v4562, 1
        %v4564 = vmax.f32 %v4562, %v4563
        %v4565 = vsel %vm4466, %v3859, -inf
        %v4566 = vrot.slane %v4565, 4
        %v4567 = vmax.f32 %v4565, %v4566
        %v4568 = vrot.slane %v4567, 2
        %v4569 = vmax.f32 %v4567, %v4568
        %v4570 = vrot.slane %v4569, 1
        %v4571 = vmax.f32 %v4569, %v4570
        %v4572 = vsel %vm4466, %v3861, -inf
        %v4573 = vrot.slane %v4572, 4
        %v4574 = vmax.f32 %v4572, %v4573
        %v4575 = vrot.slane %v4574, 2
        %v4576 = vmax.f32 %v4574, %v4575
        %v4577 = vrot.slane %v4576, 1
        %v4578 = vmax.f32 %v4576, %v4577
        %v4579 = vsel %vm4466, %v3869, -inf
        %v4580 = vrot.slane %v4579, 4
        %v4581 = vmax.f32 %v4579, %v4580
        %v4582 = vrot.slane %v4581, 2
        %v4583 = vmax.f32 %v4581, %v4582
        %v4584 = vrot.slane %v4583, 1
        %v4585 = vmax.f32 %v4583, %v4584
        %v4586 = vsel %vm4466, %v3877, -inf
        %v4587 = vrot.slane %v4586, 4
        %v4588 = vmax.f32 %v4586, %v4587
        %v4589 = vrot.slane %v4588, 2
        %v4590 = vmax.f32 %v4588, %v4589
        %v4591 = vrot.slane %v4590, 1
        %v4592 = vmax.f32 %v4590, %v4591
        %v4593 = vsel %vm4466, %v3876, -inf
        %v4594 = vrot.slane %v4593, 4
        %v4595 = vmax.f32 %v4593, %v4594
        %v4596 = vrot.slane %v4595, 2
        %v4597 = vmax.f32 %v4595, %v4596
        %v4598 = vrot.slane %v4597, 1
        %v4599 = vmax.f32 %v4597, %v4598
        %v4600 = vsel %vm4466, %v3878, -inf
        %v4601 = vrot.slane %v4600, 4
        %v4602 = vmax.f32 %v4600, %v4601
        %v4603 = vrot.slane %v4602, 2
        %v4604 = vmax.f32 %v4602, %v4603
        %v4605 = vrot.slane %v4604, 1
        %v4606 = vmax.f32 %v4604, %v4605
        %v4607 = vsel %vm4466, %v3886, -inf
        %v4608 = vrot.slane %v4607, 4
        %v4609 = vmax.f32 %v4607, %v4608
        %v4610 = vrot.slane %v4609, 2
        %v4611 = vmax.f32 %v4609, %v4610
        %v4612 = vrot.slane %v4611, 1
        %v4613 = vmax.f32 %v4611, %v4612
        %v4614 = vsel %vm4466, %v3894, -inf
        %v4615 = vrot.slane %v4614, 4
        %v4616 = vmax.f32 %v4614, %v4615
        %v4617 = vrot.slane %v4616, 2
        %v4618 = vmax.f32 %v4616, %v4617
        %v4619 = vrot.slane %v4618, 1
        %v4620 = vmax.f32 %v4618, %v4619
        %v4621 = vsel %vm4466, %v3893, -inf
        %v4622 = vrot.slane %v4621, 4
        %v4623 = vmax.f32 %v4621, %v4622
        %v4624 = vrot.slane %v4623, 2
        %v4625 = vmax.f32 %v4623, %v4624
        %v4626 = vrot.slane %v4625, 1
        %v4627 = vmax.f32 %v4625, %v4626
        %v4628 = vsel %vm4466, %v3895, -inf
        %v4629 = vrot.slane %v4628, 4
        %v4630 = vmax.f32 %v4628, %v4629
        %v4631 = vrot.slane %v4630, 2
        %v4632 = vmax.f32 %v4630, %v4631
        %v4633 = vrot.slane %v4632, 1
        %v4634 = vmax.f32 %v4632, %v4633
        %v4635 = vsel %vm4466, %v3903, -inf
        %v4636 = vrot.slane %v4635, 4
        %v4637 = vmax.f32 %v4635, %v4636
        %v4638 = vrot.slane %v4637, 2
        %v4639 = vmax.f32 %v4637, %v4638
        %v4640 = vrot.slane %v4639, 1
        %v4641 = vmax.f32 %v4639, %v4640
        %v4642 = vsel %vm4466, %v3911, -inf
        %v4643 = vrot.slane %v4642, 4
        %v4644 = vmax.f32 %v4642, %v4643
        %v4645 = vrot.slane %v4644, 2
        %v4646 = vmax.f32 %v4644, %v4645
        %v4647 = vrot.slane %v4646, 1
        %v4648 = vmax.f32 %v4646, %v4647
        %v4649 = vsel %vm4466, %v3910, -inf
        %v4650 = vrot.slane %v4649, 4
        %v4651 = vmax.f32 %v4649, %v4650
        %v4652 = vrot.slane %v4651, 2
        %v4653 = vmax.f32 %v4651, %v4652
        %v4654 = vrot.slane %v4653, 1
        %v4655 = vmax.f32 %v4653, %v4654
        %v4656 = vsel %vm4466, %v3912, -inf
        %v4657 = vrot.slane %v4656, 4
        %v4658 = vmax.f32 %v4656, %v4657
        %v4659 = vrot.slane %v4658, 2
        %v4660 = vmax.f32 %v4658, %v4659
        %v4661 = vrot.slane %v4660, 1
        %v4662 = vmax.f32 %v4660, %v4661
        %v4663 = vsel %vm4466, %v3920, -inf
        %v4664 = vrot.slane %v4663, 4
        %v4665 = vmax.f32 %v4663, %v4664
        %v4666 = vrot.slane %v4665, 2
        %v4667 = vmax.f32 %v4665, %v4666
        %v4668 = vrot.slane %v4667, 1
        %v4669 = vmax.f32 %v4667, %v4668
        %v4670 = vsel %vm4466, %v3928, -inf
        %v4671 = vrot.slane %v4670, 4
        %v4672 = vmax.f32 %v4670, %v4671
        %v4673 = vrot.slane %v4672, 2
        %v4674 = vmax.f32 %v4672, %v4673
        %v4675 = vrot.slane %v4674, 1
        %v4676 = vmax.f32 %v4674, %v4675
        %v4677 = vsel %vm4466, %v3927, -inf
        %v4678 = vrot.slane %v4677, 4
        %v4679 = vmax.f32 %v4677, %v4678
        %v4680 = vrot.slane %v4679, 2
        %v4681 = vmax.f32 %v4679, %v4680
        %v4682 = vrot.slane %v4681, 1
        %v4683 = vmax.f32 %v4681, %v4682
        %v4684 = vsel %vm4466, %v3929, -inf
        %v4685 = vrot.slane %v4684, 4
        %v4686 = vmax.f32 %v4684, %v4685
        %v4687 = vrot.slane %v4686, 2
        %v4688 = vmax.f32 %v4686, %v4687
        %v4689 = vrot.slane %v4688, 1
        %v4690 = vmax.f32 %v4688, %v4689
        %v4691 = vsel %vm4466, %v3937, -inf
        %v4692 = vrot.slane %v4691, 4
        %v4693 = vmax.f32 %v4691, %v4692
        %v4694 = vrot.slane %v4693, 2
        %v4695 = vmax.f32 %v4693, %v4694
        %v4696 = vrot.slane %v4695, 1
        %v4697 = vmax.f32 %v4695, %v4696
        %v4698 = vsel %vm4466, %v3945, -inf
        %v4699 = vrot.slane %v4698, 4
        %v4700 = vmax.f32 %v4698, %v4699
        %v4701 = vrot.slane %v4700, 2
        %v4702 = vmax.f32 %v4700, %v4701
        %v4703 = vrot.slane %v4702, 1
        %v4704 = vmax.f32 %v4702, %v4703
        %v4705 = vsel %vm4466, %v3944, -inf
        %v4706 = vrot.slane %v4705, 4
        %v4707 = vmax.f32 %v4705, %v4706
        %v4708 = vrot.slane %v4707, 2
        %v4709 = vmax.f32 %v4707, %v4708
        %v4710 = vrot.slane %v4709, 1
        %v4711 = vmax.f32 %v4709, %v4710
        %v4712 = vsel %vm4466, %v3946, -inf
        %v4713 = vrot.slane %v4712, 4
        %v4714 = vmax.f32 %v4712, %v4713
        %v4715 = vrot.slane %v4714, 2
        %v4716 = vmax.f32 %v4714, %v4715
        %v4717 = vrot.slane %v4716, 1
        %v4718 = vmax.f32 %v4716, %v4717
        %v4719 = vsel %vm4466, %v3954, -inf
        %v4720 = vrot.slane %v4719, 4
        %v4721 = vmax.f32 %v4719, %v4720
        %v4722 = vrot.slane %v4721, 2
        %v4723 = vmax.f32 %v4721, %v4722
        %v4724 = vrot.slane %v4723, 1
        %v4725 = vmax.f32 %v4723, %v4724
        %v4726 = vsel %vm4466, %v3962, -inf
        %v4727 = vrot.slane %v4726, 4
        %v4728 = vmax.f32 %v4726, %v4727
        %v4729 = vrot.slane %v4728, 2
        %v4730 = vmax.f32 %v4728, %v4729
        %v4731 = vrot.slane %v4730, 1
        %v4732 = vmax.f32 %v4730, %v4731
        %v4733 = vsel %vm4466, %v3961, -inf
        %v4734 = vrot.slane %v4733, 4
        %v4735 = vmax.f32 %v4733, %v4734
        %v4736 = vrot.slane %v4735, 2
        %v4737 = vmax.f32 %v4735, %v4736
        %v4738 = vrot.slane %v4737, 1
        %v4739 = vmax.f32 %v4737, %v4738
        %v4740 = vsel %vm4466, %v3963, -inf
        %v4741 = vrot.slane %v4740, 4
        %v4742 = vmax.f32 %v4740, %v4741
        %v4743 = vrot.slane %v4742, 2
        %v4744 = vmax.f32 %v4742, %v4743
        %v4745 = vrot.slane %v4744, 1
        %v4746 = vmax.f32 %v4744, %v4745
        %v4747 = vsel %vm4466, %v3971, -inf
        %v4748 = vrot.slane %v4747, 4
        %v4749 = vmax.f32 %v4747, %v4748
        %v4750 = vrot.slane %v4749, 2
        %v4751 = vmax.f32 %v4749, %v4750
        %v4752 = vrot.slane %v4751, 1
        %v4753 = vmax.f32 %v4751, %v4752
        %v4754 = vsel %vm4466, %v3979, -inf
        %v4755 = vrot.slane %v4754, 4
        %v4756 = vmax.f32 %v4754, %v4755
        %v4757 = vrot.slane %v4756, 2
        %v4758 = vmax.f32 %v4756, %v4757
        %v4759 = vrot.slane %v4758, 1
        %v4760 = vmax.f32 %v4758, %v4759
        %v4761 = vsel %vm4466, %v3978, -inf
        %v4762 = vrot.slane %v4761, 4
        %v4763 = vmax.f32 %v4761, %v4762
        %v4764 = vrot.slane %v4763, 2
        %v4765 = vmax.f32 %v4763, %v4764
        %v4766 = vrot.slane %v4765, 1
        %v4767 = vmax.f32 %v4765, %v4766
        %v4768 = vsel %vm4466, %v3980, -inf
        %v4769 = vrot.slane %v4768, 4
        %v4770 = vmax.f32 %v4768, %v4769
        %v4771 = vrot.slane %v4770, 2
        %v4772 = vmax.f32 %v4770, %v4771
        %v4773 = vrot.slane %v4772, 1
        %v4774 = vmax.f32 %v4772, %v4773
        %v4775 = vsel %vm4466, %v3988, -inf
        %v4776 = vrot.slane %v4775, 4
        %v4777 = vmax.f32 %v4775, %v4776
        %v4778 = vrot.slane %v4777, 2
        %v4779 = vmax.f32 %v4777, %v4778
        %v4780 = vrot.slane %v4779, 1
        %v4781 = vmax.f32 %v4779, %v4780
        %v4782 = vsel %vm4466, %v3996, -inf
        %v4783 = vrot.slane %v4782, 4
        %v4784 = vmax.f32 %v4782, %v4783
        %v4785 = vrot.slane %v4784, 2
        %v4786 = vmax.f32 %v4784, %v4785
        %v4787 = vrot.slane %v4786, 1
        %v4788 = vmax.f32 %v4786, %v4787
        %v4789 = vsel %vm4466, %v3995, -inf
        %v4790 = vrot.slane %v4789, 4
        %v4791 = vmax.f32 %v4789, %v4790
        %v4792 = vrot.slane %v4791, 2
        %v4793 = vmax.f32 %v4791, %v4792
        %v4794 = vrot.slane %v4793, 1
        %v4795 = vmax.f32 %v4793, %v4794
        %v4796 = vsel %vm4466, %v3997, -inf
        %v4797 = vrot.slane %v4796, 4
        %v4798 = vmax.f32 %v4796, %v4797
        %v4799 = vrot.slane %v4798, 2
        %v4800 = vmax.f32 %v4798, %v4799
        %v4801 = vrot.slane %v4800, 1
        %v4802 = vmax.f32 %v4800, %v4801
        %v4803 = vsel %vm4466, %v4005, -inf
        %v4804 = vrot.slane %v4803, 4
        %v4805 = vmax.f32 %v4803, %v4804
        %v4806 = vrot.slane %v4805, 2
        %v4807 = vmax.f32 %v4805, %v4806
        %v4808 = vrot.slane %v4807, 1
        %v4809 = vmax.f32 %v4807, %v4808
        %v4810 = vsel %vm4466, %v4013, -inf
        %v4811 = vrot.slane %v4810, 4
        %v4812 = vmax.f32 %v4810, %v4811
        %v4813 = vrot.slane %v4812, 2
        %v4814 = vmax.f32 %v4812, %v4813
        %v4815 = vrot.slane %v4814, 1
        %v4816 = vmax.f32 %v4814, %v4815
        %v4817 = vsel %vm4466, %v4012, -inf
        %v4818 = vrot.slane %v4817, 4
        %v4819 = vmax.f32 %v4817, %v4818
        %v4820 = vrot.slane %v4819, 2
        %v4821 = vmax.f32 %v4819, %v4820
        %v4822 = vrot.slane %v4821, 1
        %v4823 = vmax.f32 %v4821, %v4822
        %v4824 = vsel %vm4466, %v4014, -inf
        %v4825 = vrot.slane %v4824, 4
        %v4826 = vmax.f32 %v4824, %v4825
        %v4827 = vrot.slane %v4826, 2
        %v4828 = vmax.f32 %v4826, %v4827
        %v4829 = vrot.slane %v4828, 1
        %v4830 = vmax.f32 %v4828, %v4829
        %v4831 = vsel %vm4466, %v4022, -inf
        %v4832 = vrot.slane %v4831, 4
        %v4833 = vmax.f32 %v4831, %v4832
        %v4834 = vrot.slane %v4833, 2
        %v4835 = vmax.f32 %v4833, %v4834
        %v4836 = vrot.slane %v4835, 1
        %v4837 = vmax.f32 %v4835, %v4836
        %v4838 = vsel %vm4466, %v4030, -inf
        %v4839 = vrot.slane %v4838, 4
        %v4840 = vmax.f32 %v4838, %v4839
        %v4841 = vrot.slane %v4840, 2
        %v4842 = vmax.f32 %v4840, %v4841
        %v4843 = vrot.slane %v4842, 1
        %v4844 = vmax.f32 %v4842, %v4843
        %v4845 = vsel %vm4466, %v4029, -inf
        %v4846 = vrot.slane %v4845, 4
        %v4847 = vmax.f32 %v4845, %v4846
        %v4848 = vrot.slane %v4847, 2
        %v4849 = vmax.f32 %v4847, %v4848
        %v4850 = vrot.slane %v4849, 1
        %v4851 = vmax.f32 %v4849, %v4850
        %v4852 = vsel %vm4466, %v4031, -inf
        %v4853 = vrot.slane %v4852, 4
        %v4854 = vmax.f32 %v4852, %v4853
        %v4855 = vrot.slane %v4854, 2
        %v4856 = vmax.f32 %v4854, %v4855
        %v4857 = vrot.slane %v4856, 1
        %v4858 = vmax.f32 %v4856, %v4857
        %v4859 = vsel %vm4466, %v4039, -inf
        %v4860 = vrot.slane %v4859, 4
        %v4861 = vmax.f32 %v4859, %v4860
        %v4862 = vrot.slane %v4861, 2
        %v4863 = vmax.f32 %v4861, %v4862
        %v4864 = vrot.slane %v4863, 1
        %v4865 = vmax.f32 %v4863, %v4864
        %v4866 = vsel %vm4466, %v4047, -inf
        %v4867 = vrot.slane %v4866, 4
        %v4868 = vmax.f32 %v4866, %v4867
        %v4869 = vrot.slane %v4868, 2
        %v4870 = vmax.f32 %v4868, %v4869
        %v4871 = vrot.slane %v4870, 1
        %v4872 = vmax.f32 %v4870, %v4871
        %v4873 = vsel %vm4466, %v4046, -inf
        %v4874 = vrot.slane %v4873, 4
        %v4875 = vmax.f32 %v4873, %v4874
        %v4876 = vrot.slane %v4875, 2
        %v4877 = vmax.f32 %v4875, %v4876
        %v4878 = vrot.slane %v4877, 1
        %v4879 = vmax.f32 %v4877, %v4878
        %v4880 = vsel %vm4466, %v4048, -inf
        %v4881 = vrot.slane %v4880, 4
        %v4882 = vmax.f32 %v4880, %v4881
        %v4883 = vrot.slane %v4882, 2
        %v4884 = vmax.f32 %v4882, %v4883
        %v4885 = vrot.slane %v4884, 1
        %v4886 = vmax.f32 %v4884, %v4885
        %v4887 = vsel %vm4466, %v4056, -inf
        %v4888 = vrot.slane %v4887, 4
        %v4889 = vmax.f32 %v4887, %v4888
        %v4890 = vrot.slane %v4889, 2
        %v4891 = vmax.f32 %v4889, %v4890
        %v4892 = vrot.slane %v4891, 1
        %v4893 = vmax.f32 %v4891, %v4892
        %v4894 = vsel %vm4466, %v4064, -inf
        %v4895 = vrot.slane %v4894, 4
        %v4896 = vmax.f32 %v4894, %v4895
        %v4897 = vrot.slane %v4896, 2
        %v4898 = vmax.f32 %v4896, %v4897
        %v4899 = vrot.slane %v4898, 1
        %v4900 = vmax.f32 %v4898, %v4899
        %v4901 = vsel %vm4466, %v4063, -inf
        %v4902 = vrot.slane %v4901, 4
        %v4903 = vmax.f32 %v4901, %v4902
        %v4904 = vrot.slane %v4903, 2
        %v4905 = vmax.f32 %v4903, %v4904
        %v4906 = vrot.slane %v4905, 1
        %v4907 = vmax.f32 %v4905, %v4906
        %v4908 = vsel %vm4466, %v4065, -inf
        %v4909 = vrot.slane %v4908, 4
        %v4910 = vmax.f32 %v4908, %v4909
        %v4911 = vrot.slane %v4910, 2
        %v4912 = vmax.f32 %v4910, %v4911
        %v4913 = vrot.slane %v4912, 1
        %v4914 = vmax.f32 %v4912, %v4913
        %v4915 = vsel %vm4466, %v4073, -inf
        %v4916 = vrot.slane %v4915, 4
        %v4917 = vmax.f32 %v4915, %v4916
        %v4918 = vrot.slane %v4917, 2
        %v4919 = vmax.f32 %v4917, %v4918
        %v4920 = vrot.slane %v4919, 1
        %v4921 = vmax.f32 %v4919, %v4920
        %v4922 = vsel %vm4466, %v4081, -inf
        %v4923 = vrot.slane %v4922, 4
        %v4924 = vmax.f32 %v4922, %v4923
        %v4925 = vrot.slane %v4924, 2
        %v4926 = vmax.f32 %v4924, %v4925
        %v4927 = vrot.slane %v4926, 1
        %v4928 = vmax.f32 %v4926, %v4927
        %v4929 = vsel %vm4466, %v4080, -inf
        %v4930 = vrot.slane %v4929, 4
        %v4931 = vmax.f32 %v4929, %v4930
        %v4932 = vrot.slane %v4931, 2
        %v4933 = vmax.f32 %v4931, %v4932
        %v4934 = vrot.slane %v4933, 1
        %v4935 = vmax.f32 %v4933, %v4934
        %v4936 = vsel %vm4466, %v4082, -inf
        %v4937 = vrot.slane %v4936, 4
        %v4938 = vmax.f32 %v4936, %v4937
        %v4939 = vrot.slane %v4938, 2
        %v4940 = vmax.f32 %v4938, %v4939
        %v4941 = vrot.slane %v4940, 1
        %v4942 = vmax.f32 %v4940, %v4941
        %v4943 = vsel %vm4466, %v4090, -inf
        %v4944 = vrot.slane %v4943, 4
        %v4945 = vmax.f32 %v4943, %v4944
        %v4946 = vrot.slane %v4945, 2
        %v4947 = vmax.f32 %v4945, %v4946
        %v4948 = vrot.slane %v4947, 1
        %v4949 = vmax.f32 %v4947, %v4948
        %v4950 = vsel %vm4466, %v4098, -inf
        %v4951 = vrot.slane %v4950, 4
        %v4952 = vmax.f32 %v4950, %v4951
        %v4953 = vrot.slane %v4952, 2
        %v4954 = vmax.f32 %v4952, %v4953
        %v4955 = vrot.slane %v4954, 1
        %v4956 = vmax.f32 %v4954, %v4955
        %v4957 = vsel %vm4466, %v4097, -inf
        %v4958 = vrot.slane %v4957, 4
        %v4959 = vmax.f32 %v4957, %v4958
        %v4960 = vrot.slane %v4959, 2
        %v4961 = vmax.f32 %v4959, %v4960
        %v4962 = vrot.slane %v4961, 1
        %v4963 = vmax.f32 %v4961, %v4962
        %v4964 = vsel %vm4466, %v4099, -inf
        %v4965 = vrot.slane %v4964, 4
        %v4966 = vmax.f32 %v4964, %v4965
        %v4967 = vrot.slane %v4966, 2
        %v4968 = vmax.f32 %v4966, %v4967
        %v4969 = vrot.slane %v4968, 1
        %v4970 = vmax.f32 %v4968, %v4969
        %v4971 = vsel %vm4466, %v4107, -inf
        %v4972 = vrot.slane %v4971, 4
        %v4973 = vmax.f32 %v4971, %v4972
        %v4974 = vrot.slane %v4973, 2
        %v4975 = vmax.f32 %v4973, %v4974
        %v4976 = vrot.slane %v4975, 1
        %v4977 = vmax.f32 %v4975, %v4976
        %v4978 = vsel %vm4466, %v4115, -inf
        %v4979 = vrot.slane %v4978, 4
        %v4980 = vmax.f32 %v4978, %v4979
        %v4981 = vrot.slane %v4980, 2
        %v4982 = vmax.f32 %v4980, %v4981
        %v4983 = vrot.slane %v4982, 1
        %v4984 = vmax.f32 %v4982, %v4983
        %v4985 = vsel %vm4466, %v4114, -inf
        %v4986 = vrot.slane %v4985, 4
        %v4987 = vmax.f32 %v4985, %v4986
        %v4988 = vrot.slane %v4987, 2
        %v4989 = vmax.f32 %v4987, %v4988
        %v4990 = vrot.slane %v4989, 1
        %v4991 = vmax.f32 %v4989, %v4990
        %v4992 = vsel %vm4466, %v4116, -inf
        %v4993 = vrot.slane %v4992, 4
        %v4994 = vmax.f32 %v4992, %v4993
        %v4995 = vrot.slane %v4994, 2
        %v4996 = vmax.f32 %v4994, %v4995
        %v4997 = vrot.slane %v4996, 1
        %v4998 = vmax.f32 %v4996, %v4997
        %v4999 = vsel %vm4466, %v4124, -inf
        %v5000 = vrot.slane %v4999, 4
        %v5001 = vmax.f32 %v4999, %v5000
        %v5002 = vrot.slane %v5001, 2
        %v5003 = vmax.f32 %v5001, %v5002
        %v5004 = vrot.slane %v5003, 1
        %v5005 = vmax.f32 %v5003, %v5004
        %v5006 = vsel %vm4466, %v4132, -inf
        %v5007 = vrot.slane %v5006, 4
        %v5008 = vmax.f32 %v5006, %v5007
        %v5009 = vrot.slane %v5008, 2
        %v5010 = vmax.f32 %v5008, %v5009
        %v5011 = vrot.slane %v5010, 1
        %v5012 = vmax.f32 %v5010, %v5011
        %v5013 = vsel %vm4466, %v4131, -inf
        %v5014 = vrot.slane %v5013, 4
        %v5015 = vmax.f32 %v5013, %v5014
        %v5016 = vrot.slane %v5015, 2
        %v5017 = vmax.f32 %v5015, %v5016
        %v5018 = vrot.slane %v5017, 1
        %v5019 = vmax.f32 %v5017, %v5018
        %v5020 = vsel %vm4466, %v4133, -inf
        %v5021 = vrot.slane %v5020, 4
        %v5022 = vmax.f32 %v5020, %v5021
        %v5023 = vrot.slane %v5022, 2
        %v5024 = vmax.f32 %v5022, %v5023
        %v5025 = vrot.slane %v5024, 1
        %v5026 = vmax.f32 %v5024, %v5025
        %v5027 = vsel %vm4466, %v4141, -inf
        %v5028 = vrot.slane %v5027, 4
        %v5029 = vmax.f32 %v5027, %v5028
        %v5030 = vrot.slane %v5029, 2
        %v5031 = vmax.f32 %v5029, %v5030
        %v5032 = vrot.slane %v5031, 1
        %v5033 = vmax.f32 %v5031, %v5032
        %v5034 = vsel %vm4466, %v4149, -inf
        %v5035 = vrot.slane %v5034, 4
        %v5036 = vmax.f32 %v5034, %v5035
        %v5037 = vrot.slane %v5036, 2
        %v5038 = vmax.f32 %v5036, %v5037
        %v5039 = vrot.slane %v5038, 1
        %v5040 = vmax.f32 %v5038, %v5039
        %v5041 = vsel %vm4466, %v4148, -inf
        %v5042 = vrot.slane %v5041, 4
        %v5043 = vmax.f32 %v5041, %v5042
        %v5044 = vrot.slane %v5043, 2
        %v5045 = vmax.f32 %v5043, %v5044
        %v5046 = vrot.slane %v5045, 1
        %v5047 = vmax.f32 %v5045, %v5046
        %v5048 = vsel %vm4466, %v4150, -inf
        %v5049 = vrot.slane %v5048, 4
        %v5050 = vmax.f32 %v5048, %v5049
        %v5051 = vrot.slane %v5050, 2
        %v5052 = vmax.f32 %v5050, %v5051
        %v5053 = vrot.slane %v5052, 1
        %v5054 = vmax.f32 %v5052, %v5053
        %v5055 = vsel %vm4466, %v4158, -inf
        %v5056 = vrot.slane %v5055, 4
        %v5057 = vmax.f32 %v5055, %v5056
        %v5058 = vrot.slane %v5057, 2
        %v5059 = vmax.f32 %v5057, %v5058
        %v5060 = vrot.slane %v5059, 1
        %v5061 = vmax.f32 %v5059, %v5060
        %v5062 = vsel %vm4466, %v4166, -inf
        %v5063 = vrot.slane %v5062, 4
        %v5064 = vmax.f32 %v5062, %v5063
        %v5065 = vrot.slane %v5064, 2
        %v5066 = vmax.f32 %v5064, %v5065
        %v5067 = vrot.slane %v5066, 1
        %v5068 = vmax.f32 %v5066, %v5067
        %v5069 = vsel %vm4466, %v4165, -inf
        %v5070 = vrot.slane %v5069, 4
        %v5071 = vmax.f32 %v5069, %v5070
        %v5072 = vrot.slane %v5071, 2
        %v5073 = vmax.f32 %v5071, %v5072
        %v5074 = vrot.slane %v5073, 1
        %v5075 = vmax.f32 %v5073, %v5074
        %v5076 = vsel %vm4466, %v4167, -inf
        %v5077 = vrot.slane %v5076, 4
        %v5078 = vmax.f32 %v5076, %v5077
        %v5079 = vrot.slane %v5078, 2
        %v5080 = vmax.f32 %v5078, %v5079
        %v5081 = vrot.slane %v5080, 1
        %v5082 = vmax.f32 %v5080, %v5081
        %v5083 = vsel %vm4466, %v4175, -inf
        %v5084 = vrot.slane %v5083, 4
        %v5085 = vmax.f32 %v5083, %v5084
        %v5086 = vrot.slane %v5085, 2
        %v5087 = vmax.f32 %v5085, %v5086
        %v5088 = vrot.slane %v5087, 1
        %v5089 = vmax.f32 %v5087, %v5088
        %v5090 = vsel %vm4466, %v4183, -inf
        %v5091 = vrot.slane %v5090, 4
        %v5092 = vmax.f32 %v5090, %v5091
        %v5093 = vrot.slane %v5092, 2
        %v5094 = vmax.f32 %v5092, %v5093
        %v5095 = vrot.slane %v5094, 1
        %v5096 = vmax.f32 %v5094, %v5095
        %v5097 = vsel %vm4466, %v4182, -inf
        %v5098 = vrot.slane %v5097, 4
        %v5099 = vmax.f32 %v5097, %v5098
        %v5100 = vrot.slane %v5099, 2
        %v5101 = vmax.f32 %v5099, %v5100
        %v5102 = vrot.slane %v5101, 1
        %v5103 = vmax.f32 %v5101, %v5102
        %v5104 = vsel %vm4466, %v4184, -inf
        %v5105 = vrot.slane %v5104, 4
        %v5106 = vmax.f32 %v5104, %v5105
        %v5107 = vrot.slane %v5106, 2
        %v5108 = vmax.f32 %v5106, %v5107
        %v5109 = vrot.slane %v5108, 1
        %v5110 = vmax.f32 %v5108, %v5109
        %v5111 = vsel %vm4466, %v4192, -inf
        %v5112 = vrot.slane %v5111, 4
        %v5113 = vmax.f32 %v5111, %v5112
        %v5114 = vrot.slane %v5113, 2
        %v5115 = vmax.f32 %v5113, %v5114
        %v5116 = vrot.slane %v5115, 1
        %v5117 = vmax.f32 %v5115, %v5116
        %v5118 = vsel %vm4466, %v4200, -inf
        %v5119 = vrot.slane %v5118, 4
        %v5120 = vmax.f32 %v5118, %v5119
        %v5121 = vrot.slane %v5120, 2
        %v5122 = vmax.f32 %v5120, %v5121
        %v5123 = vrot.slane %v5122, 1
        %v5124 = vmax.f32 %v5122, %v5123
        %v5125 = vsel %vm4466, %v4199, -inf
        %v5126 = vrot.slane %v5125, 4
        %v5127 = vmax.f32 %v5125, %v5126
        %v5128 = vrot.slane %v5127, 2
        %v5129 = vmax.f32 %v5127, %v5128
        %v5130 = vrot.slane %v5129, 1
        %v5131 = vmax.f32 %v5129, %v5130
        %v5132 = vsel %vm4466, %v4201, -inf
        %v5133 = vrot.slane %v5132, 4
        %v5134 = vmax.f32 %v5132, %v5133
        %v5135 = vrot.slane %v5134, 2
        %v5136 = vmax.f32 %v5134, %v5135
        %v5137 = vrot.slane %v5136, 1
        %v5138 = vmax.f32 %v5136, %v5137
        %v5139 = vsel %vm4466, %v4209, -inf
        %v5140 = vrot.slane %v5139, 4
        %v5141 = vmax.f32 %v5139, %v5140
        %v5142 = vrot.slane %v5141, 2
        %v5143 = vmax.f32 %v5141, %v5142
        %v5144 = vrot.slane %v5143, 1
        %v5145 = vmax.f32 %v5143, %v5144
        %v5146 = vsel %vm4466, %v4217, -inf
        %v5147 = vrot.slane %v5146, 4
        %v5148 = vmax.f32 %v5146, %v5147
        %v5149 = vrot.slane %v5148, 2
        %v5150 = vmax.f32 %v5148, %v5149
        %v5151 = vrot.slane %v5150, 1
        %v5152 = vmax.f32 %v5150, %v5151
        %v5153 = vsel %vm4466, %v4216, -inf
        %v5154 = vrot.slane %v5153, 4
        %v5155 = vmax.f32 %v5153, %v5154
        %v5156 = vrot.slane %v5155, 2
        %v5157 = vmax.f32 %v5155, %v5156
        %v5158 = vrot.slane %v5157, 1
        %v5159 = vmax.f32 %v5157, %v5158
        %v5160 = vsel %vm4466, %v4218, -inf
        %v5161 = vrot.slane %v5160, 4
        %v5162 = vmax.f32 %v5160, %v5161
        %v5163 = vrot.slane %v5162, 2
        %v5164 = vmax.f32 %v5162, %v5163
        %v5165 = vrot.slane %v5164, 1
        %v5166 = vmax.f32 %v5164, %v5165
        %v5167 = vsel %vm4466, %v4226, -inf
        %v5168 = vrot.slane %v5167, 4
        %v5169 = vmax.f32 %v5167, %v5168
        %v5170 = vrot.slane %v5169, 2
        %v5171 = vmax.f32 %v5169, %v5170
        %v5172 = vrot.slane %v5171, 1
        %v5173 = vmax.f32 %v5171, %v5172
        %v5174 = vsel %vm4466, %v4234, -inf
        %v5175 = vrot.slane %v5174, 4
        %v5176 = vmax.f32 %v5174, %v5175
        %v5177 = vrot.slane %v5176, 2
        %v5178 = vmax.f32 %v5176, %v5177
        %v5179 = vrot.slane %v5178, 1
        %v5180 = vmax.f32 %v5178, %v5179
        %v5181 = vsel %vm4466, %v4233, -inf
        %v5182 = vrot.slane %v5181, 4
        %v5183 = vmax.f32 %v5181, %v5182
        %v5184 = vrot.slane %v5183, 2
        %v5185 = vmax.f32 %v5183, %v5184
        %v5186 = vrot.slane %v5185, 1
        %v5187 = vmax.f32 %v5185, %v5186
        %v5188 = vsel %vm4466, %v4235, -inf
        %v5189 = vrot.slane %v5188, 4
        %v5190 = vmax.f32 %v5188, %v5189
        %v5191 = vrot.slane %v5190, 2
        %v5192 = vmax.f32 %v5190, %v5191
        %v5193 = vrot.slane %v5192, 1
        %v5194 = vmax.f32 %v5192, %v5193
        %v5195 = vsel %vm4466, %v4243, -inf
        %v5196 = vrot.slane %v5195, 4
        %v5197 = vmax.f32 %v5195, %v5196
        %v5198 = vrot.slane %v5197, 2
        %v5199 = vmax.f32 %v5197, %v5198
        %v5200 = vrot.slane %v5199, 1
        %v5201 = vmax.f32 %v5199, %v5200
        %v5202 = vsel %vm4466, %v4251, -inf
        %v5203 = vrot.slane %v5202, 4
        %v5204 = vmax.f32 %v5202, %v5203
        %v5205 = vrot.slane %v5204, 2
        %v5206 = vmax.f32 %v5204, %v5205
        %v5207 = vrot.slane %v5206, 1
        %v5208 = vmax.f32 %v5206, %v5207
        %v5209 = vsel %vm4466, %v4250, -inf
        %v5210 = vrot.slane %v5209, 4
        %v5211 = vmax.f32 %v5209, %v5210
        %v5212 = vrot.slane %v5211, 2
        %v5213 = vmax.f32 %v5211, %v5212
        %v5214 = vrot.slane %v5213, 1
        %v5215 = vmax.f32 %v5213, %v5214
        %v5216 = vsel %vm4466, %v4252, -inf
        %v5217 = vrot.slane %v5216, 4
        %v5218 = vmax.f32 %v5216, %v5217
        %v5219 = vrot.slane %v5218, 2
        %v5220 = vmax.f32 %v5218, %v5219
        %v5221 = vrot.slane %v5220, 1
        %v5222 = vmax.f32 %v5220, %v5221
        %v5223 = vsel %vm4466, %v4260, -inf
        %v5224 = vrot.slane %v5223, 4
        %v5225 = vmax.f32 %v5223, %v5224
        %v5226 = vrot.slane %v5225, 2
        %v5227 = vmax.f32 %v5225, %v5226
        %v5228 = vrot.slane %v5227, 1
        %v5229 = vmax.f32 %v5227, %v5228
        %v5230 = vsel %vm4466, %v4268, -inf
        %v5231 = vrot.slane %v5230, 4
        %v5232 = vmax.f32 %v5230, %v5231
        %v5233 = vrot.slane %v5232, 2
        %v5234 = vmax.f32 %v5232, %v5233
        %v5235 = vrot.slane %v5234, 1
        %v5236 = vmax.f32 %v5234, %v5235
        %v5237 = vsel %vm4466, %v4267, -inf
        %v5238 = vrot.slane %v5237, 4
        %v5239 = vmax.f32 %v5237, %v5238
        %v5240 = vrot.slane %v5239, 2
        %v5241 = vmax.f32 %v5239, %v5240
        %v5242 = vrot.slane %v5241, 1
        %v5243 = vmax.f32 %v5241, %v5242
        %v5244 = vsel %vm4466, %v4269, -inf
        %v5245 = vrot.slane %v5244, 4
        %v5246 = vmax.f32 %v5244, %v5245
        %v5247 = vrot.slane %v5246, 2
        %v5248 = vmax.f32 %v5246, %v5247
        %v5249 = vrot.slane %v5248, 1
        %v5250 = vmax.f32 %v5248, %v5249
        %v5251 = vsel %vm4466, %v4277, -inf
        %v5252 = vrot.slane %v5251, 4
        %v5253 = vmax.f32 %v5251, %v5252
        %v5254 = vrot.slane %v5253, 2
        %v5255 = vmax.f32 %v5253, %v5254
        %v5256 = vrot.slane %v5255, 1
        %v5257 = vmax.f32 %v5255, %v5256
        %v5258 = vsel %vm4466, %v4285, -inf
        %v5259 = vrot.slane %v5258, 4
        %v5260 = vmax.f32 %v5258, %v5259
        %v5261 = vrot.slane %v5260, 2
        %v5262 = vmax.f32 %v5260, %v5261
        %v5263 = vrot.slane %v5262, 1
        %v5264 = vmax.f32 %v5262, %v5263
        %v5265 = vsel %vm4466, %v4284, -inf
        %v5266 = vrot.slane %v5265, 4
        %v5267 = vmax.f32 %v5265, %v5266
        %v5268 = vrot.slane %v5267, 2
        %v5269 = vmax.f32 %v5267, %v5268
        %v5270 = vrot.slane %v5269, 1
        %v5271 = vmax.f32 %v5269, %v5270
        %v5272 = vsel %vm4466, %v4286, -inf
        %v5273 = vrot.slane %v5272, 4
        %v5274 = vmax.f32 %v5272, %v5273
        %v5275 = vrot.slane %v5274, 2
        %v5276 = vmax.f32 %v5274, %v5275
        %v5277 = vrot.slane %v5276, 1
        %v5278 = vmax.f32 %v5276, %v5277
        %v5279 = vsel %vm4466, %v4294, -inf
        %v5280 = vrot.slane %v5279, 4
        %v5281 = vmax.f32 %v5279, %v5280
        %v5282 = vrot.slane %v5281, 2
        %v5283 = vmax.f32 %v5281, %v5282
        %v5284 = vrot.slane %v5283, 1
        %v5285 = vmax.f32 %v5283, %v5284
        %v5286 = vsel %vm4466, %v4302, -inf
        %v5287 = vrot.slane %v5286, 4
        %v5288 = vmax.f32 %v5286, %v5287
        %v5289 = vrot.slane %v5288, 2
        %v5290 = vmax.f32 %v5288, %v5289
        %v5291 = vrot.slane %v5290, 1
        %v5292 = vmax.f32 %v5290, %v5291
        %v5293 = vsel %vm4466, %v4301, -inf
        %v5294 = vrot.slane %v5293, 4
        %v5295 = vmax.f32 %v5293, %v5294
        %v5296 = vrot.slane %v5295, 2
        %v5297 = vmax.f32 %v5295, %v5296
        %v5298 = vrot.slane %v5297, 1
        %v5299 = vmax.f32 %v5297, %v5298
        %v5300 = vsel %vm4466, %v4303, -inf
        %v5301 = vrot.slane %v5300, 4
        %v5302 = vmax.f32 %v5300, %v5301
        %v5303 = vrot.slane %v5302, 2
        %v5304 = vmax.f32 %v5302, %v5303
        %v5305 = vrot.slane %v5304, 1
        %v5306 = vmax.f32 %v5304, %v5305
        %v5307 = vsel %vm4466, %v4311, -inf
        %v5308 = vrot.slane %v5307, 4
        %v5309 = vmax.f32 %v5307, %v5308
        %v5310 = vrot.slane %v5309, 2
        %v5311 = vmax.f32 %v5309, %v5310
        %v5312 = vrot.slane %v5311, 1
        %v5313 = vmax.f32 %v5311, %v5312
        %v5314 = vsel %vm4466, %v4319, -inf
        %v5315 = vrot.slane %v5314, 4
        %v5316 = vmax.f32 %v5314, %v5315
        %v5317 = vrot.slane %v5316, 2
        %v5318 = vmax.f32 %v5316, %v5317
        %v5319 = vrot.slane %v5318, 1
        %v5320 = vmax.f32 %v5318, %v5319
        %v5321 = vsel %vm4466, %v4318, -inf
        %v5322 = vrot.slane %v5321, 4
        %v5323 = vmax.f32 %v5321, %v5322
        %v5324 = vrot.slane %v5323, 2
        %v5325 = vmax.f32 %v5323, %v5324
        %v5326 = vrot.slane %v5325, 1
        %v5327 = vmax.f32 %v5325, %v5326
        %v5328 = vsel %vm4466, %v4320, -inf
        %v5329 = vrot.slane %v5328, 4
        %v5330 = vmax.f32 %v5328, %v5329
        %v5331 = vrot.slane %v5330, 2
        %v5332 = vmax.f32 %v5330, %v5331
        %v5333 = vrot.slane %v5332, 1
        %v5334 = vmax.f32 %v5332, %v5333
        %v5335 = vsel %vm4466, %v4328, -inf
        %v5336 = vrot.slane %v5335, 4
        %v5337 = vmax.f32 %v5335, %v5336
        %v5338 = vrot.slane %v5337, 2
        %v5339 = vmax.f32 %v5337, %v5338
        %v5340 = vrot.slane %v5339, 1
        %v5341 = vmax.f32 %v5339, %v5340
        %v5342 = vsel %vm4466, %v4336, -inf
        %v5343 = vrot.slane %v5342, 4
        %v5344 = vmax.f32 %v5342, %v5343
        %v5345 = vrot.slane %v5344, 2
        %v5346 = vmax.f32 %v5344, %v5345
        %v5347 = vrot.slane %v5346, 1
        %v5348 = vmax.f32 %v5346, %v5347
        %v5349 = vsel %vm4466, %v4335, -inf
        %v5350 = vrot.slane %v5349, 4
        %v5351 = vmax.f32 %v5349, %v5350
        %v5352 = vrot.slane %v5351, 2
        %v5353 = vmax.f32 %v5351, %v5352
        %v5354 = vrot.slane %v5353, 1
        %v5355 = vmax.f32 %v5353, %v5354
        %v5356 = vsel %vm4466, %v4337, -inf
        %v5357 = vrot.slane %v5356, 4
        %v5358 = vmax.f32 %v5356, %v5357
        %v5359 = vrot.slane %v5358, 2
        %v5360 = vmax.f32 %v5358, %v5359
        %v5361 = vrot.slane %v5360, 1
        %v5362 = vmax.f32 %v5360, %v5361
        %v5363 = vsel %vm761, %v4473, -inf
        %v5364 = vsel %vm761, %v4529, -inf
        %v5365 = vmax.f32 %v5363, %v5364
        %v5366 = vsel %vm761, %v4480, -inf
        %v5367 = vsel %vm761, %v4536, -inf
        %v5368 = vmax.f32 %v5366, %v5367
        %v5369 = vsel %vm761, %v4487, -inf
        %v5370 = vsel %vm761, %v4543, -inf
        %v5371 = vmax.f32 %v5369, %v5370
        %v5372 = vsel %vm761, %v4494, -inf
        %v5373 = vsel %vm761, %v4550, -inf
        %v5374 = vmax.f32 %v5372, %v5373
        %v5375 = vsel %vm761, %v4501, -inf
        %v5376 = vsel %vm761, %v4557, -inf
        %v5377 = vmax.f32 %v5375, %v5376
        %v5378 = vsel %vm761, %v4508, -inf
        %v5379 = vsel %vm761, %v4564, -inf
        %v5380 = vmax.f32 %v5378, %v5379
        %v5381 = vsel %vm761, %v4515, -inf
        %v5382 = vsel %vm761, %v4571, -inf
        %v5383 = vmax.f32 %v5381, %v5382
        %v5384 = vsel %vm761, %v4522, -inf
        %v5385 = vsel %vm761, %v4578, -inf
        %v5386 = vmax.f32 %v5384, %v5385
        %v5387 = vsel %vm761, %v4585, -inf
        %v5388 = vsel %vm761, %v4641, -inf
        %v5389 = vmax.f32 %v5387, %v5388
        %v5390 = vsel %vm761, %v4592, -inf
        %v5391 = vsel %vm761, %v4648, -inf
        %v5392 = vmax.f32 %v5390, %v5391
        %v5393 = vsel %vm761, %v4599, -inf
        %v5394 = vsel %vm761, %v4655, -inf
        %v5395 = vmax.f32 %v5393, %v5394
        %v5396 = vsel %vm761, %v4606, -inf
        %v5397 = vsel %vm761, %v4662, -inf
        %v5398 = vmax.f32 %v5396, %v5397
        %v5399 = vsel %vm761, %v4613, -inf
        %v5400 = vsel %vm761, %v4669, -inf
        %v5401 = vmax.f32 %v5399, %v5400
        %v5402 = vsel %vm761, %v4620, -inf
        %v5403 = vsel %vm761, %v4676, -inf
        %v5404 = vmax.f32 %v5402, %v5403
        %v5405 = vsel %vm761, %v4627, -inf
        %v5406 = vsel %vm761, %v4683, -inf
        %v5407 = vmax.f32 %v5405, %v5406
        %v5408 = vsel %vm761, %v4634, -inf
        %v5409 = vsel %vm761, %v4690, -inf
        %v5410 = vmax.f32 %v5408, %v5409
        %v5411 = vsel %vm761, %v4697, -inf
        %v5412 = vsel %vm761, %v4753, -inf
        %v5413 = vmax.f32 %v5411, %v5412
        %v5414 = vsel %vm761, %v4704, -inf
        %v5415 = vsel %vm761, %v4760, -inf
        %v5416 = vmax.f32 %v5414, %v5415
        %v5417 = vsel %vm761, %v4711, -inf
        %v5418 = vsel %vm761, %v4767, -inf
        %v5419 = vmax.f32 %v5417, %v5418
        %v5420 = vsel %vm761, %v4718, -inf
        %v5421 = vsel %vm761, %v4774, -inf
        %v5422 = vmax.f32 %v5420, %v5421
        %v5423 = vsel %vm761, %v4725, -inf
        %v5424 = vsel %vm761, %v4781, -inf
        %v5425 = vmax.f32 %v5423, %v5424
        %v5426 = vsel %vm761, %v4732, -inf
        %v5427 = vsel %vm761, %v4788, -inf
        %v5428 = vmax.f32 %v5426, %v5427
        %v5429 = vsel %vm761, %v4739, -inf
        %v5430 = vsel %vm761, %v4795, -inf
        %v5431 = vmax.f32 %v5429, %v5430
        %v5432 = vsel %vm761, %v4746, -inf
        %v5433 = vsel %vm761, %v4802, -inf
        %v5434 = vmax.f32 %v5432, %v5433
        %v5435 = vsel %vm761, %v4809, -inf
        %v5436 = vsel %vm761, %v4865, -inf
        %v5437 = vmax.f32 %v5435, %v5436
        %v5438 = vsel %vm761, %v4816, -inf
        %v5439 = vsel %vm761, %v4872, -inf
        %v5440 = vmax.f32 %v5438, %v5439
        %v5441 = vsel %vm761, %v4823, -inf
        %v5442 = vsel %vm761, %v4879, -inf
        %v5443 = vmax.f32 %v5441, %v5442
        %v5444 = vsel %vm761, %v4830, -inf
        %v5445 = vsel %vm761, %v4886, -inf
        %v5446 = vmax.f32 %v5444, %v5445
        %v5447 = vsel %vm761, %v4837, -inf
        %v5448 = vsel %vm761, %v4893, -inf
        %v5449 = vmax.f32 %v5447, %v5448
        %v5450 = vsel %vm761, %v4844, -inf
        %v5451 = vsel %vm761, %v4900, -inf
        %v5452 = vmax.f32 %v5450, %v5451
        %v5453 = vsel %vm761, %v4851, -inf
        %v5454 = vsel %vm761, %v4907, -inf
        %v5455 = vmax.f32 %v5453, %v5454
        %v5456 = vsel %vm761, %v4858, -inf
        %v5457 = vsel %vm761, %v4914, -inf
        %v5458 = vmax.f32 %v5456, %v5457
        %v5459 = vsel %vm761, %v4921, -inf
        %v5460 = vsel %vm761, %v4977, -inf
        %v5461 = vmax.f32 %v5459, %v5460
        %v5462 = vsel %vm761, %v4928, -inf
        %v5463 = vsel %vm761, %v4984, -inf
        %v5464 = vmax.f32 %v5462, %v5463
        %v5465 = vsel %vm761, %v4935, -inf
        %v5466 = vsel %vm761, %v4991, -inf
        %v5467 = vmax.f32 %v5465, %v5466
        %v5468 = vsel %vm761, %v4942, -inf
        %v5469 = vsel %vm761, %v4998, -inf
        %v5470 = vmax.f32 %v5468, %v5469
        %v5471 = vsel %vm761, %v4949, -inf
        %v5472 = vsel %vm761, %v5005, -inf
        %v5473 = vmax.f32 %v5471, %v5472
        %v5474 = vsel %vm761, %v4956, -inf
        %v5475 = vsel %vm761, %v5012, -inf
        %v5476 = vmax.f32 %v5474, %v5475
        %v5477 = vsel %vm761, %v4963, -inf
        %v5478 = vsel %vm761, %v5019, -inf
        %v5479 = vmax.f32 %v5477, %v5478
        %v5480 = vsel %vm761, %v4970, -inf
        %v5481 = vsel %vm761, %v5026, -inf
        %v5482 = vmax.f32 %v5480, %v5481
        %v5483 = vsel %vm761, %v5033, -inf
        %v5484 = vsel %vm761, %v5089, -inf
        %v5485 = vmax.f32 %v5483, %v5484
        %v5486 = vsel %vm761, %v5040, -inf
        %v5487 = vsel %vm761, %v5096, -inf
        %v5488 = vmax.f32 %v5486, %v5487
        %v5489 = vsel %vm761, %v5047, -inf
        %v5490 = vsel %vm761, %v5103, -inf
        %v5491 = vmax.f32 %v5489, %v5490
        %v5492 = vsel %vm761, %v5054, -inf
        %v5493 = vsel %vm761, %v5110, -inf
        %v5494 = vmax.f32 %v5492, %v5493
        %v5495 = vsel %vm761, %v5061, -inf
        %v5496 = vsel %vm761, %v5117, -inf
        %v5497 = vmax.f32 %v5495, %v5496
        %v5498 = vsel %vm761, %v5068, -inf
        %v5499 = vsel %vm761, %v5124, -inf
        %v5500 = vmax.f32 %v5498, %v5499
        %v5501 = vsel %vm761, %v5075, -inf
        %v5502 = vsel %vm761, %v5131, -inf
        %v5503 = vmax.f32 %v5501, %v5502
        %v5504 = vsel %vm761, %v5082, -inf
        %v5505 = vsel %vm761, %v5138, -inf
        %v5506 = vmax.f32 %v5504, %v5505
        %v5507 = vsel %vm761, %v5145, -inf
        %v5508 = vsel %vm761, %v5201, -inf
        %v5509 = vmax.f32 %v5507, %v5508
        %v5510 = vsel %vm761, %v5152, -inf
        %v5511 = vsel %vm761, %v5208, -inf
        %v5512 = vmax.f32 %v5510, %v5511
        %v5513 = vsel %vm761, %v5159, -inf
        %v5514 = vsel %vm761, %v5215, -inf
        %v5515 = vmax.f32 %v5513, %v5514
        %v5516 = vsel %vm761, %v5166, -inf
        %v5517 = vsel %vm761, %v5222, -inf
        %v5518 = vmax.f32 %v5516, %v5517
        %v5519 = vsel %vm761, %v5173, -inf
        %v5520 = vsel %vm761, %v5229, -inf
        %v5521 = vmax.f32 %v5519, %v5520
        %v5522 = vsel %vm761, %v5180, -inf
        %v5523 = vsel %vm761, %v5236, -inf
        %v5524 = vmax.f32 %v5522, %v5523
        %v5525 = vsel %vm761, %v5187, -inf
        %v5526 = vsel %vm761, %v5243, -inf
        %v5527 = vmax.f32 %v5525, %v5526
        %v5528 = vsel %vm761, %v5194, -inf
        %v5529 = vsel %vm761, %v5250, -inf
        %v5530 = vmax.f32 %v5528, %v5529
        %v5531 = vsel %vm761, %v5257, -inf
        %v5532 = vsel %vm761, %v5313, -inf
        %v5533 = vmax.f32 %v5531, %v5532
        %v5534 = vsel %vm761, %v5264, -inf
        %v5535 = vsel %vm761, %v5320, -inf
        %v5536 = vmax.f32 %v5534, %v5535
        %v5537 = vsel %vm761, %v5271, -inf
        %v5538 = vsel %vm761, %v5327, -inf
        %v5539 = vmax.f32 %v5537, %v5538
        %v5540 = vsel %vm761, %v5278, -inf
        %v5541 = vsel %vm761, %v5334, -inf
        %v5542 = vmax.f32 %v5540, %v5541
        %v5543 = vsel %vm761, %v5285, -inf
        %v5544 = vsel %vm761, %v5341, -inf
        %v5545 = vmax.f32 %v5543, %v5544
        %v5546 = vsel %vm761, %v5292, -inf
        %v5547 = vsel %vm761, %v5348, -inf
        %v5548 = vmax.f32 %v5546, %v5547
        %v5549 = vsel %vm761, %v5299, -inf
        %v5550 = vsel %vm761, %v5355, -inf
        %v5551 = vmax.f32 %v5549, %v5550
        %v5552 = vsel %vm761, %v5306, -inf
        %v5553 = vsel %vm761, %v5362, -inf
        %v5554 = vmax.f32 %v5552, %v5553
        %5555 = vst.msk [vmem:[#allocation3] sm:$0xff] %vm761, 0.0
        %5556 = vst.msk [vmem:[#allocation3 + $0x8] sm:$0x3] %vm4466, 0.0
        %s5557 = scalar_lea.vmem [#allocation3], 144
        %5558 = vst.msk [vmem:[%s5557] sm:$0xff] %vm761, 0.0
        %5559 = vst.msk [vmem:[%s5557 + $0x8] sm:$0x3] %vm4466, 0.0
        %vm5560 = vcmask 122880
        %5561 = vst.msk [vmem:[#allocation3] sm:$0x1] %vm5560, 0.0
        %5562 = vst.msk [vmem:[#allocation3 + $0x10] sm:$0x1] %vm5560, 0.0
        %5563 = vst.msk [vmem:[#allocation3 + $0x20] sm:$0x1] %vm5560, 0.0
        %5564 = vst.msk [vmem:[#allocation3 + $0x30] sm:$0x1] %vm5560, 0.0
        %5565 = vst.msk [vmem:[#allocation3 + $0x40] sm:$0x1] %vm5560, 0.0
        %5566 = vst.msk [vmem:[#allocation3 + $0x50] sm:$0x1] %vm5560, 0.0
        %5567 = vst.msk [vmem:[#allocation3 + $0x60] sm:$0x1] %vm5560, 0.0
        %5568 = vst.msk [vmem:[#allocation3 + $0x70] sm:$0x1] %vm5560, 0.0
        %5569 = vst.msk [vmem:[#allocation3 + $0x80] sm:$0x1] %vm5560, 0.0
        %5570 = vst.msk [vmem:[#allocation3 + $0x90] sm:$0x1] %vm5560, 0.0
        %5571 = vst.msk [vmem:[#allocation3 + $0x9] sm:$0x1] %vm5560, 0.0
        %5572 = vst.msk [vmem:[#allocation3 + $0x19] sm:$0x1] %vm5560, 0.0
        %5573 = vst.msk [vmem:[#allocation3 + $0x29] sm:$0x1] %vm5560, 0.0
        %5574 = vst.msk [vmem:[#allocation3 + $0x39] sm:$0x1] %vm5560, 0.0
        %5575 = vst.msk [vmem:[#allocation3 + $0x49] sm:$0x1] %vm5560, 0.0
        %5576 = vst.msk [vmem:[#allocation3 + $0x59] sm:$0x1] %vm5560, 0.0
        %5577 = vst.msk [vmem:[#allocation3 + $0x69] sm:$0x1] %vm5560, 0.0
        %5578 = vst.msk [vmem:[#allocation3 + $0x79] sm:$0x1] %vm5560, 0.0
        %5579 = vst.msk [vmem:[#allocation3 + $0x89] sm:$0x1] %vm5560, 0.0
        %5580 = vst.msk [vmem:[#allocation3 + $0x99] sm:$0x1] %vm5560, 0.0
        %vm5645 = vcmask 1041409
        %v5646 = vsel %vm5645, %v5368, %v5365
        %vm5647 = vcmask 1042434
        %v5648 = vsel %vm5647, %v5371, %v5646
        %vm5649 = vcmask 1043459
        %v5650 = vsel %vm5649, %v5374, %v5648
        %vm5651 = vcmask 1044484
        %v5652 = vsel %vm5651, %v5377, %v5650
        %vm5653 = vcmask 1045509
        %v5654 = vsel %vm5653, %v5380, %v5652
        %vm5655 = vcmask 1046534
        %v5656 = vsel %vm5655, %v5383, %v5654
        %vm5657 = vcmask 1047559
        %v5658 = vsel %vm5657, %v5386, %v5656
        %v5659 = vsel %vm5645, %v5392, %v5389
        %v5660 = vsel %vm5647, %v5395, %v5659
        %v5661 = vsel %vm5649, %v5398, %v5660
        %v5662 = vsel %vm5651, %v5401, %v5661
        %v5663 = vsel %vm5653, %v5404, %v5662
        %v5664 = vsel %vm5655, %v5407, %v5663
        %v5665 = vsel %vm5657, %v5410, %v5664
        %v5666 = vsel %vm5645, %v5416, %v5413
        %v5667 = vsel %vm5647, %v5419, %v5666
        %v5668 = vsel %vm5649, %v5422, %v5667
        %v5669 = vsel %vm5651, %v5425, %v5668
        %v5670 = vsel %vm5653, %v5428, %v5669
        %v5671 = vsel %vm5655, %v5431, %v5670
        %v5672 = vsel %vm5657, %v5434, %v5671
        %v5673 = vsel %vm5645, %v5440, %v5437
        %v5674 = vsel %vm5647, %v5443, %v5673
        %v5675 = vsel %vm5649, %v5446, %v5674
        %v5676 = vsel %vm5651, %v5449, %v5675
        %v5677 = vsel %vm5653, %v5452, %v5676
        %v5678 = vsel %vm5655, %v5455, %v5677
        %v5679 = vsel %vm5657, %v5458, %v5678
        %v5680 = vsel %vm5645, %v5464, %v5461
        %v5681 = vsel %vm5647, %v5467, %v5680
        %v5682 = vsel %vm5649, %v5470, %v5681
        %v5683 = vsel %vm5651, %v5473, %v5682
        %v5684 = vsel %vm5653, %v5476, %v5683
        %v5685 = vsel %vm5655, %v5479, %v5684
        %v5686 = vsel %vm5657, %v5482, %v5685
        %v5687 = vsel %vm5645, %v5488, %v5485
        %v5688 = vsel %vm5647, %v5491, %v5687
        %v5689 = vsel %vm5649, %v5494, %v5688
        %v5690 = vsel %vm5651, %v5497, %v5689
        %v5691 = vsel %vm5653, %v5500, %v5690
        %v5692 = vsel %vm5655, %v5503, %v5691
        %v5693 = vsel %vm5657, %v5506, %v5692
        %v5694 = vsel %vm5645, %v5512, %v5509
        %v5695 = vsel %vm5647, %v5515, %v5694
        %v5696 = vsel %vm5649, %v5518, %v5695
        %v5697 = vsel %vm5651, %v5521, %v5696
        %v5698 = vsel %vm5653, %v5524, %v5697
        %v5699 = vsel %vm5655, %v5527, %v5698
        %v5700 = vsel %vm5657, %v5530, %v5699
        %v5701 = vsel %vm5645, %v5536, %v5533
        %v5702 = vsel %vm5647, %v5539, %v5701
        %v5703 = vsel %vm5649, %v5542, %v5702
        %v5704 = vsel %vm5651, %v5545, %v5703
        %v5705 = vsel %vm5653, %v5548, %v5704
        %v5706 = vsel %vm5655, %v5551, %v5705
        %v5707 = vsel %vm5657, %v5554, %v5706
        %s5716 = scalar_lea.vmem [#allocation3], 16
        %5717 = vst.msk [vmem:[%s5716 + $0x1] sm:$0xff] %vm761, %v5658
        %5718 = vst.msk [vmem:[%s5716 + $0x11] sm:$0xff] %vm761, %v5665
        %5719 = vst.msk [vmem:[%s5716 + $0x21] sm:$0xff] %vm761, %v5672
        %5720 = vst.msk [vmem:[%s5716 + $0x31] sm:$0xff] %vm761, %v5679
        %5721 = vst.msk [vmem:[%s5716 + $0x41] sm:$0xff] %vm761, %v5686
        %5722 = vst.msk [vmem:[%s5716 + $0x51] sm:$0xff] %vm761, %v5693
        %5723 = vst.msk [vmem:[%s5716 + $0x61] sm:$0xff] %vm761, %v5700
        %5724 = vst.msk [vmem:[%s5716 + $0x71] sm:$0xff] %vm761, %v5707
        %v5725 = vld [vmem:[#allocation3] sm:$0xff]
        %v5726 = vld [vmem:[#allocation3 + $0x10] sm:$0xff]
        %v5727 = vld [vmem:[#allocation3 + $0x20] sm:$0xff]
        %v5728 = vld [vmem:[#allocation3 + $0x30] sm:$0xff]
        %v5729 = vld [vmem:[#allocation3 + $0x40] sm:$0xff]
        %v5730 = vld [vmem:[#allocation3 + $0x50] sm:$0xff]
        %v5731 = vld [vmem:[#allocation3 + $0x60] sm:$0xff]
        %v5732 = vld [vmem:[#allocation3 + $0x70] sm:$0xff]
        %v5733 = vpack.c.bf16 %v5726, %v5725
        %v5734 = vpack.c.bf16 %v5728, %v5727
        %v5735 = vpack.c.bf16 %v5730, %v5729
        %v5736 = vpack.c.bf16 %v5732, %v5731
        %v5737 = vld [vmem:[%s2] sm:$0xf]
        %v5738 = vld [vmem:[%s2 + $0x4] sm:$0xf]
        %v5741 = vunpack.c.l.b16 %v5737
        %v5742 = vunpack.c.l.b16 %v5738
        %v5743 = vpack.c.b16 %v5742, %v5741
        %v5746 = vsel %vm761, %v5733, 0
        %v5749 = vsel %vm761, %v5734, 0
        %v5752 = vsel %vm761, %v5735, 0
        %v5755 = vsel %vm761, %v5736, 0
        %5757 = vmatprep.subr.bf16.mxu0 0
        %5758 = vmatpush1.bf16.msra.mxu0 %v5743
        %5759 = vmatprep.subr.bf16.mxu0 0
        %5760 = vmatpush1.bf16.msra.mxu0 0
        %5761 = vmatprep.subr.bf16.mxu0 0
        %5762 = vmatpush1.bf16.msra.mxu0 0
        %5763 = vmatprep.subr.bf16.mxu0 0
        %5764 = vmatpush1.bf16.msra.mxu0 0
        %5765 = vmatprep.subr.bf16.mxu0 0
        %5766 = vmatpush1.bf16.msra.mxu0 0
        %5767 = vmatprep.subr.bf16.mxu0 0
        %5768 = vmatpush1.bf16.msra.mxu0 0
        %5769 = vmatprep.subr.bf16.mxu0 0
        %5770 = vmatpush1.bf16.msra.mxu0 0
        %5771 = vmatprep.subr.bf16.mxu0 0
        %5772 = vmatpush1.bf16.msra.mxu0 0
        %5773 = vmatprep.subr.bf16.mxu0 0
        %5774 = vmatpush1.bf16.msra.mxu0 0
        %5775 = vmatprep.subr.bf16.mxu0 0
        %5776 = vmatpush1.bf16.msra.mxu0 0
        %5777 = vmatprep.subr.bf16.mxu0 0
        %5778 = vmatpush1.bf16.msra.mxu0 0
        %5779 = vmatprep.subr.bf16.mxu0 0
        %5780 = vmatpush1.bf16.msra.mxu0 0
        %5781 = vmatprep.subr.bf16.mxu0 0
        %5782 = vmatpush1.bf16.msra.mxu0 0
        %5783 = vmatprep.subr.bf16.mxu0 0
        %5784 = vmatpush1.bf16.msra.mxu0 0
        %5785 = vmatprep.subr.bf16.mxu0 0
        %5786 = vmatpush1.bf16.msra.mxu0 0
        %5787 = vmatprep.subr.bf16.mxu0 0
        %5788 = vmatpush1.bf16.msra.mxu0 0
        %5789 = vmatprep.mubr.bf16.mxu0 0
        %5790 = vmatmul.mubr.bf16.gmra.mrb[0].mxu0 %v5746
        %v5791 = vpop.f32.mrb[0].mxu0
        %v5792 = vadd.f32 0.0, %v5791
        %v5793 = vpop.f32.mrb[0].mxu0
        %v5794 = vpop.f32.mrb[0].mxu0
        %v5795 = vadd.f32 0.0, %v5794
        %v5796 = vpop.f32.mrb[0].mxu0
        %5797 = vmatprep.mubr.bf16.mxu0 0
        %5798 = vmatmul.mubr.bf16.gmra.mrb[0].mxu0 %v5749
        %v5799 = vpop.f32.mrb[0].mxu0
        %v5800 = vadd.f32 0.0, %v5799
        %v5801 = vpop.f32.mrb[0].mxu0
        %v5802 = vpop.f32.mrb[0].mxu0
        %v5803 = vadd.f32 0.0, %v5802
        %v5804 = vpop.f32.mrb[0].mxu0
        %5805 = vmatprep.mubr.bf16.mxu0 0
        %5806 = vmatmul.mubr.bf16.gmra.mrb[0].mxu0 %v5752
        %v5807 = vpop.f32.mrb[0].mxu0
        %v5808 = vadd.f32 0.0, %v5807
        %v5809 = vpop.f32.mrb[0].mxu0
        %v5810 = vpop.f32.mrb[0].mxu0
        %v5811 = vadd.f32 0.0, %v5810
        %v5812 = vpop.f32.mrb[0].mxu0
        %5813 = vmatprep.mubr.bf16.mxu0 0
        %5814 = vmatmul.mubr.bf16.gmra.mrb[0].mxu0 %v5755
        %v5815 = vpop.f32.mrb[0].mxu0
        %v5816 = vadd.f32 0.0, %v5815
        %v5817 = vpop.f32.mrb[0].mxu0
        %v5818 = vpop.f32.mrb[0].mxu0
        %v5819 = vadd.f32 0.0, %v5818
        %v5820 = vpop.f32.mrb[0].mxu0
        %5821 = vdwg.mxu0
        %vm5822 = vcmask 261120
        %5823 = vst.msk [vmem:[#allocation7] sm:$0xff] %vm5822, %v5792
        %5824 = vst.msk [vmem:[#allocation7 + $0x8] sm:$0xff] %vm5822, %v5795
        %5825 = vst.msk [vmem:[#allocation7 + $0x10] sm:$0xff] %vm5822, %v5800
        %5826 = vst.msk [vmem:[#allocation7 + $0x18] sm:$0xff] %vm5822, %v5803
        %5827 = vst.msk [vmem:[#allocation7 + $0x20] sm:$0xff] %vm5822, %v5808
        %5828 = vst.msk [vmem:[#allocation7 + $0x28] sm:$0xff] %vm5822, %v5811
        %5829 = vst.msk [vmem:[#allocation7 + $0x30] sm:$0xff] %vm5822, %v5816
        %5830 = vst.msk [vmem:[#allocation7 + $0x38] sm:$0xff] %vm5822, %v5819
        %v5831 = vld [vmem:[#allocation3 + $0x1] sm:$0xff]
        %v5832 = vld [vmem:[#allocation3 + $0x11] sm:$0xff]
        %v5833 = vld [vmem:[#allocation3 + $0x21] sm:$0xff]
        %v5834 = vld [vmem:[#allocation3 + $0x31] sm:$0xff]
        %v5835 = vld [vmem:[#allocation3 + $0x41] sm:$0xff]
        %v5836 = vld [vmem:[#allocation3 + $0x51] sm:$0xff]
        %v5837 = vld [vmem:[#allocation3 + $0x61] sm:$0xff]
        %v5838 = vld [vmem:[#allocation3 + $0x71] sm:$0xff]
        %v5839 = vpack.c.bf16 %v5832, %v5831
        %v5840 = vpack.c.bf16 %v5834, %v5833
        %v5841 = vpack.c.bf16 %v5836, %v5835
        %v5842 = vpack.c.bf16 %v5838, %v5837
        %s5843 = scalar_lea.vmem %s2, 8
        %v5844 = vld [vmem:[%s5843] sm:$0xf]
        %v5845 = vld [vmem:[%s5843 + $0x4] sm:$0xf]
        %v5848 = vunpack.c.l.b16 %v5844
        %v5849 = vunpack.c.l.b16 %v5845
        %v5850 = vpack.c.b16 %v5849, %v5848
        %v5853 = vsel %vm761, %v5839, 0
        %v5856 = vsel %vm761, %v5840, 0
        %v5859 = vsel %vm761, %v5841, 0
        %v5862 = vsel %vm761, %v5842, 0
        %5864 = vmatprep.subr.bf16.mxu0 0
        %5865 = vmatpush1.bf16.msra.mxu0 %v5850
        %5866 = vmatprep.subr.bf16.mxu0 0
        %5867 = vmatpush1.bf16.msra.mxu0 0
        %5868 = vmatprep.subr.bf16.mxu0 0
        %5869 = vmatpush1.bf16.msra.mxu0 0
        %5870 = vmatprep.subr.bf16.mxu0 0
        %5871 = vmatpush1.bf16.msra.mxu0 0
        %5872 = vmatprep.subr.bf16.mxu0 0
        %5873 = vmatpush1.bf16.msra.mxu0 0
        %5874 = vmatprep.subr.bf16.mxu0 0
        %5875 = vmatpush1.bf16.msra.mxu0 0
        %5876 = vmatprep.subr.bf16.mxu0 0
        %5877 = vmatpush1.bf16.msra.mxu0 0
        %5878 = vmatprep.subr.bf16.mxu0 0
        %5879 = vmatpush1.bf16.msra.mxu0 0
        %5880 = vmatprep.subr.bf16.mxu0 0
        %5881 = vmatpush1.bf16.msra.mxu0 0
        %5882 = vmatprep.subr.bf16.mxu0 0
        %5883 = vmatpush1.bf16.msra.mxu0 0
        %5884 = vmatprep.subr.bf16.mxu0 0
        %5885 = vmatpush1.bf16.msra.mxu0 0
        %5886 = vmatprep.subr.bf16.mxu0 0
        %5887 = vmatpush1.bf16.msra.mxu0 0
        %5888 = vmatprep.subr.bf16.mxu0 0
        %5889 = vmatpush1.bf16.msra.mxu0 0
        %5890 = vmatprep.subr.bf16.mxu0 0
        %5891 = vmatpush1.bf16.msra.mxu0 0
        %5892 = vmatprep.subr.bf16.mxu0 0
        %5893 = vmatpush1.bf16.msra.mxu0 0
        %5894 = vmatprep.subr.bf16.mxu0 0
        %5895 = vmatpush1.bf16.msra.mxu0 0
        %5896 = vmatprep.mubr.bf16.mxu0 0
        %5897 = vmatmul.mubr.bf16.gmra.mrb[0].mxu0 %v5853
        %v5898 = vpop.f32.mrb[0].mxu0
        %v5899 = vadd.f32 0.0, %v5898
        %v5900 = vpop.f32.mrb[0].mxu0
        %v5901 = vpop.f32.mrb[0].mxu0
        %v5902 = vadd.f32 0.0, %v5901
        %v5903 = vpop.f32.mrb[0].mxu0
        %5904 = vmatprep.mubr.bf16.mxu0 0
        %5905 = vmatmul.mubr.bf16.gmra.mrb[0].mxu0 %v5856
        %v5906 = vpop.f32.mrb[0].mxu0
        %v5907 = vadd.f32 0.0, %v5906
        %v5908 = vpop.f32.mrb[0].mxu0
        %v5909 = vpop.f32.mrb[0].mxu0
        %v5910 = vadd.f32 0.0, %v5909
        %v5911 = vpop.f32.mrb[0].mxu0
        %5912 = vmatprep.mubr.bf16.mxu0 0
        %5913 = vmatmul.mubr.bf16.gmra.mrb[0].mxu0 %v5859
        %v5914 = vpop.f32.mrb[0].mxu0
        %v5915 = vadd.f32 0.0, %v5914
        %v5916 = vpop.f32.mrb[0].mxu0
        %v5917 = vpop.f32.mrb[0].mxu0
        %v5918 = vadd.f32 0.0, %v5917
        %v5919 = vpop.f32.mrb[0].mxu0
        %5920 = vmatprep.mubr.bf16.mxu0 0
        %5921 = vmatmul.mubr.bf16.gmra.mrb[0].mxu0 %v5862
        %v5922 = vpop.f32.mrb[0].mxu0
        %v5923 = vadd.f32 0.0, %v5922
        %v5924 = vpop.f32.mrb[0].mxu0
        %v5925 = vpop.f32.mrb[0].mxu0
        %v5926 = vadd.f32 0.0, %v5925
        %v5927 = vpop.f32.mrb[0].mxu0
        %5928 = vdwg.mxu0
        %v5929 = vld [vmem:[#allocation7] sm:$0xff]
        %v5930 = vld [vmem:[#allocation7 + $0x8] sm:$0xff]
        %v5931 = vld [vmem:[#allocation7 + $0x10] sm:$0xff]
        %v5932 = vld [vmem:[#allocation7 + $0x18] sm:$0xff]
        %v5933 = vld [vmem:[#allocation7 + $0x20] sm:$0xff]
        %v5934 = vld [vmem:[#allocation7 + $0x28] sm:$0xff]
        %v5935 = vld [vmem:[#allocation7 + $0x30] sm:$0xff]
        %v5936 = vld [vmem:[#allocation7 + $0x38] sm:$0xff]
        %v5937 = vadd.f32 %v5929, %v5899
        %v5938 = vadd.f32 %v5930, %v5902
        %v5939 = vadd.f32 %v5931, %v5907
        %v5940 = vadd.f32 %v5932, %v5910
        %v5941 = vadd.f32 %v5933, %v5915
        %v5942 = vadd.f32 %v5934, %v5918
        %v5943 = vadd.f32 %v5935, %v5923
        %v5944 = vadd.f32 %v5936, %v5926
        %5945 = vst.msk [vmem:[#allocation7] sm:$0xff] %vm5822, %v5937
        %5946 = vst.msk [vmem:[#allocation7 + $0x8] sm:$0xff] %vm5822, %v5938
        %5947 = vst.msk [vmem:[#allocation7 + $0x10] sm:$0xff] %vm5822, %v5939
        %5948 = vst.msk [vmem:[#allocation7 + $0x18] sm:$0xff] %vm5822, %v5940
        %5949 = vst.msk [vmem:[#allocation7 + $0x20] sm:$0xff] %vm5822, %v5941
        %5950 = vst.msk [vmem:[#allocation7 + $0x28] sm:$0xff] %vm5822, %v5942
        %5951 = vst.msk [vmem:[#allocation7 + $0x30] sm:$0xff] %vm5822, %v5943
        %5952 = vst.msk [vmem:[#allocation7 + $0x38] sm:$0xff] %vm5822, %v5944
        %v5953 = vld [vmem:[#allocation3 + $0x2] sm:$0xff]
        %v5954 = vld [vmem:[#allocation3 + $0x12] sm:$0xff]
        %v5955 = vld [vmem:[#allocation3 + $0x22] sm:$0xff]
        %v5956 = vld [vmem:[#allocation3 + $0x32] sm:$0xff]
        %v5957 = vld [vmem:[#allocation3 + $0x42] sm:$0xff]
        %v5958 = vld [vmem:[#allocation3 + $0x52] sm:$0xff]
        %v5959 = vld [vmem:[#allocation3 + $0x62] sm:$0xff]
        %v5960 = vld [vmem:[#allocation3 + $0x72] sm:$0xff]
        %v5961 = vpack.c.bf16 %v5954, %v5953
        %v5962 = vpack.c.bf16 %v5956, %v5955
        %v5963 = vpack.c.bf16 %v5958, %v5957
        %v5964 = vpack.c.bf16 %v5960, %v5959
        %s5965 = scalar_lea.vmem %s2, 16
        %v5966 = vld [vmem:[%s5965] sm:$0xf]
        %v5967 = vld [vmem:[%s5965 + $0x4] sm:$0xf]
        %v5970 = vunpack.c.l.b16 %v5966
        %v5971 = vunpack.c.l.b16 %v5967
        %v5972 = vpack.c.b16 %v5971, %v5970
        %v5975 = vsel %vm761, %v5961, 0
        %v5978 = vsel %vm761, %v5962, 0
        %v5981 = vsel %vm761, %v5963, 0
        %v5984 = vsel %vm761, %v5964, 0
        %5986 = vmatprep.subr.bf16.mxu0 0
        %5987 = vmatpush1.bf16.msra.mxu0 %v5972
        %5988 = vmatprep.subr.bf16.mxu0 0
        %5989 = vmatpush1.bf16.msra.mxu0 0
        %5990 = vmatprep.subr.bf16.mxu0 0
        %5991 = vmatpush1.bf16.msra.mxu0 0
        %5992 = vmatprep.subr.bf16.mxu0 0
        %5993 = vmatpush1.bf16.msra.mxu0 0
        %5994 = vmatprep.subr.bf16.mxu0 0
        %5995 = vmatpush1.bf16.msra.mxu0 0
        %5996 = vmatprep.subr.bf16.mxu0 0
        %5997 = vmatpush1.bf16.msra.mxu0 0
        %5998 = vmatprep.subr.bf16.mxu0 0
        %5999 = vmatpush1.bf16.msra.mxu0 0
        %6000 = vmatprep.subr.bf16.mxu0 0
        %6001 = vmatpush1.bf16.msra.mxu0 0
        %6002 = vmatprep.subr.bf16.mxu0 0
        %6003 = vmatpush1.bf16.msra.mxu0 0
        %6004 = vmatprep.subr.bf16.mxu0 0
        %6005 = vmatpush1.bf16.msra.mxu0 0
        %6006 = vmatprep.subr.bf16.mxu0 0
        %6007 = vmatpush1.bf16.msra.mxu0 0
        %6008 = vmatprep.subr.bf16.mxu0 0
        %6009 = vmatpush1.bf16.msra.mxu0 0
        %6010 = vmatprep.subr.bf16.mxu0 0
        %6011 = vmatpush1.bf16.msra.mxu0 0
        %6012 = vmatprep.subr.bf16.mxu0 0
        %6013 = vmatpush1.bf16.msra.mxu0 0
        %6014 = vmatprep.subr.bf16.mxu0 0
        %6015 = vmatpush1.bf16.msra.mxu0 0
        %6016 = vmatprep.subr.bf16.mxu0 0
        %6017 = vmatpush1.bf16.msra.mxu0 0
        %6018 = vmatprep.mubr.bf16.mxu0 0
        %6019 = vmatmul.mubr.bf16.gmra.mrb[0].mxu0 %v5975
        %v6020 = vpop.f32.mrb[0].mxu0
        %v6021 = vadd.f32 0.0, %v6020
        %v6022 = vpop.f32.mrb[0].mxu0
        %v6023 = vpop.f32.mrb[0].mxu0
        %v6024 = vadd.f32 0.0, %v6023
        %v6025 = vpop.f32.mrb[0].mxu0
        %6026 = vmatprep.mubr.bf16.mxu0 0
        %6027 = vmatmul.mubr.bf16.gmra.mrb[0].mxu0 %v5978
        %v6028 = vpop.f32.mrb[0].mxu0
        %v6029 = vadd.f32 0.0, %v6028
        %v6030 = vpop.f32.mrb[0].mxu0
        %v6031 = vpop.f32.mrb[0].mxu0
        %v6032 = vadd.f32 0.0, %v6031
        %v6033 = vpop.f32.mrb[0].mxu0
        %6034 = vmatprep.mubr.bf16.mxu0 0
        %6035 = vmatmul.mubr.bf16.gmra.mrb[0].mxu0 %v5981
        %v6036 = vpop.f32.mrb[0].mxu0
        %v6037 = vadd.f32 0.0, %v6036
        %v6038 = vpop.f32.mrb[0].mxu0
        %v6039 = vpop.f32.mrb[0].mxu0
        %v6040 = vadd.f32 0.0, %v6039
        %v6041 = vpop.f32.mrb[0].mxu0
        %6042 = vmatprep.mubr.bf16.mxu0 0
        %6043 = vmatmul.mubr.bf16.gmra.mrb[0].mxu0 %v5984
        %v6044 = vpop.f32.mrb[0].mxu0
        %v6045 = vadd.f32 0.0, %v6044
        %v6046 = vpop.f32.mrb[0].mxu0
        %v6047 = vpop.f32.mrb[0].mxu0
        %v6048 = vadd.f32 0.0, %v6047
        %v6049 = vpop.f32.mrb[0].mxu0
        %6050 = vdwg.mxu0
        %v6051 = vld [vmem:[#allocation7] sm:$0xff]
        %v6052 = vld [vmem:[#allocation7 + $0x8] sm:$0xff]
        %v6053 = vld [vmem:[#allocation7 + $0x10] sm:$0xff]
        %v6054 = vld [vmem:[#allocation7 + $0x18] sm:$0xff]
        %v6055 = vld [vmem:[#allocation7 + $0x20] sm:$0xff]
        %v6056 = vld [vmem:[#allocation7 + $0x28] sm:$0xff]
        %v6057 = vld [vmem:[#allocation7 + $0x30] sm:$0xff]
        %v6058 = vld [vmem:[#allocation7 + $0x38] sm:$0xff]
        %v6059 = vadd.f32 %v6051, %v6021
        %v6060 = vadd.f32 %v6052, %v6024
        %v6061 = vadd.f32 %v6053, %v6029
        %v6062 = vadd.f32 %v6054, %v6032
        %v6063 = vadd.f32 %v6055, %v6037
        %v6064 = vadd.f32 %v6056, %v6040
        %v6065 = vadd.f32 %v6057, %v6045
        %v6066 = vadd.f32 %v6058, %v6048
        %6067 = vst.msk [vmem:[#allocation7] sm:$0xff] %vm5822, %v6059
        %6068 = vst.msk [vmem:[#allocation7 + $0x8] sm:$0xff] %vm5822, %v6060
        %6069 = vst.msk [vmem:[#allocation7 + $0x10] sm:$0xff] %vm5822, %v6061
        %6070 = vst.msk [vmem:[#allocation7 + $0x18] sm:$0xff] %vm5822, %v6062
        %6071 = vst.msk [vmem:[#allocation7 + $0x20] sm:$0xff] %vm5822, %v6063
        %6072 = vst.msk [vmem:[#allocation7 + $0x28] sm:$0xff] %vm5822, %v6064
        %6073 = vst.msk [vmem:[#allocation7 + $0x30] sm:$0xff] %vm5822, %v6065
        %6074 = vst.msk [vmem:[#allocation7 + $0x38] sm:$0xff] %vm5822, %v6066
        %v6075 = vld [vmem:[%s5716] sm:$0xff]
        %v6076 = vld [vmem:[%s5716 + $0x10] sm:$0xff]
        %v6077 = vld [vmem:[%s5716 + $0x20] sm:$0xff]
        %v6078 = vld [vmem:[%s5716 + $0x30] sm:$0xff]
        %v6079 = vld [vmem:[%s5716 + $0x40] sm:$0xff]
        %v6080 = vld [vmem:[%s5716 + $0x50] sm:$0xff]
        %v6081 = vld [vmem:[%s5716 + $0x60] sm:$0xff]
        %v6082 = vld [vmem:[%s5716 + $0x70] sm:$0xff]
        %v6083 = vpack.c.bf16 %v6076, %v6075
        %v6084 = vpack.c.bf16 %v6078, %v6077
        %v6085 = vpack.c.bf16 %v6080, %v6079
        %v6086 = vpack.c.bf16 %v6082, %v6081
        %s6087 = scalar_lea.vmem %s2, 24
        %v6088 = vld [vmem:[%s6087] sm:$0xf]
        %v6089 = vld [vmem:[%s6087 + $0x4] sm:$0xf]
        %v6092 = vunpack.c.l.b16 %v6088
        %v6093 = vunpack.c.l.b16 %v6089
        %v6094 = vpack.c.b16 %v6093, %v6092
        %v6097 = vsel %vm761, %v6083, 0
        %v6100 = vsel %vm761, %v6084, 0
        %v6103 = vsel %vm761, %v6085, 0
        %v6106 = vsel %vm761, %v6086, 0
        %6108 = vmatprep.subr.bf16.mxu0 0
        %6109 = vmatpush1.bf16.msra.mxu0 %v6094
        %6110 = vmatprep.subr.bf16.mxu0 0
        %6111 = vmatpush1.bf16.msra.mxu0 0
        %6112 = vmatprep.subr.bf16.mxu0 0
        %6113 = vmatpush1.bf16.msra.mxu0 0
        %6114 = vmatprep.subr.bf16.mxu0 0
        %6115 = vmatpush1.bf16.msra.mxu0 0
        %6116 = vmatprep.subr.bf16.mxu0 0
        %6117 = vmatpush1.bf16.msra.mxu0 0
        %6118 = vmatprep.subr.bf16.mxu0 0
        %6119 = vmatpush1.bf16.msra.mxu0 0
        %6120 = vmatprep.subr.bf16.mxu0 0
        %6121 = vmatpush1.bf16.msra.mxu0 0
        %6122 = vmatprep.subr.bf16.mxu0 0
        %6123 = vmatpush1.bf16.msra.mxu0 0
        %6124 = vmatprep.subr.bf16.mxu0 0
        %6125 = vmatpush1.bf16.msra.mxu0 0
        %6126 = vmatprep.subr.bf16.mxu0 0
        %6127 = vmatpush1.bf16.msra.mxu0 0
        %6128 = vmatprep.subr.bf16.mxu0 0
        %6129 = vmatpush1.bf16.msra.mxu0 0
        %6130 = vmatprep.subr.bf16.mxu0 0
        %6131 = vmatpush1.bf16.msra.mxu0 0
        %6132 = vmatprep.subr.bf16.mxu0 0
        %6133 = vmatpush1.bf16.msra.mxu0 0
        %6134 = vmatprep.subr.bf16.mxu0 0
        %6135 = vmatpush1.bf16.msra.mxu0 0
        %6136 = vmatprep.subr.bf16.mxu0 0
        %6137 = vmatpush1.bf16.msra.mxu0 0
        %6138 = vmatprep.subr.bf16.mxu0 0
        %6139 = vmatpush1.bf16.msra.mxu0 0
        %6140 = vmatprep.mubr.bf16.mxu0 0
        %6141 = vmatmul.mubr.bf16.gmra.mrb[0].mxu0 %v6097
        %v6142 = vpop.f32.mrb[0].mxu0
        %v6143 = vadd.f32 0.0, %v6142
        %v6144 = vpop.f32.mrb[0].mxu0
        %v6145 = vpop.f32.mrb[0].mxu0
        %v6146 = vadd.f32 0.0, %v6145
        %v6147 = vpop.f32.mrb[0].mxu0
        %6148 = vmatprep.mubr.bf16.mxu0 0
        %6149 = vmatmul.mubr.bf16.gmra.mrb[0].mxu0 %v6100
        %v6150 = vpop.f32.mrb[0].mxu0
        %v6151 = vadd.f32 0.0, %v6150
        %v6152 = vpop.f32.mrb[0].mxu0
        %v6153 = vpop.f32.mrb[0].mxu0
        %v6154 = vadd.f32 0.0, %v6153
        %v6155 = vpop.f32.mrb[0].mxu0
        %6156 = vmatprep.mubr.bf16.mxu0 0
        %6157 = vmatmul.mubr.bf16.gmra.mrb[0].mxu0 %v6103
        %v6158 = vpop.f32.mrb[0].mxu0
        %v6159 = vadd.f32 0.0, %v6158
        %v6160 = vpop.f32.mrb[0].mxu0
        %v6161 = vpop.f32.mrb[0].mxu0
        %v6162 = vadd.f32 0.0, %v6161
        %v6163 = vpop.f32.mrb[0].mxu0
        %6164 = vmatprep.mubr.bf16.mxu0 0
        %6165 = vmatmul.mubr.bf16.gmra.mrb[0].mxu0 %v6106
        %v6166 = vpop.f32.mrb[0].mxu0
        %v6167 = vadd.f32 0.0, %v6166
        %v6168 = vpop.f32.mrb[0].mxu0
        %v6169 = vpop.f32.mrb[0].mxu0
        %v6170 = vadd.f32 0.0, %v6169
        %v6171 = vpop.f32.mrb[0].mxu0
        %6172 = vdwg.mxu0
        %v6173 = vld [vmem:[#allocation7] sm:$0xff]
        %v6174 = vld [vmem:[#allocation7 + $0x8] sm:$0xff]
        %v6175 = vld [vmem:[#allocation7 + $0x10] sm:$0xff]
        %v6176 = vld [vmem:[#allocation7 + $0x18] sm:$0xff]
        %v6177 = vld [vmem:[#allocation7 + $0x20] sm:$0xff]
        %v6178 = vld [vmem:[#allocation7 + $0x28] sm:$0xff]
        %v6179 = vld [vmem:[#allocation7 + $0x30] sm:$0xff]
        %v6180 = vld [vmem:[#allocation7 + $0x38] sm:$0xff]
        %v6181 = vadd.f32 %v6173, %v6143
        %v6182 = vadd.f32 %v6174, %v6146
        %v6183 = vadd.f32 %v6175, %v6151
        %v6184 = vadd.f32 %v6176, %v6154
        %v6185 = vadd.f32 %v6177, %v6159
        %v6186 = vadd.f32 %v6178, %v6162
        %v6187 = vadd.f32 %v6179, %v6167
        %v6188 = vadd.f32 %v6180, %v6170
        %6189 = vst.msk [vmem:[#allocation7] sm:$0xff] %vm5822, %v6181
        %6190 = vst.msk [vmem:[#allocation7 + $0x8] sm:$0xff] %vm5822, %v6182
        %6191 = vst.msk [vmem:[#allocation7 + $0x10] sm:$0xff] %vm5822, %v6183
        %6192 = vst.msk [vmem:[#allocation7 + $0x18] sm:$0xff] %vm5822, %v6184
        %6193 = vst.msk [vmem:[#allocation7 + $0x20] sm:$0xff] %vm5822, %v6185
        %6194 = vst.msk [vmem:[#allocation7 + $0x28] sm:$0xff] %vm5822, %v6186
        %6195 = vst.msk [vmem:[#allocation7 + $0x30] sm:$0xff] %vm5822, %v6187
        %6196 = vst.msk [vmem:[#allocation7 + $0x38] sm:$0xff] %vm5822, %v6188
        %v6197 = vld [vmem:[%s5716 + $0x1] sm:$0xff]
        %v6198 = vld [vmem:[%s5716 + $0x11] sm:$0xff]
        %v6199 = vld [vmem:[%s5716 + $0x21] sm:$0xff]
        %v6200 = vld [vmem:[%s5716 + $0x31] sm:$0xff]
        %v6201 = vld [vmem:[%s5716 + $0x41] sm:$0xff]
        %v6202 = vld [vmem:[%s5716 + $0x51] sm:$0xff]
        %v6203 = vld [vmem:[%s5716 + $0x61] sm:$0xff]
        %v6204 = vld [vmem:[%s5716 + $0x71] sm:$0xff]
        %v6205 = vpack.c.bf16 %v6198, %v6197
        %v6206 = vpack.c.bf16 %v6200, %v6199
        %v6207 = vpack.c.bf16 %v6202, %v6201
        %v6208 = vpack.c.bf16 %v6204, %v6203
        %s6209 = scalar_lea.vmem %s2, 32
        %v6210 = vld [vmem:[%s6209] sm:$0xf]
        %v6211 = vld [vmem:[%s6209 + $0x4] sm:$0xf]
        %v6214 = vunpack.c.l.b16 %v6210
        %v6215 = vunpack.c.l.b16 %v6211
        %v6216 = vpack.c.b16 %v6215, %v6214
        %v6219 = vsel %vm761, %v6205, 0
        %v6222 = vsel %vm761, %v6206, 0
        %v6225 = vsel %vm761, %v6207, 0
        %v6228 = vsel %vm761, %v6208, 0
        %6230 = vmatprep.subr.bf16.mxu0 0
        %6231 = vmatpush1.bf16.msra.mxu0 %v6216
        %6232 = vmatprep.subr.bf16.mxu0 0
        %6233 = vmatpush1.bf16.msra.mxu0 0
        %6234 = vmatprep.subr.bf16.mxu0 0
        %6235 = vmatpush1.bf16.msra.mxu0 0
        %6236 = vmatprep.subr.bf16.mxu0 0
        %6237 = vmatpush1.bf16.msra.mxu0 0
        %6238 = vmatprep.subr.bf16.mxu0 0
        %6239 = vmatpush1.bf16.msra.mxu0 0
        %6240 = vmatprep.subr.bf16.mxu0 0
        %6241 = vmatpush1.bf16.msra.mxu0 0
        %6242 = vmatprep.subr.bf16.mxu0 0
        %6243 = vmatpush1.bf16.msra.mxu0 0
        %6244 = vmatprep.subr.bf16.mxu0 0
        %6245 = vmatpush1.bf16.msra.mxu0 0
        %6246 = vmatprep.subr.bf16.mxu0 0
        %6247 = vmatpush1.bf16.msra.mxu0 0
        %6248 = vmatprep.subr.bf16.mxu0 0
        %6249 = vmatpush1.bf16.msra.mxu0 0
        %6250 = vmatprep.subr.bf16.mxu0 0
        %6251 = vmatpush1.bf16.msra.mxu0 0
        %6252 = vmatprep.subr.bf16.mxu0 0
        %6253 = vmatpush1.bf16.msra.mxu0 0
        %6254 = vmatprep.subr.bf16.mxu0 0
        %6255 = vmatpush1.bf16.msra.mxu0 0
        %6256 = vmatprep.subr.bf16.mxu0 0
        %6257 = vmatpush1.bf16.msra.mxu0 0
        %6258 = vmatprep.subr.bf16.mxu0 0
        %6259 = vmatpush1.bf16.msra.mxu0 0
        %6260 = vmatprep.subr.bf16.mxu0 0
        %6261 = vmatpush1.bf16.msra.mxu0 0
        %6262 = vmatprep.mubr.bf16.mxu0 0
        %6263 = vmatmul.mubr.bf16.gmra.mrb[0].mxu0 %v6219
        %v6264 = vpop.f32.mrb[0].mxu0
        %v6265 = vadd.f32 0.0, %v6264
        %v6266 = vpop.f32.mrb[0].mxu0
        %v6267 = vpop.f32.mrb[0].mxu0
        %v6268 = vadd.f32 0.0, %v6267
        %v6269 = vpop.f32.mrb[0].mxu0
        %6270 = vmatprep.mubr.bf16.mxu0 0
        %6271 = vmatmul.mubr.bf16.gmra.mrb[0].mxu0 %v6222
        %v6272 = vpop.f32.mrb[0].mxu0
        %v6273 = vadd.f32 0.0, %v6272
        %v6274 = vpop.f32.mrb[0].mxu0
        %v6275 = vpop.f32.mrb[0].mxu0
        %v6276 = vadd.f32 0.0, %v6275
        %v6277 = vpop.f32.mrb[0].mxu0
        %6278 = vmatprep.mubr.bf16.mxu0 0
        %6279 = vmatmul.mubr.bf16.gmra.mrb[0].mxu0 %v6225
        %v6280 = vpop.f32.mrb[0].mxu0
        %v6281 = vadd.f32 0.0, %v6280
        %v6282 = vpop.f32.mrb[0].mxu0
        %v6283 = vpop.f32.mrb[0].mxu0
        %v6284 = vadd.f32 0.0, %v6283
        %v6285 = vpop.f32.mrb[0].mxu0
        %6286 = vmatprep.mubr.bf16.mxu0 0
        %6287 = vmatmul.mubr.bf16.gmra.mrb[0].mxu0 %v6228
        %v6288 = vpop.f32.mrb[0].mxu0
        %v6289 = vadd.f32 0.0, %v6288
        %v6290 = vpop.f32.mrb[0].mxu0
        %v6291 = vpop.f32.mrb[0].mxu0
        %v6292 = vadd.f32 0.0, %v6291
        %v6293 = vpop.f32.mrb[0].mxu0
        %6294 = vdwg.mxu0
        %v6295 = vld [vmem:[#allocation7] sm:$0xff]
        %v6296 = vld [vmem:[#allocation7 + $0x8] sm:$0xff]
        %v6297 = vld [vmem:[#allocation7 + $0x10] sm:$0xff]
        %v6298 = vld [vmem:[#allocation7 + $0x18] sm:$0xff]
        %v6299 = vld [vmem:[#allocation7 + $0x20] sm:$0xff]
        %v6300 = vld [vmem:[#allocation7 + $0x28] sm:$0xff]
        %v6301 = vld [vmem:[#allocation7 + $0x30] sm:$0xff]
        %v6302 = vld [vmem:[#allocation7 + $0x38] sm:$0xff]
        %v6303 = vadd.f32 %v6295, %v6265
        %v6304 = vadd.f32 %v6296, %v6268
        %v6305 = vadd.f32 %v6297, %v6273
        %v6306 = vadd.f32 %v6298, %v6276
        %v6307 = vadd.f32 %v6299, %v6281
        %v6308 = vadd.f32 %v6300, %v6284
        %v6309 = vadd.f32 %v6301, %v6289
        %v6310 = vadd.f32 %v6302, %v6292
        %6311 = vst.msk [vmem:[#allocation7] sm:$0xff] %vm5822, %v6303
        %6312 = vst.msk [vmem:[#allocation7 + $0x8] sm:$0xff] %vm5822, %v6304
        %6313 = vst.msk [vmem:[#allocation7 + $0x10] sm:$0xff] %vm5822, %v6305
        %6314 = vst.msk [vmem:[#allocation7 + $0x18] sm:$0xff] %vm5822, %v6306
        %6315 = vst.msk [vmem:[#allocation7 + $0x20] sm:$0xff] %vm5822, %v6307
        %6316 = vst.msk [vmem:[#allocation7 + $0x28] sm:$0xff] %vm5822, %v6308
        %6317 = vst.msk [vmem:[#allocation7 + $0x30] sm:$0xff] %vm5822, %v6309
        %6318 = vst.msk [vmem:[#allocation7 + $0x38] sm:$0xff] %vm5822, %v6310
        %v6319 = vld [vmem:[%s5716 + $0x2] sm:$0xff]
        %v6320 = vld [vmem:[%s5716 + $0x12] sm:$0xff]
        %v6321 = vld [vmem:[%s5716 + $0x22] sm:$0xff]
        %v6322 = vld [vmem:[%s5716 + $0x32] sm:$0xff]
        %v6323 = vld [vmem:[%s5716 + $0x42] sm:$0xff]
        %v6324 = vld [vmem:[%s5716 + $0x52] sm:$0xff]
        %v6325 = vld [vmem:[%s5716 + $0x62] sm:$0xff]
        %v6326 = vld [vmem:[%s5716 + $0x72] sm:$0xff]
        %v6327 = vpack.c.bf16 %v6320, %v6319
        %v6328 = vpack.c.bf16 %v6322, %v6321
        %v6329 = vpack.c.bf16 %v6324, %v6323
        %v6330 = vpack.c.bf16 %v6326, %v6325
        %s6331 = scalar_lea.vmem %s2, 40
        %v6332 = vld [vmem:[%s6331] sm:$0xf]
        %v6333 = vld [vmem:[%s6331 + $0x4] sm:$0xf]
        %v6336 = vunpack.c.l.b16 %v6332
        %v6337 = vunpack.c.l.b16 %v6333
        %v6338 = vpack.c.b16 %v6337, %v6336
        %v6341 = vsel %vm761, %v6327, 0
        %v6344 = vsel %vm761, %v6328, 0
        %v6347 = vsel %vm761, %v6329, 0
        %v6350 = vsel %vm761, %v6330, 0
        %6352 = vmatprep.subr.bf16.mxu0 0
        %6353 = vmatpush1.bf16.msra.mxu0 %v6338
        %6354 = vmatprep.subr.bf16.mxu0 0
        %6355 = vmatpush1.bf16.msra.mxu0 0
        %6356 = vmatprep.subr.bf16.mxu0 0
        %6357 = vmatpush1.bf16.msra.mxu0 0
        %6358 = vmatprep.subr.bf16.mxu0 0
        %6359 = vmatpush1.bf16.msra.mxu0 0
        %6360 = vmatprep.subr.bf16.mxu0 0
        %6361 = vmatpush1.bf16.msra.mxu0 0
        %6362 = vmatprep.subr.bf16.mxu0 0
        %6363 = vmatpush1.bf16.msra.mxu0 0
        %6364 = vmatprep.subr.bf16.mxu0 0
        %6365 = vmatpush1.bf16.msra.mxu0 0
        %6366 = vmatprep.subr.bf16.mxu0 0
        %6367 = vmatpush1.bf16.msra.mxu0 0
        %6368 = vmatprep.subr.bf16.mxu0 0
        %6369 = vmatpush1.bf16.msra.mxu0 0
        %6370 = vmatprep.subr.bf16.mxu0 0
        %6371 = vmatpush1.bf16.msra.mxu0 0
        %6372 = vmatprep.subr.bf16.mxu0 0
        %6373 = vmatpush1.bf16.msra.mxu0 0
        %6374 = vmatprep.subr.bf16.mxu0 0
        %6375 = vmatpush1.bf16.msra.mxu0 0
        %6376 = vmatprep.subr.bf16.mxu0 0
        %6377 = vmatpush1.bf16.msra.mxu0 0
        %6378 = vmatprep.subr.bf16.mxu0 0
        %6379 = vmatpush1.bf16.msra.mxu0 0
        %6380 = vmatprep.subr.bf16.mxu0 0
        %6381 = vmatpush1.bf16.msra.mxu0 0
        %6382 = vmatprep.subr.bf16.mxu0 0
        %6383 = vmatpush1.bf16.msra.mxu0 0
        %6384 = vmatprep.mubr.bf16.mxu0 0
        %6385 = vmatmul.mubr.bf16.gmra.mrb[0].mxu0 %v6341
        %v6386 = vpop.f32.mrb[0].mxu0
        %v6387 = vadd.f32 0.0, %v6386
        %v6388 = vpop.f32.mrb[0].mxu0
        %v6389 = vpop.f32.mrb[0].mxu0
        %v6390 = vadd.f32 0.0, %v6389
        %v6391 = vpop.f32.mrb[0].mxu0
        %6392 = vmatprep.mubr.bf16.mxu0 0
        %6393 = vmatmul.mubr.bf16.gmra.mrb[0].mxu0 %v6344
        %v6394 = vpop.f32.mrb[0].mxu0
        %v6395 = vadd.f32 0.0, %v6394
        %v6396 = vpop.f32.mrb[0].mxu0
        %v6397 = vpop.f32.mrb[0].mxu0
        %v6398 = vadd.f32 0.0, %v6397
        %v6399 = vpop.f32.mrb[0].mxu0
        %6400 = vmatprep.mubr.bf16.mxu0 0
        %6401 = vmatmul.mubr.bf16.gmra.mrb[0].mxu0 %v6347
        %v6402 = vpop.f32.mrb[0].mxu0
        %v6403 = vadd.f32 0.0, %v6402
        %v6404 = vpop.f32.mrb[0].mxu0
        %v6405 = vpop.f32.mrb[0].mxu0
        %v6406 = vadd.f32 0.0, %v6405
        %v6407 = vpop.f32.mrb[0].mxu0
        %6408 = vmatprep.mubr.bf16.mxu0 0
        %6409 = vmatmul.mubr.bf16.gmra.mrb[0].mxu0 %v6350
        %v6410 = vpop.f32.mrb[0].mxu0
        %v6411 = vadd.f32 0.0, %v6410
        %v6412 = vpop.f32.mrb[0].mxu0
        %v6413 = vpop.f32.mrb[0].mxu0
        %v6414 = vadd.f32 0.0, %v6413
        %v6415 = vpop.f32.mrb[0].mxu0
        %6416 = vdwg.mxu0
        %v6417 = vld [vmem:[#allocation7] sm:$0xff]
        %v6418 = vld [vmem:[#allocation7 + $0x8] sm:$0xff]
        %v6419 = vld [vmem:[#allocation7 + $0x10] sm:$0xff]
        %v6420 = vld [vmem:[#allocation7 + $0x18] sm:$0xff]
        %v6421 = vld [vmem:[#allocation7 + $0x20] sm:$0xff]
        %v6422 = vld [vmem:[#allocation7 + $0x28] sm:$0xff]
        %v6423 = vld [vmem:[#allocation7 + $0x30] sm:$0xff]
        %v6424 = vld [vmem:[#allocation7 + $0x38] sm:$0xff]
        %v6425 = vadd.f32 %v6417, %v6387
        %v6426 = vadd.f32 %v6418, %v6390
        %v6427 = vadd.f32 %v6419, %v6395
        %v6428 = vadd.f32 %v6420, %v6398
        %v6429 = vadd.f32 %v6421, %v6403
        %v6430 = vadd.f32 %v6422, %v6406
        %v6431 = vadd.f32 %v6423, %v6411
        %v6432 = vadd.f32 %v6424, %v6414
        %6433 = vst.msk [vmem:[#allocation7] sm:$0xff] %vm5822, %v6425
        %6434 = vst.msk [vmem:[#allocation7 + $0x8] sm:$0xff] %vm5822, %v6426
        %6435 = vst.msk [vmem:[#allocation7 + $0x10] sm:$0xff] %vm5822, %v6427
        %6436 = vst.msk [vmem:[#allocation7 + $0x18] sm:$0xff] %vm5822, %v6428
        %6437 = vst.msk [vmem:[#allocation7 + $0x20] sm:$0xff] %vm5822, %v6429
        %6438 = vst.msk [vmem:[#allocation7 + $0x28] sm:$0xff] %vm5822, %v6430
        %6439 = vst.msk [vmem:[#allocation7 + $0x30] sm:$0xff] %vm5822, %v6431
        %6440 = vst.msk [vmem:[#allocation7 + $0x38] sm:$0xff] %vm5822, %v6432
        %s6441 = scalar_lea.vmem [#allocation3], 32
        %v6442 = vld [vmem:[%s6441] sm:$0xff]
        %v6443 = vld [vmem:[%s6441 + $0x10] sm:$0xff]
        %v6444 = vld [vmem:[%s6441 + $0x20] sm:$0xff]
        %v6445 = vld [vmem:[%s6441 + $0x30] sm:$0xff]
        %v6446 = vld [vmem:[%s6441 + $0x40] sm:$0xff]
        %v6447 = vld [vmem:[%s6441 + $0x50] sm:$0xff]
        %v6448 = vld [vmem:[%s6441 + $0x60] sm:$0xff]
        %v6449 = vld [vmem:[%s6441 + $0x70] sm:$0xff]
        %v6450 = vpack.c.bf16 %v6443, %v6442
        %v6451 = vpack.c.bf16 %v6445, %v6444
        %v6452 = vpack.c.bf16 %v6447, %v6446
        %v6453 = vpack.c.bf16 %v6449, %v6448
        %s6454 = scalar_lea.vmem %s2, 48
        %v6455 = vld [vmem:[%s6454] sm:$0xf]
        %v6456 = vld [vmem:[%s6454 + $0x4] sm:$0xf]
        %v6459 = vunpack.c.l.b16 %v6455
        %v6460 = vunpack.c.l.b16 %v6456
        %v6461 = vpack.c.b16 %v6460, %v6459
        %v6464 = vsel %vm761, %v6450, 0
        %v6467 = vsel %vm761, %v6451, 0
        %v6470 = vsel %vm761, %v6452, 0
        %v6473 = vsel %vm761, %v6453, 0
        %6475 = vmatprep.subr.bf16.mxu0 0
        %6476 = vmatpush1.bf16.msra.mxu0 %v6461
        %6477 = vmatprep.subr.bf16.mxu0 0
        %6478 = vmatpush1.bf16.msra.mxu0 0
        %6479 = vmatprep.subr.bf16.mxu0 0
        %6480 = vmatpush1.bf16.msra.mxu0 0
        %6481 = vmatprep.subr.bf16.mxu0 0
        %6482 = vmatpush1.bf16.msra.mxu0 0
        %6483 = vmatprep.subr.bf16.mxu0 0
        %6484 = vmatpush1.bf16.msra.mxu0 0
        %6485 = vmatprep.subr.bf16.mxu0 0
        %6486 = vmatpush1.bf16.msra.mxu0 0
        %6487 = vmatprep.subr.bf16.mxu0 0
        %6488 = vmatpush1.bf16.msra.mxu0 0
        %6489 = vmatprep.subr.bf16.mxu0 0
        %6490 = vmatpush1.bf16.msra.mxu0 0
        %6491 = vmatprep.subr.bf16.mxu0 0
        %6492 = vmatpush1.bf16.msra.mxu0 0
        %6493 = vmatprep.subr.bf16.mxu0 0
        %6494 = vmatpush1.bf16.msra.mxu0 0
        %6495 = vmatprep.subr.bf16.mxu0 0
        %6496 = vmatpush1.bf16.msra.mxu0 0
        %6497 = vmatprep.subr.bf16.mxu0 0
        %6498 = vmatpush1.bf16.msra.mxu0 0
        %6499 = vmatprep.subr.bf16.mxu0 0
        %6500 = vmatpush1.bf16.msra.mxu0 0
        %6501 = vmatprep.subr.bf16.mxu0 0
        %6502 = vmatpush1.bf16.msra.mxu0 0
        %6503 = vmatprep.subr.bf16.mxu0 0
        %6504 = vmatpush1.bf16.msra.mxu0 0
        %6505 = vmatprep.subr.bf16.mxu0 0
        %6506 = vmatpush1.bf16.msra.mxu0 0
        %6507 = vmatprep.mubr.bf16.mxu0 0
        %6508 = vmatmul.mubr.bf16.gmra.mrb[0].mxu0 %v6464
        %v6509 = vpop.f32.mrb[0].mxu0
        %v6510 = vadd.f32 0.0, %v6509
        %v6511 = vpop.f32.mrb[0].mxu0
        %v6512 = vpop.f32.mrb[0].mxu0
        %v6513 = vadd.f32 0.0, %v6512
        %v6514 = vpop.f32.mrb[0].mxu0
        %6515 = vmatprep.mubr.bf16.mxu0 0
        %6516 = vmatmul.mubr.bf16.gmra.mrb[0].mxu0 %v6467
        %v6517 = vpop.f32.mrb[0].mxu0
        %v6518 = vadd.f32 0.0, %v6517
        %v6519 = vpop.f32.mrb[0].mxu0
        %v6520 = vpop.f32.mrb[0].mxu0
        %v6521 = vadd.f32 0.0, %v6520
        %v6522 = vpop.f32.mrb[0].mxu0
        %6523 = vmatprep.mubr.bf16.mxu0 0
        %6524 = vmatmul.mubr.bf16.gmra.mrb[0].mxu0 %v6470
        %v6525 = vpop.f32.mrb[0].mxu0
        %v6526 = vadd.f32 0.0, %v6525
        %v6527 = vpop.f32.mrb[0].mxu0
        %v6528 = vpop.f32.mrb[0].mxu0
        %v6529 = vadd.f32 0.0, %v6528
        %v6530 = vpop.f32.mrb[0].mxu0
        %6531 = vmatprep.mubr.bf16.mxu0 0
        %6532 = vmatmul.mubr.bf16.gmra.mrb[0].mxu0 %v6473
        %v6533 = vpop.f32.mrb[0].mxu0
        %v6534 = vadd.f32 0.0, %v6533
        %v6535 = vpop.f32.mrb[0].mxu0
        %v6536 = vpop.f32.mrb[0].mxu0
        %v6537 = vadd.f32 0.0, %v6536
        %v6538 = vpop.f32.mrb[0].mxu0
        %6539 = vdwg.mxu0
        %v6540 = vld [vmem:[#allocation7] sm:$0xff]
        %v6541 = vld [vmem:[#allocation7 + $0x8] sm:$0xff]
        %v6542 = vld [vmem:[#allocation7 + $0x10] sm:$0xff]
        %v6543 = vld [vmem:[#allocation7 + $0x18] sm:$0xff]
        %v6544 = vld [vmem:[#allocation7 + $0x20] sm:$0xff]
        %v6545 = vld [vmem:[#allocation7 + $0x28] sm:$0xff]
        %v6546 = vld [vmem:[#allocation7 + $0x30] sm:$0xff]
        %v6547 = vld [vmem:[#allocation7 + $0x38] sm:$0xff]
        %v6548 = vadd.f32 %v6540, %v6510
        %v6549 = vadd.f32 %v6541, %v6513
        %v6550 = vadd.f32 %v6542, %v6518
        %v6551 = vadd.f32 %v6543, %v6521
        %v6552 = vadd.f32 %v6544, %v6526
        %v6553 = vadd.f32 %v6545, %v6529
        %v6554 = vadd.f32 %v6546, %v6534
        %v6555 = vadd.f32 %v6547, %v6537
        %6556 = vst.msk [vmem:[#allocation7] sm:$0xff] %vm5822, %v6548
        %6557 = vst.msk [vmem:[#allocation7 + $0x8] sm:$0xff] %vm5822, %v6549
        %6558 = vst.msk [vmem:[#allocation7 + $0x10] sm:$0xff] %vm5822, %v6550
        %6559 = vst.msk [vmem:[#allocation7 + $0x18] sm:$0xff] %vm5822, %v6551
        %6560 = vst.msk [vmem:[#allocation7 + $0x20] sm:$0xff] %vm5822, %v6552
        %6561 = vst.msk [vmem:[#allocation7 + $0x28] sm:$0xff] %vm5822, %v6553
        %6562 = vst.msk [vmem:[#allocation7 + $0x30] sm:$0xff] %vm5822, %v6554
        %6563 = vst.msk [vmem:[#allocation7 + $0x38] sm:$0xff] %vm5822, %v6555
        %v6564 = vld [vmem:[%s6441 + $0x1] sm:$0xff]
        %v6565 = vld [vmem:[%s6441 + $0x11] sm:$0xff]
        %v6566 = vld [vmem:[%s6441 + $0x21] sm:$0xff]
        %v6567 = vld [vmem:[%s6441 + $0x31] sm:$0xff]
        %v6568 = vld [vmem:[%s6441 + $0x41] sm:$0xff]
        %v6569 = vld [vmem:[%s6441 + $0x51] sm:$0xff]
        %v6570 = vld [vmem:[%s6441 + $0x61] sm:$0xff]
        %v6571 = vld [vmem:[%s6441 + $0x71] sm:$0xff]
        %v6572 = vpack.c.bf16 %v6565, %v6564
        %v6573 = vpack.c.bf16 %v6567, %v6566
        %v6574 = vpack.c.bf16 %v6569, %v6568
        %v6575 = vpack.c.bf16 %v6571, %v6570
        %s6576 = scalar_lea.vmem %s2, 56
        %v6577 = vld [vmem:[%s6576] sm:$0xf]
        %v6578 = vld [vmem:[%s6576 + $0x4] sm:$0xf]
        %v6581 = vunpack.c.l.b16 %v6577
        %v6582 = vunpack.c.l.b16 %v6578
        %v6583 = vpack.c.b16 %v6582, %v6581
        %v6586 = vsel %vm761, %v6572, 0
        %v6589 = vsel %vm761, %v6573, 0
        %v6592 = vsel %vm761, %v6574, 0
        %v6595 = vsel %vm761, %v6575, 0
        %6597 = vmatprep.subr.bf16.mxu0 0
        %6598 = vmatpush1.bf16.msra.mxu0 %v6583
        %6599 = vmatprep.subr.bf16.mxu0 0
        %6600 = vmatpush1.bf16.msra.mxu0 0
        %6601 = vmatprep.subr.bf16.mxu0 0
        %6602 = vmatpush1.bf16.msra.mxu0 0
        %6603 = vmatprep.subr.bf16.mxu0 0
        %6604 = vmatpush1.bf16.msra.mxu0 0
        %6605 = vmatprep.subr.bf16.mxu0 0
        %6606 = vmatpush1.bf16.msra.mxu0 0
        %6607 = vmatprep.subr.bf16.mxu0 0
        %6608 = vmatpush1.bf16.msra.mxu0 0
        %6609 = vmatprep.subr.bf16.mxu0 0
        %6610 = vmatpush1.bf16.msra.mxu0 0
        %6611 = vmatprep.subr.bf16.mxu0 0
        %6612 = vmatpush1.bf16.msra.mxu0 0
        %6613 = vmatprep.subr.bf16.mxu0 0
        %6614 = vmatpush1.bf16.msra.mxu0 0
        %6615 = vmatprep.subr.bf16.mxu0 0
        %6616 = vmatpush1.bf16.msra.mxu0 0
        %6617 = vmatprep.subr.bf16.mxu0 0
        %6618 = vmatpush1.bf16.msra.mxu0 0
        %6619 = vmatprep.subr.bf16.mxu0 0
        %6620 = vmatpush1.bf16.msra.mxu0 0
        %6621 = vmatprep.subr.bf16.mxu0 0
        %6622 = vmatpush1.bf16.msra.mxu0 0
        %6623 = vmatprep.subr.bf16.mxu0 0
        %6624 = vmatpush1.bf16.msra.mxu0 0
        %6625 = vmatprep.subr.bf16.mxu0 0
        %6626 = vmatpush1.bf16.msra.mxu0 0
        %6627 = vmatprep.subr.bf16.mxu0 0
        %6628 = vmatpush1.bf16.msra.mxu0 0
        %6629 = vmatprep.mubr.bf16.mxu0 0
        %6630 = vmatmul.mubr.bf16.gmra.mrb[0].mxu0 %v6586
        %v6631 = vpop.f32.mrb[0].mxu0
        %v6632 = vadd.f32 0.0, %v6631
        %v6633 = vpop.f32.mrb[0].mxu0
        %v6634 = vpop.f32.mrb[0].mxu0
        %v6635 = vadd.f32 0.0, %v6634
        %v6636 = vpop.f32.mrb[0].mxu0
        %6637 = vmatprep.mubr.bf16.mxu0 0
        %6638 = vmatmul.mubr.bf16.gmra.mrb[0].mxu0 %v6589
        %v6639 = vpop.f32.mrb[0].mxu0
        %v6640 = vadd.f32 0.0, %v6639
        %v6641 = vpop.f32.mrb[0].mxu0
        %v6642 = vpop.f32.mrb[0].mxu0
        %v6643 = vadd.f32 0.0, %v6642
        %v6644 = vpop.f32.mrb[0].mxu0
        %6645 = vmatprep.mubr.bf16.mxu0 0
        %6646 = vmatmul.mubr.bf16.gmra.mrb[0].mxu0 %v6592
        %v6647 = vpop.f32.mrb[0].mxu0
        %v6648 = vadd.f32 0.0, %v6647
        %v6649 = vpop.f32.mrb[0].mxu0
        %v6650 = vpop.f32.mrb[0].mxu0
        %v6651 = vadd.f32 0.0, %v6650
        %v6652 = vpop.f32.mrb[0].mxu0
        %6653 = vmatprep.mubr.bf16.mxu0 0
        %6654 = vmatmul.mubr.bf16.gmra.mrb[0].mxu0 %v6595
        %v6655 = vpop.f32.mrb[0].mxu0
        %v6656 = vadd.f32 0.0, %v6655
        %v6657 = vpop.f32.mrb[0].mxu0
        %v6658 = vpop.f32.mrb[0].mxu0
        %v6659 = vadd.f32 0.0, %v6658
        %v6660 = vpop.f32.mrb[0].mxu0
        %6661 = vdwg.mxu0
        %v6662 = vld [vmem:[#allocation7] sm:$0xff]
        %v6663 = vld [vmem:[#allocation7 + $0x8] sm:$0xff]
        %v6664 = vld [vmem:[#allocation7 + $0x10] sm:$0xff]
        %v6665 = vld [vmem:[#allocation7 + $0x18] sm:$0xff]
        %v6666 = vld [vmem:[#allocation7 + $0x20] sm:$0xff]
        %v6667 = vld [vmem:[#allocation7 + $0x28] sm:$0xff]
        %v6668 = vld [vmem:[#allocation7 + $0x30] sm:$0xff]
        %v6669 = vld [vmem:[#allocation7 + $0x38] sm:$0xff]
        %v6670 = vadd.f32 %v6662, %v6632
        %v6671 = vadd.f32 %v6663, %v6635
        %v6672 = vadd.f32 %v6664, %v6640
        %v6673 = vadd.f32 %v6665, %v6643
        %v6674 = vadd.f32 %v6666, %v6648
        %v6675 = vadd.f32 %v6667, %v6651
        %v6676 = vadd.f32 %v6668, %v6656
        %v6677 = vadd.f32 %v6669, %v6659
        %6678 = vst.msk [vmem:[#allocation7] sm:$0xff] %vm5822, %v6670
        %6679 = vst.msk [vmem:[#allocation7 + $0x8] sm:$0xff] %vm5822, %v6671
        %6680 = vst.msk [vmem:[#allocation7 + $0x10] sm:$0xff] %vm5822, %v6672
        %6681 = vst.msk [vmem:[#allocation7 + $0x18] sm:$0xff] %vm5822, %v6673
        %6682 = vst.msk [vmem:[#allocation7 + $0x20] sm:$0xff] %vm5822, %v6674
        %6683 = vst.msk [vmem:[#allocation7 + $0x28] sm:$0xff] %vm5822, %v6675
        %6684 = vst.msk [vmem:[#allocation7 + $0x30] sm:$0xff] %vm5822, %v6676
        %6685 = vst.msk [vmem:[#allocation7 + $0x38] sm:$0xff] %vm5822, %v6677
        %v6686 = vld [vmem:[%s6441 + $0x2] sm:$0xff]
        %v6687 = vld [vmem:[%s6441 + $0x12] sm:$0xff]
        %v6688 = vld [vmem:[%s6441 + $0x22] sm:$0xff]
        %v6689 = vld [vmem:[%s6441 + $0x32] sm:$0xff]
        %v6690 = vld [vmem:[%s6441 + $0x42] sm:$0xff]
        %v6691 = vld [vmem:[%s6441 + $0x52] sm:$0xff]
        %v6692 = vld [vmem:[%s6441 + $0x62] sm:$0xff]
        %v6693 = vld [vmem:[%s6441 + $0x72] sm:$0xff]
        %v6694 = vpack.c.bf16 %v6687, %v6686
        %v6695 = vpack.c.bf16 %v6689, %v6688
        %v6696 = vpack.c.bf16 %v6691, %v6690
        %v6697 = vpack.c.bf16 %v6693, %v6692
        %s6698 = scalar_lea.vmem %s2, 64
        %v6699 = vld [vmem:[%s6698] sm:$0xf]
        %v6700 = vld [vmem:[%s6698 + $0x4] sm:$0xf]
        %v6703 = vunpack.c.l.b16 %v6699
        %v6704 = vunpack.c.l.b16 %v6700
        %v6705 = vpack.c.b16 %v6704, %v6703
        %v6708 = vsel %vm761, %v6694, 0
        %v6711 = vsel %vm761, %v6695, 0
        %v6714 = vsel %vm761, %v6696, 0
        %v6717 = vsel %vm761, %v6697, 0
        %6719 = vmatprep.subr.bf16.mxu0 0
        %6720 = vmatpush1.bf16.msra.mxu0 %v6705
        %6721 = vmatprep.subr.bf16.mxu0 0
        %6722 = vmatpush1.bf16.msra.mxu0 0
        %6723 = vmatprep.subr.bf16.mxu0 0
        %6724 = vmatpush1.bf16.msra.mxu0 0
        %6725 = vmatprep.subr.bf16.mxu0 0
        %6726 = vmatpush1.bf16.msra.mxu0 0
        %6727 = vmatprep.subr.bf16.mxu0 0
        %6728 = vmatpush1.bf16.msra.mxu0 0
        %6729 = vmatprep.subr.bf16.mxu0 0
        %6730 = vmatpush1.bf16.msra.mxu0 0
        %6731 = vmatprep.subr.bf16.mxu0 0
        %6732 = vmatpush1.bf16.msra.mxu0 0
        %6733 = vmatprep.subr.bf16.mxu0 0
        %6734 = vmatpush1.bf16.msra.mxu0 0
        %6735 = vmatprep.subr.bf16.mxu0 0
        %6736 = vmatpush1.bf16.msra.mxu0 0
        %6737 = vmatprep.subr.bf16.mxu0 0
        %6738 = vmatpush1.bf16.msra.mxu0 0
        %6739 = vmatprep.subr.bf16.mxu0 0
        %6740 = vmatpush1.bf16.msra.mxu0 0
        %6741 = vmatprep.subr.bf16.mxu0 0
        %6742 = vmatpush1.bf16.msra.mxu0 0
        %6743 = vmatprep.subr.bf16.mxu0 0
        %6744 = vmatpush1.bf16.msra.mxu0 0
        %6745 = vmatprep.subr.bf16.mxu0 0
        %6746 = vmatpush1.bf16.msra.mxu0 0
        %6747 = vmatprep.subr.bf16.mxu0 0
        %6748 = vmatpush1.bf16.msra.mxu0 0
        %6749 = vmatprep.subr.bf16.mxu0 0
        %6750 = vmatpush1.bf16.msra.mxu0 0
        %6751 = vmatprep.mubr.bf16.mxu0 0
        %6752 = vmatmul.mubr.bf16.gmra.mrb[0].mxu0 %v6708
        %v6753 = vpop.f32.mrb[0].mxu0
        %v6754 = vadd.f32 0.0, %v6753
        %v6755 = vpop.f32.mrb[0].mxu0
        %v6756 = vpop.f32.mrb[0].mxu0
        %v6757 = vadd.f32 0.0, %v6756
        %v6758 = vpop.f32.mrb[0].mxu0
        %6759 = vmatprep.mubr.bf16.mxu0 0
        %6760 = vmatmul.mubr.bf16.gmra.mrb[0].mxu0 %v6711
        %v6761 = vpop.f32.mrb[0].mxu0
        %v6762 = vadd.f32 0.0, %v6761
        %v6763 = vpop.f32.mrb[0].mxu0
        %v6764 = vpop.f32.mrb[0].mxu0
        %v6765 = vadd.f32 0.0, %v6764
        %v6766 = vpop.f32.mrb[0].mxu0
        %6767 = vmatprep.mubr.bf16.mxu0 0
        %6768 = vmatmul.mubr.bf16.gmra.mrb[0].mxu0 %v6714
        %v6769 = vpop.f32.mrb[0].mxu0
        %v6770 = vadd.f32 0.0, %v6769
        %v6771 = vpop.f32.mrb[0].mxu0
        %v6772 = vpop.f32.mrb[0].mxu0
        %v6773 = vadd.f32 0.0, %v6772
        %v6774 = vpop.f32.mrb[0].mxu0
        %6775 = vmatprep.mubr.bf16.mxu0 0
        %6776 = vmatmul.mubr.bf16.gmra.mrb[0].mxu0 %v6717
        %v6777 = vpop.f32.mrb[0].mxu0
        %v6778 = vadd.f32 0.0, %v6777
        %v6779 = vpop.f32.mrb[0].mxu0
        %v6780 = vpop.f32.mrb[0].mxu0
        %v6781 = vadd.f32 0.0, %v6780
        %v6782 = vpop.f32.mrb[0].mxu0
        %6783 = vdwg.mxu0
        %v6784 = vld [vmem:[#allocation7] sm:$0xff]
        %v6785 = vld [vmem:[#allocation7 + $0x8] sm:$0xff]
        %v6786 = vld [vmem:[#allocation7 + $0x10] sm:$0xff]
        %v6787 = vld [vmem:[#allocation7 + $0x18] sm:$0xff]
        %v6788 = vld [vmem:[#allocation7 + $0x20] sm:$0xff]
        %v6789 = vld [vmem:[#allocation7 + $0x28] sm:$0xff]
        %v6790 = vld [vmem:[#allocation7 + $0x30] sm:$0xff]
        %v6791 = vld [vmem:[#allocation7 + $0x38] sm:$0xff]
        %v6792 = vadd.f32 %v6784, %v6754
        %v6793 = vadd.f32 %v6785, %v6757
        %v6794 = vadd.f32 %v6786, %v6762
        %v6795 = vadd.f32 %v6787, %v6765
        %v6796 = vadd.f32 %v6788, %v6770
        %v6797 = vadd.f32 %v6789, %v6773
        %v6798 = vadd.f32 %v6790, %v6778
        %v6799 = vadd.f32 %v6791, %v6781
        %6800 = vst.msk [vmem:[#allocation7] sm:$0xff] %vm5822, %v6792
        %6801 = vst.msk [vmem:[#allocation7 + $0x8] sm:$0xff] %vm5822, %v6793
        %6802 = vst.msk [vmem:[#allocation7 + $0x10] sm:$0xff] %vm5822, %v6794
        %6803 = vst.msk [vmem:[#allocation7 + $0x18] sm:$0xff] %vm5822, %v6795
        %6804 = vst.msk [vmem:[#allocation7 + $0x20] sm:$0xff] %vm5822, %v6796
        %6805 = vst.msk [vmem:[#allocation7 + $0x28] sm:$0xff] %vm5822, %v6797
        %6806 = vst.msk [vmem:[#allocation7 + $0x30] sm:$0xff] %vm5822, %v6798
        %6807 = vst.msk [vmem:[#allocation7 + $0x38] sm:$0xff] %vm5822, %v6799
        %v6808 = vld [vmem:[#allocation7] sm:$0xff]
        %v6809 = vld [vmem:[#allocation7 + $0x8] sm:$0xff]
        %v6810 = vld [vmem:[#allocation7 + $0x10] sm:$0xff]
        %v6811 = vld [vmem:[#allocation7 + $0x18] sm:$0xff]
        %v6812 = vld [vmem:[#allocation7 + $0x20] sm:$0xff]
        %v6813 = vld [vmem:[#allocation7 + $0x28] sm:$0xff]
        %v6814 = vld [vmem:[#allocation7 + $0x30] sm:$0xff]
        %v6815 = vld [vmem:[#allocation7 + $0x38] sm:$0xff]
        %v6816 = vld [vmem:[%s6] sm:$0x1]
        %v6818 = vlaneseq
        %v6819 = vshrl.u32 %v6818, 7
        %v6820 = vsub.s32 0, %v6819
        %v6821 = vrot.slane %v6816, %v6820
        %v6823 = vadd.f32 %v6808, %v6821
        %v6824 = vadd.f32 %v6809, %v6821
        %v6825 = vadd.f32 %v6810, %v6821
        %v6826 = vadd.f32 %v6811, %v6821
        %v6827 = vadd.f32 %v6812, %v6821
        %v6828 = vadd.f32 %v6813, %v6821
        %v6829 = vadd.f32 %v6814, %v6821
        %v6830 = vadd.f32 %v6815, %v6821
        %v6831 = vmax.f32 %v6823, 0.0
        %v6832 = vmax.f32 %v6824, 0.0
        %v6833 = vmax.f32 %v6825, 0.0
        %v6834 = vmax.f32 %v6826, 0.0
        %v6835 = vmax.f32 %v6827, 0.0
        %v6836 = vmax.f32 %v6828, 0.0
        %v6837 = vmax.f32 %v6829, 0.0
        %v6838 = vmax.f32 %v6830, 0.0
        %v6847 = vcombine.high %v6831, %v6831
        %v6849 = vunpack.c.l.s4 1983009808
        %v6850 = vunpack.c.0.s8 %v6849
        %v6851 = vlaneseq
        %v6852 = vshrl.u32 %v6851, 7
        %v6853 = vsub.s32 %v6850, %v6852
        %v6854 = vrot.slane %v6831, %v6853
        %v6856 = vunpack.c.l.s4 1983009808
        %v6857 = vunpack.c.0.s8 %v6856
        %v6858 = vlaneseq
        %v6859 = vshrl.u32 %v6858, 7
        %v6860 = vsub.s32 %v6857, %v6859
        %v6861 = vrot.slane %v6847, %v6860
        %v6862 = vcombine.high %v6854, %v6854
        %v6863 = vcombine.high %v6861, %v6861
        %v6864 = vcombine.high %v6832, %v6832
        %v6866 = vunpack.c.l.s4 1983009808
        %v6867 = vunpack.c.0.s8 %v6866
        %v6868 = vlaneseq
        %v6869 = vshrl.u32 %v6868, 7
        %v6870 = vsub.s32 %v6867, %v6869
        %v6871 = vrot.slane %v6832, %v6870
        %v6873 = vunpack.c.l.s4 1983009808
        %v6874 = vunpack.c.0.s8 %v6873
        %v6875 = vlaneseq
        %v6876 = vshrl.u32 %v6875, 7
        %v6877 = vsub.s32 %v6874, %v6876
        %v6878 = vrot.slane %v6864, %v6877
        %v6879 = vcombine.high %v6871, %v6871
        %v6880 = vcombine.high %v6878, %v6878
        %v6881 = vcombine.high %v6833, %v6833
        %v6883 = vunpack.c.l.s4 1983009808
        %v6884 = vunpack.c.0.s8 %v6883
        %v6885 = vlaneseq
        %v6886 = vshrl.u32 %v6885, 7
        %v6887 = vsub.s32 %v6884, %v6886
        %v6888 = vrot.slane %v6833, %v6887
        %v6890 = vunpack.c.l.s4 1983009808
        %v6891 = vunpack.c.0.s8 %v6890
        %v6892 = vlaneseq
        %v6893 = vshrl.u32 %v6892, 7
        %v6894 = vsub.s32 %v6891, %v6893
        %v6895 = vrot.slane %v6881, %v6894
        %v6896 = vcombine.high %v6888, %v6888
        %v6897 = vcombine.high %v6895, %v6895
        %v6898 = vcombine.high %v6834, %v6834
        %v6900 = vunpack.c.l.s4 1983009808
        %v6901 = vunpack.c.0.s8 %v6900
        %v6902 = vlaneseq
        %v6903 = vshrl.u32 %v6902, 7
        %v6904 = vsub.s32 %v6901, %v6903
        %v6905 = vrot.slane %v6834, %v6904
        %v6907 = vunpack.c.l.s4 1983009808
        %v6908 = vunpack.c.0.s8 %v6907
        %v6909 = vlaneseq
        %v6910 = vshrl.u32 %v6909, 7
        %v6911 = vsub.s32 %v6908, %v6910
        %v6912 = vrot.slane %v6898, %v6911
        %v6913 = vcombine.high %v6905, %v6905
        %v6914 = vcombine.high %v6912, %v6912
        %v6915 = vcombine.high %v6835, %v6835
        %v6917 = vunpack.c.l.s4 1983009808
        %v6918 = vunpack.c.0.s8 %v6917
        %v6919 = vlaneseq
        %v6920 = vshrl.u32 %v6919, 7
        %v6921 = vsub.s32 %v6918, %v6920
        %v6922 = vrot.slane %v6835, %v6921
        %v6924 = vunpack.c.l.s4 1983009808
        %v6925 = vunpack.c.0.s8 %v6924
        %v6926 = vlaneseq
        %v6927 = vshrl.u32 %v6926, 7
        %v6928 = vsub.s32 %v6925, %v6927
        %v6929 = vrot.slane %v6915, %v6928
        %v6930 = vcombine.high %v6922, %v6922
        %v6931 = vcombine.high %v6929, %v6929
        %v6932 = vcombine.high %v6836, %v6836
        %v6934 = vunpack.c.l.s4 1983009808
        %v6935 = vunpack.c.0.s8 %v6934
        %v6936 = vlaneseq
        %v6937 = vshrl.u32 %v6936, 7
        %v6938 = vsub.s32 %v6935, %v6937
        %v6939 = vrot.slane %v6836, %v6938
        %v6941 = vunpack.c.l.s4 1983009808
        %v6942 = vunpack.c.0.s8 %v6941
        %v6943 = vlaneseq
        %v6944 = vshrl.u32 %v6943, 7
        %v6945 = vsub.s32 %v6942, %v6944
        %v6946 = vrot.slane %v6932, %v6945
        %v6947 = vcombine.high %v6939, %v6939
        %v6948 = vcombine.high %v6946, %v6946
        %v6949 = vcombine.high %v6837, %v6837
        %v6951 = vunpack.c.l.s4 1983009808
        %v6952 = vunpack.c.0.s8 %v6951
        %v6953 = vlaneseq
        %v6954 = vshrl.u32 %v6953, 7
        %v6955 = vsub.s32 %v6952, %v6954
        %v6956 = vrot.slane %v6837, %v6955
        %v6958 = vunpack.c.l.s4 1983009808
        %v6959 = vunpack.c.0.s8 %v6958
        %v6960 = vlaneseq
        %v6961 = vshrl.u32 %v6960, 7
        %v6962 = vsub.s32 %v6959, %v6961
        %v6963 = vrot.slane %v6949, %v6962
        %v6964 = vcombine.high %v6956, %v6956
        %v6965 = vcombine.high %v6963, %v6963
        %v6966 = vcombine.high %v6838, %v6838
        %v6968 = vunpack.c.l.s4 1983009808
        %v6969 = vunpack.c.0.s8 %v6968
        %v6970 = vlaneseq
        %v6971 = vshrl.u32 %v6970, 7
        %v6972 = vsub.s32 %v6969, %v6971
        %v6973 = vrot.slane %v6838, %v6972
        %v6975 = vunpack.c.l.s4 1983009808
        %v6976 = vunpack.c.0.s8 %v6975
        %v6977 = vlaneseq
        %v6978 = vshrl.u32 %v6977, 7
        %v6979 = vsub.s32 %v6976, %v6978
        %v6980 = vrot.slane %v6966, %v6979
        %v6981 = vcombine.high %v6973, %v6973
        %v6982 = vcombine.high %v6980, %v6980
        %vm7015 = vcmask 254976
        %v7016 = vsel %vm7015, %v6854, -inf
        %v7017 = vrot.slane %v7016, 4
        %v7018 = vmax.f32 %v7016, %v7017
        %v7019 = vrot.slane %v7018, 2
        %v7020 = vmax.f32 %v7018, %v7019
        %v7021 = vrot.slane %v7020, 1
        %v7022 = vmax.f32 %v7020, %v7021
        %v7023 = vsel %vm7015, %v6862, -inf
        %v7024 = vrot.slane %v7023, 4
        %v7025 = vmax.f32 %v7023, %v7024
        %v7026 = vrot.slane %v7025, 2
        %v7027 = vmax.f32 %v7025, %v7026
        %v7028 = vrot.slane %v7027, 1
        %v7029 = vmax.f32 %v7027, %v7028
        %v7030 = vsel %vm7015, %v6861, -inf
        %v7031 = vrot.slane %v7030, 4
        %v7032 = vmax.f32 %v7030, %v7031
        %v7033 = vrot.slane %v7032, 2
        %v7034 = vmax.f32 %v7032, %v7033
        %v7035 = vrot.slane %v7034, 1
        %v7036 = vmax.f32 %v7034, %v7035
        %v7037 = vsel %vm7015, %v6863, -inf
        %v7038 = vrot.slane %v7037, 4
        %v7039 = vmax.f32 %v7037, %v7038
        %v7040 = vrot.slane %v7039, 2
        %v7041 = vmax.f32 %v7039, %v7040
        %v7042 = vrot.slane %v7041, 1
        %v7043 = vmax.f32 %v7041, %v7042
        %v7044 = vsel %vm7015, %v6871, -inf
        %v7045 = vrot.slane %v7044, 4
        %v7046 = vmax.f32 %v7044, %v7045
        %v7047 = vrot.slane %v7046, 2
        %v7048 = vmax.f32 %v7046, %v7047
        %v7049 = vrot.slane %v7048, 1
        %v7050 = vmax.f32 %v7048, %v7049
        %v7051 = vsel %vm7015, %v6879, -inf
        %v7052 = vrot.slane %v7051, 4
        %v7053 = vmax.f32 %v7051, %v7052
        %v7054 = vrot.slane %v7053, 2
        %v7055 = vmax.f32 %v7053, %v7054
        %v7056 = vrot.slane %v7055, 1
        %v7057 = vmax.f32 %v7055, %v7056
        %v7058 = vsel %vm7015, %v6878, -inf
        %v7059 = vrot.slane %v7058, 4
        %v7060 = vmax.f32 %v7058, %v7059
        %v7061 = vrot.slane %v7060, 2
        %v7062 = vmax.f32 %v7060, %v7061
        %v7063 = vrot.slane %v7062, 1
        %v7064 = vmax.f32 %v7062, %v7063
        %v7065 = vsel %vm7015, %v6880, -inf
        %v7066 = vrot.slane %v7065, 4
        %v7067 = vmax.f32 %v7065, %v7066
        %v7068 = vrot.slane %v7067, 2
        %v7069 = vmax.f32 %v7067, %v7068
        %v7070 = vrot.slane %v7069, 1
        %v7071 = vmax.f32 %v7069, %v7070
        %v7072 = vsel %vm7015, %v6888, -inf
        %v7073 = vrot.slane %v7072, 4
        %v7074 = vmax.f32 %v7072, %v7073
        %v7075 = vrot.slane %v7074, 2
        %v7076 = vmax.f32 %v7074, %v7075
        %v7077 = vrot.slane %v7076, 1
        %v7078 = vmax.f32 %v7076, %v7077
        %v7079 = vsel %vm7015, %v6896, -inf
        %v7080 = vrot.slane %v7079, 4
        %v7081 = vmax.f32 %v7079, %v7080
        %v7082 = vrot.slane %v7081, 2
        %v7083 = vmax.f32 %v7081, %v7082
        %v7084 = vrot.slane %v7083, 1
        %v7085 = vmax.f32 %v7083, %v7084
        %v7086 = vsel %vm7015, %v6895, -inf
        %v7087 = vrot.slane %v7086, 4
        %v7088 = vmax.f32 %v7086, %v7087
        %v7089 = vrot.slane %v7088, 2
        %v7090 = vmax.f32 %v7088, %v7089
        %v7091 = vrot.slane %v7090, 1
        %v7092 = vmax.f32 %v7090, %v7091
        %v7093 = vsel %vm7015, %v6897, -inf
        %v7094 = vrot.slane %v7093, 4
        %v7095 = vmax.f32 %v7093, %v7094
        %v7096 = vrot.slane %v7095, 2
        %v7097 = vmax.f32 %v7095, %v7096
        %v7098 = vrot.slane %v7097, 1
        %v7099 = vmax.f32 %v7097, %v7098
        %v7100 = vsel %vm7015, %v6905, -inf
        %v7101 = vrot.slane %v7100, 4
        %v7102 = vmax.f32 %v7100, %v7101
        %v7103 = vrot.slane %v7102, 2
        %v7104 = vmax.f32 %v7102, %v7103
        %v7105 = vrot.slane %v7104, 1
        %v7106 = vmax.f32 %v7104, %v7105
        %v7107 = vsel %vm7015, %v6913, -inf
        %v7108 = vrot.slane %v7107, 4
        %v7109 = vmax.f32 %v7107, %v7108
        %v7110 = vrot.slane %v7109, 2
        %v7111 = vmax.f32 %v7109, %v7110
        %v7112 = vrot.slane %v7111, 1
        %v7113 = vmax.f32 %v7111, %v7112
        %v7114 = vsel %vm7015, %v6912, -inf
        %v7115 = vrot.slane %v7114, 4
        %v7116 = vmax.f32 %v7114, %v7115
        %v7117 = vrot.slane %v7116, 2
        %v7118 = vmax.f32 %v7116, %v7117
        %v7119 = vrot.slane %v7118, 1
        %v7120 = vmax.f32 %v7118, %v7119
        %v7121 = vsel %vm7015, %v6914, -inf
        %v7122 = vrot.slane %v7121, 4
        %v7123 = vmax.f32 %v7121, %v7122
        %v7124 = vrot.slane %v7123, 2
        %v7125 = vmax.f32 %v7123, %v7124
        %v7126 = vrot.slane %v7125, 1
        %v7127 = vmax.f32 %v7125, %v7126
        %v7128 = vsel %vm7015, %v6922, -inf
        %v7129 = vrot.slane %v7128, 4
        %v7130 = vmax.f32 %v7128, %v7129
        %v7131 = vrot.slane %v7130, 2
        %v7132 = vmax.f32 %v7130, %v7131
        %v7133 = vrot.slane %v7132, 1
        %v7134 = vmax.f32 %v7132, %v7133
        %v7135 = vsel %vm7015, %v6930, -inf
        %v7136 = vrot.slane %v7135, 4
        %v7137 = vmax.f32 %v7135, %v7136
        %v7138 = vrot.slane %v7137, 2
        %v7139 = vmax.f32 %v7137, %v7138
        %v7140 = vrot.slane %v7139, 1
        %v7141 = vmax.f32 %v7139, %v7140
        %v7142 = vsel %vm7015, %v6929, -inf
        %v7143 = vrot.slane %v7142, 4
        %v7144 = vmax.f32 %v7142, %v7143
        %v7145 = vrot.slane %v7144, 2
        %v7146 = vmax.f32 %v7144, %v7145
        %v7147 = vrot.slane %v7146, 1
        %v7148 = vmax.f32 %v7146, %v7147
        %v7149 = vsel %vm7015, %v6931, -inf
        %v7150 = vrot.slane %v7149, 4
        %v7151 = vmax.f32 %v7149, %v7150
        %v7152 = vrot.slane %v7151, 2
        %v7153 = vmax.f32 %v7151, %v7152
        %v7154 = vrot.slane %v7153, 1
        %v7155 = vmax.f32 %v7153, %v7154
        %v7156 = vsel %vm7015, %v6939, -inf
        %v7157 = vrot.slane %v7156, 4
        %v7158 = vmax.f32 %v7156, %v7157
        %v7159 = vrot.slane %v7158, 2
        %v7160 = vmax.f32 %v7158, %v7159
        %v7161 = vrot.slane %v7160, 1
        %v7162 = vmax.f32 %v7160, %v7161
        %v7163 = vsel %vm7015, %v6947, -inf
        %v7164 = vrot.slane %v7163, 4
        %v7165 = vmax.f32 %v7163, %v7164
        %v7166 = vrot.slane %v7165, 2
        %v7167 = vmax.f32 %v7165, %v7166
        %v7168 = vrot.slane %v7167, 1
        %v7169 = vmax.f32 %v7167, %v7168
        %v7170 = vsel %vm7015, %v6946, -inf
        %v7171 = vrot.slane %v7170, 4
        %v7172 = vmax.f32 %v7170, %v7171
        %v7173 = vrot.slane %v7172, 2
        %v7174 = vmax.f32 %v7172, %v7173
        %v7175 = vrot.slane %v7174, 1
        %v7176 = vmax.f32 %v7174, %v7175
        %v7177 = vsel %vm7015, %v6948, -inf
        %v7178 = vrot.slane %v7177, 4
        %v7179 = vmax.f32 %v7177, %v7178
        %v7180 = vrot.slane %v7179, 2
        %v7181 = vmax.f32 %v7179, %v7180
        %v7182 = vrot.slane %v7181, 1
        %v7183 = vmax.f32 %v7181, %v7182
        %v7184 = vsel %vm7015, %v6956, -inf
        %v7185 = vrot.slane %v7184, 4
        %v7186 = vmax.f32 %v7184, %v7185
        %v7187 = vrot.slane %v7186, 2
        %v7188 = vmax.f32 %v7186, %v7187
        %v7189 = vrot.slane %v7188, 1
        %v7190 = vmax.f32 %v7188, %v7189
        %v7191 = vsel %vm7015, %v6964, -inf
        %v7192 = vrot.slane %v7191, 4
        %v7193 = vmax.f32 %v7191, %v7192
        %v7194 = vrot.slane %v7193, 2
        %v7195 = vmax.f32 %v7193, %v7194
        %v7196 = vrot.slane %v7195, 1
        %v7197 = vmax.f32 %v7195, %v7196
        %v7198 = vsel %vm7015, %v6963, -inf
        %v7199 = vrot.slane %v7198, 4
        %v7200 = vmax.f32 %v7198, %v7199
        %v7201 = vrot.slane %v7200, 2
        %v7202 = vmax.f32 %v7200, %v7201
        %v7203 = vrot.slane %v7202, 1
        %v7204 = vmax.f32 %v7202, %v7203
        %v7205 = vsel %vm7015, %v6965, -inf
        %v7206 = vrot.slane %v7205, 4
        %v7207 = vmax.f32 %v7205, %v7206
        %v7208 = vrot.slane %v7207, 2
        %v7209 = vmax.f32 %v7207, %v7208
        %v7210 = vrot.slane %v7209, 1
        %v7211 = vmax.f32 %v7209, %v7210
        %v7212 = vsel %vm7015, %v6973, -inf
        %v7213 = vrot.slane %v7212, 4
        %v7214 = vmax.f32 %v7212, %v7213
        %v7215 = vrot.slane %v7214, 2
        %v7216 = vmax.f32 %v7214, %v7215
        %v7217 = vrot.slane %v7216, 1
        %v7218 = vmax.f32 %v7216, %v7217
        %v7219 = vsel %vm7015, %v6981, -inf
        %v7220 = vrot.slane %v7219, 4
        %v7221 = vmax.f32 %v7219, %v7220
        %v7222 = vrot.slane %v7221, 2
        %v7223 = vmax.f32 %v7221, %v7222
        %v7224 = vrot.slane %v7223, 1
        %v7225 = vmax.f32 %v7223, %v7224
        %v7226 = vsel %vm7015, %v6980, -inf
        %v7227 = vrot.slane %v7226, 4
        %v7228 = vmax.f32 %v7226, %v7227
        %v7229 = vrot.slane %v7228, 2
        %v7230 = vmax.f32 %v7228, %v7229
        %v7231 = vrot.slane %v7230, 1
        %v7232 = vmax.f32 %v7230, %v7231
        %v7233 = vsel %vm7015, %v6982, -inf
        %v7234 = vrot.slane %v7233, 4
        %v7235 = vmax.f32 %v7233, %v7234
        %v7236 = vrot.slane %v7235, 2
        %v7237 = vmax.f32 %v7235, %v7236
        %v7238 = vrot.slane %v7237, 1
        %v7239 = vmax.f32 %v7237, %v7238
        %v7240 = vsel %vm5822, %v7022, -inf
        %v7241 = vsel %vm5822, %v7050, -inf
        %v7242 = vmax.f32 %v7240, %v7241
        %v7243 = vsel %vm5822, %v7029, -inf
        %v7244 = vsel %vm5822, %v7057, -inf
        %v7245 = vmax.f32 %v7243, %v7244
        %v7246 = vsel %vm5822, %v7036, -inf
        %v7247 = vsel %vm5822, %v7064, -inf
        %v7248 = vmax.f32 %v7246, %v7247
        %v7249 = vsel %vm5822, %v7043, -inf
        %v7250 = vsel %vm5822, %v7071, -inf
        %v7251 = vmax.f32 %v7249, %v7250
        %v7252 = vsel %vm5822, %v7078, -inf
        %v7253 = vsel %vm5822, %v7106, -inf
        %v7254 = vmax.f32 %v7252, %v7253
        %v7255 = vsel %vm5822, %v7085, -inf
        %v7256 = vsel %vm5822, %v7113, -inf
        %v7257 = vmax.f32 %v7255, %v7256
        %v7258 = vsel %vm5822, %v7092, -inf
        %v7259 = vsel %vm5822, %v7120, -inf
        %v7260 = vmax.f32 %v7258, %v7259
        %v7261 = vsel %vm5822, %v7099, -inf
        %v7262 = vsel %vm5822, %v7127, -inf
        %v7263 = vmax.f32 %v7261, %v7262
        %v7264 = vsel %vm5822, %v7134, -inf
        %v7265 = vsel %vm5822, %v7162, -inf
        %v7266 = vmax.f32 %v7264, %v7265
        %v7267 = vsel %vm5822, %v7141, -inf
        %v7268 = vsel %vm5822, %v7169, -inf
        %v7269 = vmax.f32 %v7267, %v7268
        %v7270 = vsel %vm5822, %v7148, -inf
        %v7271 = vsel %vm5822, %v7176, -inf
        %v7272 = vmax.f32 %v7270, %v7271
        %v7273 = vsel %vm5822, %v7155, -inf
        %v7274 = vsel %vm5822, %v7183, -inf
        %v7275 = vmax.f32 %v7273, %v7274
        %v7276 = vsel %vm5822, %v7190, -inf
        %v7277 = vsel %vm5822, %v7218, -inf
        %v7278 = vmax.f32 %v7276, %v7277
        %v7279 = vsel %vm5822, %v7197, -inf
        %v7280 = vsel %vm5822, %v7225, -inf
        %v7281 = vmax.f32 %v7279, %v7280
        %v7282 = vsel %vm5822, %v7204, -inf
        %v7283 = vsel %vm5822, %v7232, -inf
        %v7284 = vmax.f32 %v7282, %v7283
        %v7285 = vsel %vm5822, %v7211, -inf
        %v7286 = vsel %vm5822, %v7239, -inf
        %v7287 = vmax.f32 %v7285, %v7286
        %vm7288 = vcmask 259072
        %7289 = vst.msk [vmem:[#allocation4] sm:$0x3f] %vm7288, 0.0
        %s7290 = scalar_lea.vmem [#allocation4], 40
        %7291 = vst.msk [vmem:[%s7290] sm:$0x3f] %vm7288, 0.0
        %vm7292 = vcmask 253952
        %7293 = vst.msk [vmem:[#allocation4] sm:$0x1] %vm7292, 0.0
        %7294 = vst.msk [vmem:[#allocation4 + $0x8] sm:$0x1] %vm7292, 0.0
        %7295 = vst.msk [vmem:[#allocation4 + $0x10] sm:$0x1] %vm7292, 0.0
        %7296 = vst.msk [vmem:[#allocation4 + $0x18] sm:$0x1] %vm7292, 0.0
        %7297 = vst.msk [vmem:[#allocation4 + $0x20] sm:$0x1] %vm7292, 0.0
        %7298 = vst.msk [vmem:[#allocation4 + $0x28] sm:$0x1] %vm7292, 0.0
        %7299 = vst.msk [vmem:[#allocation4 + $0x5] sm:$0x1] %vm7292, 0.0
        %7300 = vst.msk [vmem:[#allocation4 + $0xd] sm:$0x1] %vm7292, 0.0
        %7301 = vst.msk [vmem:[#allocation4 + $0x15] sm:$0x1] %vm7292, 0.0
        %7302 = vst.msk [vmem:[#allocation4 + $0x1d] sm:$0x1] %vm7292, 0.0
        %7303 = vst.msk [vmem:[#allocation4 + $0x25] sm:$0x1] %vm7292, 0.0
        %7304 = vst.msk [vmem:[#allocation4 + $0x2d] sm:$0x1] %vm7292, 0.0
        %v7321 = vsel %vm5645, %v7245, %v7242
        %v7322 = vsel %vm5647, %v7248, %v7321
        %v7323 = vsel %vm5649, %v7251, %v7322
        %v7324 = vsel %vm5645, %v7257, %v7254
        %v7325 = vsel %vm5647, %v7260, %v7324
        %v7326 = vsel %vm5649, %v7263, %v7325
        %v7327 = vsel %vm5645, %v7269, %v7266
        %v7328 = vsel %vm5647, %v7272, %v7327
        %v7329 = vsel %vm5649, %v7275, %v7328
        %v7330 = vsel %vm5645, %v7281, %v7278
        %v7331 = vsel %vm5647, %v7284, %v7330
        %v7332 = vsel %vm5649, %v7287, %v7331
        %s7337 = scalar_lea.vmem [#allocation4], 8
        %vm7338 = vcmask 257024
        %7339 = vst.msk [vmem:[%s7337 + $0x1] sm:$0xf] %vm7338, %v7323
        %7340 = vst.msk [vmem:[%s7337 + $0x9] sm:$0xf] %vm7338, %v7326
        %7341 = vst.msk [vmem:[%s7337 + $0x11] sm:$0xf] %vm7338, %v7329
        %7342 = vst.msk [vmem:[%s7337 + $0x19] sm:$0xf] %vm7338, %v7332
        %v7343 = vld [vmem:[#allocation4] sm:$0xf]
        %v7344 = vld [vmem:[#allocation4 + $0x8] sm:$0xf]
        %v7345 = vld [vmem:[#allocation4 + $0x10] sm:$0xf]
        %v7346 = vld [vmem:[#allocation4 + $0x18] sm:$0xf]
        %v7351 = vcombine.low %v7343, %v7344
        %v7352 = vcombine.low %v7345, %v7346
        %v7355 = vpack.c.bf16 %v7352, %v7351
        %v7356 = vld [vmem:[%s3] sm:$0xf]
        %v7357 = vld [vmem:[%s3 + $0x4] sm:$0xf]
        %v7358 = vld [vmem:[%s3 + $0x8] sm:$0xf]
        %v7359 = vld [vmem:[%s3 + $0xc] sm:$0xf]
        %v7364 = vunpack.c.l.b16 %v7356
        %v7365 = vunpack.c.l.b16 %v7357
        %v7366 = vunpack.c.l.b16 %v7358
        %v7367 = vunpack.c.l.b16 %v7359
        %v7368 = vpack.c.b16 %v7365, %v7364
        %v7369 = vpack.c.b16 %v7367, %v7366
        %v7373 = vsel %vm5822, %v7355, 0
        %7375 = vmatprep.subr.bf16.mxu0 0
        %7376 = vmatpush1.bf16.msra.mxu0 %v7368
        %7377 = vmatprep.subr.bf16.mxu0 0
        %7378 = vmatpush1.bf16.msra.mxu0 %v7369
        %7379 = vmatprep.subr.bf16.mxu0 0
        %7380 = vmatpush1.bf16.msra.mxu0 0
        %7381 = vmatprep.subr.bf16.mxu0 0
        %7382 = vmatpush1.bf16.msra.mxu0 0
        %7383 = vmatprep.subr.bf16.mxu0 0
        %7384 = vmatpush1.bf16.msra.mxu0 0
        %7385 = vmatprep.subr.bf16.mxu0 0
        %7386 = vmatpush1.bf16.msra.mxu0 0
        %7387 = vmatprep.subr.bf16.mxu0 0
        %7388 = vmatpush1.bf16.msra.mxu0 0
        %7389 = vmatprep.subr.bf16.mxu0 0
        %7390 = vmatpush1.bf16.msra.mxu0 0
        %7391 = vmatprep.subr.bf16.mxu0 0
        %7392 = vmatpush1.bf16.msra.mxu0 0
        %7393 = vmatprep.subr.bf16.mxu0 0
        %7394 = vmatpush1.bf16.msra.mxu0 0
        %7395 = vmatprep.subr.bf16.mxu0 0
        %7396 = vmatpush1.bf16.msra.mxu0 0
        %7397 = vmatprep.subr.bf16.mxu0 0
        %7398 = vmatpush1.bf16.msra.mxu0 0
        %7399 = vmatprep.subr.bf16.mxu0 0
        %7400 = vmatpush1.bf16.msra.mxu0 0
        %7401 = vmatprep.subr.bf16.mxu0 0
        %7402 = vmatpush1.bf16.msra.mxu0 0
        %7403 = vmatprep.subr.bf16.mxu0 0
        %7404 = vmatpush1.bf16.msra.mxu0 0
        %7405 = vmatprep.subr.bf16.mxu0 0
        %7406 = vmatpush1.bf16.msra.mxu0 0
        %7407 = vmatprep.mubr.bf16.mxu0 0
        %7408 = vmatmul.mubr.bf16.gmra.mrb[0].mxu0 %v7373
        %v7409 = vpop.f32.mrb[0].mxu0
        %v7410 = vadd.f32 0.0, %v7409
        %v7411 = vpop.f32.mrb[0].mxu0
        %v7412 = vpop.f32.mrb[0].mxu0
        %v7413 = vadd.f32 0.0, %v7412
        %v7414 = vpop.f32.mrb[0].mxu0
        %7415 = vdwg.mxu0
        %vm7416 = vcmask 523264
        %7417 = vst.msk [vmem:[#allocation8] sm:$0xff] %vm7416, %v7410
        %7418 = vst.msk [vmem:[#allocation8 + $0x8] sm:$0xff] %vm7416, %v7413
        %v7419 = vld [vmem:[#allocation4 + $0x1] sm:$0xf]
        %v7420 = vld [vmem:[#allocation4 + $0x9] sm:$0xf]
        %v7421 = vld [vmem:[#allocation4 + $0x11] sm:$0xf]
        %v7422 = vld [vmem:[#allocation4 + $0x19] sm:$0xf]
        %v7427 = vcombine.low %v7419, %v7420
        %v7428 = vcombine.low %v7421, %v7422
        %v7431 = vpack.c.bf16 %v7428, %v7427
        %s7432 = scalar_lea.vmem %s3, 16
        %v7433 = vld [vmem:[%s7432] sm:$0xf]
        %v7434 = vld [vmem:[%s7432 + $0x4] sm:$0xf]
        %v7435 = vld [vmem:[%s7432 + $0x8] sm:$0xf]
        %v7436 = vld [vmem:[%s7432 + $0xc] sm:$0xf]
        %v7441 = vunpack.c.l.b16 %v7433
        %v7442 = vunpack.c.l.b16 %v7434
        %v7443 = vunpack.c.l.b16 %v7435
        %v7444 = vunpack.c.l.b16 %v7436
        %v7445 = vpack.c.b16 %v7442, %v7441
        %v7446 = vpack.c.b16 %v7444, %v7443
        %v7450 = vsel %vm5822, %v7431, 0
        %7452 = vmatprep.subr.bf16.mxu0 0
        %7453 = vmatpush1.bf16.msra.mxu0 %v7445
        %7454 = vmatprep.subr.bf16.mxu0 0
        %7455 = vmatpush1.bf16.msra.mxu0 %v7446
        %7456 = vmatprep.subr.bf16.mxu0 0
        %7457 = vmatpush1.bf16.msra.mxu0 0
        %7458 = vmatprep.subr.bf16.mxu0 0
        %7459 = vmatpush1.bf16.msra.mxu0 0
        %7460 = vmatprep.subr.bf16.mxu0 0
        %7461 = vmatpush1.bf16.msra.mxu0 0
        %7462 = vmatprep.subr.bf16.mxu0 0
        %7463 = vmatpush1.bf16.msra.mxu0 0
        %7464 = vmatprep.subr.bf16.mxu0 0
        %7465 = vmatpush1.bf16.msra.mxu0 0
        %7466 = vmatprep.subr.bf16.mxu0 0
        %7467 = vmatpush1.bf16.msra.mxu0 0
        %7468 = vmatprep.subr.bf16.mxu0 0
        %7469 = vmatpush1.bf16.msra.mxu0 0
        %7470 = vmatprep.subr.bf16.mxu0 0
        %7471 = vmatpush1.bf16.msra.mxu0 0
        %7472 = vmatprep.subr.bf16.mxu0 0
        %7473 = vmatpush1.bf16.msra.mxu0 0
        %7474 = vmatprep.subr.bf16.mxu0 0
        %7475 = vmatpush1.bf16.msra.mxu0 0
        %7476 = vmatprep.subr.bf16.mxu0 0
        %7477 = vmatpush1.bf16.msra.mxu0 0
        %7478 = vmatprep.subr.bf16.mxu0 0
        %7479 = vmatpush1.bf16.msra.mxu0 0
        %7480 = vmatprep.subr.bf16.mxu0 0
        %7481 = vmatpush1.bf16.msra.mxu0 0
        %7482 = vmatprep.subr.bf16.mxu0 0
        %7483 = vmatpush1.bf16.msra.mxu0 0
        %7484 = vmatprep.mubr.bf16.mxu0 0
        %7485 = vmatmul.mubr.bf16.gmra.mrb[0].mxu0 %v7450
        %v7486 = vpop.f32.mrb[0].mxu0
        %v7487 = vadd.f32 0.0, %v7486
        %v7488 = vpop.f32.mrb[0].mxu0
        %v7489 = vpop.f32.mrb[0].mxu0
        %v7490 = vadd.f32 0.0, %v7489
        %v7491 = vpop.f32.mrb[0].mxu0
        %7492 = vdwg.mxu0
        %v7493 = vld [vmem:[#allocation8] sm:$0xff]
        %v7494 = vld [vmem:[#allocation8 + $0x8] sm:$0xff]
        %v7495 = vadd.f32 %v7493, %v7487
        %v7496 = vadd.f32 %v7494, %v7490
        %7497 = vst.msk [vmem:[#allocation8] sm:$0xff] %vm7416, %v7495
        %7498 = vst.msk [vmem:[#allocation8 + $0x8] sm:$0xff] %vm7416, %v7496
        %v7499 = vld [vmem:[#allocation4 + $0x2] sm:$0xf]
        %v7500 = vld [vmem:[#allocation4 + $0xa] sm:$0xf]
        %v7501 = vld [vmem:[#allocation4 + $0x12] sm:$0xf]
        %v7502 = vld [vmem:[#allocation4 + $0x1a] sm:$0xf]
        %v7507 = vcombine.low %v7499, %v7500
        %v7508 = vcombine.low %v7501, %v7502
        %v7511 = vpack.c.bf16 %v7508, %v7507
        %s7512 = scalar_lea.vmem %s3, 32
        %v7513 = vld [vmem:[%s7512] sm:$0xf]
        %v7514 = vld [vmem:[%s7512 + $0x4] sm:$0xf]
        %v7515 = vld [vmem:[%s7512 + $0x8] sm:$0xf]
        %v7516 = vld [vmem:[%s7512 + $0xc] sm:$0xf]
        %v7521 = vunpack.c.l.b16 %v7513
        %v7522 = vunpack.c.l.b16 %v7514
        %v7523 = vunpack.c.l.b16 %v7515
        %v7524 = vunpack.c.l.b16 %v7516
        %v7525 = vpack.c.b16 %v7522, %v7521
        %v7526 = vpack.c.b16 %v7524, %v7523
        %v7530 = vsel %vm5822, %v7511, 0
        %7532 = vmatprep.subr.bf16.mxu0 0
        %7533 = vmatpush1.bf16.msra.mxu0 %v7525
        %7534 = vmatprep.subr.bf16.mxu0 0
        %7535 = vmatpush1.bf16.msra.mxu0 %v7526
        %7536 = vmatprep.subr.bf16.mxu0 0
        %7537 = vmatpush1.bf16.msra.mxu0 0
        %7538 = vmatprep.subr.bf16.mxu0 0
        %7539 = vmatpush1.bf16.msra.mxu0 0
        %7540 = vmatprep.subr.bf16.mxu0 0
        %7541 = vmatpush1.bf16.msra.mxu0 0
        %7542 = vmatprep.subr.bf16.mxu0 0
        %7543 = vmatpush1.bf16.msra.mxu0 0
        %7544 = vmatprep.subr.bf16.mxu0 0
        %7545 = vmatpush1.bf16.msra.mxu0 0
        %7546 = vmatprep.subr.bf16.mxu0 0
        %7547 = vmatpush1.bf16.msra.mxu0 0
        %7548 = vmatprep.subr.bf16.mxu0 0
        %7549 = vmatpush1.bf16.msra.mxu0 0
        %7550 = vmatprep.subr.bf16.mxu0 0
        %7551 = vmatpush1.bf16.msra.mxu0 0
        %7552 = vmatprep.subr.bf16.mxu0 0
        %7553 = vmatpush1.bf16.msra.mxu0 0
        %7554 = vmatprep.subr.bf16.mxu0 0
        %7555 = vmatpush1.bf16.msra.mxu0 0
        %7556 = vmatprep.subr.bf16.mxu0 0
        %7557 = vmatpush1.bf16.msra.mxu0 0
        %7558 = vmatprep.subr.bf16.mxu0 0
        %7559 = vmatpush1.bf16.msra.mxu0 0
        %7560 = vmatprep.subr.bf16.mxu0 0
        %7561 = vmatpush1.bf16.msra.mxu0 0
        %7562 = vmatprep.subr.bf16.mxu0 0
        %7563 = vmatpush1.bf16.msra.mxu0 0
        %7564 = vmatprep.mubr.bf16.mxu0 0
        %7565 = vmatmul.mubr.bf16.gmra.mrb[0].mxu0 %v7530
        %v7566 = vpop.f32.mrb[0].mxu0
        %v7567 = vadd.f32 0.0, %v7566
        %v7568 = vpop.f32.mrb[0].mxu0
        %v7569 = vpop.f32.mrb[0].mxu0
        %v7570 = vadd.f32 0.0, %v7569
        %v7571 = vpop.f32.mrb[0].mxu0
        %7572 = vdwg.mxu0
        %v7573 = vld [vmem:[#allocation8] sm:$0xff]
        %v7574 = vld [vmem:[#allocation8 + $0x8] sm:$0xff]
        %v7575 = vadd.f32 %v7573, %v7567
        %v7576 = vadd.f32 %v7574, %v7570
        %7577 = vst.msk [vmem:[#allocation8] sm:$0xff] %vm7416, %v7575
        %7578 = vst.msk [vmem:[#allocation8 + $0x8] sm:$0xff] %vm7416, %v7576
        %v7579 = vld [vmem:[%s7337] sm:$0xf]
        %v7580 = vld [vmem:[%s7337 + $0x8] sm:$0xf]
        %v7581 = vld [vmem:[%s7337 + $0x10] sm:$0xf]
        %v7582 = vld [vmem:[%s7337 + $0x18] sm:$0xf]
        %v7587 = vcombine.low %v7579, %v7580
        %v7588 = vcombine.low %v7581, %v7582
        %v7591 = vpack.c.bf16 %v7588, %v7587
        %s7592 = scalar_lea.vmem %s3, 48
        %v7593 = vld [vmem:[%s7592] sm:$0xf]
        %v7594 = vld [vmem:[%s7592 + $0x4] sm:$0xf]
        %v7595 = vld [vmem:[%s7592 + $0x8] sm:$0xf]
        %v7596 = vld [vmem:[%s7592 + $0xc] sm:$0xf]
        %v7601 = vunpack.c.l.b16 %v7593
        %v7602 = vunpack.c.l.b16 %v7594
        %v7603 = vunpack.c.l.b16 %v7595
        %v7604 = vunpack.c.l.b16 %v7596
        %v7605 = vpack.c.b16 %v7602, %v7601
        %v7606 = vpack.c.b16 %v7604, %v7603
        %v7610 = vsel %vm5822, %v7591, 0
        %7612 = vmatprep.subr.bf16.mxu0 0
        %7613 = vmatpush1.bf16.msra.mxu0 %v7605
        %7614 = vmatprep.subr.bf16.mxu0 0
        %7615 = vmatpush1.bf16.msra.mxu0 %v7606
        %7616 = vmatprep.subr.bf16.mxu0 0
        %7617 = vmatpush1.bf16.msra.mxu0 0
        %7618 = vmatprep.subr.bf16.mxu0 0
        %7619 = vmatpush1.bf16.msra.mxu0 0
        %7620 = vmatprep.subr.bf16.mxu0 0
        %7621 = vmatpush1.bf16.msra.mxu0 0
        %7622 = vmatprep.subr.bf16.mxu0 0
        %7623 = vmatpush1.bf16.msra.mxu0 0
        %7624 = vmatprep.subr.bf16.mxu0 0
        %7625 = vmatpush1.bf16.msra.mxu0 0
        %7626 = vmatprep.subr.bf16.mxu0 0
        %7627 = vmatpush1.bf16.msra.mxu0 0
        %7628 = vmatprep.subr.bf16.mxu0 0
        %7629 = vmatpush1.bf16.msra.mxu0 0
        %7630 = vmatprep.subr.bf16.mxu0 0
        %7631 = vmatpush1.bf16.msra.mxu0 0
        %7632 = vmatprep.subr.bf16.mxu0 0
        %7633 = vmatpush1.bf16.msra.mxu0 0
        %7634 = vmatprep.subr.bf16.mxu0 0
        %7635 = vmatpush1.bf16.msra.mxu0 0
        %7636 = vmatprep.subr.bf16.mxu0 0
        %7637 = vmatpush1.bf16.msra.mxu0 0
        %7638 = vmatprep.subr.bf16.mxu0 0
        %7639 = vmatpush1.bf16.msra.mxu0 0
        %7640 = vmatprep.subr.bf16.mxu0 0
        %7641 = vmatpush1.bf16.msra.mxu0 0
        %7642 = vmatprep.subr.bf16.mxu0 0
        %7643 = vmatpush1.bf16.msra.mxu0 0
        %7644 = vmatprep.mubr.bf16.mxu0 0
        %7645 = vmatmul.mubr.bf16.gmra.mrb[0].mxu0 %v7610
        %v7646 = vpop.f32.mrb[0].mxu0
        %v7647 = vadd.f32 0.0, %v7646
        %v7648 = vpop.f32.mrb[0].mxu0
        %v7649 = vpop.f32.mrb[0].mxu0
        %v7650 = vadd.f32 0.0, %v7649
        %v7651 = vpop.f32.mrb[0].mxu0
        %7652 = vdwg.mxu0
        %v7653 = vld [vmem:[#allocation8] sm:$0xff]
        %v7654 = vld [vmem:[#allocation8 + $0x8] sm:$0xff]
        %v7655 = vadd.f32 %v7653, %v7647
        %v7656 = vadd.f32 %v7654, %v7650
        %7657 = vst.msk [vmem:[#allocation8] sm:$0xff] %vm7416, %v7655
        %7658 = vst.msk [vmem:[#allocation8 + $0x8] sm:$0xff] %vm7416, %v7656
        %v7659 = vld [vmem:[%s7337 + $0x1] sm:$0xf]
        %v7660 = vld [vmem:[%s7337 + $0x9] sm:$0xf]
        %v7661 = vld [vmem:[%s7337 + $0x11] sm:$0xf]
        %v7662 = vld [vmem:[%s7337 + $0x19] sm:$0xf]
        %v7667 = vcombine.low %v7659, %v7660
        %v7668 = vcombine.low %v7661, %v7662
        %v7671 = vpack.c.bf16 %v7668, %v7667
        %s7672 = scalar_lea.vmem %s3, 64
        %v7673 = vld [vmem:[%s7672] sm:$0xf]
        %v7674 = vld [vmem:[%s7672 + $0x4] sm:$0xf]
        %v7675 = vld [vmem:[%s7672 + $0x8] sm:$0xf]
        %v7676 = vld [vmem:[%s7672 + $0xc] sm:$0xf]
        %v7681 = vunpack.c.l.b16 %v7673
        %v7682 = vunpack.c.l.b16 %v7674
        %v7683 = vunpack.c.l.b16 %v7675
        %v7684 = vunpack.c.l.b16 %v7676
        %v7685 = vpack.c.b16 %v7682, %v7681
        %v7686 = vpack.c.b16 %v7684, %v7683
        %v7690 = vsel %vm5822, %v7671, 0
        %7692 = vmatprep.subr.bf16.mxu0 0
        %7693 = vmatpush1.bf16.msra.mxu0 %v7685
        %7694 = vmatprep.subr.bf16.mxu0 0
        %7695 = vmatpush1.bf16.msra.mxu0 %v7686
        %7696 = vmatprep.subr.bf16.mxu0 0
        %7697 = vmatpush1.bf16.msra.mxu0 0
        %7698 = vmatprep.subr.bf16.mxu0 0
        %7699 = vmatpush1.bf16.msra.mxu0 0
        %7700 = vmatprep.subr.bf16.mxu0 0
        %7701 = vmatpush1.bf16.msra.mxu0 0
        %7702 = vmatprep.subr.bf16.mxu0 0
        %7703 = vmatpush1.bf16.msra.mxu0 0
        %7704 = vmatprep.subr.bf16.mxu0 0
        %7705 = vmatpush1.bf16.msra.mxu0 0
        %7706 = vmatprep.subr.bf16.mxu0 0
        %7707 = vmatpush1.bf16.msra.mxu0 0
        %7708 = vmatprep.subr.bf16.mxu0 0
        %7709 = vmatpush1.bf16.msra.mxu0 0
        %7710 = vmatprep.subr.bf16.mxu0 0
        %7711 = vmatpush1.bf16.msra.mxu0 0
        %7712 = vmatprep.subr.bf16.mxu0 0
        %7713 = vmatpush1.bf16.msra.mxu0 0
        %7714 = vmatprep.subr.bf16.mxu0 0
        %7715 = vmatpush1.bf16.msra.mxu0 0
        %7716 = vmatprep.subr.bf16.mxu0 0
        %7717 = vmatpush1.bf16.msra.mxu0 0
        %7718 = vmatprep.subr.bf16.mxu0 0
        %7719 = vmatpush1.bf16.msra.mxu0 0
        %7720 = vmatprep.subr.bf16.mxu0 0
        %7721 = vmatpush1.bf16.msra.mxu0 0
        %7722 = vmatprep.subr.bf16.mxu0 0
        %7723 = vmatpush1.bf16.msra.mxu0 0
        %7724 = vmatprep.mubr.bf16.mxu0 0
        %7725 = vmatmul.mubr.bf16.gmra.mrb[0].mxu0 %v7690
        %v7726 = vpop.f32.mrb[0].mxu0
        %v7727 = vadd.f32 0.0, %v7726
        %v7728 = vpop.f32.mrb[0].mxu0
        %v7729 = vpop.f32.mrb[0].mxu0
        %v7730 = vadd.f32 0.0, %v7729
        %v7731 = vpop.f32.mrb[0].mxu0
        %7732 = vdwg.mxu0
        %v7733 = vld [vmem:[#allocation8] sm:$0xff]
        %v7734 = vld [vmem:[#allocation8 + $0x8] sm:$0xff]
        %v7735 = vadd.f32 %v7733, %v7727
        %v7736 = vadd.f32 %v7734, %v7730
        %7737 = vst.msk [vmem:[#allocation8] sm:$0xff] %vm7416, %v7735
        %7738 = vst.msk [vmem:[#allocation8 + $0x8] sm:$0xff] %vm7416, %v7736
        %v7739 = vld [vmem:[%s7337 + $0x2] sm:$0xf]
        %v7740 = vld [vmem:[%s7337 + $0xa] sm:$0xf]
        %v7741 = vld [vmem:[%s7337 + $0x12] sm:$0xf]
        %v7742 = vld [vmem:[%s7337 + $0x1a] sm:$0xf]
        %v7747 = vcombine.low %v7739, %v7740
        %v7748 = vcombine.low %v7741, %v7742
        %v7751 = vpack.c.bf16 %v7748, %v7747
        %s7752 = scalar_lea.vmem %s3, 80
        %v7753 = vld [vmem:[%s7752] sm:$0xf]
        %v7754 = vld [vmem:[%s7752 + $0x4] sm:$0xf]
        %v7755 = vld [vmem:[%s7752 + $0x8] sm:$0xf]
        %v7756 = vld [vmem:[%s7752 + $0xc] sm:$0xf]
        %v7761 = vunpack.c.l.b16 %v7753
        %v7762 = vunpack.c.l.b16 %v7754
        %v7763 = vunpack.c.l.b16 %v7755
        %v7764 = vunpack.c.l.b16 %v7756
        %v7765 = vpack.c.b16 %v7762, %v7761
        %v7766 = vpack.c.b16 %v7764, %v7763
        %v7770 = vsel %vm5822, %v7751, 0
        %7772 = vmatprep.subr.bf16.mxu0 0
        %7773 = vmatpush1.bf16.msra.mxu0 %v7765
        %7774 = vmatprep.subr.bf16.mxu0 0
        %7775 = vmatpush1.bf16.msra.mxu0 %v7766
        %7776 = vmatprep.subr.bf16.mxu0 0
        %7777 = vmatpush1.bf16.msra.mxu0 0
        %7778 = vmatprep.subr.bf16.mxu0 0
        %7779 = vmatpush1.bf16.msra.mxu0 0
        %7780 = vmatprep.subr.bf16.mxu0 0
        %7781 = vmatpush1.bf16.msra.mxu0 0
        %7782 = vmatprep.subr.bf16.mxu0 0
        %7783 = vmatpush1.bf16.msra.mxu0 0
        %7784 = vmatprep.subr.bf16.mxu0 0
        %7785 = vmatpush1.bf16.msra.mxu0 0
        %7786 = vmatprep.subr.bf16.mxu0 0
        %7787 = vmatpush1.bf16.msra.mxu0 0
        %7788 = vmatprep.subr.bf16.mxu0 0
        %7789 = vmatpush1.bf16.msra.mxu0 0
        %7790 = vmatprep.subr.bf16.mxu0 0
        %7791 = vmatpush1.bf16.msra.mxu0 0
        %7792 = vmatprep.subr.bf16.mxu0 0
        %7793 = vmatpush1.bf16.msra.mxu0 0
        %7794 = vmatprep.subr.bf16.mxu0 0
        %7795 = vmatpush1.bf16.msra.mxu0 0
        %7796 = vmatprep.subr.bf16.mxu0 0
        %7797 = vmatpush1.bf16.msra.mxu0 0
        %7798 = vmatprep.subr.bf16.mxu0 0
        %7799 = vmatpush1.bf16.msra.mxu0 0
        %7800 = vmatprep.subr.bf16.mxu0 0
        %7801 = vmatpush1.bf16.msra.mxu0 0
        %7802 = vmatprep.subr.bf16.mxu0 0
        %7803 = vmatpush1.bf16.msra.mxu0 0
        %7804 = vmatprep.mubr.bf16.mxu0 0
        %7805 = vmatmul.mubr.bf16.gmra.mrb[0].mxu0 %v7770
        %v7806 = vpop.f32.mrb[0].mxu0
        %v7807 = vadd.f32 0.0, %v7806
        %v7808 = vpop.f32.mrb[0].mxu0
        %v7809 = vpop.f32.mrb[0].mxu0
        %v7810 = vadd.f32 0.0, %v7809
        %v7811 = vpop.f32.mrb[0].mxu0
        %7812 = vdwg.mxu0
        %v7813 = vld [vmem:[#allocation8] sm:$0xff]
        %v7814 = vld [vmem:[#allocation8 + $0x8] sm:$0xff]
        %v7815 = vadd.f32 %v7813, %v7807
        %v7816 = vadd.f32 %v7814, %v7810
        %7817 = vst.msk [vmem:[#allocation8] sm:$0xff] %vm7416, %v7815
        %7818 = vst.msk [vmem:[#allocation8 + $0x8] sm:$0xff] %vm7416, %v7816
        %s7819 = scalar_lea.vmem [#allocation4], 16
        %v7820 = vld [vmem:[%s7819] sm:$0xf]
        %v7821 = vld [vmem:[%s7819 + $0x8] sm:$0xf]
        %v7822 = vld [vmem:[%s7819 + $0x10] sm:$0xf]
        %v7823 = vld [vmem:[%s7819 + $0x18] sm:$0xf]
        %v7828 = vcombine.low %v7820, %v7821
        %v7829 = vcombine.low %v7822, %v7823
        %v7832 = vpack.c.bf16 %v7829, %v7828
        %s7833 = scalar_lea.vmem %s3, 96
        %v7834 = vld [vmem:[%s7833] sm:$0xf]
        %v7835 = vld [vmem:[%s7833 + $0x4] sm:$0xf]
        %v7836 = vld [vmem:[%s7833 + $0x8] sm:$0xf]
        %v7837 = vld [vmem:[%s7833 + $0xc] sm:$0xf]
        %v7842 = vunpack.c.l.b16 %v7834
        %v7843 = vunpack.c.l.b16 %v7835
        %v7844 = vunpack.c.l.b16 %v7836
        %v7845 = vunpack.c.l.b16 %v7837
        %v7846 = vpack.c.b16 %v7843, %v7842
        %v7847 = vpack.c.b16 %v7845, %v7844
        %v7851 = vsel %vm5822, %v7832, 0
        %7853 = vmatprep.subr.bf16.mxu0 0
        %7854 = vmatpush1.bf16.msra.mxu0 %v7846
        %7855 = vmatprep.subr.bf16.mxu0 0
        %7856 = vmatpush1.bf16.msra.mxu0 %v7847
        %7857 = vmatprep.subr.bf16.mxu0 0
        %7858 = vmatpush1.bf16.msra.mxu0 0
        %7859 = vmatprep.subr.bf16.mxu0 0
        %7860 = vmatpush1.bf16.msra.mxu0 0
        %7861 = vmatprep.subr.bf16.mxu0 0
        %7862 = vmatpush1.bf16.msra.mxu0 0
        %7863 = vmatprep.subr.bf16.mxu0 0
        %7864 = vmatpush1.bf16.msra.mxu0 0
        %7865 = vmatprep.subr.bf16.mxu0 0
        %7866 = vmatpush1.bf16.msra.mxu0 0
        %7867 = vmatprep.subr.bf16.mxu0 0
        %7868 = vmatpush1.bf16.msra.mxu0 0
        %7869 = vmatprep.subr.bf16.mxu0 0
        %7870 = vmatpush1.bf16.msra.mxu0 0
        %7871 = vmatprep.subr.bf16.mxu0 0
        %7872 = vmatpush1.bf16.msra.mxu0 0
        %7873 = vmatprep.subr.bf16.mxu0 0
        %7874 = vmatpush1.bf16.msra.mxu0 0
        %7875 = vmatprep.subr.bf16.mxu0 0
        %7876 = vmatpush1.bf16.msra.mxu0 0
        %7877 = vmatprep.subr.bf16.mxu0 0
        %7878 = vmatpush1.bf16.msra.mxu0 0
        %7879 = vmatprep.subr.bf16.mxu0 0
        %7880 = vmatpush1.bf16.msra.mxu0 0
        %7881 = vmatprep.subr.bf16.mxu0 0
        %7882 = vmatpush1.bf16.msra.mxu0 0
        %7883 = vmatprep.subr.bf16.mxu0 0
        %7884 = vmatpush1.bf16.msra.mxu0 0
        %7885 = vmatprep.mubr.bf16.mxu0 0
        %7886 = vmatmul.mubr.bf16.gmra.mrb[0].mxu0 %v7851
        %v7887 = vpop.f32.mrb[0].mxu0
        %v7888 = vadd.f32 0.0, %v7887
        %v7889 = vpop.f32.mrb[0].mxu0
        %v7890 = vpop.f32.mrb[0].mxu0
        %v7891 = vadd.f32 0.0, %v7890
        %v7892 = vpop.f32.mrb[0].mxu0
        %7893 = vdwg.mxu0
        %v7894 = vld [vmem:[#allocation8] sm:$0xff]
        %v7895 = vld [vmem:[#allocation8 + $0x8] sm:$0xff]
        %v7896 = vadd.f32 %v7894, %v7888
        %v7897 = vadd.f32 %v7895, %v7891
        %7898 = vst.msk [vmem:[#allocation8] sm:$0xff] %vm7416, %v7896
        %7899 = vst.msk [vmem:[#allocation8 + $0x8] sm:$0xff] %vm7416, %v7897
        %v7900 = vld [vmem:[%s7819 + $0x1] sm:$0xf]
        %v7901 = vld [vmem:[%s7819 + $0x9] sm:$0xf]
        %v7902 = vld [vmem:[%s7819 + $0x11] sm:$0xf]
        %v7903 = vld [vmem:[%s7819 + $0x19] sm:$0xf]
        %v7908 = vcombine.low %v7900, %v7901
        %v7909 = vcombine.low %v7902, %v7903
        %v7912 = vpack.c.bf16 %v7909, %v7908
        %s7913 = scalar_lea.vmem %s3, 112
        %v7914 = vld [vmem:[%s7913] sm:$0xf]
        %v7915 = vld [vmem:[%s7913 + $0x4] sm:$0xf]
        %v7916 = vld [vmem:[%s7913 + $0x8] sm:$0xf]
        %v7917 = vld [vmem:[%s7913 + $0xc] sm:$0xf]
        %v7922 = vunpack.c.l.b16 %v7914
        %v7923 = vunpack.c.l.b16 %v7915
        %v7924 = vunpack.c.l.b16 %v7916
        %v7925 = vunpack.c.l.b16 %v7917
        %v7926 = vpack.c.b16 %v7923, %v7922
        %v7927 = vpack.c.b16 %v7925, %v7924
        %v7931 = vsel %vm5822, %v7912, 0
        %7933 = vmatprep.subr.bf16.mxu0 0
        %7934 = vmatpush1.bf16.msra.mxu0 %v7926
        %7935 = vmatprep.subr.bf16.mxu0 0
        %7936 = vmatpush1.bf16.msra.mxu0 %v7927
        %7937 = vmatprep.subr.bf16.mxu0 0
        %7938 = vmatpush1.bf16.msra.mxu0 0
        %7939 = vmatprep.subr.bf16.mxu0 0
        %7940 = vmatpush1.bf16.msra.mxu0 0
        %7941 = vmatprep.subr.bf16.mxu0 0
        %7942 = vmatpush1.bf16.msra.mxu0 0
        %7943 = vmatprep.subr.bf16.mxu0 0
        %7944 = vmatpush1.bf16.msra.mxu0 0
        %7945 = vmatprep.subr.bf16.mxu0 0
        %7946 = vmatpush1.bf16.msra.mxu0 0
        %7947 = vmatprep.subr.bf16.mxu0 0
        %7948 = vmatpush1.bf16.msra.mxu0 0
        %7949 = vmatprep.subr.bf16.mxu0 0
        %7950 = vmatpush1.bf16.msra.mxu0 0
        %7951 = vmatprep.subr.bf16.mxu0 0
        %7952 = vmatpush1.bf16.msra.mxu0 0
        %7953 = vmatprep.subr.bf16.mxu0 0
        %7954 = vmatpush1.bf16.msra.mxu0 0
        %7955 = vmatprep.subr.bf16.mxu0 0
        %7956 = vmatpush1.bf16.msra.mxu0 0
        %7957 = vmatprep.subr.bf16.mxu0 0
        %7958 = vmatpush1.bf16.msra.mxu0 0
        %7959 = vmatprep.subr.bf16.mxu0 0
        %7960 = vmatpush1.bf16.msra.mxu0 0
        %7961 = vmatprep.subr.bf16.mxu0 0
        %7962 = vmatpush1.bf16.msra.mxu0 0
        %7963 = vmatprep.subr.bf16.mxu0 0
        %7964 = vmatpush1.bf16.msra.mxu0 0
        %7965 = vmatprep.mubr.bf16.mxu0 0
        %7966 = vmatmul.mubr.bf16.gmra.mrb[0].mxu0 %v7931
        %v7967 = vpop.f32.mrb[0].mxu0
        %v7968 = vadd.f32 0.0, %v7967
        %v7969 = vpop.f32.mrb[0].mxu0
        %v7970 = vpop.f32.mrb[0].mxu0
        %v7971 = vadd.f32 0.0, %v7970
        %v7972 = vpop.f32.mrb[0].mxu0
        %7973 = vdwg.mxu0
        %v7974 = vld [vmem:[#allocation8] sm:$0xff]
        %v7975 = vld [vmem:[#allocation8 + $0x8] sm:$0xff]
        %v7976 = vadd.f32 %v7974, %v7968
        %v7977 = vadd.f32 %v7975, %v7971
        %7978 = vst.msk [vmem:[#allocation8] sm:$0xff] %vm7416, %v7976
        %7979 = vst.msk [vmem:[#allocation8 + $0x8] sm:$0xff] %vm7416, %v7977
        %v7980 = vld [vmem:[%s7819 + $0x2] sm:$0xf]
        %v7981 = vld [vmem:[%s7819 + $0xa] sm:$0xf]
        %v7982 = vld [vmem:[%s7819 + $0x12] sm:$0xf]
        %v7983 = vld [vmem:[%s7819 + $0x1a] sm:$0xf]
        %v7988 = vcombine.low %v7980, %v7981
        %v7989 = vcombine.low %v7982, %v7983
        %v7992 = vpack.c.bf16 %v7989, %v7988
        %s7993 = scalar_lea.vmem %s3, 128
        %v7994 = vld [vmem:[%s7993] sm:$0xf]
        %v7995 = vld [vmem:[%s7993 + $0x4] sm:$0xf]
        %v7996 = vld [vmem:[%s7993 + $0x8] sm:$0xf]
        %v7997 = vld [vmem:[%s7993 + $0xc] sm:$0xf]
        %v8002 = vunpack.c.l.b16 %v7994
        %v8003 = vunpack.c.l.b16 %v7995
        %v8004 = vunpack.c.l.b16 %v7996
        %v8005 = vunpack.c.l.b16 %v7997
        %v8006 = vpack.c.b16 %v8003, %v8002
        %v8007 = vpack.c.b16 %v8005, %v8004
        %v8011 = vsel %vm5822, %v7992, 0
        %8013 = vmatprep.subr.bf16.mxu0 0
        %8014 = vmatpush1.bf16.msra.mxu0 %v8006
        %8015 = vmatprep.subr.bf16.mxu0 0
        %8016 = vmatpush1.bf16.msra.mxu0 %v8007
        %8017 = vmatprep.subr.bf16.mxu0 0
        %8018 = vmatpush1.bf16.msra.mxu0 0
        %8019 = vmatprep.subr.bf16.mxu0 0
        %8020 = vmatpush1.bf16.msra.mxu0 0
        %8021 = vmatprep.subr.bf16.mxu0 0
        %8022 = vmatpush1.bf16.msra.mxu0 0
        %8023 = vmatprep.subr.bf16.mxu0 0
        %8024 = vmatpush1.bf16.msra.mxu0 0
        %8025 = vmatprep.subr.bf16.mxu0 0
        %8026 = vmatpush1.bf16.msra.mxu0 0
        %8027 = vmatprep.subr.bf16.mxu0 0
        %8028 = vmatpush1.bf16.msra.mxu0 0
        %8029 = vmatprep.subr.bf16.mxu0 0
        %8030 = vmatpush1.bf16.msra.mxu0 0
        %8031 = vmatprep.subr.bf16.mxu0 0
        %8032 = vmatpush1.bf16.msra.mxu0 0
        %8033 = vmatprep.subr.bf16.mxu0 0
        %8034 = vmatpush1.bf16.msra.mxu0 0
        %8035 = vmatprep.subr.bf16.mxu0 0
        %8036 = vmatpush1.bf16.msra.mxu0 0
        %8037 = vmatprep.subr.bf16.mxu0 0
        %8038 = vmatpush1.bf16.msra.mxu0 0
        %8039 = vmatprep.subr.bf16.mxu0 0
        %8040 = vmatpush1.bf16.msra.mxu0 0
        %8041 = vmatprep.subr.bf16.mxu0 0
        %8042 = vmatpush1.bf16.msra.mxu0 0
        %8043 = vmatprep.subr.bf16.mxu0 0
        %8044 = vmatpush1.bf16.msra.mxu0 0
        %8045 = vmatprep.mubr.bf16.mxu0 0
        %8046 = vmatmul.mubr.bf16.gmra.mrb[0].mxu0 %v8011
        %v8047 = vpop.f32.mrb[0].mxu0
        %v8048 = vadd.f32 0.0, %v8047
        %v8049 = vpop.f32.mrb[0].mxu0
        %v8050 = vpop.f32.mrb[0].mxu0
        %v8051 = vadd.f32 0.0, %v8050
        %v8052 = vpop.f32.mrb[0].mxu0
        %8053 = vdwg.mxu0
        %v8054 = vld [vmem:[#allocation8] sm:$0xff]
        %v8055 = vld [vmem:[#allocation8 + $0x8] sm:$0xff]
        %v8056 = vadd.f32 %v8054, %v8048
        %v8057 = vadd.f32 %v8055, %v8051
        %8058 = vst.msk [vmem:[#allocation8] sm:$0xff] %vm7416, %v8056
        %8059 = vst.msk [vmem:[#allocation8 + $0x8] sm:$0xff] %vm7416, %v8057
        %v8060 = vld [vmem:[#allocation8] sm:$0xff]
        %v8061 = vld [vmem:[#allocation8 + $0x8] sm:$0xff]
        %v8062 = vld [vmem:[%s7] sm:$0x1]
        %v8064 = vlaneseq
        %v8065 = vshrl.u32 %v8064, 7
        %v8066 = vsub.s32 0, %v8065
        %v8067 = vrot.slane %v8062, %v8066
        %v8069 = vadd.f32 %v8060, %v8067
        %v8070 = vadd.f32 %v8061, %v8067
        %v8071 = vmax.f32 %v8069, 0.0
        %v8072 = vmax.f32 %v8070, 0.0
        %v8075 = vcombine.high %v8071, %v8071
        %v8077 = vunpack.c.l.s4 1983009808
        %v8078 = vunpack.c.0.s8 %v8077
        %v8079 = vlaneseq
        %v8080 = vshrl.u32 %v8079, 7
        %v8081 = vsub.s32 %v8078, %v8080
        %v8082 = vrot.slane %v8071, %v8081
        %v8084 = vunpack.c.l.s4 1983009808
        %v8085 = vunpack.c.0.s8 %v8084
        %v8086 = vlaneseq
        %v8087 = vshrl.u32 %v8086, 7
        %v8088 = vsub.s32 %v8085, %v8087
        %v8089 = vrot.slane %v8075, %v8088
        %v8090 = vcombine.high %v8082, %v8082
        %v8091 = vcombine.high %v8089, %v8089
        %v8092 = vcombine.high %v8072, %v8072
        %v8094 = vunpack.c.l.s4 1983009808
        %v8095 = vunpack.c.0.s8 %v8094
        %v8096 = vlaneseq
        %v8097 = vshrl.u32 %v8096, 7
        %v8098 = vsub.s32 %v8095, %v8097
        %v8099 = vrot.slane %v8072, %v8098
        %v8101 = vunpack.c.l.s4 1983009808
        %v8102 = vunpack.c.0.s8 %v8101
        %v8103 = vlaneseq
        %v8104 = vshrl.u32 %v8103, 7
        %v8105 = vsub.s32 %v8102, %v8104
        %v8106 = vrot.slane %v8092, %v8105
        %v8107 = vcombine.high %v8099, %v8099
        %v8108 = vcombine.high %v8106, %v8106
        %vm8117 = vcmask 517120
        %v8118 = vsel %vm8117, %v8082, -inf
        %v8119 = vrot.slane %v8118, 4
        %v8120 = vmax.f32 %v8118, %v8119
        %v8121 = vrot.slane %v8120, 2
        %v8122 = vmax.f32 %v8120, %v8121
        %v8123 = vrot.slane %v8122, 1
        %v8124 = vmax.f32 %v8122, %v8123
        %v8125 = vsel %vm8117, %v8090, -inf
        %v8126 = vrot.slane %v8125, 4
        %v8127 = vmax.f32 %v8125, %v8126
        %v8128 = vrot.slane %v8127, 2
        %v8129 = vmax.f32 %v8127, %v8128
        %v8130 = vrot.slane %v8129, 1
        %v8131 = vmax.f32 %v8129, %v8130
        %v8132 = vsel %vm8117, %v8089, -inf
        %v8133 = vrot.slane %v8132, 4
        %v8134 = vmax.f32 %v8132, %v8133
        %v8135 = vrot.slane %v8134, 2
        %v8136 = vmax.f32 %v8134, %v8135
        %v8137 = vrot.slane %v8136, 1
        %v8138 = vmax.f32 %v8136, %v8137
        %v8139 = vsel %vm8117, %v8091, -inf
        %v8140 = vrot.slane %v8139, 4
        %v8141 = vmax.f32 %v8139, %v8140
        %v8142 = vrot.slane %v8141, 2
        %v8143 = vmax.f32 %v8141, %v8142
        %v8144 = vrot.slane %v8143, 1
        %v8145 = vmax.f32 %v8143, %v8144
        %v8146 = vsel %vm8117, %v8099, -inf
        %v8147 = vrot.slane %v8146, 4
        %v8148 = vmax.f32 %v8146, %v8147
        %v8149 = vrot.slane %v8148, 2
        %v8150 = vmax.f32 %v8148, %v8149
        %v8151 = vrot.slane %v8150, 1
        %v8152 = vmax.f32 %v8150, %v8151
        %v8153 = vsel %vm8117, %v8107, -inf
        %v8154 = vrot.slane %v8153, 4
        %v8155 = vmax.f32 %v8153, %v8154
        %v8156 = vrot.slane %v8155, 2
        %v8157 = vmax.f32 %v8155, %v8156
        %v8158 = vrot.slane %v8157, 1
        %v8159 = vmax.f32 %v8157, %v8158
        %v8160 = vsel %vm8117, %v8106, -inf
        %v8161 = vrot.slane %v8160, 4
        %v8162 = vmax.f32 %v8160, %v8161
        %v8163 = vrot.slane %v8162, 2
        %v8164 = vmax.f32 %v8162, %v8163
        %v8165 = vrot.slane %v8164, 1
        %v8166 = vmax.f32 %v8164, %v8165
        %v8167 = vsel %vm8117, %v8108, -inf
        %v8168 = vrot.slane %v8167, 4
        %v8169 = vmax.f32 %v8167, %v8168
        %v8170 = vrot.slane %v8169, 2
        %v8171 = vmax.f32 %v8169, %v8170
        %v8172 = vrot.slane %v8171, 1
        %v8173 = vmax.f32 %v8171, %v8172
        %v8174 = vsel %vm7416, %v8124, -inf
        %v8175 = vsel %vm7416, %v8138, -inf
        %v8176 = vmax.f32 %v8174, %v8175
        %v8177 = vsel %vm7416, %v8131, -inf
        %v8178 = vsel %vm7416, %v8145, -inf
        %v8179 = vmax.f32 %v8177, %v8178
        %v8180 = vsel %vm7416, %v8152, -inf
        %v8181 = vsel %vm7416, %v8166, -inf
        %v8182 = vmax.f32 %v8180, %v8181
        %v8183 = vsel %vm7416, %v8159, -inf
        %v8184 = vsel %vm7416, %v8173, -inf
        %v8185 = vmax.f32 %v8183, %v8184
        %vm8186 = vcmask 519168
        %8187 = vst.msk [vmem:[#allocation5] sm:$0xf] %vm8186, 0.0
        %s8188 = scalar_lea.vmem [#allocation5], 12
        %8189 = vst.msk [vmem:[%s8188] sm:$0xf] %vm8186, 0.0
        %vm8190 = vcmask 516096
        %8191 = vst.msk [vmem:[#allocation5] sm:$0x1] %vm8190, 0.0
        %8192 = vst.msk [vmem:[#allocation5 + $0x4] sm:$0x1] %vm8190, 0.0
        %8193 = vst.msk [vmem:[#allocation5 + $0x8] sm:$0x1] %vm8190, 0.0
        %8194 = vst.msk [vmem:[#allocation5 + $0xc] sm:$0x1] %vm8190, 0.0
        %8195 = vst.msk [vmem:[#allocation5 + $0x3] sm:$0x1] %vm8190, 0.0
        %8196 = vst.msk [vmem:[#allocation5 + $0x7] sm:$0x1] %vm8190, 0.0
        %8197 = vst.msk [vmem:[#allocation5 + $0xb] sm:$0x1] %vm8190, 0.0
        %8198 = vst.msk [vmem:[#allocation5 + $0xf] sm:$0x1] %vm8190, 0.0
        %v8203 = vsel %vm5645, %v8179, %v8176
        %v8204 = vsel %vm5645, %v8185, %v8182
        %s8207 = scalar_lea.vmem [#allocation5], 4
        %8208 = vst.msk [vmem:[%s8207 + $0x1] sm:$0x3] %vm8117, %v8203
        %8209 = vst.msk [vmem:[%s8207 + $0x5] sm:$0x3] %vm8117, %v8204
        %v8210 = vld [vmem:[#allocation5] sm:$0x3]
        %v8211 = vld [vmem:[#allocation5 + $0x4] sm:$0x3]
        %v8214 = vcombine.low %v8210, %v8211
        %v8216 = vunpack.c.l.s4 1983009808
        %v8217 = vunpack.c.0.s8 %v8216
        %v8218 = vlaneseq
        %v8219 = vshrl.u32 %v8218, 7
        %v8220 = vsub.s32 %v8217, %v8219
        %v8221 = vrot.slane %v8214, %v8220
        %v8223 = vpack.c.bf16 %v8221, %v8221
        %v8224 = vld [vmem:[%s4] sm:$0xf]
        %v8225 = vld [vmem:[%s4 + $0x4] sm:$0xf]
        %v8226 = vld [vmem:[%s4 + $0x8] sm:$0xf]
        %v8227 = vld [vmem:[%s4 + $0xc] sm:$0xf]
        %v8228 = vld [vmem:[%s4 + $0x10] sm:$0xf]
        %v8229 = vld [vmem:[%s4 + $0x14] sm:$0xf]
        %v8230 = vld [vmem:[%s4 + $0x18] sm:$0xf]
        %v8231 = vld [vmem:[%s4 + $0x1c] sm:$0xf]
        %v8240 = vunpack.c.l.b16 %v8224
        %v8241 = vunpack.c.l.b16 %v8225
        %v8242 = vunpack.c.l.b16 %v8226
        %v8243 = vunpack.c.l.b16 %v8227
        %v8244 = vunpack.c.l.b16 %v8228
        %v8245 = vunpack.c.l.b16 %v8229
        %v8246 = vunpack.c.l.b16 %v8230
        %v8247 = vunpack.c.l.b16 %v8231
        %v8248 = vpack.c.b16 %v8241, %v8240
        %v8249 = vpack.c.b16 %v8243, %v8242
        %v8250 = vpack.c.b16 %v8245, %v8244
        %v8251 = vpack.c.b16 %v8247, %v8246
        %v8257 = vsel %vm7416, %v8223, 0
        %8259 = vmatprep.subr.bf16.mxu0 0
        %8260 = vmatpush1.bf16.msra.mxu0 %v8248
        %8261 = vmatprep.subr.bf16.mxu0 0
        %8262 = vmatpush1.bf16.msra.mxu0 %v8249
        %8263 = vmatprep.subr.bf16.mxu0 0
        %8264 = vmatpush1.bf16.msra.mxu0 %v8250
        %8265 = vmatprep.subr.bf16.mxu0 0
        %8266 = vmatpush1.bf16.msra.mxu0 %v8251
        %8267 = vmatprep.subr.bf16.mxu0 0
        %8268 = vmatpush1.bf16.msra.mxu0 0
        %8269 = vmatprep.subr.bf16.mxu0 0
        %8270 = vmatpush1.bf16.msra.mxu0 0
        %8271 = vmatprep.subr.bf16.mxu0 0
        %8272 = vmatpush1.bf16.msra.mxu0 0
        %8273 = vmatprep.subr.bf16.mxu0 0
        %8274 = vmatpush1.bf16.msra.mxu0 0
        %8275 = vmatprep.subr.bf16.mxu0 0
        %8276 = vmatpush1.bf16.msra.mxu0 0
        %8277 = vmatprep.subr.bf16.mxu0 0
        %8278 = vmatpush1.bf16.msra.mxu0 0
        %8279 = vmatprep.subr.bf16.mxu0 0
        %8280 = vmatpush1.bf16.msra.mxu0 0
        %8281 = vmatprep.subr.bf16.mxu0 0
        %8282 = vmatpush1.bf16.msra.mxu0 0
        %8283 = vmatprep.subr.bf16.mxu0 0
        %8284 = vmatpush1.bf16.msra.mxu0 0
        %8285 = vmatprep.subr.bf16.mxu0 0
        %8286 = vmatpush1.bf16.msra.mxu0 0
        %8287 = vmatprep.subr.bf16.mxu0 0
        %8288 = vmatpush1.bf16.msra.mxu0 0
        %8289 = vmatprep.subr.bf16.mxu0 0
        %8290 = vmatpush1.bf16.msra.mxu0 0
        %8291 = vmatprep.mubr.bf16.mxu0 0
        %8292 = vmatmul.mubr.bf16.gmra.mrb[0].mxu0 %v8257
        %v8293 = vpop.f32.mrb[0].mxu0
        %v8294 = vadd.f32 0.0, %v8293
        %v8295 = vpop.f32.mrb[0].mxu0
        %v8296 = vpop.f32.mrb[0].mxu0
        %v8297 = vpop.f32.mrb[0].mxu0
        %8298 = vdwg.mxu0
        %8299 = vst [vmem:[#allocation9] sm:$0xf] %v8294
        %v8300 = vld [vmem:[#allocation5 + $0x1] sm:$0x3]
        %v8301 = vld [vmem:[#allocation5 + $0x5] sm:$0x3]
        %v8304 = vcombine.low %v8300, %v8301
        %v8306 = vunpack.c.l.s4 1983009808
        %v8307 = vunpack.c.0.s8 %v8306
        %v8308 = vlaneseq
        %v8309 = vshrl.u32 %v8308, 7
        %v8310 = vsub.s32 %v8307, %v8309
        %v8311 = vrot.slane %v8304, %v8310
        %v8313 = vpack.c.bf16 %v8311, %v8311
        %s8314 = scalar_lea.vmem %s4, 32
        %v8315 = vld [vmem:[%s8314] sm:$0xf]
        %v8316 = vld [vmem:[%s8314 + $0x4] sm:$0xf]
        %v8317 = vld [vmem:[%s8314 + $0x8] sm:$0xf]
        %v8318 = vld [vmem:[%s8314 + $0xc] sm:$0xf]
        %v8319 = vld [vmem:[%s8314 + $0x10] sm:$0xf]
        %v8320 = vld [vmem:[%s8314 + $0x14] sm:$0xf]
        %v8321 = vld [vmem:[%s8314 + $0x18] sm:$0xf]
        %v8322 = vld [vmem:[%s8314 + $0x1c] sm:$0xf]
        %v8331 = vunpack.c.l.b16 %v8315
        %v8332 = vunpack.c.l.b16 %v8316
        %v8333 = vunpack.c.l.b16 %v8317
        %v8334 = vunpack.c.l.b16 %v8318
        %v8335 = vunpack.c.l.b16 %v8319
        %v8336 = vunpack.c.l.b16 %v8320
        %v8337 = vunpack.c.l.b16 %v8321
        %v8338 = vunpack.c.l.b16 %v8322
        %v8339 = vpack.c.b16 %v8332, %v8331
        %v8340 = vpack.c.b16 %v8334, %v8333
        %v8341 = vpack.c.b16 %v8336, %v8335
        %v8342 = vpack.c.b16 %v8338, %v8337
        %v8348 = vsel %vm7416, %v8313, 0
        %8350 = vmatprep.subr.bf16.mxu0 0
        %8351 = vmatpush1.bf16.msra.mxu0 %v8339
        %8352 = vmatprep.subr.bf16.mxu0 0
        %8353 = vmatpush1.bf16.msra.mxu0 %v8340
        %8354 = vmatprep.subr.bf16.mxu0 0
        %8355 = vmatpush1.bf16.msra.mxu0 %v8341
        %8356 = vmatprep.subr.bf16.mxu0 0
        %8357 = vmatpush1.bf16.msra.mxu0 %v8342
        %8358 = vmatprep.subr.bf16.mxu0 0
        %8359 = vmatpush1.bf16.msra.mxu0 0
        %8360 = vmatprep.subr.bf16.mxu0 0
        %8361 = vmatpush1.bf16.msra.mxu0 0
        %8362 = vmatprep.subr.bf16.mxu0 0
        %8363 = vmatpush1.bf16.msra.mxu0 0
        %8364 = vmatprep.subr.bf16.mxu0 0
        %8365 = vmatpush1.bf16.msra.mxu0 0
        %8366 = vmatprep.subr.bf16.mxu0 0
        %8367 = vmatpush1.bf16.msra.mxu0 0
        %8368 = vmatprep.subr.bf16.mxu0 0
        %8369 = vmatpush1.bf16.msra.mxu0 0
        %8370 = vmatprep.subr.bf16.mxu0 0
        %8371 = vmatpush1.bf16.msra.mxu0 0
        %8372 = vmatprep.subr.bf16.mxu0 0
        %8373 = vmatpush1.bf16.msra.mxu0 0
        %8374 = vmatprep.subr.bf16.mxu0 0
        %8375 = vmatpush1.bf16.msra.mxu0 0
        %8376 = vmatprep.subr.bf16.mxu0 0
        %8377 = vmatpush1.bf16.msra.mxu0 0
        %8378 = vmatprep.subr.bf16.mxu0 0
        %8379 = vmatpush1.bf16.msra.mxu0 0
        %8380 = vmatprep.subr.bf16.mxu0 0
        %8381 = vmatpush1.bf16.msra.mxu0 0
        %8382 = vmatprep.mubr.bf16.mxu0 0
        %8383 = vmatmul.mubr.bf16.gmra.mrb[0].mxu0 %v8348
        %v8384 = vpop.f32.mrb[0].mxu0
        %v8385 = vadd.f32 0.0, %v8384
        %v8386 = vpop.f32.mrb[0].mxu0
        %v8387 = vpop.f32.mrb[0].mxu0
        %v8388 = vpop.f32.mrb[0].mxu0
        %8389 = vdwg.mxu0
        %v8390 = vld [vmem:[#allocation9] sm:$0xf]
        %v8391 = vadd.f32 %v8390, %v8385
        %8392 = vst [vmem:[#allocation9] sm:$0xf] %v8391
        %v8393 = vld [vmem:[#allocation5 + $0x2] sm:$0x3]
        %v8394 = vld [vmem:[#allocation5 + $0x6] sm:$0x3]
        %v8397 = vcombine.low %v8393, %v8394
        %v8399 = vunpack.c.l.s4 1983009808
        %v8400 = vunpack.c.0.s8 %v8399
        %v8401 = vlaneseq
        %v8402 = vshrl.u32 %v8401, 7
        %v8403 = vsub.s32 %v8400, %v8402
        %v8404 = vrot.slane %v8397, %v8403
        %v8406 = vpack.c.bf16 %v8404, %v8404
        %s8407 = scalar_lea.vmem %s4, 64
        %v8408 = vld [vmem:[%s8407] sm:$0xf]
        %v8409 = vld [vmem:[%s8407 + $0x4] sm:$0xf]
        %v8410 = vld [vmem:[%s8407 + $0x8] sm:$0xf]
        %v8411 = vld [vmem:[%s8407 + $0xc] sm:$0xf]
        %v8412 = vld [vmem:[%s8407 + $0x10] sm:$0xf]
        %v8413 = vld [vmem:[%s8407 + $0x14] sm:$0xf]
        %v8414 = vld [vmem:[%s8407 + $0x18] sm:$0xf]
        %v8415 = vld [vmem:[%s8407 + $0x1c] sm:$0xf]
        %v8424 = vunpack.c.l.b16 %v8408
        %v8425 = vunpack.c.l.b16 %v8409
        %v8426 = vunpack.c.l.b16 %v8410
        %v8427 = vunpack.c.l.b16 %v8411
        %v8428 = vunpack.c.l.b16 %v8412
        %v8429 = vunpack.c.l.b16 %v8413
        %v8430 = vunpack.c.l.b16 %v8414
        %v8431 = vunpack.c.l.b16 %v8415
        %v8432 = vpack.c.b16 %v8425, %v8424
        %v8433 = vpack.c.b16 %v8427, %v8426
        %v8434 = vpack.c.b16 %v8429, %v8428
        %v8435 = vpack.c.b16 %v8431, %v8430
        %v8441 = vsel %vm7416, %v8406, 0
        %8443 = vmatprep.subr.bf16.mxu0 0
        %8444 = vmatpush1.bf16.msra.mxu0 %v8432
        %8445 = vmatprep.subr.bf16.mxu0 0
        %8446 = vmatpush1.bf16.msra.mxu0 %v8433
        %8447 = vmatprep.subr.bf16.mxu0 0
        %8448 = vmatpush1.bf16.msra.mxu0 %v8434
        %8449 = vmatprep.subr.bf16.mxu0 0
        %8450 = vmatpush1.bf16.msra.mxu0 %v8435
        %8451 = vmatprep.subr.bf16.mxu0 0
        %8452 = vmatpush1.bf16.msra.mxu0 0
        %8453 = vmatprep.subr.bf16.mxu0 0
        %8454 = vmatpush1.bf16.msra.mxu0 0
        %8455 = vmatprep.subr.bf16.mxu0 0
        %8456 = vmatpush1.bf16.msra.mxu0 0
        %8457 = vmatprep.subr.bf16.mxu0 0
        %8458 = vmatpush1.bf16.msra.mxu0 0
        %8459 = vmatprep.subr.bf16.mxu0 0
        %8460 = vmatpush1.bf16.msra.mxu0 0
        %8461 = vmatprep.subr.bf16.mxu0 0
        %8462 = vmatpush1.bf16.msra.mxu0 0
        %8463 = vmatprep.subr.bf16.mxu0 0
        %8464 = vmatpush1.bf16.msra.mxu0 0
        %8465 = vmatprep.subr.bf16.mxu0 0
        %8466 = vmatpush1.bf16.msra.mxu0 0
        %8467 = vmatprep.subr.bf16.mxu0 0
        %8468 = vmatpush1.bf16.msra.mxu0 0
        %8469 = vmatprep.subr.bf16.mxu0 0
        %8470 = vmatpush1.bf16.msra.mxu0 0
        %8471 = vmatprep.subr.bf16.mxu0 0
        %8472 = vmatpush1.bf16.msra.mxu0 0
        %8473 = vmatprep.subr.bf16.mxu0 0
        %8474 = vmatpush1.bf16.msra.mxu0 0
        %8475 = vmatprep.mubr.bf16.mxu0 0
        %8476 = vmatmul.mubr.bf16.gmra.mrb[0].mxu0 %v8441
        %v8477 = vpop.f32.mrb[0].mxu0
        %v8478 = vadd.f32 0.0, %v8477
        %v8479 = vpop.f32.mrb[0].mxu0
        %v8480 = vpop.f32.mrb[0].mxu0
        %v8481 = vpop.f32.mrb[0].mxu0
        %8482 = vdwg.mxu0
        %v8483 = vld [vmem:[#allocation9] sm:$0xf]
        %v8484 = vadd.f32 %v8483, %v8478
        %8485 = vst [vmem:[#allocation9] sm:$0xf] %v8484
        %v8486 = vld [vmem:[%s8207] sm:$0x3]
        %v8487 = vld [vmem:[%s8207 + $0x4] sm:$0x3]
        %v8490 = vcombine.low %v8486, %v8487
        %v8492 = vunpack.c.l.s4 1983009808
        %v8493 = vunpack.c.0.s8 %v8492
        %v8494 = vlaneseq
        %v8495 = vshrl.u32 %v8494, 7
        %v8496 = vsub.s32 %v8493, %v8495
        %v8497 = vrot.slane %v8490, %v8496
        %v8499 = vpack.c.bf16 %v8497, %v8497
        %s8500 = scalar_lea.vmem %s4, 96
        %v8501 = vld [vmem:[%s8500] sm:$0xf]
        %v8502 = vld [vmem:[%s8500 + $0x4] sm:$0xf]
        %v8503 = vld [vmem:[%s8500 + $0x8] sm:$0xf]
        %v8504 = vld [vmem:[%s8500 + $0xc] sm:$0xf]
        %v8505 = vld [vmem:[%s8500 + $0x10] sm:$0xf]
        %v8506 = vld [vmem:[%s8500 + $0x14] sm:$0xf]
        %v8507 = vld [vmem:[%s8500 + $0x18] sm:$0xf]
        %v8508 = vld [vmem:[%s8500 + $0x1c] sm:$0xf]
        %v8517 = vunpack.c.l.b16 %v8501
        %v8518 = vunpack.c.l.b16 %v8502
        %v8519 = vunpack.c.l.b16 %v8503
        %v8520 = vunpack.c.l.b16 %v8504
        %v8521 = vunpack.c.l.b16 %v8505
        %v8522 = vunpack.c.l.b16 %v8506
        %v8523 = vunpack.c.l.b16 %v8507
        %v8524 = vunpack.c.l.b16 %v8508
        %v8525 = vpack.c.b16 %v8518, %v8517
        %v8526 = vpack.c.b16 %v8520, %v8519
        %v8527 = vpack.c.b16 %v8522, %v8521
        %v8528 = vpack.c.b16 %v8524, %v8523
        %v8534 = vsel %vm7416, %v8499, 0
        %8536 = vmatprep.subr.bf16.mxu0 0
        %8537 = vmatpush1.bf16.msra.mxu0 %v8525
        %8538 = vmatprep.subr.bf16.mxu0 0
        %8539 = vmatpush1.bf16.msra.mxu0 %v8526
        %8540 = vmatprep.subr.bf16.mxu0 0
        %8541 = vmatpush1.bf16.msra.mxu0 %v8527
        %8542 = vmatprep.subr.bf16.mxu0 0
        %8543 = vmatpush1.bf16.msra.mxu0 %v8528
        %8544 = vmatprep.subr.bf16.mxu0 0
        %8545 = vmatpush1.bf16.msra.mxu0 0
        %8546 = vmatprep.subr.bf16.mxu0 0
        %8547 = vmatpush1.bf16.msra.mxu0 0
        %8548 = vmatprep.subr.bf16.mxu0 0
        %8549 = vmatpush1.bf16.msra.mxu0 0
        %8550 = vmatprep.subr.bf16.mxu0 0
        %8551 = vmatpush1.bf16.msra.mxu0 0
        %8552 = vmatprep.subr.bf16.mxu0 0
        %8553 = vmatpush1.bf16.msra.mxu0 0
        %8554 = vmatprep.subr.bf16.mxu0 0
        %8555 = vmatpush1.bf16.msra.mxu0 0
        %8556 = vmatprep.subr.bf16.mxu0 0
        %8557 = vmatpush1.bf16.msra.mxu0 0
        %8558 = vmatprep.subr.bf16.mxu0 0
        %8559 = vmatpush1.bf16.msra.mxu0 0
        %8560 = vmatprep.subr.bf16.mxu0 0
        %8561 = vmatpush1.bf16.msra.mxu0 0
        %8562 = vmatprep.subr.bf16.mxu0 0
        %8563 = vmatpush1.bf16.msra.mxu0 0
        %8564 = vmatprep.subr.bf16.mxu0 0
        %8565 = vmatpush1.bf16.msra.mxu0 0
        %8566 = vmatprep.subr.bf16.mxu0 0
        %8567 = vmatpush1.bf16.msra.mxu0 0
        %8568 = vmatprep.mubr.bf16.mxu0 0
        %8569 = vmatmul.mubr.bf16.gmra.mrb[0].mxu0 %v8534
        %v8570 = vpop.f32.mrb[0].mxu0
        %v8571 = vadd.f32 0.0, %v8570
        %v8572 = vpop.f32.mrb[0].mxu0
        %v8573 = vpop.f32.mrb[0].mxu0
        %v8574 = vpop.f32.mrb[0].mxu0
        %8575 = vdwg.mxu0
        %v8576 = vld [vmem:[#allocation9] sm:$0xf]
        %v8577 = vadd.f32 %v8576, %v8571
        %8578 = vst [vmem:[#allocation9] sm:$0xf] %v8577
        %v8579 = vld [vmem:[%s8207 + $0x1] sm:$0x3]
        %v8580 = vld [vmem:[%s8207 + $0x5] sm:$0x3]
        %v8583 = vcombine.low %v8579, %v8580
        %v8585 = vunpack.c.l.s4 1983009808
        %v8586 = vunpack.c.0.s8 %v8585
        %v8587 = vlaneseq
        %v8588 = vshrl.u32 %v8587, 7
        %v8589 = vsub.s32 %v8586, %v8588
        %v8590 = vrot.slane %v8583, %v8589
        %v8592 = vpack.c.bf16 %v8590, %v8590
        %s8593 = scalar_lea.vmem %s4, 128
        %v8594 = vld [vmem:[%s8593] sm:$0xf]
        %v8595 = vld [vmem:[%s8593 + $0x4] sm:$0xf]
        %v8596 = vld [vmem:[%s8593 + $0x8] sm:$0xf]
        %v8597 = vld [vmem:[%s8593 + $0xc] sm:$0xf]
        %v8598 = vld [vmem:[%s8593 + $0x10] sm:$0xf]
        %v8599 = vld [vmem:[%s8593 + $0x14] sm:$0xf]
        %v8600 = vld [vmem:[%s8593 + $0x18] sm:$0xf]
        %v8601 = vld [vmem:[%s8593 + $0x1c] sm:$0xf]
        %v8610 = vunpack.c.l.b16 %v8594
        %v8611 = vunpack.c.l.b16 %v8595
        %v8612 = vunpack.c.l.b16 %v8596
        %v8613 = vunpack.c.l.b16 %v8597
        %v8614 = vunpack.c.l.b16 %v8598
        %v8615 = vunpack.c.l.b16 %v8599
        %v8616 = vunpack.c.l.b16 %v8600
        %v8617 = vunpack.c.l.b16 %v8601
        %v8618 = vpack.c.b16 %v8611, %v8610
        %v8619 = vpack.c.b16 %v8613, %v8612
        %v8620 = vpack.c.b16 %v8615, %v8614
        %v8621 = vpack.c.b16 %v8617, %v8616
        %v8627 = vsel %vm7416, %v8592, 0
        %8629 = vmatprep.subr.bf16.mxu0 0
        %8630 = vmatpush1.bf16.msra.mxu0 %v8618
        %8631 = vmatprep.subr.bf16.mxu0 0
        %8632 = vmatpush1.bf16.msra.mxu0 %v8619
        %8633 = vmatprep.subr.bf16.mxu0 0
        %8634 = vmatpush1.bf16.msra.mxu0 %v8620
        %8635 = vmatprep.subr.bf16.mxu0 0
        %8636 = vmatpush1.bf16.msra.mxu0 %v8621
        %8637 = vmatprep.subr.bf16.mxu0 0
        %8638 = vmatpush1.bf16.msra.mxu0 0
        %8639 = vmatprep.subr.bf16.mxu0 0
        %8640 = vmatpush1.bf16.msra.mxu0 0
        %8641 = vmatprep.subr.bf16.mxu0 0
        %8642 = vmatpush1.bf16.msra.mxu0 0
        %8643 = vmatprep.subr.bf16.mxu0 0
        %8644 = vmatpush1.bf16.msra.mxu0 0
        %8645 = vmatprep.subr.bf16.mxu0 0
        %8646 = vmatpush1.bf16.msra.mxu0 0
        %8647 = vmatprep.subr.bf16.mxu0 0
        %8648 = vmatpush1.bf16.msra.mxu0 0
        %8649 = vmatprep.subr.bf16.mxu0 0
        %8650 = vmatpush1.bf16.msra.mxu0 0
        %8651 = vmatprep.subr.bf16.mxu0 0
        %8652 = vmatpush1.bf16.msra.mxu0 0
        %8653 = vmatprep.subr.bf16.mxu0 0
        %8654 = vmatpush1.bf16.msra.mxu0 0
        %8655 = vmatprep.subr.bf16.mxu0 0
        %8656 = vmatpush1.bf16.msra.mxu0 0
        %8657 = vmatprep.subr.bf16.mxu0 0
        %8658 = vmatpush1.bf16.msra.mxu0 0
        %8659 = vmatprep.subr.bf16.mxu0 0
        %8660 = vmatpush1.bf16.msra.mxu0 0
        %8661 = vmatprep.mubr.bf16.mxu0 0
        %8662 = vmatmul.mubr.bf16.gmra.mrb[0].mxu0 %v8627
        %v8663 = vpop.f32.mrb[0].mxu0
        %v8664 = vadd.f32 0.0, %v8663
        %v8665 = vpop.f32.mrb[0].mxu0
        %v8666 = vpop.f32.mrb[0].mxu0
        %v8667 = vpop.f32.mrb[0].mxu0
        %8668 = vdwg.mxu0
        %v8669 = vld [vmem:[#allocation9] sm:$0xf]
        %v8670 = vadd.f32 %v8669, %v8664
        %8671 = vst [vmem:[#allocation9] sm:$0xf] %v8670
        %v8672 = vld [vmem:[%s8207 + $0x2] sm:$0x3]
        %v8673 = vld [vmem:[%s8207 + $0x6] sm:$0x3]
        %v8676 = vcombine.low %v8672, %v8673
        %v8678 = vunpack.c.l.s4 1983009808
        %v8679 = vunpack.c.0.s8 %v8678
        %v8680 = vlaneseq
        %v8681 = vshrl.u32 %v8680, 7
        %v8682 = vsub.s32 %v8679, %v8681
        %v8683 = vrot.slane %v8676, %v8682
        %v8685 = vpack.c.bf16 %v8683, %v8683
        %s8686 = scalar_lea.vmem %s4, 160
        %v8687 = vld [vmem:[%s8686] sm:$0xf]
        %v8688 = vld [vmem:[%s8686 + $0x4] sm:$0xf]
        %v8689 = vld [vmem:[%s8686 + $0x8] sm:$0xf]
        %v8690 = vld [vmem:[%s8686 + $0xc] sm:$0xf]
        %v8691 = vld [vmem:[%s8686 + $0x10] sm:$0xf]
        %v8692 = vld [vmem:[%s8686 + $0x14] sm:$0xf]
        %v8693 = vld [vmem:[%s8686 + $0x18] sm:$0xf]
        %v8694 = vld [vmem:[%s8686 + $0x1c] sm:$0xf]
        %v8703 = vunpack.c.l.b16 %v8687
        %v8704 = vunpack.c.l.b16 %v8688
        %v8705 = vunpack.c.l.b16 %v8689
        %v8706 = vunpack.c.l.b16 %v8690
        %v8707 = vunpack.c.l.b16 %v8691
        %v8708 = vunpack.c.l.b16 %v8692
        %v8709 = vunpack.c.l.b16 %v8693
        %v8710 = vunpack.c.l.b16 %v8694
        %v8711 = vpack.c.b16 %v8704, %v8703
        %v8712 = vpack.c.b16 %v8706, %v8705
        %v8713 = vpack.c.b16 %v8708, %v8707
        %v8714 = vpack.c.b16 %v8710, %v8709
        %v8720 = vsel %vm7416, %v8685, 0
        %8722 = vmatprep.subr.bf16.mxu0 0
        %8723 = vmatpush1.bf16.msra.mxu0 %v8711
        %8724 = vmatprep.subr.bf16.mxu0 0
        %8725 = vmatpush1.bf16.msra.mxu0 %v8712
        %8726 = vmatprep.subr.bf16.mxu0 0
        %8727 = vmatpush1.bf16.msra.mxu0 %v8713
        %8728 = vmatprep.subr.bf16.mxu0 0
        %8729 = vmatpush1.bf16.msra.mxu0 %v8714
        %8730 = vmatprep.subr.bf16.mxu0 0
        %8731 = vmatpush1.bf16.msra.mxu0 0
        %8732 = vmatprep.subr.bf16.mxu0 0
        %8733 = vmatpush1.bf16.msra.mxu0 0
        %8734 = vmatprep.subr.bf16.mxu0 0
        %8735 = vmatpush1.bf16.msra.mxu0 0
        %8736 = vmatprep.subr.bf16.mxu0 0
        %8737 = vmatpush1.bf16.msra.mxu0 0
        %8738 = vmatprep.subr.bf16.mxu0 0
        %8739 = vmatpush1.bf16.msra.mxu0 0
        %8740 = vmatprep.subr.bf16.mxu0 0
        %8741 = vmatpush1.bf16.msra.mxu0 0
        %8742 = vmatprep.subr.bf16.mxu0 0
        %8743 = vmatpush1.bf16.msra.mxu0 0
        %8744 = vmatprep.subr.bf16.mxu0 0
        %8745 = vmatpush1.bf16.msra.mxu0 0
        %8746 = vmatprep.subr.bf16.mxu0 0
        %8747 = vmatpush1.bf16.msra.mxu0 0
        %8748 = vmatprep.subr.bf16.mxu0 0
        %8749 = vmatpush1.bf16.msra.mxu0 0
        %8750 = vmatprep.subr.bf16.mxu0 0
        %8751 = vmatpush1.bf16.msra.mxu0 0
        %8752 = vmatprep.subr.bf16.mxu0 0
        %8753 = vmatpush1.bf16.msra.mxu0 0
        %8754 = vmatprep.mubr.bf16.mxu0 0
        %8755 = vmatmul.mubr.bf16.gmra.mrb[0].mxu0 %v8720
        %v8756 = vpop.f32.mrb[0].mxu0
        %v8757 = vadd.f32 0.0, %v8756
        %v8758 = vpop.f32.mrb[0].mxu0
        %v8759 = vpop.f32.mrb[0].mxu0
        %v8760 = vpop.f32.mrb[0].mxu0
        %8761 = vdwg.mxu0
        %v8762 = vld [vmem:[#allocation9] sm:$0xf]
        %v8763 = vadd.f32 %v8762, %v8757
        %8764 = vst [vmem:[#allocation9] sm:$0xf] %v8763
        %s8765 = scalar_lea.vmem [#allocation5], 8
        %v8766 = vld [vmem:[%s8765] sm:$0x3]
        %v8767 = vld [vmem:[%s8765 + $0x4] sm:$0x3]
        %v8770 = vcombine.low %v8766, %v8767
        %v8772 = vunpack.c.l.s4 1983009808
        %v8773 = vunpack.c.0.s8 %v8772
        %v8774 = vlaneseq
        %v8775 = vshrl.u32 %v8774, 7
        %v8776 = vsub.s32 %v8773, %v8775
        %v8777 = vrot.slane %v8770, %v8776
        %v8779 = vpack.c.bf16 %v8777, %v8777
        %s8780 = scalar_lea.vmem %s4, 192
        %v8781 = vld [vmem:[%s8780] sm:$0xf]
        %v8782 = vld [vmem:[%s8780 + $0x4] sm:$0xf]
        %v8783 = vld [vmem:[%s8780 + $0x8] sm:$0xf]
        %v8784 = vld [vmem:[%s8780 + $0xc] sm:$0xf]
        %v8785 = vld [vmem:[%s8780 + $0x10] sm:$0xf]
        %v8786 = vld [vmem:[%s8780 + $0x14] sm:$0xf]
        %v8787 = vld [vmem:[%s8780 + $0x18] sm:$0xf]
        %v8788 = vld [vmem:[%s8780 + $0x1c] sm:$0xf]
        %v8797 = vunpack.c.l.b16 %v8781
        %v8798 = vunpack.c.l.b16 %v8782
        %v8799 = vunpack.c.l.b16 %v8783
        %v8800 = vunpack.c.l.b16 %v8784
        %v8801 = vunpack.c.l.b16 %v8785
        %v8802 = vunpack.c.l.b16 %v8786
        %v8803 = vunpack.c.l.b16 %v8787
        %v8804 = vunpack.c.l.b16 %v8788
        %v8805 = vpack.c.b16 %v8798, %v8797
        %v8806 = vpack.c.b16 %v8800, %v8799
        %v8807 = vpack.c.b16 %v8802, %v8801
        %v8808 = vpack.c.b16 %v8804, %v8803
        %v8814 = vsel %vm7416, %v8779, 0
        %8816 = vmatprep.subr.bf16.mxu0 0
        %8817 = vmatpush1.bf16.msra.mxu0 %v8805
        %8818 = vmatprep.subr.bf16.mxu0 0
        %8819 = vmatpush1.bf16.msra.mxu0 %v8806
        %8820 = vmatprep.subr.bf16.mxu0 0
        %8821 = vmatpush1.bf16.msra.mxu0 %v8807
        %8822 = vmatprep.subr.bf16.mxu0 0
        %8823 = vmatpush1.bf16.msra.mxu0 %v8808
        %8824 = vmatprep.subr.bf16.mxu0 0
        %8825 = vmatpush1.bf16.msra.mxu0 0
        %8826 = vmatprep.subr.bf16.mxu0 0
        %8827 = vmatpush1.bf16.msra.mxu0 0
        %8828 = vmatprep.subr.bf16.mxu0 0
        %8829 = vmatpush1.bf16.msra.mxu0 0
        %8830 = vmatprep.subr.bf16.mxu0 0
        %8831 = vmatpush1.bf16.msra.mxu0 0
        %8832 = vmatprep.subr.bf16.mxu0 0
        %8833 = vmatpush1.bf16.msra.mxu0 0
        %8834 = vmatprep.subr.bf16.mxu0 0
        %8835 = vmatpush1.bf16.msra.mxu0 0
        %8836 = vmatprep.subr.bf16.mxu0 0
        %8837 = vmatpush1.bf16.msra.mxu0 0
        %8838 = vmatprep.subr.bf16.mxu0 0
        %8839 = vmatpush1.bf16.msra.mxu0 0
        %8840 = vmatprep.subr.bf16.mxu0 0
        %8841 = vmatpush1.bf16.msra.mxu0 0
        %8842 = vmatprep.subr.bf16.mxu0 0
        %8843 = vmatpush1.bf16.msra.mxu0 0
        %8844 = vmatprep.subr.bf16.mxu0 0
        %8845 = vmatpush1.bf16.msra.mxu0 0
        %8846 = vmatprep.subr.bf16.mxu0 0
        %8847 = vmatpush1.bf16.msra.mxu0 0
        %8848 = vmatprep.mubr.bf16.mxu0 0
        %8849 = vmatmul.mubr.bf16.gmra.mrb[0].mxu0 %v8814
        %v8850 = vpop.f32.mrb[0].mxu0
        %v8851 = vadd.f32 0.0, %v8850
        %v8852 = vpop.f32.mrb[0].mxu0
        %v8853 = vpop.f32.mrb[0].mxu0
        %v8854 = vpop.f32.mrb[0].mxu0
        %8855 = vdwg.mxu0
        %v8856 = vld [vmem:[#allocation9] sm:$0xf]
        %v8857 = vadd.f32 %v8856, %v8851
        %8858 = vst [vmem:[#allocation9] sm:$0xf] %v8857
        %v8859 = vld [vmem:[%s8765 + $0x1] sm:$0x3]
        %v8860 = vld [vmem:[%s8765 + $0x5] sm:$0x3]
        %v8863 = vcombine.low %v8859, %v8860
        %v8865 = vunpack.c.l.s4 1983009808
        %v8866 = vunpack.c.0.s8 %v8865
        %v8867 = vlaneseq
        %v8868 = vshrl.u32 %v8867, 7
        %v8869 = vsub.s32 %v8866, %v8868
        %v8870 = vrot.slane %v8863, %v8869
        %v8872 = vpack.c.bf16 %v8870, %v8870
        %s8873 = scalar_lea.vmem %s4, 224
        %v8874 = vld [vmem:[%s8873] sm:$0xf]
        %v8875 = vld [vmem:[%s8873 + $0x4] sm:$0xf]
        %v8876 = vld [vmem:[%s8873 + $0x8] sm:$0xf]
        %v8877 = vld [vmem:[%s8873 + $0xc] sm:$0xf]
        %v8878 = vld [vmem:[%s8873 + $0x10] sm:$0xf]
        %v8879 = vld [vmem:[%s8873 + $0x14] sm:$0xf]
        %v8880 = vld [vmem:[%s8873 + $0x18] sm:$0xf]
        %v8881 = vld [vmem:[%s8873 + $0x1c] sm:$0xf]
        %v8890 = vunpack.c.l.b16 %v8874
        %v8891 = vunpack.c.l.b16 %v8875
        %v8892 = vunpack.c.l.b16 %v8876
        %v8893 = vunpack.c.l.b16 %v8877
        %v8894 = vunpack.c.l.b16 %v8878
        %v8895 = vunpack.c.l.b16 %v8879
        %v8896 = vunpack.c.l.b16 %v8880
        %v8897 = vunpack.c.l.b16 %v8881
        %v8898 = vpack.c.b16 %v8891, %v8890
        %v8899 = vpack.c.b16 %v8893, %v8892
        %v8900 = vpack.c.b16 %v8895, %v8894
        %v8901 = vpack.c.b16 %v8897, %v8896
        %v8907 = vsel %vm7416, %v8872, 0
        %8909 = vmatprep.subr.bf16.mxu0 0
        %8910 = vmatpush1.bf16.msra.mxu0 %v8898
        %8911 = vmatprep.subr.bf16.mxu0 0
        %8912 = vmatpush1.bf16.msra.mxu0 %v8899
        %8913 = vmatprep.subr.bf16.mxu0 0
        %8914 = vmatpush1.bf16.msra.mxu0 %v8900
        %8915 = vmatprep.subr.bf16.mxu0 0
        %8916 = vmatpush1.bf16.msra.mxu0 %v8901
        %8917 = vmatprep.subr.bf16.mxu0 0
        %8918 = vmatpush1.bf16.msra.mxu0 0
        %8919 = vmatprep.subr.bf16.mxu0 0
        %8920 = vmatpush1.bf16.msra.mxu0 0
        %8921 = vmatprep.subr.bf16.mxu0 0
        %8922 = vmatpush1.bf16.msra.mxu0 0
        %8923 = vmatprep.subr.bf16.mxu0 0
        %8924 = vmatpush1.bf16.msra.mxu0 0
        %8925 = vmatprep.subr.bf16.mxu0 0
        %8926 = vmatpush1.bf16.msra.mxu0 0
        %8927 = vmatprep.subr.bf16.mxu0 0
        %8928 = vmatpush1.bf16.msra.mxu0 0
        %8929 = vmatprep.subr.bf16.mxu0 0
        %8930 = vmatpush1.bf16.msra.mxu0 0
        %8931 = vmatprep.subr.bf16.mxu0 0
        %8932 = vmatpush1.bf16.msra.mxu0 0
        %8933 = vmatprep.subr.bf16.mxu0 0
        %8934 = vmatpush1.bf16.msra.mxu0 0
        %8935 = vmatprep.subr.bf16.mxu0 0
        %8936 = vmatpush1.bf16.msra.mxu0 0
        %8937 = vmatprep.subr.bf16.mxu0 0
        %8938 = vmatpush1.bf16.msra.mxu0 0
        %8939 = vmatprep.subr.bf16.mxu0 0
        %8940 = vmatpush1.bf16.msra.mxu0 0
        %8941 = vmatprep.mubr.bf16.mxu0 0
        %8942 = vmatmul.mubr.bf16.gmra.mrb[0].mxu0 %v8907
        %v8943 = vpop.f32.mrb[0].mxu0
        %v8944 = vadd.f32 0.0, %v8943
        %v8945 = vpop.f32.mrb[0].mxu0
        %v8946 = vpop.f32.mrb[0].mxu0
        %v8947 = vpop.f32.mrb[0].mxu0
        %8948 = vdwg.mxu0
        %v8949 = vld [vmem:[#allocation9] sm:$0xf]
        %v8950 = vadd.f32 %v8949, %v8944
        %8951 = vst [vmem:[#allocation9] sm:$0xf] %v8950
        %v8952 = vld [vmem:[%s8765 + $0x2] sm:$0x3]
        %v8953 = vld [vmem:[%s8765 + $0x6] sm:$0x3]
        %v8956 = vcombine.low %v8952, %v8953
        %v8958 = vunpack.c.l.s4 1983009808
        %v8959 = vunpack.c.0.s8 %v8958
        %v8960 = vlaneseq
        %v8961 = vshrl.u32 %v8960, 7
        %v8962 = vsub.s32 %v8959, %v8961
        %v8963 = vrot.slane %v8956, %v8962
        %v8965 = vpack.c.bf16 %v8963, %v8963
        %s8966 = scalar_lea.vmem %s4, 256
        %v8967 = vld [vmem:[%s8966] sm:$0xf]
        %v8968 = vld [vmem:[%s8966 + $0x4] sm:$0xf]
        %v8969 = vld [vmem:[%s8966 + $0x8] sm:$0xf]
        %v8970 = vld [vmem:[%s8966 + $0xc] sm:$0xf]
        %v8971 = vld [vmem:[%s8966 + $0x10] sm:$0xf]
        %v8972 = vld [vmem:[%s8966 + $0x14] sm:$0xf]
        %v8973 = vld [vmem:[%s8966 + $0x18] sm:$0xf]
        %v8974 = vld [vmem:[%s8966 + $0x1c] sm:$0xf]
        %v8983 = vunpack.c.l.b16 %v8967
        %v8984 = vunpack.c.l.b16 %v8968
        %v8985 = vunpack.c.l.b16 %v8969
        %v8986 = vunpack.c.l.b16 %v8970
        %v8987 = vunpack.c.l.b16 %v8971
        %v8988 = vunpack.c.l.b16 %v8972
        %v8989 = vunpack.c.l.b16 %v8973
        %v8990 = vunpack.c.l.b16 %v8974
        %v8991 = vpack.c.b16 %v8984, %v8983
        %v8992 = vpack.c.b16 %v8986, %v8985
        %v8993 = vpack.c.b16 %v8988, %v8987
        %v8994 = vpack.c.b16 %v8990, %v8989
        %v9000 = vsel %vm7416, %v8965, 0
        %9002 = vmatprep.subr.bf16.mxu0 0
        %9003 = vmatpush1.bf16.msra.mxu0 %v8991
        %9004 = vmatprep.subr.bf16.mxu0 0
        %9005 = vmatpush1.bf16.msra.mxu0 %v8992
        %9006 = vmatprep.subr.bf16.mxu0 0
        %9007 = vmatpush1.bf16.msra.mxu0 %v8993
        %9008 = vmatprep.subr.bf16.mxu0 0
        %9009 = vmatpush1.bf16.msra.mxu0 %v8994
        %9010 = vmatprep.subr.bf16.mxu0 0
        %9011 = vmatpush1.bf16.msra.mxu0 0
        %9012 = vmatprep.subr.bf16.mxu0 0
        %9013 = vmatpush1.bf16.msra.mxu0 0
        %9014 = vmatprep.subr.bf16.mxu0 0
        %9015 = vmatpush1.bf16.msra.mxu0 0
        %9016 = vmatprep.subr.bf16.mxu0 0
        %9017 = vmatpush1.bf16.msra.mxu0 0
        %9018 = vmatprep.subr.bf16.mxu0 0
        %9019 = vmatpush1.bf16.msra.mxu0 0
        %9020 = vmatprep.subr.bf16.mxu0 0
        %9021 = vmatpush1.bf16.msra.mxu0 0
        %9022 = vmatprep.subr.bf16.mxu0 0
        %9023 = vmatpush1.bf16.msra.mxu0 0
        %9024 = vmatprep.subr.bf16.mxu0 0
        %9025 = vmatpush1.bf16.msra.mxu0 0
        %9026 = vmatprep.subr.bf16.mxu0 0
        %9027 = vmatpush1.bf16.msra.mxu0 0
        %9028 = vmatprep.subr.bf16.mxu0 0
        %9029 = vmatpush1.bf16.msra.mxu0 0
        %9030 = vmatprep.subr.bf16.mxu0 0
        %9031 = vmatpush1.bf16.msra.mxu0 0
        %9032 = vmatprep.subr.bf16.mxu0 0
        %9033 = vmatpush1.bf16.msra.mxu0 0
        %9034 = vmatprep.mubr.bf16.mxu0 0
        %9035 = vmatmul.mubr.bf16.gmra.mrb[0].mxu0 %v9000
        %v9036 = vpop.f32.mrb[0].mxu0
        %v9037 = vadd.f32 0.0, %v9036
        %v9038 = vpop.f32.mrb[0].mxu0
        %v9039 = vpop.f32.mrb[0].mxu0
        %v9040 = vpop.f32.mrb[0].mxu0
        %9041 = vdwg.mxu0
        %v9042 = vld [vmem:[#allocation9] sm:$0xf]
        %v9043 = vadd.f32 %v9042, %v9037
        %9044 = vst [vmem:[#allocation9] sm:$0xf] %v9043
        %v9045 = vld [vmem:[#allocation9] sm:$0xf]
        %v9046 = vld [vmem:[%s8] sm:$0x1]
        %v9048 = vlaneseq
        %v9049 = vshrl.u32 %v9048, 7
        %v9050 = vsub.s32 0, %v9049
        %v9051 = vrot.slane %v9046, %v9050
        %v9053 = vadd.f32 %v9045, %v9051
        %v9054 = vmax.f32 %v9053, 0.0
        %v9057 = vunpack.c.l.s4 1983009808
        %v9058 = vunpack.c.0.s8 %v9057
        %v9059 = vlaneseq
        %v9060 = vshrl.u32 %v9059, 7
        %v9061 = vsub.s32 %v9058, %v9060
        %v9062 = vrot.slane %v9054, %v9061
        %v9063 = vcombine.high %v9062, %v9062
        %v9066 = vsel %vm594, %v9062, -inf
        %v9067 = vrot.slane %v9066, 4
        %v9068 = vmax.f32 %v9066, %v9067
        %v9069 = vrot.slane %v9068, 2
        %v9070 = vmax.f32 %v9068, %v9069
        %v9071 = vrot.slane %v9070, 1
        %v9072 = vmax.f32 %v9070, %v9071
        %v9073 = vsel %vm594, %v9063, -inf
        %v9074 = vrot.slane %v9073, 4
        %v9075 = vmax.f32 %v9073, %v9074
        %v9076 = vrot.slane %v9075, 2
        %v9077 = vmax.f32 %v9075, %v9076
        %v9078 = vrot.slane %v9077, 1
        %v9079 = vmax.f32 %v9077, %v9078
        %v9080 = vmax.f32 %v9072, %v9079
        %v9081 = vadd.f32 %v9080, 0.0
        %v9082 = vpack.c.bf16 %v9081, %v9081
        %v9083 = vld [vmem:[%s9] sm:$0xf]
        %v9084 = vld [vmem:[%s9 + $0x4] sm:$0xf]
        %v9085 = vld [vmem:[%s9 + $0x8] sm:$0xf]
        %v9086 = vld [vmem:[%s9 + $0xc] sm:$0xf]
        %v9087 = vld [vmem:[%s9 + $0x10] sm:$0xf]
        %v9088 = vld [vmem:[%s9 + $0x14] sm:$0xf]
        %v9089 = vld [vmem:[%s9 + $0x18] sm:$0xf]
        %v9090 = vld [vmem:[%s9 + $0x1c] sm:$0xf]
        %v9091 = vld [vmem:[%s9 + $0x20] sm:$0xf]
        %v9092 = vld [vmem:[%s9 + $0x24] sm:$0xf]
        %v9093 = vld [vmem:[%s9 + $0x28] sm:$0xf]
        %v9094 = vld [vmem:[%s9 + $0x2c] sm:$0xf]
        %v9095 = vld [vmem:[%s9 + $0x30] sm:$0xf]
        %v9096 = vld [vmem:[%s9 + $0x34] sm:$0xf]
        %v9097 = vld [vmem:[%s9 + $0x38] sm:$0xf]
        %v9098 = vld [vmem:[%s9 + $0x3c] sm:$0xf]
        %v9099 = vld [vmem:[%s10] sm:$0x1]
        %v9116 = vunpack.c.l.b16 %v9083
        %v9117 = vunpack.c.l.b16 %v9084
        %v9118 = vunpack.c.l.b16 %v9085
        %v9119 = vunpack.c.l.b16 %v9086
        %v9120 = vunpack.c.l.b16 %v9087
        %v9121 = vunpack.c.l.b16 %v9088
        %v9122 = vunpack.c.l.b16 %v9089
        %v9123 = vunpack.c.l.b16 %v9090
        %v9124 = vunpack.c.l.b16 %v9091
        %v9125 = vunpack.c.l.b16 %v9092
        %v9126 = vunpack.c.l.b16 %v9093
        %v9127 = vunpack.c.l.b16 %v9094
        %v9128 = vunpack.c.l.b16 %v9095
        %v9129 = vunpack.c.l.b16 %v9096
        %v9130 = vunpack.c.l.b16 %v9097
        %v9131 = vunpack.c.l.b16 %v9098
        %v9132 = vpack.c.b16 %v9117, %v9116
        %v9133 = vpack.c.b16 %v9119, %v9118
        %v9134 = vpack.c.b16 %v9121, %v9120
        %v9135 = vpack.c.b16 %v9123, %v9122
        %v9136 = vpack.c.b16 %v9125, %v9124
        %v9137 = vpack.c.b16 %v9127, %v9126
        %v9138 = vpack.c.b16 %v9129, %v9128
        %v9139 = vpack.c.b16 %v9131, %v9130
        %9148 = vmatprep.subr.bf16.mxu0 0
        %9149 = vmatpush1.bf16.msra.mxu0 %v9132
        %9150 = vmatprep.subr.bf16.mxu0 0
        %9151 = vmatpush1.bf16.msra.mxu0 %v9133
        %9152 = vmatprep.subr.bf16.mxu0 0
        %9153 = vmatpush1.bf16.msra.mxu0 %v9134
        %9154 = vmatprep.subr.bf16.mxu0 0
        %9155 = vmatpush1.bf16.msra.mxu0 %v9135
        %9156 = vmatprep.subr.bf16.mxu0 0
        %9157 = vmatpush1.bf16.msra.mxu0 %v9136
        %9158 = vmatprep.subr.bf16.mxu0 0
        %9159 = vmatpush1.bf16.msra.mxu0 %v9137
        %9160 = vmatprep.subr.bf16.mxu0 0
        %9161 = vmatpush1.bf16.msra.mxu0 %v9138
        %9162 = vmatprep.subr.bf16.mxu0 0
        %9163 = vmatpush1.bf16.msra.mxu0 %v9139
        %9164 = vmatprep.subr.bf16.mxu0 0
        %9165 = vmatpush1.bf16.msra.mxu0 0
        %9166 = vmatprep.subr.bf16.mxu0 0
        %9167 = vmatpush1.bf16.msra.mxu0 0
        %9168 = vmatprep.subr.bf16.mxu0 0
        %9169 = vmatpush1.bf16.msra.mxu0 0
        %9170 = vmatprep.subr.bf16.mxu0 0
        %9171 = vmatpush1.bf16.msra.mxu0 0
        %9172 = vmatprep.subr.bf16.mxu0 0
        %9173 = vmatpush1.bf16.msra.mxu0 0
        %9174 = vmatprep.subr.bf16.mxu0 0
        %9175 = vmatpush1.bf16.msra.mxu0 0
        %9176 = vmatprep.subr.bf16.mxu0 0
        %9177 = vmatpush1.bf16.msra.mxu0 0
        %9178 = vmatprep.subr.bf16.mxu0 0
        %9179 = vmatpush1.bf16.msra.mxu0 0
        %9180 = vmatprep.mubr.bf16.mxu0 0
        %9181 = vmatmul.mubr.bf16.gmra.mrb[0].mxu0 %v9082
        %v9182 = vpop.f32.mrb[0].mxu0
        %v9183 = vadd.f32 %v9099, %v9182
        %v9184 = vpop.f32.mrb[0].mxu0
        %v9185 = vpop.f32.mrb[0].mxu0
        %v9186 = vpop.f32.mrb[0].mxu0
        %9187 = vdwg.mxu0
        %vm9188 = vcmask 73728
        %9189 = vst.msk [vmem:[%s378] sm:$0x1] %vm9188, %v9183
        %s9190 = sand.u32 %s269, 1
        %s9191 = scalar_lea.sflag [#allocation11], %s9190
        %s9192 = sand.u32 %s269, 1
        %s9193 = scalar_lea.vmem [#allocation10], %s9192
        // Predicated region
        $region65: #{block_forward.1} parent=63 // pred_check
          %p9194 = pneg %p279
        $region66: #{block_forward.1} parent=63 // pred_check_branch
          %9196 = sbr.rel (%p9194) target = $region68
        $region67: #{block_forward.1} parent=63 // pred_region
          %s9198 = ssub.s32 16, 16
          %9199 = vsyncadd %s9191, %s9198
          %s9200 = smul.addr %s25, 16
          %s9201 = scalar_lea.hbm %s11, %s9200
          %s9203 = sshll.u32 %s9193, 4
          %s9204 = int_to_ptr.vmem [resolvable:$true] %s9203
          %9206 = dma.vmem_to_hbm [thread:$0]  %s9204, 16, %s9201, %s9191
        $region68: #{block_forward.1} parent=63 // pred_fallthru
          _
      $region64: #{block_forward.1} parent=5 // pred_fallthru
        _
      %p9207 = scmp.le.s32.totalorder 2, %s20
      // Predicated region
      $region69: #{block_forward.1} parent=5 // pred_check
        %p9208 = pneg %p9207
      $region70: #{block_forward.1} parent=5 // pred_check_branch
        %9210 = sbr.rel (%p9208) target = $region72
      $region71: #{block_forward.1} parent=5 // pred_region
        %s9211 = ssub.s32 %s20, 2
        // Predicated region
        $region73: #{block_forward.1} parent=71 // pred_check
          %p9212 = pneg %p285
        $region74: #{block_forward.1} parent=71 // pred_check_branch
          %9214 = sbr.rel (%p9212) target = $region76
        $region75: #{block_forward.1} parent=71 // pred_region
          %s9215 = sand.u32 %s270, 1
          %s9216 = scalar_lea.sflag [#allocation11], %s9215
          %s9217 = sand.u32 %s270, 1
          %s9218 = scalar_lea.vmem [#allocation10], %s9217
          %9219 = dma.done %s9216, 16
        $region76: #{block_forward.1} parent=71 // pred_fallthru
          _
      $region72: #{block_forward.1} parent=5 // pred_fallthru
        _
    $region6: #{block_forward.1} parent=1 // loop_footer
      %s24 = sadd.s32 1, %s20
    $region7: #{block_forward.1} parent=1 // loop_footer_branch
      %19 = sbr.rel target = $region3
    $region8: #{block_forward.1} parent=1 // loop_exit
      _
    %9220 = vsyncpa [#allocation11], 1
    %s9221 = scalar_lea.sflag [#allocation11], 1
    %9222 = vsyncpa %s9221, 1

</llo_original>
